<compile_context>
chip_gen: v6e
topology: v6e:2x2x1
jax: 0.10.0
libtpu: 0.0.40
codegen_flags: <defaults>
</compile_context>

<pallas_src>
import jax
import jax.numpy as jnp
from jax.experimental import pallas as pl
from jax.experimental.pallas import tpu as pltpu


# Tap bookkeeping for ConvTranspose2d(k=3, stride=2, pad=1, output_pad=1):
# output parity phase (p, q) (i.e. out[2m+p, 2n+q]) sums over taps (di, dj)
# reading input[m+di, n+dj] (input padded by one row/col at bottom/right);
# the matching kernel position is ky = p - 2*di + 1, kx = q - 2*dj + 1.
PHASE_TAPS = {
    (0, 0): [(0, 0)],
    (0, 1): [(0, 0), (0, 1)],
    (1, 0): [(0, 0), (1, 0)],
    (1, 1): [(0, 0), (0, 1), (1, 0), (1, 1)],
}


def _make_unet_kernel(B, PH, PW):
    HW = PH * PW            # 64
    f32 = jnp.float32
    bf16 = jnp.bfloat16

    def kernel(patch_ref, w0_ref, s0_ref, b0_ref,
               wa_ref, sa_ref, ba_ref,
               wb_ref, sb_ref, bb_ref,
               wd_ref, sd_ref, bd_ref,
               wp_ref, bp_ref,
               o_ref,
               c0_ref, pc_ref, a1_ref, a2_ref):
        C0 = w0_ref.shape[-1]        # 128
        C1 = wa_ref.shape[-1]        # 64
        C2 = wb_ref.shape[-1]        # 64
        M1 = B * HW

        # -- zero only the thin, never-overwritten canvas borders -------------
        # (interiors are fully rewritten every step; done unconditionally so a
        #  megacore split of the batch grid axis stays correct)
        for p in range(2):
            for q in range(2):
                s = 2 * (1 - p) + (1 - q)
                r0 = PH if p == 0 else 0
                cc = PW if q == 0 else 0
                pc_ref[s, :, r0:r0 + 1, :, :] = jnp.zeros((B, 1, PW + 1, C0), bf16)
                pc_ref[s, :, :, cc:cc + 1, :] = jnp.zeros((B, PH + 1, 1, C0), bf16)
        a1_ref[:, 0:1, :, :] = jnp.zeros((B, 1, PW + 2, C1), bf16)
        a1_ref[:, PH + 1:PH + 2, :, :] = jnp.zeros((B, 1, PW + 2, C1), bf16)
        a1_ref[:, :, 0:1, :] = jnp.zeros((B, PH + 2, 1, C1), bf16)
        a1_ref[:, :, PW + 1:PW + 2, :] = jnp.zeros((B, PH + 2, 1, C1), bf16)
        a2_ref[:, PH:PH + 1, :, :] = jnp.zeros((B, 1, PW + 1, C2), bf16)
        a2_ref[:, :, PW:PW + 1, :] = jnp.zeros((B, PH + 1, 1, C2), bf16)

        # ---- conv0: ConvBnReLU(32, 128) as ONE matmul, M = 4*B*HW -----------
        KIN = patch_ref.shape[-1]                              # 9 * CIN
        y0 = jnp.dot(patch_ref[...].reshape(4 * B * HW, KIN), w0_ref[...],
                     preferred_element_type=f32)               # (4*B*HW, 128)
        y0 = jnp.maximum(y0 * s0_ref[...] + b0_ref[...], 0.0)
        # flat f32 copy for the UNet skip (no padded-canvas relayout reads)
        c0_ref[...] = y0.reshape(4, B, HW, C0)
        # scatter into the padded parity canvases (bf16, MXU input dtype):
        # raw phase (p, q) -> canvas slot (1-p, 1-q) at spatial offset (p, q)
        y0p = y0.astype(bf16).reshape(4, B, PH, PW, C0)
        for p in range(2):
            for q in range(2):
                s = 2 * (1 - p) + (1 - q)
                pc_ref[s, :, p:p + PH, q:q + PW, :] = y0p[2 * p + q]

        # ---- conv_0[0]: ConvBnReLU(128, 64, stride=2), one matmul, K=1152 ----
        taps = []
        for ky in range(3):
            for kx in range(3):
                t = pc_ref[2 * (ky % 2) + (kx % 2), :,
                           ky // 2:ky // 2 + PH, kx // 2:kx // 2 + PW, :]
                taps.append(t.reshape(M1, C0))
        patch = jnp.concatenate(taps, axis=-1)                 # (B*HW, 9*128) bf16
        a1 = jnp.dot(patch, wa_ref[...], preferred_element_type=f32)
        a1 = jnp.maximum(a1 * sa_ref[...] + ba_ref[...], 0.0)  # (B*HW, 64)
        a1_ref[:, 1:1 + PH, 1:1 + PW, :] = a1.astype(bf16).reshape(B, PH, PW, C1)

        # ---- conv_0[1]: ConvBnReLU(64, 64), one matmul, K=576 ---------------
        taps = []
        for ky in range(3):
            for kx in range(3):
                taps.append(a1_ref[:, ky:ky + PH, kx:kx + PW, :].reshape(M1, C1))
        patch = jnp.concatenate(taps, axis=-1)                 # (B*HW, 9*64) bf16
        a2 = jnp.dot(patch, wb_ref[...], preferred_element_type=f32)
        a2 = jnp.maximum(a2 * sb_ref[...] + bb_ref[...], 0.0)  # (B*HW, 64)
        a2_ref[:, 0:PH, 0:PW, :] = a2.astype(bf16).reshape(B, PH, PW, C2)

        # ---- deconv_0 + BN + ReLU + skip + prob (real per-phase K) ----------
        sd = sd_ref[...]
        bd = bd_ref[...]
        wp = wp_ref[...]
        bp = bp_ref[0]
        lane = jax.lax.broadcasted_iota(jnp.int32, (1, 4), 1)
        acc = jnp.zeros((M1, 4), f32)
        for p in range(2):
            for q in range(2):
                k = 2 * p + q
                taps_pq = PHASE_TAPS[(p, q)]
                slabs = [a2_ref[:, di:di + PH, dj:dj + PW, :].reshape(M1, C2)
                         for (di, dj) in taps_pq]
                patch = slabs[0] if len(slabs) == 1 else jnp.concatenate(slabs, -1)
                w_ph = wd_ref[k, :C2 * len(taps_pq), :]        # (K_phase, 128)
                y = jnp.dot(patch, w_ph, preferred_element_type=f32)
                y = jnp.maximum(y * sd + bd, 0.0)              # (B*HW, 128)
                y = y + c0_ref[k].reshape(M1, C0)              # UNet skip (f32)
                pr = jnp.sum(y * wp, axis=-1, keepdims=True) + bp   # (B*HW, 1)
                # place phase column k at lane k (no narrow column stores)
                acc = acc + jnp.where(lane == k, pr, 0.0)
        o_ref[...] = acc                                       # ONE (B*HW, 4) store

    return kernel


# ---------------------------------------------------------------------------
# Wrapper: single fused pallas_call, B samples per grid step
# ---------------------------------------------------------------------------
def unet_forward(x_nchw, p, block_b=None):
    N, CIN, H, W = x_nchw.shape
    PH, PW = H // 2, W // 2
    HW = PH * PW

    if block_b is None:
        # Biggest divisor of N up to 8 (fills the MXU M dim).  On v7x one
        # would additionally keep N // B >= 2 (and even) when N allows, so the
        # "parallel" batch axis is split across both TensorCores.
        block_b = 1
        for b in (8, 4, 2):
            if N % b == 0:
                block_b = b
                break
    B = block_b
    assert N % B == 0
    G = N // B

    # conv0 im2col in XLA (channels-last), one patch matrix per output parity
    # phase: patches[2p+q, n*HW + m*PW + w, (ky*3+kx)*CIN + c]
    #        = pad(x,1)[n, 2m+p+ky, 2w+q+kx, c]
    x = jnp.transpose(x_nchw, (0, 2, 3, 1))
    xp = jnp.pad(x, ((0, 0), (1, 1), (1, 1), (0, 0)))
    phases = []
    for pp in range(2):
        for qq in range(2):
            taps = []
            for ky in range(3):
                for kx in range(3):
                    taps.append(xp[:, pp + ky:pp + ky + 2 * PH - 1:2,
                                   qq + kx:qq + kx + 2 * PW - 1:2, :])
            phases.append(jnp.concatenate(taps, axis=-1))      # (N, PH, PW, 9*CIN)
    patches = jnp.stack(phases, axis=0).reshape(4, N * HW, 9 * CIN)
    patches = patches.astype(jnp.bfloat16)

    kernel = _make_unet_kernel(B, PH, PW)
    out = pl.pallas_call(
        kernel,
        out_shape=jax.ShapeDtypeStruct((N * HW, 4), jnp.float32),
        grid=(G,),
        in_specs=[
            pl.BlockSpec((4, B * HW, 9 * CIN), lambda g: (0, g, 0)),
            pl.BlockSpec((9 * CIN, 128), lambda g: (0, 0)),
            pl.BlockSpec((1, 128), lambda g: (0, 0)),
            pl.BlockSpec((1, 128), lambda g: (0, 0)),
            pl.BlockSpec((9 * 128, 64), lambda g: (0, 0)),
            pl.BlockSpec((1, 64), lambda g: (0, 0)),
            pl.BlockSpec((1, 64), lambda g: (0, 0)),
            pl.BlockSpec((9 * 64, 64), lambda g: (0, 0)),
            pl.BlockSpec((1, 64), lambda g: (0, 0)),
            pl.BlockSpec((1, 64), lambda g: (0, 0)),
            pl.BlockSpec((4, 4 * 64, 128), lambda g: (0, 0, 0)),
            pl.BlockSpec((1, 128), lambda g: (0, 0)),
            pl.BlockSpec((1, 128), lambda g: (0, 0)),
            pl.BlockSpec((1, 128), lambda g: (0, 0)),
            pl.BlockSpec(memory_space=pltpu.MemorySpace.SMEM),   # prob bias
        ],
        out_specs=pl.BlockSpec((B * HW, 4), lambda g: (g, 0)),
        scratch_shapes=[
            pltpu.VMEM((4, B, HW, 128), jnp.float32),               # conv0 flat (skip)
            pltpu.VMEM((4, B, PH + 1, PW + 1, 128), jnp.bfloat16),  # conv0 tap canvases
            pltpu.VMEM((B, PH + 2, PW + 2, 64), jnp.bfloat16),      # conv_0[0] out, padded
            pltpu.VMEM((B, PH + 1, PW + 1, 64), jnp.bfloat16),      # conv_0[1] out, padded
        ],
        compiler_params=pltpu.CompilerParams(
            dimension_semantics=("parallel",)),
    )(patches, p["w0"], p["s0"], p["b0"],
      p["wa"], p["sa"], p["ba"],
      p["wb"], p["sb"], p["bb"],
      p["wd"], p["sd"], p["bd"],
      p["wp"], p["bp"])

    # rows: (n, m*PW + w); lanes: 2p+q  ->  (N, 1, 2m+p, 2w+q)
    out = out.reshape(N, PH, PW, 2, 2)
    out = jnp.transpose(out, (0, 1, 3, 2, 4)).reshape(N, H, W)
    return out[:, None, :, :]


# ---------------------------------------------------------------------------
# Parameters (deterministic synthetic init; shapes from UNet defaults:
# inp_ch=32, output_chal=1, down_sample_times=1, channel_mode='v0')
# ---------------------------------------------------------------------------
def bn_fold(gamma, beta, mean, var, eps=1e-5):
    scale = gamma / jnp.sqrt(var + eps)
    shift = beta - mean * scale
    return (scale.reshape(1, -1).astype(jnp.float32),
            shift.reshape(1, -1).astype(jnp.float32))


def init_params(key):
    ks = jax.random.split(key, 10)

    def conv_w(k, K, cin, cout):
        return jax.random.normal(k, (K, K, cin, cout), jnp.float32) / jnp.sqrt(K * K * cin)

    def bn(k, c):
        k1, k2, k3, k4 = jax.random.split(k, 4)
        gamma = 1.0 + 0.1 * jax.random.normal(k1, (c,), jnp.float32)
        beta = 0.1 * jax.random.normal(k2, (c,), jnp.float32)
        mean = 0.1 * jax.random.normal(k3, (c,), jnp.float32)
        var = jax.random.uniform(k4, (c,), jnp.float32, minval=0.5, maxval=1.5)
        return bn_fold(gamma, beta, mean, var)

    p = {}
    # conv0: 3x3, 32 -> 128  (HWIO flattened to (9*32, 128), (ky, kx, cin) order)
    p["w0"] = conv_w(ks[0], 3, 32, 128).reshape(9 * 32, 128).astype(jnp.bfloat16)
    p["s0"], p["b0"] = bn(ks[1], 128)
    # conv_0[0]: 3x3 stride 2, 128 -> 64, K flattened
    p["wa"] = conv_w(ks[2], 3, 128, 64).reshape(9 * 128, 64).astype(jnp.bfloat16)
    p["sa"], p["ba"] = bn(ks[3], 64)
    # conv_0[1]: 3x3, 64 -> 64, K flattened
    p["wb"] = conv_w(ks[4], 3, 64, 64).reshape(9 * 64, 64).astype(jnp.bfloat16)
    p["sb"], p["bb"] = bn(ks[5], 64)
    # deconv_0: ConvTranspose2d(64, 128, 3, s=2, p=1, op=1); PyTorch layout
    # (Cin, Cout, kH, kW) repacked per output parity phase; only the first
    # 64*len(taps) rows of each phase slab are read by the kernel.
    wt = jax.random.normal(ks[6], (64, 128, 3, 3), jnp.float32) / jnp.sqrt(9.0 * 64)
    wd = jnp.zeros((4, 4 * 64, 128), jnp.float32)
    for (pp, qq), taps in PHASE_TAPS.items():
        for ti, (di, dj) in enumerate(taps):
            ky, kx = pp - 2 * di + 1, qq - 2 * dj + 1
            wd = wd.at[2 * pp + qq, 64 * ti:64 * (ti + 1), :].set(wt[:, :, ky, kx])
    p["wd"] = wd.astype(jnp.bfloat16)
    p["sd"], p["bd"] = bn(ks[7], 128)
    # prob: 1x1 Conv2d(128 -> 1) with bias
    p["wp"] = jax.random.normal(ks[8], (1, 128), jnp.float32) / jnp.sqrt(128.0)
    p["bp"] = 0.1 * jax.random.normal(ks[9], (1,), jnp.float32)
    return p


if __name__ == "__main__":
    key = jax.random.PRNGKey(0)
    kx, kp = jax.random.split(key)
    x = jax.random.normal(kx, (2, 32, 16, 16), jnp.float32)   # NCHW, inp_ch=32
    params = init_params(kp)

    out = jax.jit(unet_forward)(x, params)
    jax.block_until_ready(out)
    assert out.shape == (2, 1, 16, 16), out.shape
    print("KERNEL_OK")
</pallas_src>

<mosaic_0001>
module attributes {stable_mosaic.version = 11 : i64} {
  func.func @kernel(%arg0: i32, %arg1: memref<4x128x288xbf16, #tpu.memory_space<vmem>>, %arg2: memref<288x128xbf16, #tpu.memory_space<vmem>>, %arg3: memref<1x128xf32, #tpu.memory_space<vmem>>, %arg4: memref<1x128xf32, #tpu.memory_space<vmem>>, %arg5: memref<1152x64xbf16, #tpu.memory_space<vmem>>, %arg6: memref<1x64xf32, #tpu.memory_space<vmem>>, %arg7: memref<1x64xf32, #tpu.memory_space<vmem>>, %arg8: memref<576x64xbf16, #tpu.memory_space<vmem>>, %arg9: memref<1x64xf32, #tpu.memory_space<vmem>>, %arg10: memref<1x64xf32, #tpu.memory_space<vmem>>, %arg11: memref<4x256x128xbf16, #tpu.memory_space<vmem>>, %arg12: memref<1x128xf32, #tpu.memory_space<vmem>>, %arg13: memref<1x128xf32, #tpu.memory_space<vmem>>, %arg14: memref<1x128xf32, #tpu.memory_space<vmem>>, %arg15: memref<1xf32, #tpu.memory_space<smem>>, %arg16: memref<128x4xf32, #tpu.memory_space<vmem>>, %arg17: memref<4x2x64x128xf32, #tpu.memory_space<vmem>>, %arg18: memref<4x2x9x9x128xbf16, #tpu.memory_space<vmem>>, %arg19: memref<2x10x10x64xbf16, #tpu.memory_space<vmem>>, %arg20: memref<2x9x9x64xbf16, #tpu.memory_space<vmem>>) attributes {dimension_semantics = [#tpu.dimension_semantics<parallel>], iteration_bounds = array<i64: 1>, scalar_prefetch = 0 : i64, scratch_operands = 4 : i64, tpu.core_type = #tpu.core_type<tc>, window_params = [{transform_indices = @transform_0, window_bounds = array<i64: 4, 128, 288>}, {pipeline_mode = #tpu.pipeline_mode<synchronous>, transform_indices = @transform_1, window_bounds = array<i64: 288, 128>}, {pipeline_mode = #tpu.pipeline_mode<synchronous>, transform_indices = @transform_2, window_bounds = array<i64: 1, 128>}, {pipeline_mode = #tpu.pipeline_mode<synchronous>, transform_indices = @transform_3, window_bounds = array<i64: 1, 128>}, {pipeline_mode = #tpu.pipeline_mode<synchronous>, transform_indices = @transform_4, window_bounds = array<i64: 1152, 64>}, {pipeline_mode = #tpu.pipeline_mode<synchronous>, transform_indices = @transform_5, window_bounds = array<i64: 1, 64>}, {pipeline_mode = #tpu.pipeline_mode<synchronous>, transform_indices = @transform_6, window_bounds = array<i64: 1, 64>}, {pipeline_mode = #tpu.pipeline_mode<synchronous>, transform_indices = @transform_7, window_bounds = array<i64: 576, 64>}, {pipeline_mode = #tpu.pipeline_mode<synchronous>, transform_indices = @transform_8, window_bounds = array<i64: 1, 64>}, {pipeline_mode = #tpu.pipeline_mode<synchronous>, transform_indices = @transform_9, window_bounds = array<i64: 1, 64>}, {pipeline_mode = #tpu.pipeline_mode<synchronous>, transform_indices = @transform_10, window_bounds = array<i64: 4, 256, 128>}, {pipeline_mode = #tpu.pipeline_mode<synchronous>, transform_indices = @transform_11, window_bounds = array<i64: 1, 128>}, {pipeline_mode = #tpu.pipeline_mode<synchronous>, transform_indices = @transform_12, window_bounds = array<i64: 1, 128>}, {pipeline_mode = #tpu.pipeline_mode<synchronous>, transform_indices = @transform_13, window_bounds = array<i64: 1, 128>}, {transform_indices = @transform_14, window_bounds = array<i64: 1>}, {transform_indices = @transform_15, window_bounds = array<i64: 128, 4>}]} {
    %cst = arith.constant 0.000000e+00 : bf16
    %0 = vector.broadcast %cst : bf16 to vector<2x1x9x128xbf16>
    %c3 = arith.constant 3 : index
    %c0 = arith.constant 0 : index
    %c8 = arith.constant 8 : index
    %c0_0 = arith.constant 0 : index
    %c0_1 = arith.constant 0 : index
    %1 = vector.load %arg18[%c3, %c0, %c8, %c0_0, %c0_1] : memref<4x2x9x9x128xbf16, #tpu.memory_space<vmem>>, vector<1x2x1x9x128xbf16>
    %2 = vector.shape_cast %1 : vector<1x2x1x9x128xbf16> to vector<2x1x9x128xbf16>
    %3 = vector.shape_cast %0 : vector<2x1x9x128xbf16> to vector<1x2x1x9x128xbf16>
    tpu.vector_store %arg18[%c3, %c0, %c8, %c0_0, %c0_1], %3 {strides = array<i32>} : memref<4x2x9x9x128xbf16, #tpu.memory_space<vmem>>, vector<1x2x1x9x128xbf16>,
    %cst_2 = arith.constant 0.000000e+00 : bf16
    %4 = vector.broadcast %cst_2 : bf16 to vector<2x9x1x128xbf16>
    %c3_3 = arith.constant 3 : index
    %c0_4 = arith.constant 0 : index
    %c0_5 = arith.constant 0 : index
    %c8_6 = arith.constant 8 : index
    %c0_7 = arith.constant 0 : index
    %5 = vector.load %arg18[%c3_3, %c0_4, %c0_5, %c8_6, %c0_7] : memref<4x2x9x9x128xbf16, #tpu.memory_space<vmem>>, vector<1x2x9x1x128xbf16>
    %6 = vector.shape_cast %5 : vector<1x2x9x1x128xbf16> to vector<2x9x1x128xbf16>
    %7 = vector.shape_cast %4 : vector<2x9x1x128xbf16> to vector<1x2x9x1x128xbf16>
    tpu.vector_store %arg18[%c3_3, %c0_4, %c0_5, %c8_6, %c0_7], %7 {strides = array<i32>} : memref<4x2x9x9x128xbf16, #tpu.memory_space<vmem>>, vector<1x2x9x1x128xbf16>,
    %cst_8 = arith.constant 0.000000e+00 : bf16
    %8 = vector.broadcast %cst_8 : bf16 to vector<2x1x9x128xbf16>
    %c2 = arith.constant 2 : index
    %c0_9 = arith.constant 0 : index
    %c8_10 = arith.constant 8 : index
    %c0_11 = arith.constant 0 : index
    %c0_12 = arith.constant 0 : index
    %9 = vector.load %arg18[%c2, %c0_9, %c8_10, %c0_11, %c0_12] : memref<4x2x9x9x128xbf16, #tpu.memory_space<vmem>>, vector<1x2x1x9x128xbf16>
    %10 = vector.shape_cast %9 : vector<1x2x1x9x128xbf16> to vector<2x1x9x128xbf16>
    %11 = vector.shape_cast %8 : vector<2x1x9x128xbf16> to vector<1x2x1x9x128xbf16>
    tpu.vector_store %arg18[%c2, %c0_9, %c8_10, %c0_11, %c0_12], %11 {strides = array<i32>} : memref<4x2x9x9x128xbf16, #tpu.memory_space<vmem>>, vector<1x2x1x9x128xbf16>,
    %cst_13 = arith.constant 0.000000e+00 : bf16
    %12 = vector.broadcast %cst_13 : bf16 to vector<2x9x1x128xbf16>
    %c2_14 = arith.constant 2 : index
    %c0_15 = arith.constant 0 : index
    %c0_16 = arith.constant 0 : index
    %c0_17 = arith.constant 0 : index
    %c0_18 = arith.constant 0 : index
    %13 = vector.load %arg18[%c2_14, %c0_15, %c0_16, %c0_17, %c0_18] : memref<4x2x9x9x128xbf16, #tpu.memory_space<vmem>>, vector<1x2x9x1x128xbf16>
    %14 = vector.shape_cast %13 : vector<1x2x9x1x128xbf16> to vector<2x9x1x128xbf16>
    %15 = vector.shape_cast %12 : vector<2x9x1x128xbf16> to vector<1x2x9x1x128xbf16>
    tpu.vector_store %arg18[%c2_14, %c0_15, %c0_16, %c0_17, %c0_18], %15 {strides = array<i32>} : memref<4x2x9x9x128xbf16, #tpu.memory_space<vmem>>, vector<1x2x9x1x128xbf16>,
    %cst_19 = arith.constant 0.000000e+00 : bf16
    %16 = vector.broadcast %cst_19 : bf16 to vector<2x1x9x128xbf16>
    %c1 = arith.constant 1 : index
    %c0_20 = arith.constant 0 : index
    %c0_21 = arith.constant 0 : index
    %c0_22 = arith.constant 0 : index
    %c0_23 = arith.constant 0 : index
    %17 = vector.load %arg18[%c1, %c0_20, %c0_21, %c0_22, %c0_23] : memref<4x2x9x9x128xbf16, #tpu.memory_space<vmem>>, vector<1x2x1x9x128xbf16>
    %18 = vector.shape_cast %17 : vector<1x2x1x9x128xbf16> to vector<2x1x9x128xbf16>
    %19 = vector.shape_cast %16 : vector<2x1x9x128xbf16> to vector<1x2x1x9x128xbf16>
    tpu.vector_store %arg18[%c1, %c0_20, %c0_21, %c0_22, %c0_23], %19 {strides = array<i32>} : memref<4x2x9x9x128xbf16, #tpu.memory_space<vmem>>, vector<1x2x1x9x128xbf16>,
    %cst_24 = arith.constant 0.000000e+00 : bf16
    %20 = vector.broadcast %cst_24 : bf16 to vector<2x9x1x128xbf16>
    %c1_25 = arith.constant 1 : index
    %c0_26 = arith.constant 0 : index
    %c0_27 = arith.constant 0 : index
    %c8_28 = arith.constant 8 : index
    %c0_29 = arith.constant 0 : index
    %21 = vector.load %arg18[%c1_25, %c0_26, %c0_27, %c8_28, %c0_29] : memref<4x2x9x9x128xbf16, #tpu.memory_space<vmem>>, vector<1x2x9x1x128xbf16>
    %22 = vector.shape_cast %21 : vector<1x2x9x1x128xbf16> to vector<2x9x1x128xbf16>
    %23 = vector.shape_cast %20 : vector<2x9x1x128xbf16> to vector<1x2x9x1x128xbf16>
    tpu.vector_store %arg18[%c1_25, %c0_26, %c0_27, %c8_28, %c0_29], %23 {strides = array<i32>} : memref<4x2x9x9x128xbf16, #tpu.memory_space<vmem>>, vector<1x2x9x1x128xbf16>,
    %cst_30 = arith.constant 0.000000e+00 : bf16
    %24 = vector.broadcast %cst_30 : bf16 to vector<2x1x9x128xbf16>
    %c0_31 = arith.constant 0 : index
    %c0_32 = arith.constant 0 : index
    %c0_33 = arith.constant 0 : index
    %c0_34 = arith.constant 0 : index
    %c0_35 = arith.constant 0 : index
    %25 = vector.load %arg18[%c0_31, %c0_32, %c0_33, %c0_34, %c0_35] : memref<4x2x9x9x128xbf16, #tpu.memory_space<vmem>>, vector<1x2x1x9x128xbf16>
    %26 = vector.shape_cast %25 : vector<1x2x1x9x128xbf16> to vector<2x1x9x128xbf16>
    %27 = vector.shape_cast %24 : vector<2x1x9x128xbf16> to vector<1x2x1x9x128xbf16>
    tpu.vector_store %arg18[%c0_31, %c0_32, %c0_33, %c0_34, %c0_35], %27 {strides = array<i32>} : memref<4x2x9x9x128xbf16, #tpu.memory_space<vmem>>, vector<1x2x1x9x128xbf16>,
    %cst_36 = arith.constant 0.000000e+00 : bf16
    %28 = vector.broadcast %cst_36 : bf16 to vector<2x9x1x128xbf16>
    %c0_37 = arith.constant 0 : index
    %c0_38 = arith.constant 0 : index
    %c0_39 = arith.constant 0 : index
    %c0_40 = arith.constant 0 : index
    %c0_41 = arith.constant 0 : index
    %29 = vector.load %arg18[%c0_37, %c0_38, %c0_39, %c0_40, %c0_41] : memref<4x2x9x9x128xbf16, #tpu.memory_space<vmem>>, vector<1x2x9x1x128xbf16>
    %30 = vector.shape_cast %29 : vector<1x2x9x1x128xbf16> to vector<2x9x1x128xbf16>
    %31 = vector.shape_cast %28 : vector<2x9x1x128xbf16> to vector<1x2x9x1x128xbf16>
    tpu.vector_store %arg18[%c0_37, %c0_38, %c0_39, %c0_40, %c0_41], %31 {strides = array<i32>} : memref<4x2x9x9x128xbf16, #tpu.memory_space<vmem>>, vector<1x2x9x1x128xbf16>,
    %cst_42 = arith.constant 0.000000e+00 : bf16
    %32 = vector.broadcast %cst_42 : bf16 to vector<2x1x10x64xbf16>
    %c0_43 = arith.constant 0 : index
    %c0_44 = arith.constant 0 : index
    %c0_45 = arith.constant 0 : index
    %c0_46 = arith.constant 0 : index
    %33 = vector.load %arg19[%c0_43, %c0_44, %c0_45, %c0_46] : memref<2x10x10x64xbf16, #tpu.memory_space<vmem>>, vector<2x1x10x64xbf16>
    tpu.vector_store %arg19[%c0_43, %c0_44, %c0_45, %c0_46], %32 {strides = array<i32>} : memref<2x10x10x64xbf16, #tpu.memory_space<vmem>>, vector<2x1x10x64xbf16>,
    %cst_47 = arith.constant 0.000000e+00 : bf16
    %34 = vector.broadcast %cst_47 : bf16 to vector<2x1x10x64xbf16>
    %c0_48 = arith.constant 0 : index
    %c9 = arith.constant 9 : index
    %c0_49 = arith.constant 0 : index
    %c0_50 = arith.constant 0 : index
    %35 = vector.load %arg19[%c0_48, %c9, %c0_49, %c0_50] : memref<2x10x10x64xbf16, #tpu.memory_space<vmem>>, vector<2x1x10x64xbf16>
    tpu.vector_store %arg19[%c0_48, %c9, %c0_49, %c0_50], %34 {strides = array<i32>} : memref<2x10x10x64xbf16, #tpu.memory_space<vmem>>, vector<2x1x10x64xbf16>,
    %cst_51 = arith.constant 0.000000e+00 : bf16
    %36 = vector.broadcast %cst_51 : bf16 to vector<2x10x1x64xbf16>
    %c0_52 = arith.constant 0 : index
    %c0_53 = arith.constant 0 : index
    %c0_54 = arith.constant 0 : index
    %c0_55 = arith.constant 0 : index
    %37 = vector.load %arg19[%c0_52, %c0_53, %c0_54, %c0_55] : memref<2x10x10x64xbf16, #tpu.memory_space<vmem>>, vector<2x10x1x64xbf16>
    tpu.vector_store %arg19[%c0_52, %c0_53, %c0_54, %c0_55], %36 {strides = array<i32>} : memref<2x10x10x64xbf16, #tpu.memory_space<vmem>>, vector<2x10x1x64xbf16>,
    %cst_56 = arith.constant 0.000000e+00 : bf16
    %38 = vector.broadcast %cst_56 : bf16 to vector<2x10x1x64xbf16>
    %c0_57 = arith.constant 0 : index
    %c0_58 = arith.constant 0 : index
    %c9_59 = arith.constant 9 : index
    %c0_60 = arith.constant 0 : index
    %39 = vector.load %arg19[%c0_57, %c0_58, %c9_59, %c0_60] : memref<2x10x10x64xbf16, #tpu.memory_space<vmem>>, vector<2x10x1x64xbf16>
    tpu.vector_store %arg19[%c0_57, %c0_58, %c9_59, %c0_60], %38 {strides = array<i32>} : memref<2x10x10x64xbf16, #tpu.memory_space<vmem>>, vector<2x10x1x64xbf16>,
    %cst_61 = arith.constant 0.000000e+00 : bf16
    %40 = vector.broadcast %cst_61 : bf16 to vector<2x1x9x64xbf16>
    %c0_62 = arith.constant 0 : index
    %c8_63 = arith.constant 8 : index
    %c0_64 = arith.constant 0 : index
    %c0_65 = arith.constant 0 : index
    %41 = vector.load %arg20[%c0_62, %c8_63, %c0_64, %c0_65] : memref<2x9x9x64xbf16, #tpu.memory_space<vmem>>, vector<2x1x9x64xbf16>
    tpu.vector_store %arg20[%c0_62, %c8_63, %c0_64, %c0_65], %40 {strides = array<i32>} : memref<2x9x9x64xbf16, #tpu.memory_space<vmem>>, vector<2x1x9x64xbf16>,
    %cst_66 = arith.constant 0.000000e+00 : bf16
    %42 = vector.broadcast %cst_66 : bf16 to vector<2x9x1x64xbf16>
    %c0_67 = arith.constant 0 : index
    %c0_68 = arith.constant 0 : index
    %c8_69 = arith.constant 8 : index
    %c0_70 = arith.constant 0 : index
    %43 = vector.load %arg20[%c0_67, %c0_68, %c8_69, %c0_70] : memref<2x9x9x64xbf16, #tpu.memory_space<vmem>>, vector<2x9x1x64xbf16>
    tpu.vector_store %arg20[%c0_67, %c0_68, %c8_69, %c0_70], %42 {strides = array<i32>} : memref<2x9x9x64xbf16, #tpu.memory_space<vmem>>, vector<2x9x1x64xbf16>,
    %c0_71 = arith.constant 0 : index
    %c0_72 = arith.constant 0 : index
    %c0_73 = arith.constant 0 : index
    %44 = vector.load %arg1[%c0_71, %c0_72, %c0_73] : memref<4x128x288xbf16, #tpu.memory_space<vmem>>, vector<4x128x288xbf16>
    %45 = vector.shape_cast %44 : vector<4x128x288xbf16> to vector<512x288xbf16>
    %c0_74 = arith.constant 0 : index
    %c0_75 = arith.constant 0 : index
    %46 = vector.load %arg2[%c0_74, %c0_75] : memref<288x128xbf16, #tpu.memory_space<vmem>>, vector<288x128xbf16>
    %cst_76 = arith.constant dense<0.000000e+00> : vector<512x128xf32>
    %47 = tpu.matmul %45, %46, %cst_76 {dimension_numbers = #tpu.dot_dimension_numbers<[1], [0], [0], [1], [0, 0, 1, 1], [], []>} : vector<512x288xbf16>, vector<288x128xbf16>, vector<512x128xf32> -> vector<512x128xf32>
    %c0_77 = arith.constant 0 : index
    %c0_78 = arith.constant 0 : index
    %48 = vector.load %arg3[%c0_77, %c0_78] : memref<1x128xf32, #tpu.memory_space<vmem>>, vector<1x128xf32>
    %49 = vector.broadcast %48 : vector<1x128xf32> to vector<512x128xf32>
    %50 = arith.mulf %47, %49 : vector<512x128xf32>
    %c0_79 = arith.constant 0 : index
    %c0_80 = arith.constant 0 : index
    %51 = vector.load %arg4[%c0_79, %c0_80] : memref<1x128xf32, #tpu.memory_space<vmem>>, vector<1x128xf32>
    %52 = vector.broadcast %51 : vector<1x128xf32> to vector<512x128xf32>
    %53 = arith.addf %50, %52 : vector<512x128xf32>
    %cst_81 = arith.constant 0.000000e+00 : f32
    %54 = vector.broadcast %cst_81 : f32 to vector<512x128xf32>
    %55 = arith.maximumf %53, %54 : vector<512x128xf32>
    %56 = vector.shape_cast %55 : vector<512x128xf32> to vector<4x2x64x128xf32>
    %c0_82 = arith.constant 0 : index
    %c0_83 = arith.constant 0 : index
    %c0_84 = arith.constant 0 : index
    %c0_85 = arith.constant 0 : index
    %57 = vector.load %arg17[%c0_82, %c0_83, %c0_84, %c0_85] : memref<4x2x64x128xf32, #tpu.memory_space<vmem>>, vector<4x2x64x128xf32>
    tpu.vector_store %arg17[%c0_82, %c0_83, %c0_84, %c0_85], %56 {strides = array<i32>} : memref<4x2x64x128xf32, #tpu.memory_space<vmem>>, vector<4x2x64x128xf32>,
    %58 = arith.truncf %55 : vector<512x128xf32> to vector<512x128xbf16>
    %59 = vector.shape_cast %58 : vector<512x128xbf16> to vector<4x2x8x8x128xbf16>
    %60 = vector.extract_strided_slice %59 {offsets = [0, 0, 0, 0, 0], sizes = [1, 2, 8, 8, 128], strides = [1, 1, 1, 1, 1]} : vector<4x2x8x8x128xbf16> to vector<1x2x8x8x128xbf16>
    %61 = vector.shape_cast %60 : vector<1x2x8x8x128xbf16> to vector<2x8x8x128xbf16>
    %c3_86 = arith.constant 3 : index
    %c0_87 = arith.constant 0 : index
    %c0_88 = arith.constant 0 : index
    %c0_89 = arith.constant 0 : index
    %c0_90 = arith.constant 0 : index
    %62 = vector.load %arg18[%c3_86, %c0_87, %c0_88, %c0_89, %c0_90] : memref<4x2x9x9x128xbf16, #tpu.memory_space<vmem>>, vector<1x2x8x8x128xbf16>
    %63 = vector.shape_cast %62 : vector<1x2x8x8x128xbf16> to vector<2x8x8x128xbf16>
    %64 = vector.shape_cast %61 : vector<2x8x8x128xbf16> to vector<1x2x8x8x128xbf16>
    tpu.vector_store %arg18[%c3_86, %c0_87, %c0_88, %c0_89, %c0_90], %64 {strides = array<i32>} : memref<4x2x9x9x128xbf16, #tpu.memory_space<vmem>>, vector<1x2x8x8x128xbf16>,
    %65 = vector.extract_strided_slice %59 {offsets = [1, 0, 0, 0, 0], sizes = [1, 2, 8, 8, 128], strides = [1, 1, 1, 1, 1]} : vector<4x2x8x8x128xbf16> to vector<1x2x8x8x128xbf16>
    %66 = vector.shape_cast %65 : vector<1x2x8x8x128xbf16> to vector<2x8x8x128xbf16>
    %c2_91 = arith.constant 2 : index
    %c0_92 = arith.constant 0 : index
    %c0_93 = arith.constant 0 : index
    %c1_94 = arith.constant 1 : index
    %c0_95 = arith.constant 0 : index
    %67 = vector.load %arg18[%c2_91, %c0_92, %c0_93, %c1_94, %c0_95] : memref<4x2x9x9x128xbf16, #tpu.memory_space<vmem>>, vector<1x2x8x8x128xbf16>
    %68 = vector.shape_cast %67 : vector<1x2x8x8x128xbf16> to vector<2x8x8x128xbf16>
    %69 = vector.shape_cast %66 : vector<2x8x8x128xbf16> to vector<1x2x8x8x128xbf16>
    tpu.vector_store %arg18[%c2_91, %c0_92, %c0_93, %c1_94, %c0_95], %69 {strides = array<i32>} : memref<4x2x9x9x128xbf16, #tpu.memory_space<vmem>>, vector<1x2x8x8x128xbf16>,
    %70 = vector.extract_strided_slice %59 {offsets = [2, 0, 0, 0, 0], sizes = [1, 2, 8, 8, 128], strides = [1, 1, 1, 1, 1]} : vector<4x2x8x8x128xbf16> to vector<1x2x8x8x128xbf16>
    %71 = vector.shape_cast %70 : vector<1x2x8x8x128xbf16> to vector<2x8x8x128xbf16>
    %c1_96 = arith.constant 1 : index
    %c0_97 = arith.constant 0 : index
    %c1_98 = arith.constant 1 : index
    %c0_99 = arith.constant 0 : index
    %c0_100 = arith.constant 0 : index
    %72 = vector.load %arg18[%c1_96, %c0_97, %c1_98, %c0_99, %c0_100] : memref<4x2x9x9x128xbf16, #tpu.memory_space<vmem>>, vector<1x2x8x8x128xbf16>
    %73 = vector.shape_cast %72 : vector<1x2x8x8x128xbf16> to vector<2x8x8x128xbf16>
    %74 = vector.shape_cast %71 : vector<2x8x8x128xbf16> to vector<1x2x8x8x128xbf16>
    tpu.vector_store %arg18[%c1_96, %c0_97, %c1_98, %c0_99, %c0_100], %74 {strides = array<i32>} : memref<4x2x9x9x128xbf16, #tpu.memory_space<vmem>>, vector<1x2x8x8x128xbf16>,
    %75 = vector.extract_strided_slice %59 {offsets = [3, 0, 0, 0, 0], sizes = [1, 2, 8, 8, 128], strides = [1, 1, 1, 1, 1]} : vector<4x2x8x8x128xbf16> to vector<1x2x8x8x128xbf16>
    %76 = vector.shape_cast %75 : vector<1x2x8x8x128xbf16> to vector<2x8x8x128xbf16>
    %c0_101 = arith.constant 0 : index
    %c0_102 = arith.constant 0 : index
    %c1_103 = arith.constant 1 : index
    %c1_104 = arith.constant 1 : index
    %c0_105 = arith.constant 0 : index
    %77 = vector.load %arg18[%c0_101, %c0_102, %c1_103, %c1_104, %c0_105] : memref<4x2x9x9x128xbf16, #tpu.memory_space<vmem>>, vector<1x2x8x8x128xbf16>
    %78 = vector.shape_cast %77 : vector<1x2x8x8x128xbf16> to vector<2x8x8x128xbf16>
    %79 = vector.shape_cast %76 : vector<2x8x8x128xbf16> to vector<1x2x8x8x128xbf16>
    tpu.vector_store %arg18[%c0_101, %c0_102, %c1_103, %c1_104, %c0_105], %79 {strides = array<i32>} : memref<4x2x9x9x128xbf16, #tpu.memory_space<vmem>>, vector<1x2x8x8x128xbf16>,
    %c0_106 = arith.constant 0 : index
    %c0_107 = arith.constant 0 : index
    %c0_108 = arith.constant 0 : index
    %c0_109 = arith.constant 0 : index
    %c0_110 = arith.constant 0 : index
    %80 = vector.load %arg18[%c0_106, %c0_107, %c0_108, %c0_109, %c0_110] : memref<4x2x9x9x128xbf16, #tpu.memory_space<vmem>>, vector<1x2x8x8x128xbf16>
    %81 = vector.shape_cast %80 : vector<1x2x8x8x128xbf16> to vector<2x8x8x128xbf16>
    %82 = vector.shape_cast %81 : vector<2x8x8x128xbf16> to vector<128x128xbf16>
    %c1_111 = arith.constant 1 : index
    %c0_112 = arith.constant 0 : index
    %c0_113 = arith.constant 0 : index
    %c0_114 = arith.constant 0 : index
    %c0_115 = arith.constant 0 : index
    %83 = vector.load %arg18[%c1_111, %c0_112, %c0_113, %c0_114, %c0_115] : memref<4x2x9x9x128xbf16, #tpu.memory_space<vmem>>, vector<1x2x8x8x128xbf16>
    %84 = vector.shape_cast %83 : vector<1x2x8x8x128xbf16> to vector<2x8x8x128xbf16>
    %85 = vector.shape_cast %84 : vector<2x8x8x128xbf16> to vector<128x128xbf16>
    %c0_116 = arith.constant 0 : index
    %c0_117 = arith.constant 0 : index
    %c0_118 = arith.constant 0 : index
    %c1_119 = arith.constant 1 : index
    %c0_120 = arith.constant 0 : index
    %86 = vector.load %arg18[%c0_116, %c0_117, %c0_118, %c1_119, %c0_120] : memref<4x2x9x9x128xbf16, #tpu.memory_space<vmem>>, vector<1x2x8x8x128xbf16>
    %87 = vector.shape_cast %86 : vector<1x2x8x8x128xbf16> to vector<2x8x8x128xbf16>
    %88 = vector.shape_cast %87 : vector<2x8x8x128xbf16> to vector<128x128xbf16>
    %c2_121 = arith.constant 2 : index
    %c0_122 = arith.constant 0 : index
    %c0_123 = arith.constant 0 : index
    %c0_124 = arith.constant 0 : index
    %c0_125 = arith.constant 0 : index
    %89 = vector.load %arg18[%c2_121, %c0_122, %c0_123, %c0_124, %c0_125] : memref<4x2x9x9x128xbf16, #tpu.memory_space<vmem>>, vector<1x2x8x8x128xbf16>
    %90 = vector.shape_cast %89 : vector<1x2x8x8x128xbf16> to vector<2x8x8x128xbf16>
    %91 = vector.shape_cast %90 : vector<2x8x8x128xbf16> to vector<128x128xbf16>
    %c3_126 = arith.constant 3 : index
    %c0_127 = arith.constant 0 : index
    %c0_128 = arith.constant 0 : index
    %c0_129 = arith.constant 0 : index
    %c0_130 = arith.constant 0 : index
    %92 = vector.load %arg18[%c3_126, %c0_127, %c0_128, %c0_129, %c0_130] : memref<4x2x9x9x128xbf16, #tpu.memory_space<vmem>>, vector<1x2x8x8x128xbf16>
    %93 = vector.shape_cast %92 : vector<1x2x8x8x128xbf16> to vector<2x8x8x128xbf16>
    %94 = vector.shape_cast %93 : vector<2x8x8x128xbf16> to vector<128x128xbf16>
    %c2_131 = arith.constant 2 : index
    %c0_132 = arith.constant 0 : index
    %c0_133 = arith.constant 0 : index
    %c1_134 = arith.constant 1 : index
    %c0_135 = arith.constant 0 : index
    %95 = vector.load %arg18[%c2_131, %c0_132, %c0_133, %c1_134, %c0_135] : memref<4x2x9x9x128xbf16, #tpu.memory_space<vmem>>, vector<1x2x8x8x128xbf16>
    %96 = vector.shape_cast %95 : vector<1x2x8x8x128xbf16> to vector<2x8x8x128xbf16>
    %97 = vector.shape_cast %96 : vector<2x8x8x128xbf16> to vector<128x128xbf16>
    %c0_136 = arith.constant 0 : index
    %c0_137 = arith.constant 0 : index
    %c1_138 = arith.constant 1 : index
    %c0_139 = arith.constant 0 : index
    %c0_140 = arith.constant 0 : index
    %98 = vector.load %arg18[%c0_136, %c0_137, %c1_138, %c0_139, %c0_140] : memref<4x2x9x9x128xbf16, #tpu.memory_space<vmem>>, vector<1x2x8x8x128xbf16>
    %99 = vector.shape_cast %98 : vector<1x2x8x8x128xbf16> to vector<2x8x8x128xbf16>
    %100 = vector.shape_cast %99 : vector<2x8x8x128xbf16> to vector<128x128xbf16>
    %c1_141 = arith.constant 1 : index
    %c0_142 = arith.constant 0 : index
    %c1_143 = arith.constant 1 : index
    %c0_144 = arith.constant 0 : index
    %c0_145 = arith.constant 0 : index
    %101 = vector.load %arg18[%c1_141, %c0_142, %c1_143, %c0_144, %c0_145] : memref<4x2x9x9x128xbf16, #tpu.memory_space<vmem>>, vector<1x2x8x8x128xbf16>
    %102 = vector.shape_cast %101 : vector<1x2x8x8x128xbf16> to vector<2x8x8x128xbf16>
    %103 = vector.shape_cast %102 : vector<2x8x8x128xbf16> to vector<128x128xbf16>
    %c0_146 = arith.constant 0 : index
    %c0_147 = arith.constant 0 : index
    %c1_148 = arith.constant 1 : index
    %c1_149 = arith.constant 1 : index
    %c0_150 = arith.constant 0 : index
    %104 = vector.load %arg18[%c0_146, %c0_147, %c1_148, %c1_149, %c0_150] : memref<4x2x9x9x128xbf16, #tpu.memory_space<vmem>>, vector<1x2x8x8x128xbf16>
    %105 = vector.shape_cast %104 : vector<1x2x8x8x128xbf16> to vector<2x8x8x128xbf16>
    %106 = vector.shape_cast %105 : vector<2x8x8x128xbf16> to vector<128x128xbf16>
    %107 = tpu.concatenate %82, %85, %88, %91, %94, %97, %100, %103, %106 in 1 : vector<128x128xbf16>, vector<128x128xbf16>, vector<128x128xbf16>, vector<128x128xbf16>, vector<128x128xbf16>, vector<128x128xbf16>, vector<128x128xbf16>, vector<128x128xbf16>, vector<128x128xbf16> -> vector<128x1152xbf16>
    %c0_151 = arith.constant 0 : index
    %c0_152 = arith.constant 0 : index
    %108 = vector.load %arg5[%c0_151, %c0_152] : memref<1152x64xbf16, #tpu.memory_space<vmem>>, vector<1152x64xbf16>
    %cst_153 = arith.constant dense<0.000000e+00> : vector<128x64xf32>
    %109 = tpu.matmul %107, %108, %cst_153 {dimension_numbers = #tpu.dot_dimension_numbers<[1], [0], [0], [1], [0, 0, 1, 1], [], []>} : vector<128x1152xbf16>, vector<1152x64xbf16>, vector<128x64xf32> -> vector<128x64xf32>
    %c0_154 = arith.constant 0 : index
    %c0_155 = arith.constant 0 : index
    %110 = vector.load %arg6[%c0_154, %c0_155] : memref<1x64xf32, #tpu.memory_space<vmem>>, vector<1x64xf32>
    %111 = vector.broadcast %110 : vector<1x64xf32> to vector<128x64xf32>
    %112 = arith.mulf %109, %111 : vector<128x64xf32>
    %c0_156 = arith.constant 0 : index
    %c0_157 = arith.constant 0 : index
    %113 = vector.load %arg7[%c0_156, %c0_157] : memref<1x64xf32, #tpu.memory_space<vmem>>, vector<1x64xf32>
    %114 = vector.broadcast %113 : vector<1x64xf32> to vector<128x64xf32>
    %115 = arith.addf %112, %114 : vector<128x64xf32>
    %cst_158 = arith.constant 0.000000e+00 : f32
    %116 = vector.broadcast %cst_158 : f32 to vector<128x64xf32>
    %117 = arith.maximumf %115, %116 : vector<128x64xf32>
    %118 = arith.truncf %117 : vector<128x64xf32> to vector<128x64xbf16>
    %119 = vector.shape_cast %118 : vector<128x64xbf16> to vector<2x8x8x64xbf16>
    %c0_159 = arith.constant 0 : index
    %c1_160 = arith.constant 1 : index
    %c1_161 = arith.constant 1 : index
    %c0_162 = arith.constant 0 : index
    %120 = vector.load %arg19[%c0_159, %c1_160, %c1_161, %c0_162] : memref<2x10x10x64xbf16, #tpu.memory_space<vmem>>, vector<2x8x8x64xbf16>
    tpu.vector_store %arg19[%c0_159, %c1_160, %c1_161, %c0_162], %119 {strides = array<i32>} : memref<2x10x10x64xbf16, #tpu.memory_space<vmem>>, vector<2x8x8x64xbf16>,
    %c0_163 = arith.constant 0 : index
    %c0_164 = arith.constant 0 : index
    %c0_165 = arith.constant 0 : index
    %c0_166 = arith.constant 0 : index
    %121 = vector.load %arg19[%c0_163, %c0_164, %c0_165, %c0_166] : memref<2x10x10x64xbf16, #tpu.memory_space<vmem>>, vector<2x8x8x64xbf16>
    %122 = vector.shape_cast %121 : vector<2x8x8x64xbf16> to vector<128x64xbf16>
    %c0_167 = arith.constant 0 : index
    %c0_168 = arith.constant 0 : index
    %c1_169 = arith.constant 1 : index
    %c0_170 = arith.constant 0 : index
    %123 = vector.load %arg19[%c0_167, %c0_168, %c1_169, %c0_170] : memref<2x10x10x64xbf16, #tpu.memory_space<vmem>>, vector<2x8x8x64xbf16>
    %124 = vector.shape_cast %123 : vector<2x8x8x64xbf16> to vector<128x64xbf16>
    %c0_171 = arith.constant 0 : index
    %c0_172 = arith.constant 0 : index
    %c2_173 = arith.constant 2 : index
    %c0_174 = arith.constant 0 : index
    %125 = vector.load %arg19[%c0_171, %c0_172, %c2_173, %c0_174] : memref<2x10x10x64xbf16, #tpu.memory_space<vmem>>, vector<2x8x8x64xbf16>
    %126 = vector.shape_cast %125 : vector<2x8x8x64xbf16> to vector<128x64xbf16>
    %c0_175 = arith.constant 0 : index
    %c1_176 = arith.constant 1 : index
    %c0_177 = arith.constant 0 : index
    %c0_178 = arith.constant 0 : index
    %127 = vector.load %arg19[%c0_175, %c1_176, %c0_177, %c0_178] : memref<2x10x10x64xbf16, #tpu.memory_space<vmem>>, vector<2x8x8x64xbf16>
    %128 = vector.shape_cast %127 : vector<2x8x8x64xbf16> to vector<128x64xbf16>
    %c0_179 = arith.constant 0 : index
    %c1_180 = arith.constant 1 : index
    %c1_181 = arith.constant 1 : index
    %c0_182 = arith.constant 0 : index
    %129 = vector.load %arg19[%c0_179, %c1_180, %c1_181, %c0_182] : memref<2x10x10x64xbf16, #tpu.memory_space<vmem>>, vector<2x8x8x64xbf16>
    %130 = vector.shape_cast %129 : vector<2x8x8x64xbf16> to vector<128x64xbf16>
    %c0_183 = arith.constant 0 : index
    %c1_184 = arith.constant 1 : index
    %c2_185 = arith.constant 2 : index
    %c0_186 = arith.constant 0 : index
    %131 = vector.load %arg19[%c0_183, %c1_184, %c2_185, %c0_186] : memref<2x10x10x64xbf16, #tpu.memory_space<vmem>>, vector<2x8x8x64xbf16>
    %132 = vector.shape_cast %131 : vector<2x8x8x64xbf16> to vector<128x64xbf16>
    %c0_187 = arith.constant 0 : index
    %c2_188 = arith.constant 2 : index
    %c0_189 = arith.constant 0 : index
    %c0_190 = arith.constant 0 : index
    %133 = vector.load %arg19[%c0_187, %c2_188, %c0_189, %c0_190] : memref<2x10x10x64xbf16, #tpu.memory_space<vmem>>, vector<2x8x8x64xbf16>
    %134 = vector.shape_cast %133 : vector<2x8x8x64xbf16> to vector<128x64xbf16>
    %c0_191 = arith.constant 0 : index
    %c2_192 = arith.constant 2 : index
    %c1_193 = arith.constant 1 : index
    %c0_194 = arith.constant 0 : index
    %135 = vector.load %arg19[%c0_191, %c2_192, %c1_193, %c0_194] : memref<2x10x10x64xbf16, #tpu.memory_space<vmem>>, vector<2x8x8x64xbf16>
    %136 = vector.shape_cast %135 : vector<2x8x8x64xbf16> to vector<128x64xbf16>
    %c0_195 = arith.constant 0 : index
    %c2_196 = arith.constant 2 : index
    %c2_197 = arith.constant 2 : index
    %c0_198 = arith.constant 0 : index
    %137 = vector.load %arg19[%c0_195, %c2_196, %c2_197, %c0_198] : memref<2x10x10x64xbf16, #tpu.memory_space<vmem>>, vector<2x8x8x64xbf16>
    %138 = vector.shape_cast %137 : vector<2x8x8x64xbf16> to vector<128x64xbf16>
    %139 = tpu.concatenate %122, %124, %126, %128, %130, %132, %134, %136, %138 in 1 : vector<128x64xbf16>, vector<128x64xbf16>, vector<128x64xbf16>, vector<128x64xbf16>, vector<128x64xbf16>, vector<128x64xbf16>, vector<128x64xbf16>, vector<128x64xbf16>, vector<128x64xbf16> -> vector<128x576xbf16>
    %c0_199 = arith.constant 0 : index
    %c0_200 = arith.constant 0 : index
    %140 = vector.load %arg8[%c0_199, %c0_200] : memref<576x64xbf16, #tpu.memory_space<vmem>>, vector<576x64xbf16>
    %cst_201 = arith.constant dense<0.000000e+00> : vector<128x64xf32>
    %141 = tpu.matmul %139, %140, %cst_201 {dimension_numbers = #tpu.dot_dimension_numbers<[1], [0], [0], [1], [0, 0, 1, 1], [], []>} : vector<128x576xbf16>, vector<576x64xbf16>, vector<128x64xf32> -> vector<128x64xf32>
    %c0_202 = arith.constant 0 : index
    %c0_203 = arith.constant 0 : index
    %142 = vector.load %arg9[%c0_202, %c0_203] : memref<1x64xf32, #tpu.memory_space<vmem>>, vector<1x64xf32>
    %143 = vector.broadcast %142 : vector<1x64xf32> to vector<128x64xf32>
    %144 = arith.mulf %141, %143 : vector<128x64xf32>
    %c0_204 = arith.constant 0 : index
    %c0_205 = arith.constant 0 : index
    %145 = vector.load %arg10[%c0_204, %c0_205] : memref<1x64xf32, #tpu.memory_space<vmem>>, vector<1x64xf32>
    %146 = vector.broadcast %145 : vector<1x64xf32> to vector<128x64xf32>
    %147 = arith.addf %144, %146 : vector<128x64xf32>
    %cst_206 = arith.constant 0.000000e+00 : f32
    %148 = vector.broadcast %cst_206 : f32 to vector<128x64xf32>
    %149 = arith.maximumf %147, %148 : vector<128x64xf32>
    %150 = arith.truncf %149 : vector<128x64xf32> to vector<128x64xbf16>
    %151 = vector.shape_cast %150 : vector<128x64xbf16> to vector<2x8x8x64xbf16>
    %c0_207 = arith.constant 0 : index
    %c0_208 = arith.constant 0 : index
    %c0_209 = arith.constant 0 : index
    %c0_210 = arith.constant 0 : index
    %152 = vector.load %arg20[%c0_207, %c0_208, %c0_209, %c0_210] : memref<2x9x9x64xbf16, #tpu.memory_space<vmem>>, vector<2x8x8x64xbf16>
    tpu.vector_store %arg20[%c0_207, %c0_208, %c0_209, %c0_210], %151 {strides = array<i32>} : memref<2x9x9x64xbf16, #tpu.memory_space<vmem>>, vector<2x8x8x64xbf16>,
    %c0_211 = arith.constant 0 : index
    %c0_212 = arith.constant 0 : index
    %153 = vector.load %arg12[%c0_211, %c0_212] : memref<1x128xf32, #tpu.memory_space<vmem>>, vector<1x128xf32>
    %c0_213 = arith.constant 0 : index
    %c0_214 = arith.constant 0 : index
    %154 = vector.load %arg13[%c0_213, %c0_214] : memref<1x128xf32, #tpu.memory_space<vmem>>, vector<1x128xf32>
    %c0_215 = arith.constant 0 : index
    %c0_216 = arith.constant 0 : index
    %155 = vector.load %arg14[%c0_215, %c0_216] : memref<1x128xf32, #tpu.memory_space<vmem>>, vector<1x128xf32>
    %c0_217 = arith.constant 0 : index
    %156 = memref.load %arg15[%c0_217] : memref<1xf32, #tpu.memory_space<smem>>
    %157 = tpu.iota {dimensions = array<i32: 1>} : vector<1x4xi32>
    %cst_218 = arith.constant 0.000000e+00 : f32
    %158 = vector.broadcast %cst_218 : f32 to vector<128x4xf32>
    %c0_219 = arith.constant 0 : index
    %c0_220 = arith.constant 0 : index
    %c0_221 = arith.constant 0 : index
    %c0_222 = arith.constant 0 : index
    %159 = vector.load %arg20[%c0_219, %c0_220, %c0_221, %c0_222] : memref<2x9x9x64xbf16, #tpu.memory_space<vmem>>, vector<2x8x8x64xbf16>
    %160 = vector.shape_cast %159 : vector<2x8x8x64xbf16> to vector<128x64xbf16>
    %c0_223 = arith.constant 0 : index
    %c0_224 = arith.constant 0 : index
    %c0_225 = arith.constant 0 : index
    %161 = vector.load %arg11[%c0_223, %c0_224, %c0_225] : memref<4x256x128xbf16, #tpu.memory_space<vmem>>, vector<1x64x128xbf16>
    %162 = vector.shape_cast %161 : vector<1x64x128xbf16> to vector<64x128xbf16>
    %cst_226 = arith.constant dense<0.000000e+00> : vector<128x128xf32>
    %163 = tpu.matmul %160, %162, %cst_226 {dimension_numbers = #tpu.dot_dimension_numbers<[1], [0], [0], [1], [0, 0, 1, 1], [], []>} : vector<128x64xbf16>, vector<64x128xbf16>, vector<128x128xf32> -> vector<128x128xf32>
    %164 = vector.broadcast %153 : vector<1x128xf32> to vector<128x128xf32>
    %165 = arith.mulf %163, %164 : vector<128x128xf32>
    %166 = vector.broadcast %154 : vector<1x128xf32> to vector<128x128xf32>
    %167 = arith.addf %165, %166 : vector<128x128xf32>
    %cst_227 = arith.constant 0.000000e+00 : f32
    %168 = vector.broadcast %cst_227 : f32 to vector<128x128xf32>
    %169 = arith.maximumf %167, %168 : vector<128x128xf32>
    %c0_228 = arith.constant 0 : index
    %c0_229 = arith.constant 0 : index
    %c0_230 = arith.constant 0 : index
    %c0_231 = arith.constant 0 : index
    %170 = vector.load %arg17[%c0_228, %c0_229, %c0_230, %c0_231] : memref<4x2x64x128xf32, #tpu.memory_space<vmem>>, vector<1x2x64x128xf32>
    %171 = vector.shape_cast %170 : vector<1x2x64x128xf32> to vector<2x64x128xf32>
    %172 = vector.shape_cast %171 : vector<2x64x128xf32> to vector<128x128xf32>
    %173 = arith.addf %169, %172 : vector<128x128xf32>
    %174 = vector.broadcast %155 : vector<1x128xf32> to vector<128x128xf32>
    %175 = arith.mulf %173, %174 : vector<128x128xf32>
    %cst_232 = arith.constant dense<0.000000e+00> : vector<128xf32>
    %176 = vector.multi_reduction <add>, %175, %cst_232 [1] : vector<128x128xf32> to vector<128xf32>
    %177 = vector.shape_cast %176 : vector<128xf32> to vector<128x1xf32>
    %178 = vector.broadcast %156 : f32 to vector<128x1xf32>
    %179 = arith.addf %177, %178 : vector<128x1xf32>
    %c0_i32 = arith.constant 0 : i32
    %180 = vector.broadcast %c0_i32 : i32 to vector<1x4xi32>
    %181 = arith.cmpi eq, %157, %180 : vector<1x4xi32>
    %cst_233 = arith.constant 0.000000e+00 : f32
    %182 = vector.shape_cast %181 : vector<1x4xi1> to vector<1x4xi1>
    %183 = vector.broadcast %182 : vector<1x4xi1> to vector<128x4xi1>
    %184 = vector.shape_cast %179 : vector<128x1xf32> to vector<128x1xf32>
    %185 = vector.broadcast %184 : vector<128x1xf32> to vector<128x4xf32>
    %186 = vector.broadcast %cst_233 : f32 to vector<128x4xf32>
    %187 = arith.select %183, %185, %186 : vector<128x4xi1>, vector<128x4xf32>
    %188 = arith.addf %158, %187 : vector<128x4xf32>
    %c0_234 = arith.constant 0 : index
    %c0_235 = arith.constant 0 : index
    %c0_236 = arith.constant 0 : index
    %c0_237 = arith.constant 0 : index
    %189 = vector.load %arg20[%c0_234, %c0_235, %c0_236, %c0_237] : memref<2x9x9x64xbf16, #tpu.memory_space<vmem>>, vector<2x8x8x64xbf16>
    %190 = vector.shape_cast %189 : vector<2x8x8x64xbf16> to vector<128x64xbf16>
    %c0_238 = arith.constant 0 : index
    %c0_239 = arith.constant 0 : index
    %c1_240 = arith.constant 1 : index
    %c0_241 = arith.constant 0 : index
    %191 = vector.load %arg20[%c0_238, %c0_239, %c1_240, %c0_241] : memref<2x9x9x64xbf16, #tpu.memory_space<vmem>>, vector<2x8x8x64xbf16>
    %192 = vector.shape_cast %191 : vector<2x8x8x64xbf16> to vector<128x64xbf16>
    %193 = tpu.concatenate %190, %192 in 1 : vector<128x64xbf16>, vector<128x64xbf16> -> vector<128x128xbf16>
    %c1_242 = arith.constant 1 : index
    %c0_243 = arith.constant 0 : index
    %c0_244 = arith.constant 0 : index
    %194 = vector.load %arg11[%c1_242, %c0_243, %c0_244] : memref<4x256x128xbf16, #tpu.memory_space<vmem>>, vector<1x128x128xbf16>
    %195 = vector.shape_cast %194 : vector<1x128x128xbf16> to vector<128x128xbf16>
    %cst_245 = arith.constant dense<0.000000e+00> : vector<128x128xf32>
    %196 = tpu.matmul %193, %195, %cst_245 {dimension_numbers = #tpu.dot_dimension_numbers<[1], [0], [0], [1], [0, 0, 1, 1], [], []>} : vector<128x128xbf16>, vector<128x128xbf16>, vector<128x128xf32> -> vector<128x128xf32>
    %197 = vector.broadcast %153 : vector<1x128xf32> to vector<128x128xf32>
    %198 = arith.mulf %196, %197 : vector<128x128xf32>
    %199 = vector.broadcast %154 : vector<1x128xf32> to vector<128x128xf32>
    %200 = arith.addf %198, %199 : vector<128x128xf32>
    %cst_246 = arith.constant 0.000000e+00 : f32
    %201 = vector.broadcast %cst_246 : f32 to vector<128x128xf32>
    %202 = arith.maximumf %200, %201 : vector<128x128xf32>
    %c1_247 = arith.constant 1 : index
    %c0_248 = arith.constant 0 : index
    %c0_249 = arith.constant 0 : index
    %c0_250 = arith.constant 0 : index
    %203 = vector.load %arg17[%c1_247, %c0_248, %c0_249, %c0_250] : memref<4x2x64x128xf32, #tpu.memory_space<vmem>>, vector<1x2x64x128xf32>
    %204 = vector.shape_cast %203 : vector<1x2x64x128xf32> to vector<2x64x128xf32>
    %205 = vector.shape_cast %204 : vector<2x64x128xf32> to vector<128x128xf32>
    %206 = arith.addf %202, %205 : vector<128x128xf32>
    %207 = vector.broadcast %155 : vector<1x128xf32> to vector<128x128xf32>
    %208 = arith.mulf %206, %207 : vector<128x128xf32>
    %cst_251 = arith.constant dense<0.000000e+00> : vector<128xf32>
    %209 = vector.multi_reduction <add>, %208, %cst_251 [1] : vector<128x128xf32> to vector<128xf32>
    %210 = vector.shape_cast %209 : vector<128xf32> to vector<128x1xf32>
    %211 = vector.broadcast %156 : f32 to vector<128x1xf32>
    %212 = arith.addf %210, %211 : vector<128x1xf32>
    %c1_i32 = arith.constant 1 : i32
    %213 = vector.broadcast %c1_i32 : i32 to vector<1x4xi32>
    %214 = arith.cmpi eq, %157, %213 : vector<1x4xi32>
    %cst_252 = arith.constant 0.000000e+00 : f32
    %215 = vector.shape_cast %214 : vector<1x4xi1> to vector<1x4xi1>
    %216 = vector.broadcast %215 : vector<1x4xi1> to vector<128x4xi1>
    %217 = vector.shape_cast %212 : vector<128x1xf32> to vector<128x1xf32>
    %218 = vector.broadcast %217 : vector<128x1xf32> to vector<128x4xf32>
    %219 = vector.broadcast %cst_252 : f32 to vector<128x4xf32>
    %220 = arith.select %216, %218, %219 : vector<128x4xi1>, vector<128x4xf32>
    %221 = arith.addf %188, %220 : vector<128x4xf32>
    %c0_253 = arith.constant 0 : index
    %c0_254 = arith.constant 0 : index
    %c0_255 = arith.constant 0 : index
    %c0_256 = arith.constant 0 : index
    %222 = vector.load %arg20[%c0_253, %c0_254, %c0_255, %c0_256] : memref<2x9x9x64xbf16, #tpu.memory_space<vmem>>, vector<2x8x8x64xbf16>
    %223 = vector.shape_cast %222 : vector<2x8x8x64xbf16> to vector<128x64xbf16>
    %c0_257 = arith.constant 0 : index
    %c1_258 = arith.constant 1 : index
    %c0_259 = arith.constant 0 : index
    %c0_260 = arith.constant 0 : index
    %224 = vector.load %arg20[%c0_257, %c1_258, %c0_259, %c0_260] : memref<2x9x9x64xbf16, #tpu.memory_space<vmem>>, vector<2x8x8x64xbf16>
    %225 = vector.shape_cast %224 : vector<2x8x8x64xbf16> to vector<128x64xbf16>
    %226 = tpu.concatenate %223, %225 in 1 : vector<128x64xbf16>, vector<128x64xbf16> -> vector<128x128xbf16>
    %c2_261 = arith.constant 2 : index
    %c0_262 = arith.constant 0 : index
    %c0_263 = arith.constant 0 : index
    %227 = vector.load %arg11[%c2_261, %c0_262, %c0_263] : memref<4x256x128xbf16, #tpu.memory_space<vmem>>, vector<1x128x128xbf16>
    %228 = vector.shape_cast %227 : vector<1x128x128xbf16> to vector<128x128xbf16>
    %cst_264 = arith.constant dense<0.000000e+00> : vector<128x128xf32>
    %229 = tpu.matmul %226, %228, %cst_264 {dimension_numbers = #tpu.dot_dimension_numbers<[1], [0], [0], [1], [0, 0, 1, 1], [], []>} : vector<128x128xbf16>, vector<128x128xbf16>, vector<128x128xf32> -> vector<128x128xf32>
    %230 = vector.broadcast %153 : vector<1x128xf32> to vector<128x128xf32>
    %231 = arith.mulf %229, %230 : vector<128x128xf32>
    %232 = vector.broadcast %154 : vector<1x128xf32> to vector<128x128xf32>
    %233 = arith.addf %231, %232 : vector<128x128xf32>
    %cst_265 = arith.constant 0.000000e+00 : f32
    %234 = vector.broadcast %cst_265 : f32 to vector<128x128xf32>
    %235 = arith.maximumf %233, %234 : vector<128x128xf32>
    %c2_266 = arith.constant 2 : index
    %c0_267 = arith.constant 0 : index
    %c0_268 = arith.constant 0 : index
    %c0_269 = arith.constant 0 : index
    %236 = vector.load %arg17[%c2_266, %c0_267, %c0_268, %c0_269] : memref<4x2x64x128xf32, #tpu.memory_space<vmem>>, vector<1x2x64x128xf32>
    %237 = vector.shape_cast %236 : vector<1x2x64x128xf32> to vector<2x64x128xf32>
    %238 = vector.shape_cast %237 : vector<2x64x128xf32> to vector<128x128xf32>
    %239 = arith.addf %235, %238 : vector<128x128xf32>
    %240 = vector.broadcast %155 : vector<1x128xf32> to vector<128x128xf32>
    %241 = arith.mulf %239, %240 : vector<128x128xf32>
    %cst_270 = arith.constant dense<0.000000e+00> : vector<128xf32>
    %242 = vector.multi_reduction <add>, %241, %cst_270 [1] : vector<128x128xf32> to vector<128xf32>
    %243 = vector.shape_cast %242 : vector<128xf32> to vector<128x1xf32>
    %244 = vector.broadcast %156 : f32 to vector<128x1xf32>
    %245 = arith.addf %243, %244 : vector<128x1xf32>
    %c2_i32 = arith.constant 2 : i32
    %246 = vector.broadcast %c2_i32 : i32 to vector<1x4xi32>
    %247 = arith.cmpi eq, %157, %246 : vector<1x4xi32>
    %cst_271 = arith.constant 0.000000e+00 : f32
    %248 = vector.shape_cast %247 : vector<1x4xi1> to vector<1x4xi1>
    %249 = vector.broadcast %248 : vector<1x4xi1> to vector<128x4xi1>
    %250 = vector.shape_cast %245 : vector<128x1xf32> to vector<128x1xf32>
    %251 = vector.broadcast %250 : vector<128x1xf32> to vector<128x4xf32>
    %252 = vector.broadcast %cst_271 : f32 to vector<128x4xf32>
    %253 = arith.select %249, %251, %252 : vector<128x4xi1>, vector<128x4xf32>
    %254 = arith.addf %221, %253 : vector<128x4xf32>
    %c0_272 = arith.constant 0 : index
    %c0_273 = arith.constant 0 : index
    %c0_274 = arith.constant 0 : index
    %c0_275 = arith.constant 0 : index
    %255 = vector.load %arg20[%c0_272, %c0_273, %c0_274, %c0_275] : memref<2x9x9x64xbf16, #tpu.memory_space<vmem>>, vector<2x8x8x64xbf16>
    %256 = vector.shape_cast %255 : vector<2x8x8x64xbf16> to vector<128x64xbf16>
    %c0_276 = arith.constant 0 : index
    %c0_277 = arith.constant 0 : index
    %c1_278 = arith.constant 1 : index
    %c0_279 = arith.constant 0 : index
    %257 = vector.load %arg20[%c0_276, %c0_277, %c1_278, %c0_279] : memref<2x9x9x64xbf16, #tpu.memory_space<vmem>>, vector<2x8x8x64xbf16>
    %258 = vector.shape_cast %257 : vector<2x8x8x64xbf16> to vector<128x64xbf16>
    %c0_280 = arith.constant 0 : index
    %c1_281 = arith.constant 1 : index
    %c0_282 = arith.constant 0 : index
    %c0_283 = arith.constant 0 : index
    %259 = vector.load %arg20[%c0_280, %c1_281, %c0_282, %c0_283] : memref<2x9x9x64xbf16, #tpu.memory_space<vmem>>, vector<2x8x8x64xbf16>
    %260 = vector.shape_cast %259 : vector<2x8x8x64xbf16> to vector<128x64xbf16>
    %c0_284 = arith.constant 0 : index
    %c1_285 = arith.constant 1 : index
    %c1_286 = arith.constant 1 : index
    %c0_287 = arith.constant 0 : index
    %261 = vector.load %arg20[%c0_284, %c1_285, %c1_286, %c0_287] : memref<2x9x9x64xbf16, #tpu.memory_space<vmem>>, vector<2x8x8x64xbf16>
    %262 = vector.shape_cast %261 : vector<2x8x8x64xbf16> to vector<128x64xbf16>
    %263 = tpu.concatenate %256, %258, %260, %262 in 1 : vector<128x64xbf16>, vector<128x64xbf16>, vector<128x64xbf16>, vector<128x64xbf16> -> vector<128x256xbf16>
    %c3_288 = arith.constant 3 : index
    %c0_289 = arith.constant 0 : index
    %c0_290 = arith.constant 0 : index
    %264 = vector.load %arg11[%c3_288, %c0_289, %c0_290] : memref<4x256x128xbf16, #tpu.memory_space<vmem>>, vector<1x256x128xbf16>
    %265 = vector.shape_cast %264 : vector<1x256x128xbf16> to vector<256x128xbf16>
    %cst_291 = arith.constant dense<0.000000e+00> : vector<128x128xf32>
    %266 = tpu.matmul %263, %265, %cst_291 {dimension_numbers = #tpu.dot_dimension_numbers<[1], [0], [0], [1], [0, 0, 1, 1], [], []>} : vector<128x256xbf16>, vector<256x128xbf16>, vector<128x128xf32> -> vector<128x128xf32>
    %267 = vector.broadcast %153 : vector<1x128xf32> to vector<128x128xf32>
    %268 = arith.mulf %266, %267 : vector<128x128xf32>
    %269 = vector.broadcast %154 : vector<1x128xf32> to vector<128x128xf32>
    %270 = arith.addf %268, %269 : vector<128x128xf32>
    %cst_292 = arith.constant 0.000000e+00 : f32
    %271 = vector.broadcast %cst_292 : f32 to vector<128x128xf32>
    %272 = arith.maximumf %270, %271 : vector<128x128xf32>
    %c3_293 = arith.constant 3 : index
    %c0_294 = arith.constant 0 : index
    %c0_295 = arith.constant 0 : index
    %c0_296 = arith.constant 0 : index
    %273 = vector.load %arg17[%c3_293, %c0_294, %c0_295, %c0_296] : memref<4x2x64x128xf32, #tpu.memory_space<vmem>>, vector<1x2x64x128xf32>
    %274 = vector.shape_cast %273 : vector<1x2x64x128xf32> to vector<2x64x128xf32>
    %275 = vector.shape_cast %274 : vector<2x64x128xf32> to vector<128x128xf32>
    %276 = arith.addf %272, %275 : vector<128x128xf32>
    %277 = vector.broadcast %155 : vector<1x128xf32> to vector<128x128xf32>
    %278 = arith.mulf %276, %277 : vector<128x128xf32>
    %cst_297 = arith.constant dense<0.000000e+00> : vector<128xf32>
    %279 = vector.multi_reduction <add>, %278, %cst_297 [1] : vector<128x128xf32> to vector<128xf32>
    %280 = vector.shape_cast %279 : vector<128xf32> to vector<128x1xf32>
    %281 = vector.broadcast %156 : f32 to vector<128x1xf32>
    %282 = arith.addf %280, %281 : vector<128x1xf32>
    %c3_i32 = arith.constant 3 : i32
    %283 = vector.broadcast %c3_i32 : i32 to vector<1x4xi32>
    %284 = arith.cmpi eq, %157, %283 : vector<1x4xi32>
    %cst_298 = arith.constant 0.000000e+00 : f32
    %285 = vector.shape_cast %284 : vector<1x4xi1> to vector<1x4xi1>
    %286 = vector.broadcast %285 : vector<1x4xi1> to vector<128x4xi1>
    %287 = vector.shape_cast %282 : vector<128x1xf32> to vector<128x1xf32>
    %288 = vector.broadcast %287 : vector<128x1xf32> to vector<128x4xf32>
    %289 = vector.broadcast %cst_298 : f32 to vector<128x4xf32>
    %290 = arith.select %286, %288, %289 : vector<128x4xi1>, vector<128x4xf32>
    %291 = arith.addf %254, %290 : vector<128x4xf32>
    %c0_299 = arith.constant 0 : index
    %c0_300 = arith.constant 0 : index
    %292 = vector.load %arg16[%c0_299, %c0_300] : memref<128x4xf32, #tpu.memory_space<vmem>>, vector<128x4xf32>
    tpu.vector_store %arg16[%c0_299, %c0_300], %291 {strides = array<i32>} : memref<128x4xf32, #tpu.memory_space<vmem>>, vector<128x4xf32>,
    return
  }
  func.func @transform_0(%arg0: i32) -> (i32, i32, i32) {
    %c0_i32 = arith.constant 0 : i32
    %c0_i32_0 = arith.constant 0 : i32
    %c0_i32_1 = arith.constant 0 : i32
    return %c0_i32, %arg0, %c0_i32_0 : i32, i32, i32
  }
  func.func @transform_1(%arg0: i32) -> (i32, i32) {
    %c0_i32 = arith.constant 0 : i32
    %c0_i32_0 = arith.constant 0 : i32
    %c0_i32_1 = arith.constant 0 : i32
    return %c0_i32, %c0_i32_0 : i32, i32
  }
  func.func @transform_2(%arg0: i32) -> (i32, i32) {
    %c0_i32 = arith.constant 0 : i32
    %c0_i32_0 = arith.constant 0 : i32
    %c0_i32_1 = arith.constant 0 : i32
    return %c0_i32, %c0_i32_0 : i32, i32
  }
  func.func @transform_3(%arg0: i32) -> (i32, i32) {
    %c0_i32 = arith.constant 0 : i32
    %c0_i32_0 = arith.constant 0 : i32
    %c0_i32_1 = arith.constant 0 : i32
    return %c0_i32, %c0_i32_0 : i32, i32
  }
  func.func @transform_4(%arg0: i32) -> (i32, i32) {
    %c0_i32 = arith.constant 0 : i32
    %c0_i32_0 = arith.constant 0 : i32
    %c0_i32_1 = arith.constant 0 : i32
    return %c0_i32, %c0_i32_0 : i32, i32
  }
  func.func @transform_5(%arg0: i32) -> (i32, i32) {
    %c0_i32 = arith.constant 0 : i32
    %c0_i32_0 = arith.constant 0 : i32
    %c0_i32_1 = arith.constant 0 : i32
    return %c0_i32, %c0_i32_0 : i32, i32
  }
  func.func @transform_6(%arg0: i32) -> (i32, i32) {
    %c0_i32 = arith.constant 0 : i32
    %c0_i32_0 = arith.constant 0 : i32
    %c0_i32_1 = arith.constant 0 : i32
    return %c0_i32, %c0_i32_0 : i32, i32
  }
  func.func @transform_7(%arg0: i32) -> (i32, i32) {
    %c0_i32 = arith.constant 0 : i32
    %c0_i32_0 = arith.constant 0 : i32
    %c0_i32_1 = arith.constant 0 : i32
    return %c0_i32, %c0_i32_0 : i32, i32
  }
  func.func @transform_8(%arg0: i32) -> (i32, i32) {
    %c0_i32 = arith.constant 0 : i32
    %c0_i32_0 = arith.constant 0 : i32
    %c0_i32_1 = arith.constant 0 : i32
    return %c0_i32, %c0_i32_0 : i32, i32
  }
  func.func @transform_9(%arg0: i32) -> (i32, i32) {
    %c0_i32 = arith.constant 0 : i32
    %c0_i32_0 = arith.constant 0 : i32
    %c0_i32_1 = arith.constant 0 : i32
    return %c0_i32, %c0_i32_0 : i32, i32
  }
  func.func @transform_10(%arg0: i32) -> (i32, i32, i32) {
    %c0_i32 = arith.constant 0 : i32
    %c0_i32_0 = arith.constant 0 : i32
    %c0_i32_1 = arith.constant 0 : i32
    %c0_i32_2 = arith.constant 0 : i32
    return %c0_i32, %c0_i32_0, %c0_i32_1 : i32, i32, i32
  }
  func.func @transform_11(%arg0: i32) -> (i32, i32) {
    %c0_i32 = arith.constant 0 : i32
    %c0_i32_0 = arith.constant 0 : i32
    %c0_i32_1 = arith.constant 0 : i32
    return %c0_i32, %c0_i32_0 : i32, i32
  }
  func.func @transform_12(%arg0: i32) -> (i32, i32) {
    %c0_i32 = arith.constant 0 : i32
    %c0_i32_0 = arith.constant 0 : i32
    %c0_i32_1 = arith.constant 0 : i32
    return %c0_i32, %c0_i32_0 : i32, i32
  }
  func.func @transform_13(%arg0: i32) -> (i32, i32) {
    %c0_i32 = arith.constant 0 : i32
    %c0_i32_0 = arith.constant 0 : i32
    %c0_i32_1 = arith.constant 0 : i32
    return %c0_i32, %c0_i32_0 : i32, i32
  }
  func.func @transform_14(%arg0: i32) -> i32 {
    %c0_i32 = arith.constant 0 : i32
    %c0_i32_0 = arith.constant 0 : i32
    return %c0_i32 : i32
  }
  func.func @transform_15(%arg0: i32) -> (i32, i32) {
    %c0_i32 = arith.constant 0 : i32
    %c0_i32_0 = arith.constant 0 : i32
    return %arg0, %c0_i32 : i32, i32
  }
}

</mosaic_0001>

<llo_original>
// kernel: unet_forward.1
$region0: #{unet_forward.1}
  #allocation0 [shape = 'u32[]', space=smem, size = 0x4, offset = 0x4, fixed_abs, tag = 'smem constant byte address 0x4 - core index']
  #allocation1 [shape = 'u32[144,128]{1,0:T(1,128)}', space=vmem, size = 0x12000, scoped, tag = 'internal scratch']
  #allocation2 [shape = 'f32[4,2,64,128]{3,2,1,0:T(8,128)}', space=vmem, size = 0x40000, scoped, tag = 'scratch operand']
  #allocation3 [shape = 'bf16[4,2,9,9,128]{4,3,2,1,0:T(8,128)(2,1)}', space=vmem, size = 0x48000, scoped, tag = 'scratch operand']
  #allocation4 [shape = 'bf16[2,10,10,64]{3,2,1,0:T(8,128)(2,1)}', space=vmem, size = 0x14000, scoped, tag = 'scratch operand']
  #allocation5 [shape = 'bf16[2,9,9,64]{3,2,1,0:T(8,128)(2,1)}', space=vmem, size = 0x12000, scoped, tag = 'scratch operand']
  #allocation6 [shape = 'f32[1]{0:T(128)S(6)}', space=smem, size = 0x200, scoped, tag = 'scoped memory for unet_forward.1']
  %s0 = inlined_call_operand.vmem [shape: bf16[4,128,288], index: 0, kind: input, shape index: {}]
  %s1 = inlined_call_operand.vmem [shape: bf16[288,128], index: 1, kind: input, shape index: {}]
  %s2 = inlined_call_operand.vmem [shape: f32[1,128], index: 2, kind: input, shape index: {}]
  %s3 = inlined_call_operand.vmem [shape: f32[1,128], index: 3, kind: input, shape index: {}]
  %s4 = inlined_call_operand.vmem [shape: bf16[1152,64], index: 4, kind: input, shape index: {}]
  %s5 = inlined_call_operand.vmem [shape: f32[1,64], index: 5, kind: input, shape index: {}]
  %s6 = inlined_call_operand.vmem [shape: f32[1,64], index: 6, kind: input, shape index: {}]
  %s7 = inlined_call_operand.vmem [shape: bf16[576,64], index: 7, kind: input, shape index: {}]
  %s8 = inlined_call_operand.vmem [shape: f32[1,64], index: 8, kind: input, shape index: {}]
  %s9 = inlined_call_operand.vmem [shape: f32[1,64], index: 9, kind: input, shape index: {}]
  %s10 = inlined_call_operand.vmem [shape: bf16[4,256,128], index: 10, kind: input, shape index: {}]
  %s11 = inlined_call_operand.vmem [shape: f32[1,128], index: 11, kind: input, shape index: {}]
  %s12 = inlined_call_operand.vmem [shape: f32[1,128], index: 12, kind: input, shape index: {}]
  %s13 = inlined_call_operand.vmem [shape: f32[1,128], index: 13, kind: input, shape index: {}]
  %s14 = inlined_call_operand.<no memory space> [shape: f32[1], index: 14, kind: input, shape index: {}]
  %s15 = inlined_call_operand.vmem [shape: f32[128,4], index: 15, kind: output, shape index: {}]
  %s16 = sld [smem:[#allocation0]]
  $region70: #{unet_forward.1} parent=0
    _
  %s18 = ssub.s32 1, %s16
  %s19 = scalar_select 0, %s18, %s16
  %20 = sst [smem:[#allocation6]] %s14
  // Predicated region
  $region2: #{unet_forward.1} parent=0 // pred_check
    _
  $region3: #{unet_forward.1} parent=0 // pred_check_branch
    %22 = sbr.rel (0) target = $region5
  $region4: #{unet_forward.1} parent=0 // pred_region
    _
  $region5: #{unet_forward.1} parent=0 // pred_fallthru
    _
  // Predicated region
  $region6: #{unet_forward.1} parent=0 // pred_check
    _
  $region7: #{unet_forward.1} parent=0 // pred_check_branch
    %24 = sbr.rel (0) target = $region9
  $region8: #{unet_forward.1} parent=0 // pred_region
    _
  $region9: #{unet_forward.1} parent=0 // pred_fallthru
    _
  // Predicated region
  $region10: #{unet_forward.1} parent=0 // pred_check
    _
  $region11: #{unet_forward.1} parent=0 // pred_check_branch
    %26 = sbr.rel (0) target = $region13
  $region12: #{unet_forward.1} parent=0 // pred_region
    _
  $region13: #{unet_forward.1} parent=0 // pred_fallthru
    _
  // Predicated region
  $region14: #{unet_forward.1} parent=0 // pred_check
    _
  $region15: #{unet_forward.1} parent=0 // pred_check_branch
    %28 = sbr.rel (0) target = $region17
  $region16: #{unet_forward.1} parent=0 // pred_region
    _
  $region17: #{unet_forward.1} parent=0 // pred_fallthru
    _
  // Predicated region
  $region18: #{unet_forward.1} parent=0 // pred_check
    _
  $region19: #{unet_forward.1} parent=0 // pred_check_branch
    %30 = sbr.rel (0) target = $region21
  $region20: #{unet_forward.1} parent=0 // pred_region
    _
  $region21: #{unet_forward.1} parent=0 // pred_fallthru
    _
  // Predicated region
  $region22: #{unet_forward.1} parent=0 // pred_check
    _
  $region23: #{unet_forward.1} parent=0 // pred_check_branch
    %32 = sbr.rel (0) target = $region25
  $region24: #{unet_forward.1} parent=0 // pred_region
    _
  $region25: #{unet_forward.1} parent=0 // pred_fallthru
    _
  // Predicated region
  $region26: #{unet_forward.1} parent=0 // pred_check
    _
  $region27: #{unet_forward.1} parent=0 // pred_check_branch
    %34 = sbr.rel (0) target = $region29
  $region28: #{unet_forward.1} parent=0 // pred_region
    _
  $region29: #{unet_forward.1} parent=0 // pred_fallthru
    _
  // Predicated region
  $region30: #{unet_forward.1} parent=0 // pred_check
    _
  $region31: #{unet_forward.1} parent=0 // pred_check_branch
    %36 = sbr.rel (0) target = $region33
  $region32: #{unet_forward.1} parent=0 // pred_region
    _
  $region33: #{unet_forward.1} parent=0 // pred_fallthru
    _
  // Predicated region
  $region34: #{unet_forward.1} parent=0 // pred_check
    _
  $region35: #{unet_forward.1} parent=0 // pred_check_branch
    %38 = sbr.rel (0) target = $region37
  $region36: #{unet_forward.1} parent=0 // pred_region
    _
  $region37: #{unet_forward.1} parent=0 // pred_fallthru
    _
  // Predicated region
  $region38: #{unet_forward.1} parent=0 // pred_check
    _
  $region39: #{unet_forward.1} parent=0 // pred_check_branch
    %40 = sbr.rel (0) target = $region41
  $region40: #{unet_forward.1} parent=0 // pred_region
    _
  $region41: #{unet_forward.1} parent=0 // pred_fallthru
    _
  // Predicated region
  $region42: #{unet_forward.1} parent=0 // pred_check
    _
  $region43: #{unet_forward.1} parent=0 // pred_check_branch
    %42 = sbr.rel (0) target = $region45
  $region44: #{unet_forward.1} parent=0 // pred_region
    _
  $region45: #{unet_forward.1} parent=0 // pred_fallthru
    _
  // Predicated region
  $region46: #{unet_forward.1} parent=0 // pred_check
    _
  $region47: #{unet_forward.1} parent=0 // pred_check_branch
    %44 = sbr.rel (0) target = $region49
  $region48: #{unet_forward.1} parent=0 // pred_region
    _
  $region49: #{unet_forward.1} parent=0 // pred_fallthru
    _
  // Predicated region
  $region50: #{unet_forward.1} parent=0 // pred_check
    _
  $region51: #{unet_forward.1} parent=0 // pred_check_branch
    %46 = sbr.rel (0) target = $region53
  $region52: #{unet_forward.1} parent=0 // pred_region
    _
  $region53: #{unet_forward.1} parent=0 // pred_fallthru
    _
  // Predicated region
  $region54: #{unet_forward.1} parent=0 // pred_check
    _
  $region55: #{unet_forward.1} parent=0 // pred_check_branch
    %48 = sbr.rel (0) target = $region57
  $region56: #{unet_forward.1} parent=0 // pred_region
    _
  $region57: #{unet_forward.1} parent=0 // pred_fallthru
    _
  // Predicated region
  $region58: #{unet_forward.1} parent=0 // pred_check
    _
  $region59: #{unet_forward.1} parent=0 // pred_check_branch
    %50 = sbr.rel (0) target = $region61
  $region60: #{unet_forward.1} parent=0 // pred_region
    _
  $region61: #{unet_forward.1} parent=0 // pred_fallthru
    _
  %s52 = scalar_lea.vmem [#allocation3], 496
  %53 = vst [vmem:[%s52] sm:$0xf] 0
  %vm54 = vcmask 1040384
  %vm55 = vsmask.f32 256
  %vm56 = vmand %vm54, %vm55
  %v57 = vld [vmem:[%s52 + $0x4] sm:$0x1]
  %v58 = vsel %vm56, 0, %v57
  %59 = vst [vmem:[%s52 + $0x4] sm:$0x1] %v58
  %60 = vst [vmem:[%s52 + $0x48] sm:$0xf] 0
  %v61 = vld [vmem:[%s52 + $0x4c] sm:$0x1]
  %v62 = vsel %vm56, 0, %v61
  %63 = vst [vmem:[%s52 + $0x4c] sm:$0x1] %v62
  %s64 = scalar_lea.vmem [#allocation3], 432
  %v65 = vld [vmem:[%s64 + $0x4] sm:$0x1]
  %v66 = vsel %vm56, 0, %v65
  %67 = vst [vmem:[%s64 + $0x4] sm:$0x1] %v66
  %v68 = vld [vmem:[%s64 + $0xc] sm:$0x1]
  %v69 = vsel %vm56, 0, %v68
  %70 = vst [vmem:[%s64 + $0xc] sm:$0x1] %v69
  %v71 = vld [vmem:[%s64 + $0x14] sm:$0x1]
  %v72 = vsel %vm56, 0, %v71
  %73 = vst [vmem:[%s64 + $0x14] sm:$0x1] %v72
  %v74 = vld [vmem:[%s64 + $0x1c] sm:$0x1]
  %v75 = vsel %vm56, 0, %v74
  %76 = vst [vmem:[%s64 + $0x1c] sm:$0x1] %v75
  %v77 = vld [vmem:[%s64 + $0x24] sm:$0x1]
  %v78 = vsel %vm56, 0, %v77
  %79 = vst [vmem:[%s64 + $0x24] sm:$0x1] %v78
  %v80 = vld [vmem:[%s64 + $0x2c] sm:$0x1]
  %v81 = vsel %vm56, 0, %v80
  %82 = vst [vmem:[%s64 + $0x2c] sm:$0x1] %v81
  %v83 = vld [vmem:[%s64 + $0x34] sm:$0x1]
  %v84 = vsel %vm56, 0, %v83
  %85 = vst [vmem:[%s64 + $0x34] sm:$0x1] %v84
  %v86 = vld [vmem:[%s64 + $0x3c] sm:$0x1]
  %v87 = vsel %vm56, 0, %v86
  %88 = vst [vmem:[%s64 + $0x3c] sm:$0x1] %v87
  %v89 = vld [vmem:[%s64 + $0x44] sm:$0x1]
  %v90 = vsel %vm56, 0, %v89
  %91 = vst [vmem:[%s64 + $0x44] sm:$0x1] %v90
  %v92 = vld [vmem:[%s64 + $0x4c] sm:$0x1]
  %v93 = vsel %vm56, 0, %v92
  %94 = vst [vmem:[%s64 + $0x4c] sm:$0x1] %v93
  %v95 = vld [vmem:[%s64 + $0x54] sm:$0x1]
  %v96 = vsel %vm56, 0, %v95
  %97 = vst [vmem:[%s64 + $0x54] sm:$0x1] %v96
  %v98 = vld [vmem:[%s64 + $0x5c] sm:$0x1]
  %v99 = vsel %vm56, 0, %v98
  %100 = vst [vmem:[%s64 + $0x5c] sm:$0x1] %v99
  %v101 = vld [vmem:[%s64 + $0x64] sm:$0x1]
  %v102 = vsel %vm56, 0, %v101
  %103 = vst [vmem:[%s64 + $0x64] sm:$0x1] %v102
  %v104 = vld [vmem:[%s64 + $0x6c] sm:$0x1]
  %v105 = vsel %vm56, 0, %v104
  %106 = vst [vmem:[%s64 + $0x6c] sm:$0x1] %v105
  %v107 = vld [vmem:[%s64 + $0x74] sm:$0x1]
  %v108 = vsel %vm56, 0, %v107
  %109 = vst [vmem:[%s64 + $0x74] sm:$0x1] %v108
  %v110 = vld [vmem:[%s64 + $0x7c] sm:$0x1]
  %v111 = vsel %vm56, 0, %v110
  %112 = vst [vmem:[%s64 + $0x7c] sm:$0x1] %v111
  %v113 = vld [vmem:[%s64 + $0x84] sm:$0x1]
  %v114 = vsel %vm56, 0, %v113
  %115 = vst [vmem:[%s64 + $0x84] sm:$0x1] %v114
  %v116 = vld [vmem:[%s64 + $0x8c] sm:$0x1]
  %v117 = vsel %vm56, 0, %v116
  %118 = vst [vmem:[%s64 + $0x8c] sm:$0x1] %v117
  %s119 = scalar_lea.vmem [#allocation3], 352
  %120 = vst [vmem:[%s119] sm:$0xf] 0
  %v121 = vld [vmem:[%s119 + $0x4] sm:$0x1]
  %v122 = vsel %vm56, 0, %v121
  %123 = vst [vmem:[%s119 + $0x4] sm:$0x1] %v122
  %124 = vst [vmem:[%s119 + $0x48] sm:$0xf] 0
  %v125 = vld [vmem:[%s119 + $0x4c] sm:$0x1]
  %v126 = vsel %vm56, 0, %v125
  %127 = vst [vmem:[%s119 + $0x4c] sm:$0x1] %v126
  %s128 = scalar_lea.vmem [#allocation3], 288
  %v129 = vld [vmem:[%s128] sm:$0x1]
  %v130 = vsel %vm56, 0, %v129
  %131 = vst [vmem:[%s128] sm:$0x1] %v130
  %v132 = vld [vmem:[%s128 + $0x8] sm:$0x1]
  %v133 = vsel %vm56, 0, %v132
  %134 = vst [vmem:[%s128 + $0x8] sm:$0x1] %v133
  %v135 = vld [vmem:[%s128 + $0x10] sm:$0x1]
  %v136 = vsel %vm56, 0, %v135
  %137 = vst [vmem:[%s128 + $0x10] sm:$0x1] %v136
  %v138 = vld [vmem:[%s128 + $0x18] sm:$0x1]
  %v139 = vsel %vm56, 0, %v138
  %140 = vst [vmem:[%s128 + $0x18] sm:$0x1] %v139
  %v141 = vld [vmem:[%s128 + $0x20] sm:$0x1]
  %v142 = vsel %vm56, 0, %v141
  %143 = vst [vmem:[%s128 + $0x20] sm:$0x1] %v142
  %v144 = vld [vmem:[%s128 + $0x28] sm:$0x1]
  %v145 = vsel %vm56, 0, %v144
  %146 = vst [vmem:[%s128 + $0x28] sm:$0x1] %v145
  %v147 = vld [vmem:[%s128 + $0x30] sm:$0x1]
  %v148 = vsel %vm56, 0, %v147
  %149 = vst [vmem:[%s128 + $0x30] sm:$0x1] %v148
  %v150 = vld [vmem:[%s128 + $0x38] sm:$0x1]
  %v151 = vsel %vm56, 0, %v150
  %152 = vst [vmem:[%s128 + $0x38] sm:$0x1] %v151
  %v153 = vld [vmem:[%s128 + $0x40] sm:$0x1]
  %v154 = vsel %vm56, 0, %v153
  %155 = vst [vmem:[%s128 + $0x40] sm:$0x1] %v154
  %v156 = vld [vmem:[%s128 + $0x48] sm:$0x1]
  %v157 = vsel %vm56, 0, %v156
  %158 = vst [vmem:[%s128 + $0x48] sm:$0x1] %v157
  %v159 = vld [vmem:[%s128 + $0x50] sm:$0x1]
  %v160 = vsel %vm56, 0, %v159
  %161 = vst [vmem:[%s128 + $0x50] sm:$0x1] %v160
  %v162 = vld [vmem:[%s128 + $0x58] sm:$0x1]
  %v163 = vsel %vm56, 0, %v162
  %164 = vst [vmem:[%s128 + $0x58] sm:$0x1] %v163
  %v165 = vld [vmem:[%s128 + $0x60] sm:$0x1]
  %v166 = vsel %vm56, 0, %v165
  %167 = vst [vmem:[%s128 + $0x60] sm:$0x1] %v166
  %v168 = vld [vmem:[%s128 + $0x68] sm:$0x1]
  %v169 = vsel %vm56, 0, %v168
  %170 = vst [vmem:[%s128 + $0x68] sm:$0x1] %v169
  %v171 = vld [vmem:[%s128 + $0x70] sm:$0x1]
  %v172 = vsel %vm56, 0, %v171
  %173 = vst [vmem:[%s128 + $0x70] sm:$0x1] %v172
  %v174 = vld [vmem:[%s128 + $0x78] sm:$0x1]
  %v175 = vsel %vm56, 0, %v174
  %176 = vst [vmem:[%s128 + $0x78] sm:$0x1] %v175
  %v177 = vld [vmem:[%s128 + $0x80] sm:$0x1]
  %v178 = vsel %vm56, 0, %v177
  %179 = vst [vmem:[%s128 + $0x80] sm:$0x1] %v178
  %v180 = vld [vmem:[%s128 + $0x88] sm:$0x1]
  %v181 = vsel %vm56, 0, %v180
  %182 = vst [vmem:[%s128 + $0x88] sm:$0x1] %v181
  %s183 = scalar_lea.vmem [#allocation3], 144
  %184 = vst [vmem:[%s183] sm:$0xf] 0
  %v185 = vld [vmem:[%s183 + $0x4] sm:$0x1]
  %v186 = vsel %vm56, 0, %v185
  %187 = vst [vmem:[%s183 + $0x4] sm:$0x1] %v186
  %188 = vst [vmem:[%s183 + $0x48] sm:$0xf] 0
  %v189 = vld [vmem:[%s183 + $0x4c] sm:$0x1]
  %v190 = vsel %vm56, 0, %v189
  %191 = vst [vmem:[%s183 + $0x4c] sm:$0x1] %v190
  %v192 = vld [vmem:[%s183 + $0x4] sm:$0x1]
  %v193 = vsel %vm56, 0, %v192
  %194 = vst [vmem:[%s183 + $0x4] sm:$0x1] %v193
  %v195 = vld [vmem:[%s183 + $0xc] sm:$0x1]
  %v196 = vsel %vm56, 0, %v195
  %197 = vst [vmem:[%s183 + $0xc] sm:$0x1] %v196
  %v198 = vld [vmem:[%s183 + $0x14] sm:$0x1]
  %v199 = vsel %vm56, 0, %v198
  %200 = vst [vmem:[%s183 + $0x14] sm:$0x1] %v199
  %v201 = vld [vmem:[%s183 + $0x1c] sm:$0x1]
  %v202 = vsel %vm56, 0, %v201
  %203 = vst [vmem:[%s183 + $0x1c] sm:$0x1] %v202
  %v204 = vld [vmem:[%s183 + $0x24] sm:$0x1]
  %v205 = vsel %vm56, 0, %v204
  %206 = vst [vmem:[%s183 + $0x24] sm:$0x1] %v205
  %v207 = vld [vmem:[%s183 + $0x2c] sm:$0x1]
  %v208 = vsel %vm56, 0, %v207
  %209 = vst [vmem:[%s183 + $0x2c] sm:$0x1] %v208
  %v210 = vld [vmem:[%s183 + $0x34] sm:$0x1]
  %v211 = vsel %vm56, 0, %v210
  %212 = vst [vmem:[%s183 + $0x34] sm:$0x1] %v211
  %v213 = vld [vmem:[%s183 + $0x3c] sm:$0x1]
  %v214 = vsel %vm56, 0, %v213
  %215 = vst [vmem:[%s183 + $0x3c] sm:$0x1] %v214
  %v216 = vld [vmem:[%s183 + $0x44] sm:$0x1]
  %v217 = vsel %vm56, 0, %v216
  %218 = vst [vmem:[%s183 + $0x44] sm:$0x1] %v217
  %v219 = vld [vmem:[%s183 + $0x4c] sm:$0x1]
  %v220 = vsel %vm56, 0, %v219
  %221 = vst [vmem:[%s183 + $0x4c] sm:$0x1] %v220
  %v222 = vld [vmem:[%s183 + $0x54] sm:$0x1]
  %v223 = vsel %vm56, 0, %v222
  %224 = vst [vmem:[%s183 + $0x54] sm:$0x1] %v223
  %v225 = vld [vmem:[%s183 + $0x5c] sm:$0x1]
  %v226 = vsel %vm56, 0, %v225
  %227 = vst [vmem:[%s183 + $0x5c] sm:$0x1] %v226
  %v228 = vld [vmem:[%s183 + $0x64] sm:$0x1]
  %v229 = vsel %vm56, 0, %v228
  %230 = vst [vmem:[%s183 + $0x64] sm:$0x1] %v229
  %v231 = vld [vmem:[%s183 + $0x6c] sm:$0x1]
  %v232 = vsel %vm56, 0, %v231
  %233 = vst [vmem:[%s183 + $0x6c] sm:$0x1] %v232
  %v234 = vld [vmem:[%s183 + $0x74] sm:$0x1]
  %v235 = vsel %vm56, 0, %v234
  %236 = vst [vmem:[%s183 + $0x74] sm:$0x1] %v235
  %v237 = vld [vmem:[%s183 + $0x7c] sm:$0x1]
  %v238 = vsel %vm56, 0, %v237
  %239 = vst [vmem:[%s183 + $0x7c] sm:$0x1] %v238
  %v240 = vld [vmem:[%s183 + $0x84] sm:$0x1]
  %v241 = vsel %vm56, 0, %v240
  %242 = vst [vmem:[%s183 + $0x84] sm:$0x1] %v241
  %v243 = vld [vmem:[%s183 + $0x8c] sm:$0x1]
  %v244 = vsel %vm56, 0, %v243
  %245 = vst [vmem:[%s183 + $0x8c] sm:$0x1] %v244
  %246 = vst [vmem:[#allocation3] sm:$0xf] 0
  %v247 = vld [vmem:[#allocation3 + $0x4] sm:$0x1]
  %v248 = vsel %vm56, 0, %v247
  %249 = vst [vmem:[#allocation3 + $0x4] sm:$0x1] %v248
  %250 = vst [vmem:[#allocation3 + $0x48] sm:$0xf] 0
  %v251 = vld [vmem:[#allocation3 + $0x4c] sm:$0x1]
  %v252 = vsel %vm56, 0, %v251
  %253 = vst [vmem:[#allocation3 + $0x4c] sm:$0x1] %v252
  %v254 = vld [vmem:[#allocation3] sm:$0x1]
  %v255 = vsel %vm56, 0, %v254
  %256 = vst [vmem:[#allocation3] sm:$0x1] %v255
  %v257 = vld [vmem:[#allocation3 + $0x8] sm:$0x1]
  %v258 = vsel %vm56, 0, %v257
  %259 = vst [vmem:[#allocation3 + $0x8] sm:$0x1] %v258
  %v260 = vld [vmem:[#allocation3 + $0x10] sm:$0x1]
  %v261 = vsel %vm56, 0, %v260
  %262 = vst [vmem:[#allocation3 + $0x10] sm:$0x1] %v261
  %v263 = vld [vmem:[#allocation3 + $0x18] sm:$0x1]
  %v264 = vsel %vm56, 0, %v263
  %265 = vst [vmem:[#allocation3 + $0x18] sm:$0x1] %v264
  %v266 = vld [vmem:[#allocation3 + $0x20] sm:$0x1]
  %v267 = vsel %vm56, 0, %v266
  %268 = vst [vmem:[#allocation3 + $0x20] sm:$0x1] %v267
  %v269 = vld [vmem:[#allocation3 + $0x28] sm:$0x1]
  %v270 = vsel %vm56, 0, %v269
  %271 = vst [vmem:[#allocation3 + $0x28] sm:$0x1] %v270
  %v272 = vld [vmem:[#allocation3 + $0x30] sm:$0x1]
  %v273 = vsel %vm56, 0, %v272
  %274 = vst [vmem:[#allocation3 + $0x30] sm:$0x1] %v273
  %v275 = vld [vmem:[#allocation3 + $0x38] sm:$0x1]
  %v276 = vsel %vm56, 0, %v275
  %277 = vst [vmem:[#allocation3 + $0x38] sm:$0x1] %v276
  %v278 = vld [vmem:[#allocation3 + $0x40] sm:$0x1]
  %v279 = vsel %vm56, 0, %v278
  %280 = vst [vmem:[#allocation3 + $0x40] sm:$0x1] %v279
  %v281 = vld [vmem:[#allocation3 + $0x48] sm:$0x1]
  %v282 = vsel %vm56, 0, %v281
  %283 = vst [vmem:[#allocation3 + $0x48] sm:$0x1] %v282
  %v284 = vld [vmem:[#allocation3 + $0x50] sm:$0x1]
  %v285 = vsel %vm56, 0, %v284
  %286 = vst [vmem:[#allocation3 + $0x50] sm:$0x1] %v285
  %v287 = vld [vmem:[#allocation3 + $0x58] sm:$0x1]
  %v288 = vsel %vm56, 0, %v287
  %289 = vst [vmem:[#allocation3 + $0x58] sm:$0x1] %v288
  %v290 = vld [vmem:[#allocation3 + $0x60] sm:$0x1]
  %v291 = vsel %vm56, 0, %v290
  %292 = vst [vmem:[#allocation3 + $0x60] sm:$0x1] %v291
  %v293 = vld [vmem:[#allocation3 + $0x68] sm:$0x1]
  %v294 = vsel %vm56, 0, %v293
  %295 = vst [vmem:[#allocation3 + $0x68] sm:$0x1] %v294
  %v296 = vld [vmem:[#allocation3 + $0x70] sm:$0x1]
  %v297 = vsel %vm56, 0, %v296
  %298 = vst [vmem:[#allocation3 + $0x70] sm:$0x1] %v297
  %v299 = vld [vmem:[#allocation3 + $0x78] sm:$0x1]
  %v300 = vsel %vm56, 0, %v299
  %301 = vst [vmem:[#allocation3 + $0x78] sm:$0x1] %v300
  %v302 = vld [vmem:[#allocation3 + $0x80] sm:$0x1]
  %v303 = vsel %vm56, 0, %v302
  %304 = vst [vmem:[#allocation3 + $0x80] sm:$0x1] %v303
  %v305 = vld [vmem:[#allocation3 + $0x88] sm:$0x1]
  %v306 = vsel %vm56, 0, %v305
  %307 = vst [vmem:[#allocation3 + $0x88] sm:$0x1] %v306
  %vm308 = vcmask 519168
  %309 = vst.msk [vmem:[#allocation4] sm:$0xf] %vm308, 0
  %vm310 = vcmask 516096
  %311 = vst.msk [vmem:[#allocation4 + $0x4] sm:$0x1] %vm310, 0
  %312 = vst.msk [vmem:[#allocation4 + $0x50] sm:$0xf] %vm308, 0
  %313 = vst.msk [vmem:[#allocation4 + $0x54] sm:$0x1] %vm310, 0
  %s314 = scalar_lea.vmem [#allocation4], 72
  %315 = vst.msk [vmem:[%s314] sm:$0xf] %vm308, 0
  %316 = vst.msk [vmem:[%s314 + $0x4] sm:$0x1] %vm310, 0
  %317 = vst.msk [vmem:[%s314 + $0x50] sm:$0xf] %vm308, 0
  %318 = vst.msk [vmem:[%s314 + $0x54] sm:$0x1] %vm310, 0
  %vm319 = vcmask 516096
  %vm320 = vmand %vm319, %vm55
  %v321 = vld [vmem:[#allocation4] sm:$0x1]
  %v322 = vsel %vm320, 0, %v321
  %323 = vst [vmem:[#allocation4] sm:$0x1] %v322
  %v324 = vld [vmem:[#allocation4 + $0x8] sm:$0x1]
  %v325 = vsel %vm320, 0, %v324
  %326 = vst [vmem:[#allocation4 + $0x8] sm:$0x1] %v325
  %v327 = vld [vmem:[#allocation4 + $0x10] sm:$0x1]
  %v328 = vsel %vm320, 0, %v327
  %329 = vst [vmem:[#allocation4 + $0x10] sm:$0x1] %v328
  %v330 = vld [vmem:[#allocation4 + $0x18] sm:$0x1]
  %v331 = vsel %vm320, 0, %v330
  %332 = vst [vmem:[#allocation4 + $0x18] sm:$0x1] %v331
  %v333 = vld [vmem:[#allocation4 + $0x20] sm:$0x1]
  %v334 = vsel %vm320, 0, %v333
  %335 = vst [vmem:[#allocation4 + $0x20] sm:$0x1] %v334
  %v336 = vld [vmem:[#allocation4 + $0x28] sm:$0x1]
  %v337 = vsel %vm320, 0, %v336
  %338 = vst [vmem:[#allocation4 + $0x28] sm:$0x1] %v337
  %v339 = vld [vmem:[#allocation4 + $0x30] sm:$0x1]
  %v340 = vsel %vm320, 0, %v339
  %341 = vst [vmem:[#allocation4 + $0x30] sm:$0x1] %v340
  %v342 = vld [vmem:[#allocation4 + $0x38] sm:$0x1]
  %v343 = vsel %vm320, 0, %v342
  %344 = vst [vmem:[#allocation4 + $0x38] sm:$0x1] %v343
  %v345 = vld [vmem:[#allocation4 + $0x40] sm:$0x1]
  %v346 = vsel %vm320, 0, %v345
  %347 = vst [vmem:[#allocation4 + $0x40] sm:$0x1] %v346
  %v348 = vld [vmem:[#allocation4 + $0x48] sm:$0x1]
  %v349 = vsel %vm320, 0, %v348
  %350 = vst [vmem:[#allocation4 + $0x48] sm:$0x1] %v349
  %v351 = vld [vmem:[#allocation4 + $0x50] sm:$0x1]
  %v352 = vsel %vm320, 0, %v351
  %353 = vst [vmem:[#allocation4 + $0x50] sm:$0x1] %v352
  %v354 = vld [vmem:[#allocation4 + $0x58] sm:$0x1]
  %v355 = vsel %vm320, 0, %v354
  %356 = vst [vmem:[#allocation4 + $0x58] sm:$0x1] %v355
  %v357 = vld [vmem:[#allocation4 + $0x60] sm:$0x1]
  %v358 = vsel %vm320, 0, %v357
  %359 = vst [vmem:[#allocation4 + $0x60] sm:$0x1] %v358
  %v360 = vld [vmem:[#allocation4 + $0x68] sm:$0x1]
  %v361 = vsel %vm320, 0, %v360
  %362 = vst [vmem:[#allocation4 + $0x68] sm:$0x1] %v361
  %v363 = vld [vmem:[#allocation4 + $0x70] sm:$0x1]
  %v364 = vsel %vm320, 0, %v363
  %365 = vst [vmem:[#allocation4 + $0x70] sm:$0x1] %v364
  %v366 = vld [vmem:[#allocation4 + $0x78] sm:$0x1]
  %v367 = vsel %vm320, 0, %v366
  %368 = vst [vmem:[#allocation4 + $0x78] sm:$0x1] %v367
  %v369 = vld [vmem:[#allocation4 + $0x80] sm:$0x1]
  %v370 = vsel %vm320, 0, %v369
  %371 = vst [vmem:[#allocation4 + $0x80] sm:$0x1] %v370
  %v372 = vld [vmem:[#allocation4 + $0x88] sm:$0x1]
  %v373 = vsel %vm320, 0, %v372
  %374 = vst [vmem:[#allocation4 + $0x88] sm:$0x1] %v373
  %v375 = vld [vmem:[#allocation4 + $0x90] sm:$0x1]
  %v376 = vsel %vm320, 0, %v375
  %377 = vst [vmem:[#allocation4 + $0x90] sm:$0x1] %v376
  %v378 = vld [vmem:[#allocation4 + $0x98] sm:$0x1]
  %v379 = vsel %vm320, 0, %v378
  %380 = vst [vmem:[#allocation4 + $0x98] sm:$0x1] %v379
  %vm381 = vsmask.f32 7938
  %vm382 = vmand %vm319, %vm381
  %v383 = vld [vmem:[#allocation4 + $0x4] sm:$0x1]
  %v384 = vsel %vm382, 0, %v383
  %385 = vst [vmem:[#allocation4 + $0x4] sm:$0x1] %v384
  %v386 = vld [vmem:[#allocation4 + $0xc] sm:$0x1]
  %v387 = vsel %vm382, 0, %v386
  %388 = vst [vmem:[#allocation4 + $0xc] sm:$0x1] %v387
  %v389 = vld [vmem:[#allocation4 + $0x14] sm:$0x1]
  %v390 = vsel %vm382, 0, %v389
  %391 = vst [vmem:[#allocation4 + $0x14] sm:$0x1] %v390
  %v392 = vld [vmem:[#allocation4 + $0x1c] sm:$0x1]
  %v393 = vsel %vm382, 0, %v392
  %394 = vst [vmem:[#allocation4 + $0x1c] sm:$0x1] %v393
  %v395 = vld [vmem:[#allocation4 + $0x24] sm:$0x1]
  %v396 = vsel %vm382, 0, %v395
  %397 = vst [vmem:[#allocation4 + $0x24] sm:$0x1] %v396
  %v398 = vld [vmem:[#allocation4 + $0x2c] sm:$0x1]
  %v399 = vsel %vm382, 0, %v398
  %400 = vst [vmem:[#allocation4 + $0x2c] sm:$0x1] %v399
  %v401 = vld [vmem:[#allocation4 + $0x34] sm:$0x1]
  %v402 = vsel %vm382, 0, %v401
  %403 = vst [vmem:[#allocation4 + $0x34] sm:$0x1] %v402
  %v404 = vld [vmem:[#allocation4 + $0x3c] sm:$0x1]
  %v405 = vsel %vm382, 0, %v404
  %406 = vst [vmem:[#allocation4 + $0x3c] sm:$0x1] %v405
  %v407 = vld [vmem:[#allocation4 + $0x44] sm:$0x1]
  %v408 = vsel %vm382, 0, %v407
  %409 = vst [vmem:[#allocation4 + $0x44] sm:$0x1] %v408
  %v410 = vld [vmem:[#allocation4 + $0x4c] sm:$0x1]
  %v411 = vsel %vm382, 0, %v410
  %412 = vst [vmem:[#allocation4 + $0x4c] sm:$0x1] %v411
  %v413 = vld [vmem:[#allocation4 + $0x54] sm:$0x1]
  %v414 = vsel %vm382, 0, %v413
  %415 = vst [vmem:[#allocation4 + $0x54] sm:$0x1] %v414
  %v416 = vld [vmem:[#allocation4 + $0x5c] sm:$0x1]
  %v417 = vsel %vm382, 0, %v416
  %418 = vst [vmem:[#allocation4 + $0x5c] sm:$0x1] %v417
  %v419 = vld [vmem:[#allocation4 + $0x64] sm:$0x1]
  %v420 = vsel %vm382, 0, %v419
  %421 = vst [vmem:[#allocation4 + $0x64] sm:$0x1] %v420
  %v422 = vld [vmem:[#allocation4 + $0x6c] sm:$0x1]
  %v423 = vsel %vm382, 0, %v422
  %424 = vst [vmem:[#allocation4 + $0x6c] sm:$0x1] %v423
  %v425 = vld [vmem:[#allocation4 + $0x74] sm:$0x1]
  %v426 = vsel %vm382, 0, %v425
  %427 = vst [vmem:[#allocation4 + $0x74] sm:$0x1] %v426
  %v428 = vld [vmem:[#allocation4 + $0x7c] sm:$0x1]
  %v429 = vsel %vm382, 0, %v428
  %430 = vst [vmem:[#allocation4 + $0x7c] sm:$0x1] %v429
  %v431 = vld [vmem:[#allocation4 + $0x84] sm:$0x1]
  %v432 = vsel %vm382, 0, %v431
  %433 = vst [vmem:[#allocation4 + $0x84] sm:$0x1] %v432
  %v434 = vld [vmem:[#allocation4 + $0x8c] sm:$0x1]
  %v435 = vsel %vm382, 0, %v434
  %436 = vst [vmem:[#allocation4 + $0x8c] sm:$0x1] %v435
  %v437 = vld [vmem:[#allocation4 + $0x94] sm:$0x1]
  %v438 = vsel %vm382, 0, %v437
  %439 = vst [vmem:[#allocation4 + $0x94] sm:$0x1] %v438
  %v440 = vld [vmem:[#allocation4 + $0x9c] sm:$0x1]
  %v441 = vsel %vm382, 0, %v440
  %442 = vst [vmem:[#allocation4 + $0x9c] sm:$0x1] %v441
  %s443 = scalar_lea.vmem [#allocation5], 64
  %444 = vst.msk [vmem:[%s443] sm:$0xf] %vm308, 0
  %v445 = vld [vmem:[%s443 + $0x4] sm:$0x1]
  %v446 = vsel %vm320, 0, %v445
  %447 = vst [vmem:[%s443 + $0x4] sm:$0x1] %v446
  %448 = vst.msk [vmem:[%s443 + $0x48] sm:$0xf] %vm308, 0
  %v449 = vld [vmem:[%s443 + $0x4c] sm:$0x1]
  %v450 = vsel %vm320, 0, %v449
  %451 = vst [vmem:[%s443 + $0x4c] sm:$0x1] %v450
  %v452 = vld [vmem:[#allocation5 + $0x4] sm:$0x1]
  %v453 = vsel %vm320, 0, %v452
  %454 = vst [vmem:[#allocation5 + $0x4] sm:$0x1] %v453
  %v455 = vld [vmem:[#allocation5 + $0xc] sm:$0x1]
  %v456 = vsel %vm320, 0, %v455
  %457 = vst [vmem:[#allocation5 + $0xc] sm:$0x1] %v456
  %v458 = vld [vmem:[#allocation5 + $0x14] sm:$0x1]
  %v459 = vsel %vm320, 0, %v458
  %460 = vst [vmem:[#allocation5 + $0x14] sm:$0x1] %v459
  %v461 = vld [vmem:[#allocation5 + $0x1c] sm:$0x1]
  %v462 = vsel %vm320, 0, %v461
  %463 = vst [vmem:[#allocation5 + $0x1c] sm:$0x1] %v462
  %v464 = vld [vmem:[#allocation5 + $0x24] sm:$0x1]
  %v465 = vsel %vm320, 0, %v464
  %466 = vst [vmem:[#allocation5 + $0x24] sm:$0x1] %v465
  %v467 = vld [vmem:[#allocation5 + $0x2c] sm:$0x1]
  %v468 = vsel %vm320, 0, %v467
  %469 = vst [vmem:[#allocation5 + $0x2c] sm:$0x1] %v468
  %v470 = vld [vmem:[#allocation5 + $0x34] sm:$0x1]
  %v471 = vsel %vm320, 0, %v470
  %472 = vst [vmem:[#allocation5 + $0x34] sm:$0x1] %v471
  %v473 = vld [vmem:[#allocation5 + $0x3c] sm:$0x1]
  %v474 = vsel %vm320, 0, %v473
  %475 = vst [vmem:[#allocation5 + $0x3c] sm:$0x1] %v474
  %v476 = vld [vmem:[#allocation5 + $0x44] sm:$0x1]
  %v477 = vsel %vm320, 0, %v476
  %478 = vst [vmem:[#allocation5 + $0x44] sm:$0x1] %v477
  %v479 = vld [vmem:[#allocation5 + $0x4c] sm:$0x1]
  %v480 = vsel %vm320, 0, %v479
  %481 = vst [vmem:[#allocation5 + $0x4c] sm:$0x1] %v480
  %v482 = vld [vmem:[#allocation5 + $0x54] sm:$0x1]
  %v483 = vsel %vm320, 0, %v482
  %484 = vst [vmem:[#allocation5 + $0x54] sm:$0x1] %v483
  %v485 = vld [vmem:[#allocation5 + $0x5c] sm:$0x1]
  %v486 = vsel %vm320, 0, %v485
  %487 = vst [vmem:[#allocation5 + $0x5c] sm:$0x1] %v486
  %v488 = vld [vmem:[#allocation5 + $0x64] sm:$0x1]
  %v489 = vsel %vm320, 0, %v488
  %490 = vst [vmem:[#allocation5 + $0x64] sm:$0x1] %v489
  %v491 = vld [vmem:[#allocation5 + $0x6c] sm:$0x1]
  %v492 = vsel %vm320, 0, %v491
  %493 = vst [vmem:[#allocation5 + $0x6c] sm:$0x1] %v492
  %v494 = vld [vmem:[#allocation5 + $0x74] sm:$0x1]
  %v495 = vsel %vm320, 0, %v494
  %496 = vst [vmem:[#allocation5 + $0x74] sm:$0x1] %v495
  %v497 = vld [vmem:[#allocation5 + $0x7c] sm:$0x1]
  %v498 = vsel %vm320, 0, %v497
  %499 = vst [vmem:[#allocation5 + $0x7c] sm:$0x1] %v498
  %v500 = vld [vmem:[#allocation5 + $0x84] sm:$0x1]
  %v501 = vsel %vm320, 0, %v500
  %502 = vst [vmem:[#allocation5 + $0x84] sm:$0x1] %v501
  %v503 = vld [vmem:[#allocation5 + $0x8c] sm:$0x1]
  %v504 = vsel %vm320, 0, %v503
  %505 = vst [vmem:[#allocation5 + $0x8c] sm:$0x1] %v504
  %v506 = vld [vmem:[%s0] sm:$0xff]
  %v507 = vld [vmem:[%s0 + $0x8] sm:$0xf]
  %v508 = vld [vmem:[%s0 + $0xc] sm:$0xff]
  %v509 = vld [vmem:[%s0 + $0x14] sm:$0xf]
  %v510 = vld [vmem:[%s0 + $0x18] sm:$0xff]
  %v511 = vld [vmem:[%s0 + $0x20] sm:$0xf]
  %v512 = vld [vmem:[%s0 + $0x24] sm:$0xff]
  %v513 = vld [vmem:[%s0 + $0x2c] sm:$0xf]
  %v514 = vld [vmem:[%s0 + $0x30] sm:$0xff]
  %v515 = vld [vmem:[%s0 + $0x38] sm:$0xf]
  %v516 = vld [vmem:[%s0 + $0x3c] sm:$0xff]
  %v517 = vld [vmem:[%s0 + $0x44] sm:$0xf]
  %v518 = vld [vmem:[%s0 + $0x48] sm:$0xff]
  %v519 = vld [vmem:[%s0 + $0x50] sm:$0xf]
  %v520 = vld [vmem:[%s0 + $0x54] sm:$0xff]
  %v521 = vld [vmem:[%s0 + $0x5c] sm:$0xf]
  %v522 = vld [vmem:[%s0 + $0x60] sm:$0xff]
  %v523 = vld [vmem:[%s0 + $0x68] sm:$0xf]
  %v524 = vld [vmem:[%s0 + $0x6c] sm:$0xff]
  %v525 = vld [vmem:[%s0 + $0x74] sm:$0xf]
  %v526 = vld [vmem:[%s0 + $0x78] sm:$0xff]
  %v527 = vld [vmem:[%s0 + $0x80] sm:$0xf]
  %v528 = vld [vmem:[%s0 + $0x84] sm:$0xff]
  %v529 = vld [vmem:[%s0 + $0x8c] sm:$0xf]
  %v530 = vld [vmem:[%s0 + $0x90] sm:$0xff]
  %v531 = vld [vmem:[%s0 + $0x98] sm:$0xf]
  %v532 = vld [vmem:[%s0 + $0x9c] sm:$0xff]
  %v533 = vld [vmem:[%s0 + $0xa4] sm:$0xf]
  %v534 = vld [vmem:[%s0 + $0xa8] sm:$0xff]
  %v535 = vld [vmem:[%s0 + $0xb0] sm:$0xf]
  %v536 = vld [vmem:[%s0 + $0xb4] sm:$0xff]
  %v537 = vld [vmem:[%s0 + $0xbc] sm:$0xf]
  %v538 = vld [vmem:[%s0 + $0xc0] sm:$0xff]
  %v539 = vld [vmem:[%s0 + $0xc8] sm:$0xf]
  %v540 = vld [vmem:[%s0 + $0xcc] sm:$0xff]
  %v541 = vld [vmem:[%s0 + $0xd4] sm:$0xf]
  %v542 = vld [vmem:[%s0 + $0xd8] sm:$0xff]
  %v543 = vld [vmem:[%s0 + $0xe0] sm:$0xf]
  %v544 = vld [vmem:[%s0 + $0xe4] sm:$0xff]
  %v545 = vld [vmem:[%s0 + $0xec] sm:$0xf]
  %v546 = vld [vmem:[%s0 + $0xf0] sm:$0xff]
  %v547 = vld [vmem:[%s0 + $0xf8] sm:$0xf]
  %v548 = vld [vmem:[%s0 + $0xfc] sm:$0xff]
  %v549 = vld [vmem:[%s0 + $0x104] sm:$0xf]
  %v550 = vld [vmem:[%s0 + $0x108] sm:$0xff]
  %v551 = vld [vmem:[%s0 + $0x110] sm:$0xf]
  %v552 = vld [vmem:[%s0 + $0x114] sm:$0xff]
  %v553 = vld [vmem:[%s0 + $0x11c] sm:$0xf]
  %v554 = vld [vmem:[%s0 + $0x120] sm:$0xff]
  %v555 = vld [vmem:[%s0 + $0x128] sm:$0xf]
  %v556 = vld [vmem:[%s0 + $0x12c] sm:$0xff]
  %v557 = vld [vmem:[%s0 + $0x134] sm:$0xf]
  %v558 = vld [vmem:[%s0 + $0x138] sm:$0xff]
  %v559 = vld [vmem:[%s0 + $0x140] sm:$0xf]
  %v560 = vld [vmem:[%s0 + $0x144] sm:$0xff]
  %v561 = vld [vmem:[%s0 + $0x14c] sm:$0xf]
  %v562 = vld [vmem:[%s0 + $0x150] sm:$0xff]
  %v563 = vld [vmem:[%s0 + $0x158] sm:$0xf]
  %v564 = vld [vmem:[%s0 + $0x15c] sm:$0xff]
  %v565 = vld [vmem:[%s0 + $0x164] sm:$0xf]
  %v566 = vld [vmem:[%s0 + $0x168] sm:$0xff]
  %v567 = vld [vmem:[%s0 + $0x170] sm:$0xf]
  %v568 = vld [vmem:[%s0 + $0x174] sm:$0xff]
  %v569 = vld [vmem:[%s0 + $0x17c] sm:$0xf]
  %v570 = vld [vmem:[%s0 + $0x180] sm:$0xff]
  %v571 = vld [vmem:[%s0 + $0x188] sm:$0xf]
  %v572 = vld [vmem:[%s0 + $0x18c] sm:$0xff]
  %v573 = vld [vmem:[%s0 + $0x194] sm:$0xf]
  %v574 = vld [vmem:[%s0 + $0x198] sm:$0xff]
  %v575 = vld [vmem:[%s0 + $0x1a0] sm:$0xf]
  %v576 = vld [vmem:[%s0 + $0x1a4] sm:$0xff]
  %v577 = vld [vmem:[%s0 + $0x1ac] sm:$0xf]
  %v578 = vld [vmem:[%s0 + $0x1b0] sm:$0xff]
  %v579 = vld [vmem:[%s0 + $0x1b8] sm:$0xf]
  %v580 = vld [vmem:[%s0 + $0x1bc] sm:$0xff]
  %v581 = vld [vmem:[%s0 + $0x1c4] sm:$0xf]
  %v582 = vld [vmem:[%s0 + $0x1c8] sm:$0xff]
  %v583 = vld [vmem:[%s0 + $0x1d0] sm:$0xf]
  %v584 = vld [vmem:[%s0 + $0x1d4] sm:$0xff]
  %v585 = vld [vmem:[%s0 + $0x1dc] sm:$0xf]
  %v586 = vld [vmem:[%s0 + $0x1e0] sm:$0xff]
  %v587 = vld [vmem:[%s0 + $0x1e8] sm:$0xf]
  %v588 = vld [vmem:[%s0 + $0x1ec] sm:$0xff]
  %v589 = vld [vmem:[%s0 + $0x1f4] sm:$0xf]
  %v590 = vld [vmem:[%s0 + $0x1f8] sm:$0xff]
  %v591 = vld [vmem:[%s0 + $0x200] sm:$0xf]
  %v592 = vld [vmem:[%s0 + $0x204] sm:$0xff]
  %v593 = vld [vmem:[%s0 + $0x20c] sm:$0xf]
  %v594 = vld [vmem:[%s0 + $0x210] sm:$0xff]
  %v595 = vld [vmem:[%s0 + $0x218] sm:$0xf]
  %v596 = vld [vmem:[%s0 + $0x21c] sm:$0xff]
  %v597 = vld [vmem:[%s0 + $0x224] sm:$0xf]
  %v598 = vld [vmem:[%s0 + $0x228] sm:$0xff]
  %v599 = vld [vmem:[%s0 + $0x230] sm:$0xf]
  %v600 = vld [vmem:[%s0 + $0x234] sm:$0xff]
  %v601 = vld [vmem:[%s0 + $0x23c] sm:$0xf]
  %v602 = vld [vmem:[%s0 + $0x240] sm:$0xff]
  %v603 = vld [vmem:[%s0 + $0x248] sm:$0xf]
  %v604 = vld [vmem:[%s0 + $0x24c] sm:$0xff]
  %v605 = vld [vmem:[%s0 + $0x254] sm:$0xf]
  %v606 = vld [vmem:[%s0 + $0x258] sm:$0xff]
  %v607 = vld [vmem:[%s0 + $0x260] sm:$0xf]
  %v608 = vld [vmem:[%s0 + $0x264] sm:$0xff]
  %v609 = vld [vmem:[%s0 + $0x26c] sm:$0xf]
  %v610 = vld [vmem:[%s0 + $0x270] sm:$0xff]
  %v611 = vld [vmem:[%s0 + $0x278] sm:$0xf]
  %v612 = vld [vmem:[%s0 + $0x27c] sm:$0xff]
  %v613 = vld [vmem:[%s0 + $0x284] sm:$0xf]
  %v614 = vld [vmem:[%s0 + $0x288] sm:$0xff]
  %v615 = vld [vmem:[%s0 + $0x290] sm:$0xf]
  %v616 = vld [vmem:[%s0 + $0x294] sm:$0xff]
  %v617 = vld [vmem:[%s0 + $0x29c] sm:$0xf]
  %v618 = vld [vmem:[%s0 + $0x2a0] sm:$0xff]
  %v619 = vld [vmem:[%s0 + $0x2a8] sm:$0xf]
  %v620 = vld [vmem:[%s0 + $0x2ac] sm:$0xff]
  %v621 = vld [vmem:[%s0 + $0x2b4] sm:$0xf]
  %v622 = vld [vmem:[%s0 + $0x2b8] sm:$0xff]
  %v623 = vld [vmem:[%s0 + $0x2c0] sm:$0xf]
  %v624 = vld [vmem:[%s0 + $0x2c4] sm:$0xff]
  %v625 = vld [vmem:[%s0 + $0x2cc] sm:$0xf]
  %v626 = vld [vmem:[%s0 + $0x2d0] sm:$0xff]
  %v627 = vld [vmem:[%s0 + $0x2d8] sm:$0xf]
  %v628 = vld [vmem:[%s0 + $0x2dc] sm:$0xff]
  %v629 = vld [vmem:[%s0 + $0x2e4] sm:$0xf]
  %v630 = vld [vmem:[%s0 + $0x2e8] sm:$0xff]
  %v631 = vld [vmem:[%s0 + $0x2f0] sm:$0xf]
  %v632 = vld [vmem:[%s0 + $0x2f4] sm:$0xff]
  %v633 = vld [vmem:[%s0 + $0x2fc] sm:$0xf]
  %v634 = vld [vmem:[%s1] sm:$0xf]
  %v635 = vld [vmem:[%s1 + $0x4] sm:$0xf]
  %v636 = vld [vmem:[%s1 + $0x8] sm:$0xf]
  %v637 = vld [vmem:[%s1 + $0xc] sm:$0xf]
  %v638 = vld [vmem:[%s1 + $0x10] sm:$0xf]
  %v639 = vld [vmem:[%s1 + $0x14] sm:$0xf]
  %v640 = vld [vmem:[%s1 + $0x18] sm:$0xf]
  %v641 = vld [vmem:[%s1 + $0x1c] sm:$0xf]
  %v642 = vld [vmem:[%s1 + $0x20] sm:$0xf]
  %v643 = vld [vmem:[%s1 + $0x24] sm:$0xf]
  %v644 = vld [vmem:[%s1 + $0x28] sm:$0xf]
  %v645 = vld [vmem:[%s1 + $0x2c] sm:$0xf]
  %v646 = vld [vmem:[%s1 + $0x30] sm:$0xf]
  %v647 = vld [vmem:[%s1 + $0x34] sm:$0xf]
  %v648 = vld [vmem:[%s1 + $0x38] sm:$0xf]
  %v649 = vld [vmem:[%s1 + $0x3c] sm:$0xf]
  %v650 = vld [vmem:[%s1 + $0x40] sm:$0xf]
  %v651 = vld [vmem:[%s1 + $0x44] sm:$0xf]
  %v652 = vld [vmem:[%s1 + $0x48] sm:$0xf]
  %v653 = vld [vmem:[%s1 + $0x4c] sm:$0xf]
  %v654 = vld [vmem:[%s1 + $0x50] sm:$0xf]
  %v655 = vld [vmem:[%s1 + $0x54] sm:$0xf]
  %v656 = vld [vmem:[%s1 + $0x58] sm:$0xf]
  %v657 = vld [vmem:[%s1 + $0x5c] sm:$0xf]
  %v658 = vld [vmem:[%s1 + $0x60] sm:$0xf]
  %v659 = vld [vmem:[%s1 + $0x64] sm:$0xf]
  %v660 = vld [vmem:[%s1 + $0x68] sm:$0xf]
  %v661 = vld [vmem:[%s1 + $0x6c] sm:$0xf]
  %v662 = vld [vmem:[%s1 + $0x70] sm:$0xf]
  %v663 = vld [vmem:[%s1 + $0x74] sm:$0xf]
  %v664 = vld [vmem:[%s1 + $0x78] sm:$0xf]
  %v665 = vld [vmem:[%s1 + $0x7c] sm:$0xf]
  %v666 = vld [vmem:[%s1 + $0x80] sm:$0xf]
  %v667 = vld [vmem:[%s1 + $0x84] sm:$0xf]
  %v668 = vld [vmem:[%s1 + $0x88] sm:$0xf]
  %v669 = vld [vmem:[%s1 + $0x8c] sm:$0xf]
  %v798 = vunpack.c.l.b16 %v506
  %v799 = vunpack.c.h.b16 %v506
  %v800 = vunpack.c.l.b16 %v507
  %v801 = vunpack.c.l.b16 %v508
  %v802 = vunpack.c.h.b16 %v508
  %v803 = vunpack.c.l.b16 %v509
  %v804 = vunpack.c.l.b16 %v510
  %v805 = vunpack.c.h.b16 %v510
  %v806 = vunpack.c.l.b16 %v511
  %v807 = vunpack.c.l.b16 %v512
  %v808 = vunpack.c.h.b16 %v512
  %v809 = vunpack.c.l.b16 %v513
  %v810 = vunpack.c.l.b16 %v514
  %v811 = vunpack.c.h.b16 %v514
  %v812 = vunpack.c.l.b16 %v515
  %v813 = vunpack.c.l.b16 %v516
  %v814 = vunpack.c.h.b16 %v516
  %v815 = vunpack.c.l.b16 %v517
  %v816 = vunpack.c.l.b16 %v518
  %v817 = vunpack.c.h.b16 %v518
  %v818 = vunpack.c.l.b16 %v519
  %v819 = vunpack.c.l.b16 %v520
  %v820 = vunpack.c.h.b16 %v520
  %v821 = vunpack.c.l.b16 %v521
  %v822 = vunpack.c.l.b16 %v522
  %v823 = vunpack.c.h.b16 %v522
  %v824 = vunpack.c.l.b16 %v523
  %v825 = vunpack.c.l.b16 %v524
  %v826 = vunpack.c.h.b16 %v524
  %v827 = vunpack.c.l.b16 %v525
  %v828 = vunpack.c.l.b16 %v526
  %v829 = vunpack.c.h.b16 %v526
  %v830 = vunpack.c.l.b16 %v527
  %v831 = vunpack.c.l.b16 %v528
  %v832 = vunpack.c.h.b16 %v528
  %v833 = vunpack.c.l.b16 %v529
  %v834 = vunpack.c.l.b16 %v530
  %v835 = vunpack.c.h.b16 %v530
  %v836 = vunpack.c.l.b16 %v531
  %v837 = vunpack.c.l.b16 %v532
  %v838 = vunpack.c.h.b16 %v532
  %v839 = vunpack.c.l.b16 %v533
  %v840 = vunpack.c.l.b16 %v534
  %v841 = vunpack.c.h.b16 %v534
  %v842 = vunpack.c.l.b16 %v535
  %v843 = vunpack.c.l.b16 %v536
  %v844 = vunpack.c.h.b16 %v536
  %v845 = vunpack.c.l.b16 %v537
  %v846 = vunpack.c.l.b16 %v538
  %v847 = vunpack.c.h.b16 %v538
  %v848 = vunpack.c.l.b16 %v539
  %v849 = vunpack.c.l.b16 %v540
  %v850 = vunpack.c.h.b16 %v540
  %v851 = vunpack.c.l.b16 %v541
  %v852 = vunpack.c.l.b16 %v542
  %v853 = vunpack.c.h.b16 %v542
  %v854 = vunpack.c.l.b16 %v543
  %v855 = vunpack.c.l.b16 %v544
  %v856 = vunpack.c.h.b16 %v544
  %v857 = vunpack.c.l.b16 %v545
  %v858 = vunpack.c.l.b16 %v546
  %v859 = vunpack.c.h.b16 %v546
  %v860 = vunpack.c.l.b16 %v547
  %v861 = vunpack.c.l.b16 %v548
  %v862 = vunpack.c.h.b16 %v548
  %v863 = vunpack.c.l.b16 %v549
  %v864 = vunpack.c.l.b16 %v550
  %v865 = vunpack.c.h.b16 %v550
  %v866 = vunpack.c.l.b16 %v551
  %v867 = vunpack.c.l.b16 %v552
  %v868 = vunpack.c.h.b16 %v552
  %v869 = vunpack.c.l.b16 %v553
  %v870 = vunpack.c.l.b16 %v554
  %v871 = vunpack.c.h.b16 %v554
  %v872 = vunpack.c.l.b16 %v555
  %v873 = vunpack.c.l.b16 %v556
  %v874 = vunpack.c.h.b16 %v556
  %v875 = vunpack.c.l.b16 %v557
  %v876 = vunpack.c.l.b16 %v558
  %v877 = vunpack.c.h.b16 %v558
  %v878 = vunpack.c.l.b16 %v559
  %v879 = vunpack.c.l.b16 %v560
  %v880 = vunpack.c.h.b16 %v560
  %v881 = vunpack.c.l.b16 %v561
  %v882 = vunpack.c.l.b16 %v562
  %v883 = vunpack.c.h.b16 %v562
  %v884 = vunpack.c.l.b16 %v563
  %v885 = vunpack.c.l.b16 %v564
  %v886 = vunpack.c.h.b16 %v564
  %v887 = vunpack.c.l.b16 %v565
  %v888 = vunpack.c.l.b16 %v566
  %v889 = vunpack.c.h.b16 %v566
  %v890 = vunpack.c.l.b16 %v567
  %v891 = vunpack.c.l.b16 %v568
  %v892 = vunpack.c.h.b16 %v568
  %v893 = vunpack.c.l.b16 %v569
  %v894 = vunpack.c.l.b16 %v570
  %v895 = vunpack.c.h.b16 %v570
  %v896 = vunpack.c.l.b16 %v571
  %v897 = vunpack.c.l.b16 %v572
  %v898 = vunpack.c.h.b16 %v572
  %v899 = vunpack.c.l.b16 %v573
  %v900 = vunpack.c.l.b16 %v574
  %v901 = vunpack.c.h.b16 %v574
  %v902 = vunpack.c.l.b16 %v575
  %v903 = vunpack.c.l.b16 %v576
  %v904 = vunpack.c.h.b16 %v576
  %v905 = vunpack.c.l.b16 %v577
  %v906 = vunpack.c.l.b16 %v578
  %v907 = vunpack.c.h.b16 %v578
  %v908 = vunpack.c.l.b16 %v579
  %v909 = vunpack.c.l.b16 %v580
  %v910 = vunpack.c.h.b16 %v580
  %v911 = vunpack.c.l.b16 %v581
  %v912 = vunpack.c.l.b16 %v582
  %v913 = vunpack.c.h.b16 %v582
  %v914 = vunpack.c.l.b16 %v583
  %v915 = vunpack.c.l.b16 %v584
  %v916 = vunpack.c.h.b16 %v584
  %v917 = vunpack.c.l.b16 %v585
  %v918 = vunpack.c.l.b16 %v586
  %v919 = vunpack.c.h.b16 %v586
  %v920 = vunpack.c.l.b16 %v587
  %v921 = vunpack.c.l.b16 %v588
  %v922 = vunpack.c.h.b16 %v588
  %v923 = vunpack.c.l.b16 %v589
  %v924 = vunpack.c.l.b16 %v590
  %v925 = vunpack.c.h.b16 %v590
  %v926 = vunpack.c.l.b16 %v591
  %v927 = vunpack.c.l.b16 %v592
  %v928 = vunpack.c.h.b16 %v592
  %v929 = vunpack.c.l.b16 %v593
  %v930 = vunpack.c.l.b16 %v594
  %v931 = vunpack.c.h.b16 %v594
  %v932 = vunpack.c.l.b16 %v595
  %v933 = vunpack.c.l.b16 %v596
  %v934 = vunpack.c.h.b16 %v596
  %v935 = vunpack.c.l.b16 %v597
  %v936 = vunpack.c.l.b16 %v598
  %v937 = vunpack.c.h.b16 %v598
  %v938 = vunpack.c.l.b16 %v599
  %v939 = vunpack.c.l.b16 %v600
  %v940 = vunpack.c.h.b16 %v600
  %v941 = vunpack.c.l.b16 %v601
  %v942 = vunpack.c.l.b16 %v602
  %v943 = vunpack.c.h.b16 %v602
  %v944 = vunpack.c.l.b16 %v603
  %v945 = vunpack.c.l.b16 %v604
  %v946 = vunpack.c.h.b16 %v604
  %v947 = vunpack.c.l.b16 %v605
  %v948 = vunpack.c.l.b16 %v606
  %v949 = vunpack.c.h.b16 %v606
  %v950 = vunpack.c.l.b16 %v607
  %v951 = vunpack.c.l.b16 %v608
  %v952 = vunpack.c.h.b16 %v608
  %v953 = vunpack.c.l.b16 %v609
  %v954 = vunpack.c.l.b16 %v610
  %v955 = vunpack.c.h.b16 %v610
  %v956 = vunpack.c.l.b16 %v611
  %v957 = vunpack.c.l.b16 %v612
  %v958 = vunpack.c.h.b16 %v612
  %v959 = vunpack.c.l.b16 %v613
  %v960 = vunpack.c.l.b16 %v614
  %v961 = vunpack.c.h.b16 %v614
  %v962 = vunpack.c.l.b16 %v615
  %v963 = vunpack.c.l.b16 %v616
  %v964 = vunpack.c.h.b16 %v616
  %v965 = vunpack.c.l.b16 %v617
  %v966 = vunpack.c.l.b16 %v618
  %v967 = vunpack.c.h.b16 %v618
  %v968 = vunpack.c.l.b16 %v619
  %v969 = vunpack.c.l.b16 %v620
  %v970 = vunpack.c.h.b16 %v620
  %v971 = vunpack.c.l.b16 %v621
  %v972 = vunpack.c.l.b16 %v622
  %v973 = vunpack.c.h.b16 %v622
  %v974 = vunpack.c.l.b16 %v623
  %v975 = vunpack.c.l.b16 %v624
  %v976 = vunpack.c.h.b16 %v624
  %v977 = vunpack.c.l.b16 %v625
  %v978 = vunpack.c.l.b16 %v626
  %v979 = vunpack.c.h.b16 %v626
  %v980 = vunpack.c.l.b16 %v627
  %v981 = vunpack.c.l.b16 %v628
  %v982 = vunpack.c.h.b16 %v628
  %v983 = vunpack.c.l.b16 %v629
  %v984 = vunpack.c.l.b16 %v630
  %v985 = vunpack.c.h.b16 %v630
  %v986 = vunpack.c.l.b16 %v631
  %v987 = vunpack.c.l.b16 %v632
  %v988 = vunpack.c.h.b16 %v632
  %v989 = vunpack.c.l.b16 %v633
  %v990 = vpack.c.b16 %v801, %v798
  %v991 = vpack.c.b16 %v802, %v799
  %v992 = vpack.c.b16 %v803, %v800
  %v993 = vpack.c.b16 %v807, %v804
  %v994 = vpack.c.b16 %v808, %v805
  %v995 = vpack.c.b16 %v809, %v806
  %v996 = vpack.c.b16 %v813, %v810
  %v997 = vpack.c.b16 %v814, %v811
  %v998 = vpack.c.b16 %v815, %v812
  %v999 = vpack.c.b16 %v819, %v816
  %v1000 = vpack.c.b16 %v820, %v817
  %v1001 = vpack.c.b16 %v821, %v818
  %v1002 = vpack.c.b16 %v825, %v822
  %v1003 = vpack.c.b16 %v826, %v823
  %v1004 = vpack.c.b16 %v827, %v824
  %v1005 = vpack.c.b16 %v831, %v828
  %v1006 = vpack.c.b16 %v832, %v829
  %v1007 = vpack.c.b16 %v833, %v830
  %v1008 = vpack.c.b16 %v837, %v834
  %v1009 = vpack.c.b16 %v838, %v835
  %v1010 = vpack.c.b16 %v839, %v836
  %v1011 = vpack.c.b16 %v843, %v840
  %v1012 = vpack.c.b16 %v844, %v841
  %v1013 = vpack.c.b16 %v845, %v842
  %v1014 = vpack.c.b16 %v849, %v846
  %v1015 = vpack.c.b16 %v850, %v847
  %v1016 = vpack.c.b16 %v851, %v848
  %v1017 = vpack.c.b16 %v855, %v852
  %v1018 = vpack.c.b16 %v856, %v853
  %v1019 = vpack.c.b16 %v857, %v854
  %v1020 = vpack.c.b16 %v861, %v858
  %v1021 = vpack.c.b16 %v862, %v859
  %v1022 = vpack.c.b16 %v863, %v860
  %v1023 = vpack.c.b16 %v867, %v864
  %v1024 = vpack.c.b16 %v868, %v865
  %v1025 = vpack.c.b16 %v869, %v866
  %v1026 = vpack.c.b16 %v873, %v870
  %v1027 = vpack.c.b16 %v874, %v871
  %v1028 = vpack.c.b16 %v875, %v872
  %v1029 = vpack.c.b16 %v879, %v876
  %v1030 = vpack.c.b16 %v880, %v877
  %v1031 = vpack.c.b16 %v881, %v878
  %v1032 = vpack.c.b16 %v885, %v882
  %v1033 = vpack.c.b16 %v886, %v883
  %v1034 = vpack.c.b16 %v887, %v884
  %v1035 = vpack.c.b16 %v891, %v888
  %v1036 = vpack.c.b16 %v892, %v889
  %v1037 = vpack.c.b16 %v893, %v890
  %v1038 = vpack.c.b16 %v897, %v894
  %v1039 = vpack.c.b16 %v898, %v895
  %v1040 = vpack.c.b16 %v899, %v896
  %v1041 = vpack.c.b16 %v903, %v900
  %v1042 = vpack.c.b16 %v904, %v901
  %v1043 = vpack.c.b16 %v905, %v902
  %v1044 = vpack.c.b16 %v909, %v906
  %v1045 = vpack.c.b16 %v910, %v907
  %v1046 = vpack.c.b16 %v911, %v908
  %v1047 = vpack.c.b16 %v915, %v912
  %v1048 = vpack.c.b16 %v916, %v913
  %v1049 = vpack.c.b16 %v917, %v914
  %v1050 = vpack.c.b16 %v921, %v918
  %v1051 = vpack.c.b16 %v922, %v919
  %v1052 = vpack.c.b16 %v923, %v920
  %v1053 = vpack.c.b16 %v927, %v924
  %v1054 = vpack.c.b16 %v928, %v925
  %v1055 = vpack.c.b16 %v929, %v926
  %v1056 = vpack.c.b16 %v933, %v930
  %v1057 = vpack.c.b16 %v934, %v931
  %v1058 = vpack.c.b16 %v935, %v932
  %v1059 = vpack.c.b16 %v939, %v936
  %v1060 = vpack.c.b16 %v940, %v937
  %v1061 = vpack.c.b16 %v941, %v938
  %v1062 = vpack.c.b16 %v945, %v942
  %v1063 = vpack.c.b16 %v946, %v943
  %v1064 = vpack.c.b16 %v947, %v944
  %v1065 = vpack.c.b16 %v951, %v948
  %v1066 = vpack.c.b16 %v952, %v949
  %v1067 = vpack.c.b16 %v953, %v950
  %v1068 = vpack.c.b16 %v957, %v954
  %v1069 = vpack.c.b16 %v958, %v955
  %v1070 = vpack.c.b16 %v959, %v956
  %v1071 = vpack.c.b16 %v963, %v960
  %v1072 = vpack.c.b16 %v964, %v961
  %v1073 = vpack.c.b16 %v965, %v962
  %v1074 = vpack.c.b16 %v969, %v966
  %v1075 = vpack.c.b16 %v970, %v967
  %v1076 = vpack.c.b16 %v971, %v968
  %v1077 = vpack.c.b16 %v975, %v972
  %v1078 = vpack.c.b16 %v976, %v973
  %v1079 = vpack.c.b16 %v977, %v974
  %v1080 = vpack.c.b16 %v981, %v978
  %v1081 = vpack.c.b16 %v982, %v979
  %v1082 = vpack.c.b16 %v983, %v980
  %v1083 = vpack.c.b16 %v987, %v984
  %v1084 = vpack.c.b16 %v988, %v985
  %v1085 = vpack.c.b16 %v989, %v986
  %v1186 = vunpack.c.l.b16 %v634
  %v1187 = vunpack.c.l.b16 %v635
  %v1188 = vunpack.c.l.b16 %v636
  %v1189 = vunpack.c.l.b16 %v637
  %v1190 = vunpack.c.l.b16 %v638
  %v1191 = vunpack.c.l.b16 %v639
  %v1192 = vunpack.c.l.b16 %v640
  %v1193 = vunpack.c.l.b16 %v641
  %v1194 = vunpack.c.l.b16 %v642
  %v1195 = vunpack.c.l.b16 %v643
  %v1196 = vunpack.c.l.b16 %v644
  %v1197 = vunpack.c.l.b16 %v645
  %v1198 = vunpack.c.l.b16 %v646
  %v1199 = vunpack.c.l.b16 %v647
  %v1200 = vunpack.c.l.b16 %v648
  %v1201 = vunpack.c.l.b16 %v649
  %v1202 = vunpack.c.l.b16 %v650
  %v1203 = vunpack.c.l.b16 %v651
  %v1204 = vunpack.c.l.b16 %v652
  %v1205 = vunpack.c.l.b16 %v653
  %v1206 = vunpack.c.l.b16 %v654
  %v1207 = vunpack.c.l.b16 %v655
  %v1208 = vunpack.c.l.b16 %v656
  %v1209 = vunpack.c.l.b16 %v657
  %v1210 = vunpack.c.l.b16 %v658
  %v1211 = vunpack.c.l.b16 %v659
  %v1212 = vunpack.c.l.b16 %v660
  %v1213 = vunpack.c.l.b16 %v661
  %v1214 = vunpack.c.l.b16 %v662
  %v1215 = vunpack.c.l.b16 %v663
  %v1216 = vunpack.c.l.b16 %v664
  %v1217 = vunpack.c.l.b16 %v665
  %v1218 = vunpack.c.l.b16 %v666
  %v1219 = vunpack.c.l.b16 %v667
  %v1220 = vunpack.c.l.b16 %v668
  %v1221 = vunpack.c.l.b16 %v669
  %v1222 = vpack.c.b16 %v1187, %v1186
  %v1223 = vpack.c.b16 %v1189, %v1188
  %v1224 = vpack.c.b16 %v1191, %v1190
  %v1225 = vpack.c.b16 %v1193, %v1192
  %v1226 = vpack.c.b16 %v1195, %v1194
  %v1227 = vpack.c.b16 %v1197, %v1196
  %v1228 = vpack.c.b16 %v1199, %v1198
  %v1229 = vpack.c.b16 %v1201, %v1200
  %v1230 = vpack.c.b16 %v1203, %v1202
  %v1231 = vpack.c.b16 %v1205, %v1204
  %v1232 = vpack.c.b16 %v1207, %v1206
  %v1233 = vpack.c.b16 %v1209, %v1208
  %v1234 = vpack.c.b16 %v1211, %v1210
  %v1235 = vpack.c.b16 %v1213, %v1212
  %v1236 = vpack.c.b16 %v1215, %v1214
  %v1237 = vpack.c.b16 %v1217, %v1216
  %v1238 = vpack.c.b16 %v1219, %v1218
  %v1239 = vpack.c.b16 %v1221, %v1220
  %vm1258 = vcmask 261120
  %v1260 = vsel %vm1258, %v992, 0
  %v1263 = vsel %vm1258, %v995, 0
  %v1266 = vsel %vm1258, %v998, 0
  %v1269 = vsel %vm1258, %v1001, 0
  %v1272 = vsel %vm1258, %v1004, 0
  %v1275 = vsel %vm1258, %v1007, 0
  %v1278 = vsel %vm1258, %v1010, 0
  %v1281 = vsel %vm1258, %v1013, 0
  %v1284 = vsel %vm1258, %v1016, 0
  %v1287 = vsel %vm1258, %v1019, 0
  %v1290 = vsel %vm1258, %v1022, 0
  %v1293 = vsel %vm1258, %v1025, 0
  %v1296 = vsel %vm1258, %v1028, 0
  %v1299 = vsel %vm1258, %v1031, 0
  %v1302 = vsel %vm1258, %v1034, 0
  %v1305 = vsel %vm1258, %v1037, 0
  %v1308 = vsel %vm1258, %v1040, 0
  %v1311 = vsel %vm1258, %v1043, 0
  %v1314 = vsel %vm1258, %v1046, 0
  %v1317 = vsel %vm1258, %v1049, 0
  %v1320 = vsel %vm1258, %v1052, 0
  %v1323 = vsel %vm1258, %v1055, 0
  %v1326 = vsel %vm1258, %v1058, 0
  %v1329 = vsel %vm1258, %v1061, 0
  %v1332 = vsel %vm1258, %v1064, 0
  %v1335 = vsel %vm1258, %v1067, 0
  %v1338 = vsel %vm1258, %v1070, 0
  %v1341 = vsel %vm1258, %v1073, 0
  %v1344 = vsel %vm1258, %v1076, 0
  %v1347 = vsel %vm1258, %v1079, 0
  %v1350 = vsel %vm1258, %v1082, 0
  %v1353 = vsel %vm1258, %v1085, 0
  %1355 = vmatprep.subr.bf16.mxu0 0
  %1356 = vmatpush1.bf16.msra.mxu0 %v1229
  %1357 = vmatprep.subr.bf16.mxu0 0
  %1358 = vmatpush1.bf16.msra.mxu0 %v1228
  %1359 = vmatprep.subr.bf16.mxu0 0
  %1360 = vmatpush1.bf16.msra.mxu0 %v1227
  %1361 = vmatprep.subr.bf16.mxu0 0
  %1362 = vmatpush1.bf16.msra.mxu0 %v1226
  %1363 = vmatprep.subr.bf16.mxu0 0
  %1364 = vmatpush1.bf16.msra.mxu0 %v1225
  %1365 = vmatprep.subr.bf16.mxu0 0
  %1366 = vmatpush1.bf16.msra.mxu0 %v1224
  %1367 = vmatprep.subr.bf16.mxu0 0
  %1368 = vmatpush1.bf16.msra.mxu0 %v1223
  %1369 = vmatprep.subr.bf16.mxu0 0
  %1370 = vmatpush1.bf16.msra.mxu0 %v1222
  %1371 = vmatprep.subr.bf16.mxu0 0
  %1372 = vmatpush2.bf16.msra.mxu0 %v1237
  %1373 = vmatprep.subr.bf16.mxu0 0
  %1374 = vmatpush2.bf16.msra.mxu0 %v1236
  %1375 = vmatprep.subr.bf16.mxu0 0
  %1376 = vmatpush2.bf16.msra.mxu0 %v1235
  %1377 = vmatprep.subr.bf16.mxu0 0
  %1378 = vmatpush2.bf16.msra.mxu0 %v1234
  %1379 = vmatprep.subr.bf16.mxu0 0
  %1380 = vmatpush2.bf16.msra.mxu0 %v1233
  %1381 = vmatprep.subr.bf16.mxu0 0
  %1382 = vmatpush2.bf16.msra.mxu0 %v1232
  %1383 = vmatprep.subr.bf16.mxu0 0
  %1384 = vmatpush2.bf16.msra.mxu0 %v1231
  %1385 = vmatprep.subr.bf16.mxu0 0
  %1386 = vmatpush2.bf16.msra.mxu0 %v1230
  %1387 = vmatprep.mubr.bf16.mxu0 %v991
  %1388 = vmatmul.mubr.bf16.gmra.mxu0 %v990
  %v1389 = vpop.f32.mrf.mxu0
  %v1390 = vadd.f32 0.0, %v1389
  %v1391 = vpop.f32.mrf.mxu0
  %v1392 = vpop.f32.mrf.mxu0
  %v1393 = vadd.f32 0.0, %v1392
  %v1394 = vpop.f32.mrf.mxu0
  %1395 = vmatprep.mubr.bf16.mxu0 %v994
  %1396 = vmatmul.mubr.bf16.gmra.mxu0 %v993
  %v1397 = vpop.f32.mrf.mxu0
  %v1398 = vadd.f32 0.0, %v1397
  %v1399 = vpop.f32.mrf.mxu0
  %v1400 = vpop.f32.mrf.mxu0
  %v1401 = vadd.f32 0.0, %v1400
  %v1402 = vpop.f32.mrf.mxu0
  %1403 = vmatprep.mubr.bf16.mxu0 %v997
  %1404 = vmatmul.mubr.bf16.gmra.mxu0 %v996
  %v1405 = vpop.f32.mrf.mxu0
  %v1406 = vadd.f32 0.0, %v1405
  %v1407 = vpop.f32.mrf.mxu0
  %v1408 = vpop.f32.mrf.mxu0
  %v1409 = vadd.f32 0.0, %v1408
  %v1410 = vpop.f32.mrf.mxu0
  %1411 = vmatprep.mubr.bf16.mxu0 %v1000
  %1412 = vmatmul.mubr.bf16.gmra.mxu0 %v999
  %v1413 = vpop.f32.mrf.mxu0
  %v1414 = vadd.f32 0.0, %v1413
  %v1415 = vpop.f32.mrf.mxu0
  %v1416 = vpop.f32.mrf.mxu0
  %v1417 = vadd.f32 0.0, %v1416
  %v1418 = vpop.f32.mrf.mxu0
  %1419 = vmatprep.mubr.bf16.mxu0 %v1003
  %1420 = vmatmul.mubr.bf16.gmra.mxu0 %v1002
  %v1421 = vpop.f32.mrf.mxu0
  %v1422 = vadd.f32 0.0, %v1421
  %v1423 = vpop.f32.mrf.mxu0
  %v1424 = vpop.f32.mrf.mxu0
  %v1425 = vadd.f32 0.0, %v1424
  %v1426 = vpop.f32.mrf.mxu0
  %1427 = vmatprep.mubr.bf16.mxu0 %v1006
  %1428 = vmatmul.mubr.bf16.gmra.mxu0 %v1005
  %v1429 = vpop.f32.mrf.mxu0
  %v1430 = vadd.f32 0.0, %v1429
  %v1431 = vpop.f32.mrf.mxu0
  %v1432 = vpop.f32.mrf.mxu0
  %v1433 = vadd.f32 0.0, %v1432
  %v1434 = vpop.f32.mrf.mxu0
  %1435 = vmatprep.mubr.bf16.mxu0 %v1009
  %1436 = vmatmul.mubr.bf16.gmra.mxu0 %v1008
  %v1437 = vpop.f32.mrf.mxu0
  %v1438 = vadd.f32 0.0, %v1437
  %v1439 = vpop.f32.mrf.mxu0
  %v1440 = vpop.f32.mrf.mxu0
  %v1441 = vadd.f32 0.0, %v1440
  %v1442 = vpop.f32.mrf.mxu0
  %1443 = vmatprep.mubr.bf16.mxu0 %v1012
  %1444 = vmatmul.mubr.bf16.gmra.mxu0 %v1011
  %v1445 = vpop.f32.mrf.mxu0
  %v1446 = vadd.f32 0.0, %v1445
  %v1447 = vpop.f32.mrf.mxu0
  %v1448 = vpop.f32.mrf.mxu0
  %v1449 = vadd.f32 0.0, %v1448
  %v1450 = vpop.f32.mrf.mxu0
  %1451 = vmatprep.mubr.bf16.mxu0 %v1015
  %1452 = vmatmul.mubr.bf16.gmra.mxu0 %v1014
  %v1453 = vpop.f32.mrf.mxu0
  %v1454 = vadd.f32 0.0, %v1453
  %v1455 = vpop.f32.mrf.mxu0
  %v1456 = vpop.f32.mrf.mxu0
  %v1457 = vadd.f32 0.0, %v1456
  %v1458 = vpop.f32.mrf.mxu0
  %1459 = vmatprep.mubr.bf16.mxu0 %v1018
  %1460 = vmatmul.mubr.bf16.gmra.mxu0 %v1017
  %v1461 = vpop.f32.mrf.mxu0
  %v1462 = vadd.f32 0.0, %v1461
  %v1463 = vpop.f32.mrf.mxu0
  %v1464 = vpop.f32.mrf.mxu0
  %v1465 = vadd.f32 0.0, %v1464
  %v1466 = vpop.f32.mrf.mxu0
  %1467 = vmatprep.mubr.bf16.mxu0 %v1021
  %1468 = vmatmul.mubr.bf16.gmra.mxu0 %v1020
  %v1469 = vpop.f32.mrf.mxu0
  %v1470 = vadd.f32 0.0, %v1469
  %v1471 = vpop.f32.mrf.mxu0
  %v1472 = vpop.f32.mrf.mxu0
  %v1473 = vadd.f32 0.0, %v1472
  %v1474 = vpop.f32.mrf.mxu0
  %1475 = vmatprep.mubr.bf16.mxu0 %v1024
  %1476 = vmatmul.mubr.bf16.gmra.mxu0 %v1023
  %v1477 = vpop.f32.mrf.mxu0
  %v1478 = vadd.f32 0.0, %v1477
  %v1479 = vpop.f32.mrf.mxu0
  %v1480 = vpop.f32.mrf.mxu0
  %v1481 = vadd.f32 0.0, %v1480
  %v1482 = vpop.f32.mrf.mxu0
  %1483 = vmatprep.mubr.bf16.mxu0 %v1027
  %1484 = vmatmul.mubr.bf16.gmra.mxu0 %v1026
  %v1485 = vpop.f32.mrf.mxu0
  %v1486 = vadd.f32 0.0, %v1485
  %v1487 = vpop.f32.mrf.mxu0
  %v1488 = vpop.f32.mrf.mxu0
  %v1489 = vadd.f32 0.0, %v1488
  %v1490 = vpop.f32.mrf.mxu0
  %1491 = vmatprep.mubr.bf16.mxu0 %v1030
  %1492 = vmatmul.mubr.bf16.gmra.mxu0 %v1029
  %v1493 = vpop.f32.mrf.mxu0
  %v1494 = vadd.f32 0.0, %v1493
  %v1495 = vpop.f32.mrf.mxu0
  %v1496 = vpop.f32.mrf.mxu0
  %v1497 = vadd.f32 0.0, %v1496
  %v1498 = vpop.f32.mrf.mxu0
  %1499 = vmatprep.mubr.bf16.mxu0 %v1033
  %1500 = vmatmul.mubr.bf16.gmra.mxu0 %v1032
  %v1501 = vpop.f32.mrf.mxu0
  %v1502 = vadd.f32 0.0, %v1501
  %v1503 = vpop.f32.mrf.mxu0
  %v1504 = vpop.f32.mrf.mxu0
  %v1505 = vadd.f32 0.0, %v1504
  %v1506 = vpop.f32.mrf.mxu0
  %1507 = vmatprep.mubr.bf16.mxu0 %v1036
  %1508 = vmatmul.mubr.bf16.gmra.mxu0 %v1035
  %v1509 = vpop.f32.mrf.mxu0
  %v1510 = vadd.f32 0.0, %v1509
  %v1511 = vpop.f32.mrf.mxu0
  %v1512 = vpop.f32.mrf.mxu0
  %v1513 = vadd.f32 0.0, %v1512
  %v1514 = vpop.f32.mrf.mxu0
  %1515 = vmatprep.mubr.bf16.mxu0 %v1039
  %1516 = vmatmul.mubr.bf16.gmra.mxu0 %v1038
  %v1517 = vpop.f32.mrf.mxu0
  %v1518 = vadd.f32 0.0, %v1517
  %v1519 = vpop.f32.mrf.mxu0
  %v1520 = vpop.f32.mrf.mxu0
  %v1521 = vadd.f32 0.0, %v1520
  %v1522 = vpop.f32.mrf.mxu0
  %1523 = vmatprep.mubr.bf16.mxu0 %v1042
  %1524 = vmatmul.mubr.bf16.gmra.mxu0 %v1041
  %v1525 = vpop.f32.mrf.mxu0
  %v1526 = vadd.f32 0.0, %v1525
  %v1527 = vpop.f32.mrf.mxu0
  %v1528 = vpop.f32.mrf.mxu0
  %v1529 = vadd.f32 0.0, %v1528
  %v1530 = vpop.f32.mrf.mxu0
  %1531 = vmatprep.mubr.bf16.mxu0 %v1045
  %1532 = vmatmul.mubr.bf16.gmra.mxu0 %v1044
  %v1533 = vpop.f32.mrf.mxu0
  %v1534 = vadd.f32 0.0, %v1533
  %v1535 = vpop.f32.mrf.mxu0
  %v1536 = vpop.f32.mrf.mxu0
  %v1537 = vadd.f32 0.0, %v1536
  %v1538 = vpop.f32.mrf.mxu0
  %1539 = vmatprep.mubr.bf16.mxu0 %v1048
  %1540 = vmatmul.mubr.bf16.gmra.mxu0 %v1047
  %v1541 = vpop.f32.mrf.mxu0
  %v1542 = vadd.f32 0.0, %v1541
  %v1543 = vpop.f32.mrf.mxu0
  %v1544 = vpop.f32.mrf.mxu0
  %v1545 = vadd.f32 0.0, %v1544
  %v1546 = vpop.f32.mrf.mxu0
  %1547 = vmatprep.mubr.bf16.mxu0 %v1051
  %1548 = vmatmul.mubr.bf16.gmra.mxu0 %v1050
  %v1549 = vpop.f32.mrf.mxu0
  %v1550 = vadd.f32 0.0, %v1549
  %v1551 = vpop.f32.mrf.mxu0
  %v1552 = vpop.f32.mrf.mxu0
  %v1553 = vadd.f32 0.0, %v1552
  %v1554 = vpop.f32.mrf.mxu0
  %1555 = vmatprep.mubr.bf16.mxu0 %v1054
  %1556 = vmatmul.mubr.bf16.gmra.mxu0 %v1053
  %v1557 = vpop.f32.mrf.mxu0
  %v1558 = vadd.f32 0.0, %v1557
  %v1559 = vpop.f32.mrf.mxu0
  %v1560 = vpop.f32.mrf.mxu0
  %v1561 = vadd.f32 0.0, %v1560
  %v1562 = vpop.f32.mrf.mxu0
  %1563 = vmatprep.mubr.bf16.mxu0 %v1057
  %1564 = vmatmul.mubr.bf16.gmra.mxu0 %v1056
  %v1565 = vpop.f32.mrf.mxu0
  %v1566 = vadd.f32 0.0, %v1565
  %v1567 = vpop.f32.mrf.mxu0
  %v1568 = vpop.f32.mrf.mxu0
  %v1569 = vadd.f32 0.0, %v1568
  %v1570 = vpop.f32.mrf.mxu0
  %1571 = vmatprep.mubr.bf16.mxu0 %v1060
  %1572 = vmatmul.mubr.bf16.gmra.mxu0 %v1059
  %v1573 = vpop.f32.mrf.mxu0
  %v1574 = vadd.f32 0.0, %v1573
  %v1575 = vpop.f32.mrf.mxu0
  %v1576 = vpop.f32.mrf.mxu0
  %v1577 = vadd.f32 0.0, %v1576
  %v1578 = vpop.f32.mrf.mxu0
  %1579 = vmatprep.mubr.bf16.mxu0 %v1063
  %1580 = vmatmul.mubr.bf16.gmra.mxu0 %v1062
  %v1581 = vpop.f32.mrf.mxu0
  %v1582 = vadd.f32 0.0, %v1581
  %v1583 = vpop.f32.mrf.mxu0
  %v1584 = vpop.f32.mrf.mxu0
  %v1585 = vadd.f32 0.0, %v1584
  %v1586 = vpop.f32.mrf.mxu0
  %1587 = vmatprep.mubr.bf16.mxu0 %v1066
  %1588 = vmatmul.mubr.bf16.gmra.mxu0 %v1065
  %v1589 = vpop.f32.mrf.mxu0
  %v1590 = vadd.f32 0.0, %v1589
  %v1591 = vpop.f32.mrf.mxu0
  %v1592 = vpop.f32.mrf.mxu0
  %v1593 = vadd.f32 0.0, %v1592
  %v1594 = vpop.f32.mrf.mxu0
  %1595 = vmatprep.mubr.bf16.mxu0 %v1069
  %1596 = vmatmul.mubr.bf16.gmra.mxu0 %v1068
  %v1597 = vpop.f32.mrf.mxu0
  %v1598 = vadd.f32 0.0, %v1597
  %v1599 = vpop.f32.mrf.mxu0
  %v1600 = vpop.f32.mrf.mxu0
  %v1601 = vadd.f32 0.0, %v1600
  %v1602 = vpop.f32.mrf.mxu0
  %1603 = vmatprep.mubr.bf16.mxu0 %v1072
  %1604 = vmatmul.mubr.bf16.gmra.mxu0 %v1071
  %v1605 = vpop.f32.mrf.mxu0
  %v1606 = vadd.f32 0.0, %v1605
  %v1607 = vpop.f32.mrf.mxu0
  %v1608 = vpop.f32.mrf.mxu0
  %v1609 = vadd.f32 0.0, %v1608
  %v1610 = vpop.f32.mrf.mxu0
  %1611 = vmatprep.mubr.bf16.mxu0 %v1075
  %1612 = vmatmul.mubr.bf16.gmra.mxu0 %v1074
  %v1613 = vpop.f32.mrf.mxu0
  %v1614 = vadd.f32 0.0, %v1613
  %v1615 = vpop.f32.mrf.mxu0
  %v1616 = vpop.f32.mrf.mxu0
  %v1617 = vadd.f32 0.0, %v1616
  %v1618 = vpop.f32.mrf.mxu0
  %1619 = vmatprep.mubr.bf16.mxu0 %v1078
  %1620 = vmatmul.mubr.bf16.gmra.mxu0 %v1077
  %v1621 = vpop.f32.mrf.mxu0
  %v1622 = vadd.f32 0.0, %v1621
  %v1623 = vpop.f32.mrf.mxu0
  %v1624 = vpop.f32.mrf.mxu0
  %v1625 = vadd.f32 0.0, %v1624
  %v1626 = vpop.f32.mrf.mxu0
  %1627 = vmatprep.mubr.bf16.mxu0 %v1081
  %1628 = vmatmul.mubr.bf16.gmra.mxu0 %v1080
  %v1629 = vpop.f32.mrf.mxu0
  %v1630 = vadd.f32 0.0, %v1629
  %v1631 = vpop.f32.mrf.mxu0
  %v1632 = vpop.f32.mrf.mxu0
  %v1633 = vadd.f32 0.0, %v1632
  %v1634 = vpop.f32.mrf.mxu0
  %1635 = vmatprep.mubr.bf16.mxu0 %v1084
  %1636 = vmatmul.mubr.bf16.gmra.mxu0 %v1083
  %v1637 = vpop.f32.mrf.mxu0
  %v1638 = vadd.f32 0.0, %v1637
  %v1639 = vpop.f32.mrf.mxu0
  %v1640 = vpop.f32.mrf.mxu0
  %v1641 = vadd.f32 0.0, %v1640
  %v1642 = vpop.f32.mrf.mxu0
  %1643 = vdwg.mxu0
  %1644 = vmatprep.subr.bf16.mxu0 0
  %1645 = vmatpush1.bf16.msra.mxu0 0
  %1646 = vmatprep.subr.bf16.mxu0 0
  %1647 = vmatpush1.bf16.msra.mxu0 0
  %1648 = vmatprep.subr.bf16.mxu0 0
  %1649 = vmatpush1.bf16.msra.mxu0 0
  %1650 = vmatprep.subr.bf16.mxu0 0
  %1651 = vmatpush1.bf16.msra.mxu0 0
  %1652 = vmatprep.subr.bf16.mxu0 0
  %1653 = vmatpush1.bf16.msra.mxu0 0
  %1654 = vmatprep.subr.bf16.mxu0 0
  %1655 = vmatpush1.bf16.msra.mxu0 0
  %1656 = vmatprep.subr.bf16.mxu0 0
  %1657 = vmatpush1.bf16.msra.mxu0 %v1239
  %1658 = vmatprep.subr.bf16.mxu0 0
  %1659 = vmatpush1.bf16.msra.mxu0 %v1238
  %1660 = vmatprep.subr.bf16.mxu0 0
  %1661 = vmatpush2.bf16.msra.mxu0 0
  %1662 = vmatprep.subr.bf16.mxu0 0
  %1663 = vmatpush2.bf16.msra.mxu0 0
  %1664 = vmatprep.subr.bf16.mxu0 0
  %1665 = vmatpush2.bf16.msra.mxu0 0
  %1666 = vmatprep.subr.bf16.mxu0 0
  %1667 = vmatpush2.bf16.msra.mxu0 0
  %1668 = vmatprep.subr.bf16.mxu0 0
  %1669 = vmatpush2.bf16.msra.mxu0 0
  %1670 = vmatprep.subr.bf16.mxu0 0
  %1671 = vmatpush2.bf16.msra.mxu0 0
  %1672 = vmatprep.subr.bf16.mxu0 0
  %1673 = vmatpush2.bf16.msra.mxu0 0
  %1674 = vmatprep.subr.bf16.mxu0 0
  %1675 = vmatpush2.bf16.msra.mxu0 0
  %1676 = vmatprep.mubr.bf16.mxu0 0
  %1677 = vmatmul.mubr.bf16.gmra.mxu0 %v1260
  %v1678 = vpop.f32.mrf.mxu0
  %v1679 = vadd.f32 %v1390, %v1678
  %v1680 = vpop.f32.mrf.mxu0
  %v1681 = vpop.f32.mrf.mxu0
  %v1682 = vadd.f32 %v1393, %v1681
  %v1683 = vpop.f32.mrf.mxu0
  %1684 = vmatprep.mubr.bf16.mxu0 0
  %1685 = vmatmul.mubr.bf16.gmra.mxu0 %v1263
  %v1686 = vpop.f32.mrf.mxu0
  %v1687 = vadd.f32 %v1398, %v1686
  %v1688 = vpop.f32.mrf.mxu0
  %v1689 = vpop.f32.mrf.mxu0
  %v1690 = vadd.f32 %v1401, %v1689
  %v1691 = vpop.f32.mrf.mxu0
  %1692 = vmatprep.mubr.bf16.mxu0 0
  %1693 = vmatmul.mubr.bf16.gmra.mxu0 %v1266
  %v1694 = vpop.f32.mrf.mxu0
  %v1695 = vadd.f32 %v1406, %v1694
  %v1696 = vpop.f32.mrf.mxu0
  %v1697 = vpop.f32.mrf.mxu0
  %v1698 = vadd.f32 %v1409, %v1697
  %v1699 = vpop.f32.mrf.mxu0
  %1700 = vmatprep.mubr.bf16.mxu0 0
  %1701 = vmatmul.mubr.bf16.gmra.mxu0 %v1269
  %v1702 = vpop.f32.mrf.mxu0
  %v1703 = vadd.f32 %v1414, %v1702
  %v1704 = vpop.f32.mrf.mxu0
  %v1705 = vpop.f32.mrf.mxu0
  %v1706 = vadd.f32 %v1417, %v1705
  %v1707 = vpop.f32.mrf.mxu0
  %1708 = vmatprep.mubr.bf16.mxu0 0
  %1709 = vmatmul.mubr.bf16.gmra.mxu0 %v1272
  %v1710 = vpop.f32.mrf.mxu0
  %v1711 = vadd.f32 %v1422, %v1710
  %v1712 = vpop.f32.mrf.mxu0
  %v1713 = vpop.f32.mrf.mxu0
  %v1714 = vadd.f32 %v1425, %v1713
  %v1715 = vpop.f32.mrf.mxu0
  %1716 = vmatprep.mubr.bf16.mxu0 0
  %1717 = vmatmul.mubr.bf16.gmra.mxu0 %v1275
  %v1718 = vpop.f32.mrf.mxu0
  %v1719 = vadd.f32 %v1430, %v1718
  %v1720 = vpop.f32.mrf.mxu0
  %v1721 = vpop.f32.mrf.mxu0
  %v1722 = vadd.f32 %v1433, %v1721
  %v1723 = vpop.f32.mrf.mxu0
  %1724 = vmatprep.mubr.bf16.mxu0 0
  %1725 = vmatmul.mubr.bf16.gmra.mxu0 %v1278
  %v1726 = vpop.f32.mrf.mxu0
  %v1727 = vadd.f32 %v1438, %v1726
  %v1728 = vpop.f32.mrf.mxu0
  %v1729 = vpop.f32.mrf.mxu0
  %v1730 = vadd.f32 %v1441, %v1729
  %v1731 = vpop.f32.mrf.mxu0
  %1732 = vmatprep.mubr.bf16.mxu0 0
  %1733 = vmatmul.mubr.bf16.gmra.mxu0 %v1281
  %v1734 = vpop.f32.mrf.mxu0
  %v1735 = vadd.f32 %v1446, %v1734
  %v1736 = vpop.f32.mrf.mxu0
  %v1737 = vpop.f32.mrf.mxu0
  %v1738 = vadd.f32 %v1449, %v1737
  %v1739 = vpop.f32.mrf.mxu0
  %1740 = vmatprep.mubr.bf16.mxu0 0
  %1741 = vmatmul.mubr.bf16.gmra.mxu0 %v1284
  %v1742 = vpop.f32.mrf.mxu0
  %v1743 = vadd.f32 %v1454, %v1742
  %v1744 = vpop.f32.mrf.mxu0
  %v1745 = vpop.f32.mrf.mxu0
  %v1746 = vadd.f32 %v1457, %v1745
  %v1747 = vpop.f32.mrf.mxu0
  %1748 = vmatprep.mubr.bf16.mxu0 0
  %1749 = vmatmul.mubr.bf16.gmra.mxu0 %v1287
  %v1750 = vpop.f32.mrf.mxu0
  %v1751 = vadd.f32 %v1462, %v1750
  %v1752 = vpop.f32.mrf.mxu0
  %v1753 = vpop.f32.mrf.mxu0
  %v1754 = vadd.f32 %v1465, %v1753
  %v1755 = vpop.f32.mrf.mxu0
  %1756 = vmatprep.mubr.bf16.mxu0 0
  %1757 = vmatmul.mubr.bf16.gmra.mxu0 %v1290
  %v1758 = vpop.f32.mrf.mxu0
  %v1759 = vadd.f32 %v1470, %v1758
  %v1760 = vpop.f32.mrf.mxu0
  %v1761 = vpop.f32.mrf.mxu0
  %v1762 = vadd.f32 %v1473, %v1761
  %v1763 = vpop.f32.mrf.mxu0
  %1764 = vmatprep.mubr.bf16.mxu0 0
  %1765 = vmatmul.mubr.bf16.gmra.mxu0 %v1293
  %v1766 = vpop.f32.mrf.mxu0
  %v1767 = vadd.f32 %v1478, %v1766
  %v1768 = vpop.f32.mrf.mxu0
  %v1769 = vpop.f32.mrf.mxu0
  %v1770 = vadd.f32 %v1481, %v1769
  %v1771 = vpop.f32.mrf.mxu0
  %1772 = vmatprep.mubr.bf16.mxu0 0
  %1773 = vmatmul.mubr.bf16.gmra.mxu0 %v1296
  %v1774 = vpop.f32.mrf.mxu0
  %v1775 = vadd.f32 %v1486, %v1774
  %v1776 = vpop.f32.mrf.mxu0
  %v1777 = vpop.f32.mrf.mxu0
  %v1778 = vadd.f32 %v1489, %v1777
  %v1779 = vpop.f32.mrf.mxu0
  %1780 = vmatprep.mubr.bf16.mxu0 0
  %1781 = vmatmul.mubr.bf16.gmra.mxu0 %v1299
  %v1782 = vpop.f32.mrf.mxu0
  %v1783 = vadd.f32 %v1494, %v1782
  %v1784 = vpop.f32.mrf.mxu0
  %v1785 = vpop.f32.mrf.mxu0
  %v1786 = vadd.f32 %v1497, %v1785
  %v1787 = vpop.f32.mrf.mxu0
  %1788 = vmatprep.mubr.bf16.mxu0 0
  %1789 = vmatmul.mubr.bf16.gmra.mxu0 %v1302
  %v1790 = vpop.f32.mrf.mxu0
  %v1791 = vadd.f32 %v1502, %v1790
  %v1792 = vpop.f32.mrf.mxu0
  %v1793 = vpop.f32.mrf.mxu0
  %v1794 = vadd.f32 %v1505, %v1793
  %v1795 = vpop.f32.mrf.mxu0
  %1796 = vmatprep.mubr.bf16.mxu0 0
  %1797 = vmatmul.mubr.bf16.gmra.mxu0 %v1305
  %v1798 = vpop.f32.mrf.mxu0
  %v1799 = vadd.f32 %v1510, %v1798
  %v1800 = vpop.f32.mrf.mxu0
  %v1801 = vpop.f32.mrf.mxu0
  %v1802 = vadd.f32 %v1513, %v1801
  %v1803 = vpop.f32.mrf.mxu0
  %1804 = vmatprep.mubr.bf16.mxu0 0
  %1805 = vmatmul.mubr.bf16.gmra.mxu0 %v1308
  %v1806 = vpop.f32.mrf.mxu0
  %v1807 = vadd.f32 %v1518, %v1806
  %v1808 = vpop.f32.mrf.mxu0
  %v1809 = vpop.f32.mrf.mxu0
  %v1810 = vadd.f32 %v1521, %v1809
  %v1811 = vpop.f32.mrf.mxu0
  %1812 = vmatprep.mubr.bf16.mxu0 0
  %1813 = vmatmul.mubr.bf16.gmra.mxu0 %v1311
  %v1814 = vpop.f32.mrf.mxu0
  %v1815 = vadd.f32 %v1526, %v1814
  %v1816 = vpop.f32.mrf.mxu0
  %v1817 = vpop.f32.mrf.mxu0
  %v1818 = vadd.f32 %v1529, %v1817
  %v1819 = vpop.f32.mrf.mxu0
  %1820 = vmatprep.mubr.bf16.mxu0 0
  %1821 = vmatmul.mubr.bf16.gmra.mxu0 %v1314
  %v1822 = vpop.f32.mrf.mxu0
  %v1823 = vadd.f32 %v1534, %v1822
  %v1824 = vpop.f32.mrf.mxu0
  %v1825 = vpop.f32.mrf.mxu0
  %v1826 = vadd.f32 %v1537, %v1825
  %v1827 = vpop.f32.mrf.mxu0
  %1828 = vmatprep.mubr.bf16.mxu0 0
  %1829 = vmatmul.mubr.bf16.gmra.mxu0 %v1317
  %v1830 = vpop.f32.mrf.mxu0
  %v1831 = vadd.f32 %v1542, %v1830
  %v1832 = vpop.f32.mrf.mxu0
  %v1833 = vpop.f32.mrf.mxu0
  %v1834 = vadd.f32 %v1545, %v1833
  %v1835 = vpop.f32.mrf.mxu0
  %1836 = vmatprep.mubr.bf16.mxu0 0
  %1837 = vmatmul.mubr.bf16.gmra.mxu0 %v1320
  %v1838 = vpop.f32.mrf.mxu0
  %v1839 = vadd.f32 %v1550, %v1838
  %v1840 = vpop.f32.mrf.mxu0
  %v1841 = vpop.f32.mrf.mxu0
  %v1842 = vadd.f32 %v1553, %v1841
  %v1843 = vpop.f32.mrf.mxu0
  %1844 = vmatprep.mubr.bf16.mxu0 0
  %1845 = vmatmul.mubr.bf16.gmra.mxu0 %v1323
  %v1846 = vpop.f32.mrf.mxu0
  %v1847 = vadd.f32 %v1558, %v1846
  %v1848 = vpop.f32.mrf.mxu0
  %v1849 = vpop.f32.mrf.mxu0
  %v1850 = vadd.f32 %v1561, %v1849
  %v1851 = vpop.f32.mrf.mxu0
  %1852 = vmatprep.mubr.bf16.mxu0 0
  %1853 = vmatmul.mubr.bf16.gmra.mxu0 %v1326
  %v1854 = vpop.f32.mrf.mxu0
  %v1855 = vadd.f32 %v1566, %v1854
  %v1856 = vpop.f32.mrf.mxu0
  %v1857 = vpop.f32.mrf.mxu0
  %v1858 = vadd.f32 %v1569, %v1857
  %v1859 = vpop.f32.mrf.mxu0
  %1860 = vmatprep.mubr.bf16.mxu0 0
  %1861 = vmatmul.mubr.bf16.gmra.mxu0 %v1329
  %v1862 = vpop.f32.mrf.mxu0
  %v1863 = vadd.f32 %v1574, %v1862
  %v1864 = vpop.f32.mrf.mxu0
  %v1865 = vpop.f32.mrf.mxu0
  %v1866 = vadd.f32 %v1577, %v1865
  %v1867 = vpop.f32.mrf.mxu0
  %1868 = vmatprep.mubr.bf16.mxu0 0
  %1869 = vmatmul.mubr.bf16.gmra.mxu0 %v1332
  %v1870 = vpop.f32.mrf.mxu0
  %v1871 = vadd.f32 %v1582, %v1870
  %v1872 = vpop.f32.mrf.mxu0
  %v1873 = vpop.f32.mrf.mxu0
  %v1874 = vadd.f32 %v1585, %v1873
  %v1875 = vpop.f32.mrf.mxu0
  %1876 = vmatprep.mubr.bf16.mxu0 0
  %1877 = vmatmul.mubr.bf16.gmra.mxu0 %v1335
  %v1878 = vpop.f32.mrf.mxu0
  %v1879 = vadd.f32 %v1590, %v1878
  %v1880 = vpop.f32.mrf.mxu0
  %v1881 = vpop.f32.mrf.mxu0
  %v1882 = vadd.f32 %v1593, %v1881
  %v1883 = vpop.f32.mrf.mxu0
  %1884 = vmatprep.mubr.bf16.mxu0 0
  %1885 = vmatmul.mubr.bf16.gmra.mxu0 %v1338
  %v1886 = vpop.f32.mrf.mxu0
  %v1887 = vadd.f32 %v1598, %v1886
  %v1888 = vpop.f32.mrf.mxu0
  %v1889 = vpop.f32.mrf.mxu0
  %v1890 = vadd.f32 %v1601, %v1889
  %v1891 = vpop.f32.mrf.mxu0
  %1892 = vmatprep.mubr.bf16.mxu0 0
  %1893 = vmatmul.mubr.bf16.gmra.mxu0 %v1341
  %v1894 = vpop.f32.mrf.mxu0
  %v1895 = vadd.f32 %v1606, %v1894
  %v1896 = vpop.f32.mrf.mxu0
  %v1897 = vpop.f32.mrf.mxu0
  %v1898 = vadd.f32 %v1609, %v1897
  %v1899 = vpop.f32.mrf.mxu0
  %1900 = vmatprep.mubr.bf16.mxu0 0
  %1901 = vmatmul.mubr.bf16.gmra.mxu0 %v1344
  %v1902 = vpop.f32.mrf.mxu0
  %v1903 = vadd.f32 %v1614, %v1902
  %v1904 = vpop.f32.mrf.mxu0
  %v1905 = vpop.f32.mrf.mxu0
  %v1906 = vadd.f32 %v1617, %v1905
  %v1907 = vpop.f32.mrf.mxu0
  %1908 = vmatprep.mubr.bf16.mxu0 0
  %1909 = vmatmul.mubr.bf16.gmra.mxu0 %v1347
  %v1910 = vpop.f32.mrf.mxu0
  %v1911 = vadd.f32 %v1622, %v1910
  %v1912 = vpop.f32.mrf.mxu0
  %v1913 = vpop.f32.mrf.mxu0
  %v1914 = vadd.f32 %v1625, %v1913
  %v1915 = vpop.f32.mrf.mxu0
  %1916 = vmatprep.mubr.bf16.mxu0 0
  %1917 = vmatmul.mubr.bf16.gmra.mxu0 %v1350
  %v1918 = vpop.f32.mrf.mxu0
  %v1919 = vadd.f32 %v1630, %v1918
  %v1920 = vpop.f32.mrf.mxu0
  %v1921 = vpop.f32.mrf.mxu0
  %v1922 = vadd.f32 %v1633, %v1921
  %v1923 = vpop.f32.mrf.mxu0
  %1924 = vmatprep.mubr.bf16.mxu0 0
  %1925 = vmatmul.mubr.bf16.gmra.mxu0 %v1353
  %v1926 = vpop.f32.mrf.mxu0
  %v1927 = vadd.f32 %v1638, %v1926
  %v1928 = vpop.f32.mrf.mxu0
  %v1929 = vpop.f32.mrf.mxu0
  %v1930 = vadd.f32 %v1641, %v1929
  %v1931 = vpop.f32.mrf.mxu0
  %1932 = vdwg.mxu0
  %v1933 = vld [vmem:[%s2] sm:$0x1]
  %v1935 = vlaneseq
  %v1936 = vshrl.u32 %v1935, 7
  %v1937 = vsub.s32 0, %v1936
  %v1938 = vrot.slane %v1933, %v1937
  %v1940 = vmul.f32 %v1679, %v1938
  %v1941 = vmul.f32 %v1682, %v1938
  %v1942 = vmul.f32 %v1687, %v1938
  %v1943 = vmul.f32 %v1690, %v1938
  %v1944 = vmul.f32 %v1695, %v1938
  %v1945 = vmul.f32 %v1698, %v1938
  %v1946 = vmul.f32 %v1703, %v1938
  %v1947 = vmul.f32 %v1706, %v1938
  %v1948 = vmul.f32 %v1711, %v1938
  %v1949 = vmul.f32 %v1714, %v1938
  %v1950 = vmul.f32 %v1719, %v1938
  %v1951 = vmul.f32 %v1722, %v1938
  %v1952 = vmul.f32 %v1727, %v1938
  %v1953 = vmul.f32 %v1730, %v1938
  %v1954 = vmul.f32 %v1735, %v1938
  %v1955 = vmul.f32 %v1738, %v1938
  %v1956 = vmul.f32 %v1743, %v1938
  %v1957 = vmul.f32 %v1746, %v1938
  %v1958 = vmul.f32 %v1751, %v1938
  %v1959 = vmul.f32 %v1754, %v1938
  %v1960 = vmul.f32 %v1759, %v1938
  %v1961 = vmul.f32 %v1762, %v1938
  %v1962 = vmul.f32 %v1767, %v1938
  %v1963 = vmul.f32 %v1770, %v1938
  %v1964 = vmul.f32 %v1775, %v1938
  %v1965 = vmul.f32 %v1778, %v1938
  %v1966 = vmul.f32 %v1783, %v1938
  %v1967 = vmul.f32 %v1786, %v1938
  %v1968 = vmul.f32 %v1791, %v1938
  %v1969 = vmul.f32 %v1794, %v1938
  %v1970 = vmul.f32 %v1799, %v1938
  %v1971 = vmul.f32 %v1802, %v1938
  %v1972 = vmul.f32 %v1807, %v1938
  %v1973 = vmul.f32 %v1810, %v1938
  %v1974 = vmul.f32 %v1815, %v1938
  %v1975 = vmul.f32 %v1818, %v1938
  %v1976 = vmul.f32 %v1823, %v1938
  %v1977 = vmul.f32 %v1826, %v1938
  %v1978 = vmul.f32 %v1831, %v1938
  %v1979 = vmul.f32 %v1834, %v1938
  %v1980 = vmul.f32 %v1839, %v1938
  %v1981 = vmul.f32 %v1842, %v1938
  %v1982 = vmul.f32 %v1847, %v1938
  %v1983 = vmul.f32 %v1850, %v1938
  %v1984 = vmul.f32 %v1855, %v1938
  %v1985 = vmul.f32 %v1858, %v1938
  %v1986 = vmul.f32 %v1863, %v1938
  %v1987 = vmul.f32 %v1866, %v1938
  %v1988 = vmul.f32 %v1871, %v1938
  %v1989 = vmul.f32 %v1874, %v1938
  %v1990 = vmul.f32 %v1879, %v1938
  %v1991 = vmul.f32 %v1882, %v1938
  %v1992 = vmul.f32 %v1887, %v1938
  %v1993 = vmul.f32 %v1890, %v1938
  %v1994 = vmul.f32 %v1895, %v1938
  %v1995 = vmul.f32 %v1898, %v1938
  %v1996 = vmul.f32 %v1903, %v1938
  %v1997 = vmul.f32 %v1906, %v1938
  %v1998 = vmul.f32 %v1911, %v1938
  %v1999 = vmul.f32 %v1914, %v1938
  %v2000 = vmul.f32 %v1919, %v1938
  %v2001 = vmul.f32 %v1922, %v1938
  %v2002 = vmul.f32 %v1927, %v1938
  %v2003 = vmul.f32 %v1930, %v1938
  %v2004 = vld [vmem:[%s3] sm:$0x1]
  %v2006 = vlaneseq
  %v2007 = vshrl.u32 %v2006, 7
  %v2008 = vsub.s32 0, %v2007
  %v2009 = vrot.slane %v2004, %v2008
  %v2011 = vadd.f32 %v1940, %v2009
  %v2012 = vadd.f32 %v1941, %v2009
  %v2013 = vadd.f32 %v1942, %v2009
  %v2014 = vadd.f32 %v1943, %v2009
  %v2015 = vadd.f32 %v1944, %v2009
  %v2016 = vadd.f32 %v1945, %v2009
  %v2017 = vadd.f32 %v1946, %v2009
  %v2018 = vadd.f32 %v1947, %v2009
  %v2019 = vadd.f32 %v1948, %v2009
  %v2020 = vadd.f32 %v1949, %v2009
  %v2021 = vadd.f32 %v1950, %v2009
  %v2022 = vadd.f32 %v1951, %v2009
  %v2023 = vadd.f32 %v1952, %v2009
  %v2024 = vadd.f32 %v1953, %v2009
  %v2025 = vadd.f32 %v1954, %v2009
  %v2026 = vadd.f32 %v1955, %v2009
  %v2027 = vadd.f32 %v1956, %v2009
  %v2028 = vadd.f32 %v1957, %v2009
  %v2029 = vadd.f32 %v1958, %v2009
  %v2030 = vadd.f32 %v1959, %v2009
  %v2031 = vadd.f32 %v1960, %v2009
  %v2032 = vadd.f32 %v1961, %v2009
  %v2033 = vadd.f32 %v1962, %v2009
  %v2034 = vadd.f32 %v1963, %v2009
  %v2035 = vadd.f32 %v1964, %v2009
  %v2036 = vadd.f32 %v1965, %v2009
  %v2037 = vadd.f32 %v1966, %v2009
  %v2038 = vadd.f32 %v1967, %v2009
  %v2039 = vadd.f32 %v1968, %v2009
  %v2040 = vadd.f32 %v1969, %v2009
  %v2041 = vadd.f32 %v1970, %v2009
  %v2042 = vadd.f32 %v1971, %v2009
  %v2043 = vadd.f32 %v1972, %v2009
  %v2044 = vadd.f32 %v1973, %v2009
  %v2045 = vadd.f32 %v1974, %v2009
  %v2046 = vadd.f32 %v1975, %v2009
  %v2047 = vadd.f32 %v1976, %v2009
  %v2048 = vadd.f32 %v1977, %v2009
  %v2049 = vadd.f32 %v1978, %v2009
  %v2050 = vadd.f32 %v1979, %v2009
  %v2051 = vadd.f32 %v1980, %v2009
  %v2052 = vadd.f32 %v1981, %v2009
  %v2053 = vadd.f32 %v1982, %v2009
  %v2054 = vadd.f32 %v1983, %v2009
  %v2055 = vadd.f32 %v1984, %v2009
  %v2056 = vadd.f32 %v1985, %v2009
  %v2057 = vadd.f32 %v1986, %v2009
  %v2058 = vadd.f32 %v1987, %v2009
  %v2059 = vadd.f32 %v1988, %v2009
  %v2060 = vadd.f32 %v1989, %v2009
  %v2061 = vadd.f32 %v1990, %v2009
  %v2062 = vadd.f32 %v1991, %v2009
  %v2063 = vadd.f32 %v1992, %v2009
  %v2064 = vadd.f32 %v1993, %v2009
  %v2065 = vadd.f32 %v1994, %v2009
  %v2066 = vadd.f32 %v1995, %v2009
  %v2067 = vadd.f32 %v1996, %v2009
  %v2068 = vadd.f32 %v1997, %v2009
  %v2069 = vadd.f32 %v1998, %v2009
  %v2070 = vadd.f32 %v1999, %v2009
  %v2071 = vadd.f32 %v2000, %v2009
  %v2072 = vadd.f32 %v2001, %v2009
  %v2073 = vadd.f32 %v2002, %v2009
  %v2074 = vadd.f32 %v2003, %v2009
  %v2075 = vmax.f32 %v2011, 0.0
  %v2076 = vmax.f32 %v2012, 0.0
  %v2077 = vmax.f32 %v2013, 0.0
  %v2078 = vmax.f32 %v2014, 0.0
  %v2079 = vmax.f32 %v2015, 0.0
  %v2080 = vmax.f32 %v2016, 0.0
  %v2081 = vmax.f32 %v2017, 0.0
  %v2082 = vmax.f32 %v2018, 0.0
  %v2083 = vmax.f32 %v2019, 0.0
  %v2084 = vmax.f32 %v2020, 0.0
  %v2085 = vmax.f32 %v2021, 0.0
  %v2086 = vmax.f32 %v2022, 0.0
  %v2087 = vmax.f32 %v2023, 0.0
  %v2088 = vmax.f32 %v2024, 0.0
  %v2089 = vmax.f32 %v2025, 0.0
  %v2090 = vmax.f32 %v2026, 0.0
  %v2091 = vmax.f32 %v2027, 0.0
  %v2092 = vmax.f32 %v2028, 0.0
  %v2093 = vmax.f32 %v2029, 0.0
  %v2094 = vmax.f32 %v2030, 0.0
  %v2095 = vmax.f32 %v2031, 0.0
  %v2096 = vmax.f32 %v2032, 0.0
  %v2097 = vmax.f32 %v2033, 0.0
  %v2098 = vmax.f32 %v2034, 0.0
  %v2099 = vmax.f32 %v2035, 0.0
  %v2100 = vmax.f32 %v2036, 0.0
  %v2101 = vmax.f32 %v2037, 0.0
  %v2102 = vmax.f32 %v2038, 0.0
  %v2103 = vmax.f32 %v2039, 0.0
  %v2104 = vmax.f32 %v2040, 0.0
  %v2105 = vmax.f32 %v2041, 0.0
  %v2106 = vmax.f32 %v2042, 0.0
  %v2107 = vmax.f32 %v2043, 0.0
  %v2108 = vmax.f32 %v2044, 0.0
  %v2109 = vmax.f32 %v2045, 0.0
  %v2110 = vmax.f32 %v2046, 0.0
  %v2111 = vmax.f32 %v2047, 0.0
  %v2112 = vmax.f32 %v2048, 0.0
  %v2113 = vmax.f32 %v2049, 0.0
  %v2114 = vmax.f32 %v2050, 0.0
  %v2115 = vmax.f32 %v2051, 0.0
  %v2116 = vmax.f32 %v2052, 0.0
  %v2117 = vmax.f32 %v2053, 0.0
  %v2118 = vmax.f32 %v2054, 0.0
  %v2119 = vmax.f32 %v2055, 0.0
  %v2120 = vmax.f32 %v2056, 0.0
  %v2121 = vmax.f32 %v2057, 0.0
  %v2122 = vmax.f32 %v2058, 0.0
  %v2123 = vmax.f32 %v2059, 0.0
  %v2124 = vmax.f32 %v2060, 0.0
  %v2125 = vmax.f32 %v2061, 0.0
  %v2126 = vmax.f32 %v2062, 0.0
  %v2127 = vmax.f32 %v2063, 0.0
  %v2128 = vmax.f32 %v2064, 0.0
  %v2129 = vmax.f32 %v2065, 0.0
  %v2130 = vmax.f32 %v2066, 0.0
  %v2131 = vmax.f32 %v2067, 0.0
  %v2132 = vmax.f32 %v2068, 0.0
  %v2133 = vmax.f32 %v2069, 0.0
  %v2134 = vmax.f32 %v2070, 0.0
  %v2135 = vmax.f32 %v2071, 0.0
  %v2136 = vmax.f32 %v2072, 0.0
  %v2137 = vmax.f32 %v2073, 0.0
  %v2138 = vmax.f32 %v2074, 0.0
  %2139 = vst [vmem:[#allocation2] sm:$0xff] %v2075
  %2140 = vst [vmem:[#allocation2 + $0x8] sm:$0xff] %v2076
  %2141 = vst [vmem:[#allocation2 + $0x10] sm:$0xff] %v2077
  %2142 = vst [vmem:[#allocation2 + $0x18] sm:$0xff] %v2078
  %2143 = vst [vmem:[#allocation2 + $0x20] sm:$0xff] %v2079
  %2144 = vst [vmem:[#allocation2 + $0x28] sm:$0xff] %v2080
  %2145 = vst [vmem:[#allocation2 + $0x30] sm:$0xff] %v2081
  %2146 = vst [vmem:[#allocation2 + $0x38] sm:$0xff] %v2082
  %2147 = vst [vmem:[#allocation2 + $0x40] sm:$0xff] %v2083
  %2148 = vst [vmem:[#allocation2 + $0x48] sm:$0xff] %v2084
  %2149 = vst [vmem:[#allocation2 + $0x50] sm:$0xff] %v2085
  %2150 = vst [vmem:[#allocation2 + $0x58] sm:$0xff] %v2086
  %2151 = vst [vmem:[#allocation2 + $0x60] sm:$0xff] %v2087
  %2152 = vst [vmem:[#allocation2 + $0x68] sm:$0xff] %v2088
  %2153 = vst [vmem:[#allocation2 + $0x70] sm:$0xff] %v2089
  %2154 = vst [vmem:[#allocation2 + $0x78] sm:$0xff] %v2090
  %2155 = vst [vmem:[#allocation2 + $0x80] sm:$0xff] %v2091
  %2156 = vst [vmem:[#allocation2 + $0x88] sm:$0xff] %v2092
  %2157 = vst [vmem:[#allocation2 + $0x90] sm:$0xff] %v2093
  %2158 = vst [vmem:[#allocation2 + $0x98] sm:$0xff] %v2094
  %2159 = vst [vmem:[#allocation2 + $0xa0] sm:$0xff] %v2095
  %2160 = vst [vmem:[#allocation2 + $0xa8] sm:$0xff] %v2096
  %2161 = vst [vmem:[#allocation2 + $0xb0] sm:$0xff] %v2097
  %2162 = vst [vmem:[#allocation2 + $0xb8] sm:$0xff] %v2098
  %2163 = vst [vmem:[#allocation2 + $0xc0] sm:$0xff] %v2099
  %2164 = vst [vmem:[#allocation2 + $0xc8] sm:$0xff] %v2100
  %2165 = vst [vmem:[#allocation2 + $0xd0] sm:$0xff] %v2101
  %2166 = vst [vmem:[#allocation2 + $0xd8] sm:$0xff] %v2102
  %2167 = vst [vmem:[#allocation2 + $0xe0] sm:$0xff] %v2103
  %2168 = vst [vmem:[#allocation2 + $0xe8] sm:$0xff] %v2104
  %2169 = vst [vmem:[#allocation2 + $0xf0] sm:$0xff] %v2105
  %2170 = vst [vmem:[#allocation2 + $0xf8] sm:$0xff] %v2106
  %2171 = vst [vmem:[#allocation2 + $0x100] sm:$0xff] %v2107
  %2172 = vst [vmem:[#allocation2 + $0x108] sm:$0xff] %v2108
  %2173 = vst [vmem:[#allocation2 + $0x110] sm:$0xff] %v2109
  %2174 = vst [vmem:[#allocation2 + $0x118] sm:$0xff] %v2110
  %2175 = vst [vmem:[#allocation2 + $0x120] sm:$0xff] %v2111
  %2176 = vst [vmem:[#allocation2 + $0x128] sm:$0xff] %v2112
  %2177 = vst [vmem:[#allocation2 + $0x130] sm:$0xff] %v2113
  %2178 = vst [vmem:[#allocation2 + $0x138] sm:$0xff] %v2114
  %2179 = vst [vmem:[#allocation2 + $0x140] sm:$0xff] %v2115
  %2180 = vst [vmem:[#allocation2 + $0x148] sm:$0xff] %v2116
  %2181 = vst [vmem:[#allocation2 + $0x150] sm:$0xff] %v2117
  %2182 = vst [vmem:[#allocation2 + $0x158] sm:$0xff] %v2118
  %2183 = vst [vmem:[#allocation2 + $0x160] sm:$0xff] %v2119
  %2184 = vst [vmem:[#allocation2 + $0x168] sm:$0xff] %v2120
  %2185 = vst [vmem:[#allocation2 + $0x170] sm:$0xff] %v2121
  %2186 = vst [vmem:[#allocation2 + $0x178] sm:$0xff] %v2122
  %2187 = vst [vmem:[#allocation2 + $0x180] sm:$0xff] %v2123
  %2188 = vst [vmem:[#allocation2 + $0x188] sm:$0xff] %v2124
  %2189 = vst [vmem:[#allocation2 + $0x190] sm:$0xff] %v2125
  %2190 = vst [vmem:[#allocation2 + $0x198] sm:$0xff] %v2126
  %2191 = vst [vmem:[#allocation2 + $0x1a0] sm:$0xff] %v2127
  %2192 = vst [vmem:[#allocation2 + $0x1a8] sm:$0xff] %v2128
  %2193 = vst [vmem:[#allocation2 + $0x1b0] sm:$0xff] %v2129
  %2194 = vst [vmem:[#allocation2 + $0x1b8] sm:$0xff] %v2130
  %2195 = vst [vmem:[#allocation2 + $0x1c0] sm:$0xff] %v2131
  %2196 = vst [vmem:[#allocation2 + $0x1c8] sm:$0xff] %v2132
  %2197 = vst [vmem:[#allocation2 + $0x1d0] sm:$0xff] %v2133
  %2198 = vst [vmem:[#allocation2 + $0x1d8] sm:$0xff] %v2134
  %2199 = vst [vmem:[#allocation2 + $0x1e0] sm:$0xff] %v2135
  %2200 = vst [vmem:[#allocation2 + $0x1e8] sm:$0xff] %v2136
  %2201 = vst [vmem:[#allocation2 + $0x1f0] sm:$0xff] %v2137
  %2202 = vst [vmem:[#allocation2 + $0x1f8] sm:$0xff] %v2138
  %v2203 = vpack.c.bf16 %v2076, %v2075
  %v2204 = vpack.c.bf16 %v2078, %v2077
  %v2205 = vpack.c.bf16 %v2080, %v2079
  %v2206 = vpack.c.bf16 %v2082, %v2081
  %v2207 = vpack.c.bf16 %v2084, %v2083
  %v2208 = vpack.c.bf16 %v2086, %v2085
  %v2209 = vpack.c.bf16 %v2088, %v2087
  %v2210 = vpack.c.bf16 %v2090, %v2089
  %v2211 = vpack.c.bf16 %v2092, %v2091
  %v2212 = vpack.c.bf16 %v2094, %v2093
  %v2213 = vpack.c.bf16 %v2096, %v2095
  %v2214 = vpack.c.bf16 %v2098, %v2097
  %v2215 = vpack.c.bf16 %v2100, %v2099
  %v2216 = vpack.c.bf16 %v2102, %v2101
  %v2217 = vpack.c.bf16 %v2104, %v2103
  %v2218 = vpack.c.bf16 %v2106, %v2105
  %v2219 = vpack.c.bf16 %v2108, %v2107
  %v2220 = vpack.c.bf16 %v2110, %v2109
  %v2221 = vpack.c.bf16 %v2112, %v2111
  %v2222 = vpack.c.bf16 %v2114, %v2113
  %v2223 = vpack.c.bf16 %v2116, %v2115
  %v2224 = vpack.c.bf16 %v2118, %v2117
  %v2225 = vpack.c.bf16 %v2120, %v2119
  %v2226 = vpack.c.bf16 %v2122, %v2121
  %v2227 = vpack.c.bf16 %v2124, %v2123
  %v2228 = vpack.c.bf16 %v2126, %v2125
  %v2229 = vpack.c.bf16 %v2128, %v2127
  %v2230 = vpack.c.bf16 %v2130, %v2129
  %v2231 = vpack.c.bf16 %v2132, %v2131
  %v2232 = vpack.c.bf16 %v2134, %v2133
  %v2233 = vpack.c.bf16 %v2136, %v2135
  %v2234 = vpack.c.bf16 %v2138, %v2137
  %v2267 = vunpack.c.l.b16 %v2203
  %v2268 = vunpack.c.h.b16 %v2203
  %v2269 = vunpack.c.l.b16 %v2204
  %v2270 = vunpack.c.h.b16 %v2204
  %v2271 = vunpack.c.l.b16 %v2205
  %v2272 = vunpack.c.h.b16 %v2205
  %v2273 = vunpack.c.l.b16 %v2206
  %v2274 = vunpack.c.h.b16 %v2206
  %v2275 = vunpack.c.l.b16 %v2207
  %v2276 = vunpack.c.h.b16 %v2207
  %v2277 = vunpack.c.l.b16 %v2208
  %v2278 = vunpack.c.h.b16 %v2208
  %v2279 = vunpack.c.l.b16 %v2209
  %v2280 = vunpack.c.h.b16 %v2209
  %v2281 = vunpack.c.l.b16 %v2210
  %v2282 = vunpack.c.h.b16 %v2210
  %v2283 = vunpack.c.l.b16 %v2211
  %v2284 = vunpack.c.h.b16 %v2211
  %v2285 = vunpack.c.l.b16 %v2212
  %v2286 = vunpack.c.h.b16 %v2212
  %v2287 = vunpack.c.l.b16 %v2213
  %v2288 = vunpack.c.h.b16 %v2213
  %v2289 = vunpack.c.l.b16 %v2214
  %v2290 = vunpack.c.h.b16 %v2214
  %v2291 = vunpack.c.l.b16 %v2215
  %v2292 = vunpack.c.h.b16 %v2215
  %v2293 = vunpack.c.l.b16 %v2216
  %v2294 = vunpack.c.h.b16 %v2216
  %v2295 = vunpack.c.l.b16 %v2217
  %v2296 = vunpack.c.h.b16 %v2217
  %v2297 = vunpack.c.l.b16 %v2218
  %v2298 = vunpack.c.h.b16 %v2218
  %v2299 = vunpack.c.l.b16 %v2219
  %v2300 = vunpack.c.h.b16 %v2219
  %v2301 = vunpack.c.l.b16 %v2220
  %v2302 = vunpack.c.h.b16 %v2220
  %v2303 = vunpack.c.l.b16 %v2221
  %v2304 = vunpack.c.h.b16 %v2221
  %v2305 = vunpack.c.l.b16 %v2222
  %v2306 = vunpack.c.h.b16 %v2222
  %v2307 = vunpack.c.l.b16 %v2223
  %v2308 = vunpack.c.h.b16 %v2223
  %v2309 = vunpack.c.l.b16 %v2224
  %v2310 = vunpack.c.h.b16 %v2224
  %v2311 = vunpack.c.l.b16 %v2225
  %v2312 = vunpack.c.h.b16 %v2225
  %v2313 = vunpack.c.l.b16 %v2226
  %v2314 = vunpack.c.h.b16 %v2226
  %v2315 = vunpack.c.l.b16 %v2227
  %v2316 = vunpack.c.h.b16 %v2227
  %v2317 = vunpack.c.l.b16 %v2228
  %v2318 = vunpack.c.h.b16 %v2228
  %v2319 = vunpack.c.l.b16 %v2229
  %v2320 = vunpack.c.h.b16 %v2229
  %v2321 = vunpack.c.l.b16 %v2230
  %v2322 = vunpack.c.h.b16 %v2230
  %v2323 = vunpack.c.l.b16 %v2231
  %v2324 = vunpack.c.h.b16 %v2231
  %v2325 = vunpack.c.l.b16 %v2232
  %v2326 = vunpack.c.h.b16 %v2232
  %v2327 = vunpack.c.l.b16 %v2233
  %v2328 = vunpack.c.h.b16 %v2233
  %v2329 = vunpack.c.l.b16 %v2234
  %v2330 = vunpack.c.h.b16 %v2234
  %v2331 = vpack.c.b16 %v2267, %v2267
  %v2332 = vpack.c.b16 %v2268, %v2268
  %v2333 = vpack.c.b16 %v2269, %v2269
  %v2334 = vpack.c.b16 %v2270, %v2270
  %v2335 = vpack.c.b16 %v2271, %v2271
  %v2336 = vpack.c.b16 %v2272, %v2272
  %v2337 = vpack.c.b16 %v2273, %v2273
  %v2338 = vpack.c.b16 %v2274, %v2274
  %v2339 = vpack.c.b16 %v2275, %v2275
  %v2340 = vpack.c.b16 %v2276, %v2276
  %v2341 = vpack.c.b16 %v2277, %v2277
  %v2342 = vpack.c.b16 %v2278, %v2278
  %v2343 = vpack.c.b16 %v2279, %v2279
  %v2344 = vpack.c.b16 %v2280, %v2280
  %v2345 = vpack.c.b16 %v2281, %v2281
  %v2346 = vpack.c.b16 %v2282, %v2282
  %v2347 = vpack.c.b16 %v2283, %v2283
  %v2348 = vpack.c.b16 %v2284, %v2284
  %v2349 = vpack.c.b16 %v2285, %v2285
  %v2350 = vpack.c.b16 %v2286, %v2286
  %v2351 = vpack.c.b16 %v2287, %v2287
  %v2352 = vpack.c.b16 %v2288, %v2288
  %v2353 = vpack.c.b16 %v2289, %v2289
  %v2354 = vpack.c.b16 %v2290, %v2290
  %v2355 = vpack.c.b16 %v2291, %v2291
  %v2356 = vpack.c.b16 %v2292, %v2292
  %v2357 = vpack.c.b16 %v2293, %v2293
  %v2358 = vpack.c.b16 %v2294, %v2294
  %v2359 = vpack.c.b16 %v2295, %v2295
  %v2360 = vpack.c.b16 %v2296, %v2296
  %v2361 = vpack.c.b16 %v2297, %v2297
  %v2362 = vpack.c.b16 %v2298, %v2298
  %v2363 = vpack.c.b16 %v2299, %v2299
  %v2364 = vpack.c.b16 %v2300, %v2300
  %v2365 = vpack.c.b16 %v2301, %v2301
  %v2366 = vpack.c.b16 %v2302, %v2302
  %v2367 = vpack.c.b16 %v2303, %v2303
  %v2368 = vpack.c.b16 %v2304, %v2304
  %v2369 = vpack.c.b16 %v2305, %v2305
  %v2370 = vpack.c.b16 %v2306, %v2306
  %v2371 = vpack.c.b16 %v2307, %v2307
  %v2372 = vpack.c.b16 %v2308, %v2308
  %v2373 = vpack.c.b16 %v2309, %v2309
  %v2374 = vpack.c.b16 %v2310, %v2310
  %v2375 = vpack.c.b16 %v2311, %v2311
  %v2376 = vpack.c.b16 %v2312, %v2312
  %v2377 = vpack.c.b16 %v2313, %v2313
  %v2378 = vpack.c.b16 %v2314, %v2314
  %v2379 = vpack.c.b16 %v2315, %v2315
  %v2380 = vpack.c.b16 %v2316, %v2316
  %v2381 = vpack.c.b16 %v2317, %v2317
  %v2382 = vpack.c.b16 %v2318, %v2318
  %v2383 = vpack.c.b16 %v2319, %v2319
  %v2384 = vpack.c.b16 %v2320, %v2320
  %v2385 = vpack.c.b16 %v2321, %v2321
  %v2386 = vpack.c.b16 %v2322, %v2322
  %v2387 = vpack.c.b16 %v2323, %v2323
  %v2388 = vpack.c.b16 %v2324, %v2324
  %v2389 = vpack.c.b16 %v2325, %v2325
  %v2390 = vpack.c.b16 %v2326, %v2326
  %v2391 = vpack.c.b16 %v2327, %v2327
  %v2392 = vpack.c.b16 %v2328, %v2328
  %v2393 = vpack.c.b16 %v2329, %v2329
  %v2394 = vpack.c.b16 %v2330, %v2330
  %2427 = vst [vmem:[%s64] sm:$0xf] %v2331
  %2428 = vst [vmem:[%s64 + $0x8] sm:$0xf] %v2332
  %2429 = vst [vmem:[%s64 + $0x10] sm:$0xf] %v2333
  %2430 = vst [vmem:[%s64 + $0x18] sm:$0xf] %v2334
  %2431 = vst [vmem:[%s64 + $0x20] sm:$0xf] %v2335
  %2432 = vst [vmem:[%s64 + $0x28] sm:$0xf] %v2336
  %2433 = vst [vmem:[%s64 + $0x30] sm:$0xf] %v2337
  %2434 = vst [vmem:[%s64 + $0x38] sm:$0xf] %v2338
  %2435 = vst [vmem:[%s64 + $0x48] sm:$0xf] %v2339
  %2436 = vst [vmem:[%s64 + $0x50] sm:$0xf] %v2340
  %2437 = vst [vmem:[%s64 + $0x58] sm:$0xf] %v2341
  %2438 = vst [vmem:[%s64 + $0x60] sm:$0xf] %v2342
  %2439 = vst [vmem:[%s64 + $0x68] sm:$0xf] %v2343
  %2440 = vst [vmem:[%s64 + $0x70] sm:$0xf] %v2344
  %2441 = vst [vmem:[%s64 + $0x78] sm:$0xf] %v2345
  %2442 = vst [vmem:[%s64 + $0x80] sm:$0xf] %v2346
  %v2444 = vshrl.u32 %v2347, 16
  %v2446 = vrot.slane %v2444, 7
  %v2447 = vshll.u32 %v2347, 16
  %v2449 = vor.u32 %v2446, %v2447
  %v2450 = vrot.slane %v2446, 4
  %v2452 = vshrl.u32 %v2348, 16
  %v2454 = vrot.slane %v2452, 7
  %v2455 = vshll.u32 %v2348, 16
  %v2457 = vor.u32 %v2454, %v2455
  %v2458 = vrot.slane %v2454, 4
  %v2460 = vshrl.u32 %v2349, 16
  %v2462 = vrot.slane %v2460, 7
  %v2463 = vshll.u32 %v2349, 16
  %v2465 = vor.u32 %v2462, %v2463
  %v2466 = vrot.slane %v2462, 4
  %v2468 = vshrl.u32 %v2350, 16
  %v2470 = vrot.slane %v2468, 7
  %v2471 = vshll.u32 %v2350, 16
  %v2473 = vor.u32 %v2470, %v2471
  %v2474 = vrot.slane %v2470, 4
  %v2476 = vshrl.u32 %v2351, 16
  %v2478 = vrot.slane %v2476, 7
  %v2479 = vshll.u32 %v2351, 16
  %v2481 = vor.u32 %v2478, %v2479
  %v2482 = vrot.slane %v2478, 4
  %v2484 = vshrl.u32 %v2352, 16
  %v2486 = vrot.slane %v2484, 7
  %v2487 = vshll.u32 %v2352, 16
  %v2489 = vor.u32 %v2486, %v2487
  %v2490 = vrot.slane %v2486, 4
  %v2492 = vshrl.u32 %v2353, 16
  %v2494 = vrot.slane %v2492, 7
  %v2495 = vshll.u32 %v2353, 16
  %v2497 = vor.u32 %v2494, %v2495
  %v2498 = vrot.slane %v2494, 4
  %v2500 = vshrl.u32 %v2354, 16
  %v2502 = vrot.slane %v2500, 7
  %v2503 = vshll.u32 %v2354, 16
  %v2505 = vor.u32 %v2502, %v2503
  %v2506 = vrot.slane %v2502, 4
  %v2508 = vshrl.u32 %v2355, 16
  %v2510 = vrot.slane %v2508, 7
  %v2511 = vshll.u32 %v2355, 16
  %v2513 = vor.u32 %v2510, %v2511
  %v2514 = vrot.slane %v2510, 4
  %v2516 = vshrl.u32 %v2356, 16
  %v2518 = vrot.slane %v2516, 7
  %v2519 = vshll.u32 %v2356, 16
  %v2521 = vor.u32 %v2518, %v2519
  %v2522 = vrot.slane %v2518, 4
  %v2524 = vshrl.u32 %v2357, 16
  %v2526 = vrot.slane %v2524, 7
  %v2527 = vshll.u32 %v2357, 16
  %v2529 = vor.u32 %v2526, %v2527
  %v2530 = vrot.slane %v2526, 4
  %v2532 = vshrl.u32 %v2358, 16
  %v2534 = vrot.slane %v2532, 7
  %v2535 = vshll.u32 %v2358, 16
  %v2537 = vor.u32 %v2534, %v2535
  %v2538 = vrot.slane %v2534, 4
  %v2540 = vshrl.u32 %v2359, 16
  %v2542 = vrot.slane %v2540, 7
  %v2543 = vshll.u32 %v2359, 16
  %v2545 = vor.u32 %v2542, %v2543
  %v2546 = vrot.slane %v2542, 4
  %v2548 = vshrl.u32 %v2360, 16
  %v2550 = vrot.slane %v2548, 7
  %v2551 = vshll.u32 %v2360, 16
  %v2553 = vor.u32 %v2550, %v2551
  %v2554 = vrot.slane %v2550, 4
  %v2556 = vshrl.u32 %v2361, 16
  %v2558 = vrot.slane %v2556, 7
  %v2559 = vshll.u32 %v2361, 16
  %v2561 = vor.u32 %v2558, %v2559
  %v2562 = vrot.slane %v2558, 4
  %v2564 = vshrl.u32 %v2362, 16
  %v2566 = vrot.slane %v2564, 7
  %v2567 = vshll.u32 %v2362, 16
  %v2569 = vor.u32 %v2566, %v2567
  %v2570 = vrot.slane %v2566, 4
  %vm2603 = vcmask 1043456
  %vm2604 = vmand %vm2603, %vm381
  %v2605 = vld [vmem:[%s128] sm:$0xf]
  %v2606 = vsel %vm2604, %v2449, %v2605
  %2607 = vst [vmem:[%s128] sm:$0xf] %v2606
  %v2608 = vld [vmem:[%s128 + $0x4] sm:$0x1]
  %v2609 = vsel %vm56, %v2450, %v2608
  %2610 = vst [vmem:[%s128 + $0x4] sm:$0x1] %v2609
  %v2611 = vld [vmem:[%s128 + $0x8] sm:$0xf]
  %v2612 = vsel %vm2604, %v2457, %v2611
  %2613 = vst [vmem:[%s128 + $0x8] sm:$0xf] %v2612
  %v2614 = vld [vmem:[%s128 + $0xc] sm:$0x1]
  %v2615 = vsel %vm56, %v2458, %v2614
  %2616 = vst [vmem:[%s128 + $0xc] sm:$0x1] %v2615
  %v2617 = vld [vmem:[%s128 + $0x10] sm:$0xf]
  %v2618 = vsel %vm2604, %v2465, %v2617
  %2619 = vst [vmem:[%s128 + $0x10] sm:$0xf] %v2618
  %v2620 = vld [vmem:[%s128 + $0x14] sm:$0x1]
  %v2621 = vsel %vm56, %v2466, %v2620
  %2622 = vst [vmem:[%s128 + $0x14] sm:$0x1] %v2621
  %v2623 = vld [vmem:[%s128 + $0x18] sm:$0xf]
  %v2624 = vsel %vm2604, %v2473, %v2623
  %2625 = vst [vmem:[%s128 + $0x18] sm:$0xf] %v2624
  %v2626 = vld [vmem:[%s128 + $0x1c] sm:$0x1]
  %v2627 = vsel %vm56, %v2474, %v2626
  %2628 = vst [vmem:[%s128 + $0x1c] sm:$0x1] %v2627
  %v2629 = vld [vmem:[%s128 + $0x20] sm:$0xf]
  %v2630 = vsel %vm2604, %v2481, %v2629
  %2631 = vst [vmem:[%s128 + $0x20] sm:$0xf] %v2630
  %v2632 = vld [vmem:[%s128 + $0x24] sm:$0x1]
  %v2633 = vsel %vm56, %v2482, %v2632
  %2634 = vst [vmem:[%s128 + $0x24] sm:$0x1] %v2633
  %v2635 = vld [vmem:[%s128 + $0x28] sm:$0xf]
  %v2636 = vsel %vm2604, %v2489, %v2635
  %2637 = vst [vmem:[%s128 + $0x28] sm:$0xf] %v2636
  %v2638 = vld [vmem:[%s128 + $0x2c] sm:$0x1]
  %v2639 = vsel %vm56, %v2490, %v2638
  %2640 = vst [vmem:[%s128 + $0x2c] sm:$0x1] %v2639
  %v2641 = vld [vmem:[%s128 + $0x30] sm:$0xf]
  %v2642 = vsel %vm2604, %v2497, %v2641
  %2643 = vst [vmem:[%s128 + $0x30] sm:$0xf] %v2642
  %v2644 = vld [vmem:[%s128 + $0x34] sm:$0x1]
  %v2645 = vsel %vm56, %v2498, %v2644
  %2646 = vst [vmem:[%s128 + $0x34] sm:$0x1] %v2645
  %v2647 = vld [vmem:[%s128 + $0x38] sm:$0xf]
  %v2648 = vsel %vm2604, %v2505, %v2647
  %2649 = vst [vmem:[%s128 + $0x38] sm:$0xf] %v2648
  %v2650 = vld [vmem:[%s128 + $0x3c] sm:$0x1]
  %v2651 = vsel %vm56, %v2506, %v2650
  %2652 = vst [vmem:[%s128 + $0x3c] sm:$0x1] %v2651
  %v2653 = vld [vmem:[%s128 + $0x48] sm:$0xf]
  %v2654 = vsel %vm2604, %v2513, %v2653
  %2655 = vst [vmem:[%s128 + $0x48] sm:$0xf] %v2654
  %v2656 = vld [vmem:[%s128 + $0x4c] sm:$0x1]
  %v2657 = vsel %vm56, %v2514, %v2656
  %2658 = vst [vmem:[%s128 + $0x4c] sm:$0x1] %v2657
  %v2659 = vld [vmem:[%s128 + $0x50] sm:$0xf]
  %v2660 = vsel %vm2604, %v2521, %v2659
  %2661 = vst [vmem:[%s128 + $0x50] sm:$0xf] %v2660
  %v2662 = vld [vmem:[%s128 + $0x54] sm:$0x1]
  %v2663 = vsel %vm56, %v2522, %v2662
  %2664 = vst [vmem:[%s128 + $0x54] sm:$0x1] %v2663
  %v2665 = vld [vmem:[%s128 + $0x58] sm:$0xf]
  %v2666 = vsel %vm2604, %v2529, %v2665
  %2667 = vst [vmem:[%s128 + $0x58] sm:$0xf] %v2666
  %v2668 = vld [vmem:[%s128 + $0x5c] sm:$0x1]
  %v2669 = vsel %vm56, %v2530, %v2668
  %2670 = vst [vmem:[%s128 + $0x5c] sm:$0x1] %v2669
  %v2671 = vld [vmem:[%s128 + $0x60] sm:$0xf]
  %v2672 = vsel %vm2604, %v2537, %v2671
  %2673 = vst [vmem:[%s128 + $0x60] sm:$0xf] %v2672
  %v2674 = vld [vmem:[%s128 + $0x64] sm:$0x1]
  %v2675 = vsel %vm56, %v2538, %v2674
  %2676 = vst [vmem:[%s128 + $0x64] sm:$0x1] %v2675
  %v2677 = vld [vmem:[%s128 + $0x68] sm:$0xf]
  %v2678 = vsel %vm2604, %v2545, %v2677
  %2679 = vst [vmem:[%s128 + $0x68] sm:$0xf] %v2678
  %v2680 = vld [vmem:[%s128 + $0x6c] sm:$0x1]
  %v2681 = vsel %vm56, %v2546, %v2680
  %2682 = vst [vmem:[%s128 + $0x6c] sm:$0x1] %v2681
  %v2683 = vld [vmem:[%s128 + $0x70] sm:$0xf]
  %v2684 = vsel %vm2604, %v2553, %v2683
  %2685 = vst [vmem:[%s128 + $0x70] sm:$0xf] %v2684
  %v2686 = vld [vmem:[%s128 + $0x74] sm:$0x1]
  %v2687 = vsel %vm56, %v2554, %v2686
  %2688 = vst [vmem:[%s128 + $0x74] sm:$0x1] %v2687
  %v2689 = vld [vmem:[%s128 + $0x78] sm:$0xf]
  %v2690 = vsel %vm2604, %v2561, %v2689
  %2691 = vst [vmem:[%s128 + $0x78] sm:$0xf] %v2690
  %v2692 = vld [vmem:[%s128 + $0x7c] sm:$0x1]
  %v2693 = vsel %vm56, %v2562, %v2692
  %2694 = vst [vmem:[%s128 + $0x7c] sm:$0x1] %v2693
  %v2695 = vld [vmem:[%s128 + $0x80] sm:$0xf]
  %v2696 = vsel %vm2604, %v2569, %v2695
  %2697 = vst [vmem:[%s128 + $0x80] sm:$0xf] %v2696
  %v2698 = vld [vmem:[%s128 + $0x84] sm:$0x1]
  %v2699 = vsel %vm56, %v2570, %v2698
  %2700 = vst [vmem:[%s128 + $0x84] sm:$0x1] %v2699
  %s2701 = scalar_lea.vmem [#allocation3], 152
  %2702 = vst [vmem:[%s2701] sm:$0xf] %v2363
  %2703 = vst [vmem:[%s2701 + $0x8] sm:$0xf] %v2364
  %2704 = vst [vmem:[%s2701 + $0x10] sm:$0xf] %v2365
  %2705 = vst [vmem:[%s2701 + $0x18] sm:$0xf] %v2366
  %2706 = vst [vmem:[%s2701 + $0x20] sm:$0xf] %v2367
  %2707 = vst [vmem:[%s2701 + $0x28] sm:$0xf] %v2368
  %2708 = vst [vmem:[%s2701 + $0x30] sm:$0xf] %v2369
  %2709 = vst [vmem:[%s2701 + $0x38] sm:$0xf] %v2370
  %2710 = vst [vmem:[%s2701 + $0x48] sm:$0xf] %v2371
  %2711 = vst [vmem:[%s2701 + $0x50] sm:$0xf] %v2372
  %2712 = vst [vmem:[%s2701 + $0x58] sm:$0xf] %v2373
  %2713 = vst [vmem:[%s2701 + $0x60] sm:$0xf] %v2374
  %2714 = vst [vmem:[%s2701 + $0x68] sm:$0xf] %v2375
  %2715 = vst [vmem:[%s2701 + $0x70] sm:$0xf] %v2376
  %2716 = vst [vmem:[%s2701 + $0x78] sm:$0xf] %v2377
  %2717 = vst [vmem:[%s2701 + $0x80] sm:$0xf] %v2378
  %v2719 = vshrl.u32 %v2379, 16
  %v2721 = vrot.slane %v2719, 7
  %v2722 = vshll.u32 %v2379, 16
  %v2724 = vor.u32 %v2721, %v2722
  %v2725 = vrot.slane %v2721, 4
  %v2727 = vshrl.u32 %v2380, 16
  %v2729 = vrot.slane %v2727, 7
  %v2730 = vshll.u32 %v2380, 16
  %v2732 = vor.u32 %v2729, %v2730
  %v2733 = vrot.slane %v2729, 4
  %v2735 = vshrl.u32 %v2381, 16
  %v2737 = vrot.slane %v2735, 7
  %v2738 = vshll.u32 %v2381, 16
  %v2740 = vor.u32 %v2737, %v2738
  %v2741 = vrot.slane %v2737, 4
  %v2743 = vshrl.u32 %v2382, 16
  %v2745 = vrot.slane %v2743, 7
  %v2746 = vshll.u32 %v2382, 16
  %v2748 = vor.u32 %v2745, %v2746
  %v2749 = vrot.slane %v2745, 4
  %v2751 = vshrl.u32 %v2383, 16
  %v2753 = vrot.slane %v2751, 7
  %v2754 = vshll.u32 %v2383, 16
  %v2756 = vor.u32 %v2753, %v2754
  %v2757 = vrot.slane %v2753, 4
  %v2759 = vshrl.u32 %v2384, 16
  %v2761 = vrot.slane %v2759, 7
  %v2762 = vshll.u32 %v2384, 16
  %v2764 = vor.u32 %v2761, %v2762
  %v2765 = vrot.slane %v2761, 4
  %v2767 = vshrl.u32 %v2385, 16
  %v2769 = vrot.slane %v2767, 7
  %v2770 = vshll.u32 %v2385, 16
  %v2772 = vor.u32 %v2769, %v2770
  %v2773 = vrot.slane %v2769, 4
  %v2775 = vshrl.u32 %v2386, 16
  %v2777 = vrot.slane %v2775, 7
  %v2778 = vshll.u32 %v2386, 16
  %v2780 = vor.u32 %v2777, %v2778
  %v2781 = vrot.slane %v2777, 4
  %v2783 = vshrl.u32 %v2387, 16
  %v2785 = vrot.slane %v2783, 7
  %v2786 = vshll.u32 %v2387, 16
  %v2788 = vor.u32 %v2785, %v2786
  %v2789 = vrot.slane %v2785, 4
  %v2791 = vshrl.u32 %v2388, 16
  %v2793 = vrot.slane %v2791, 7
  %v2794 = vshll.u32 %v2388, 16
  %v2796 = vor.u32 %v2793, %v2794
  %v2797 = vrot.slane %v2793, 4
  %v2799 = vshrl.u32 %v2389, 16
  %v2801 = vrot.slane %v2799, 7
  %v2802 = vshll.u32 %v2389, 16
  %v2804 = vor.u32 %v2801, %v2802
  %v2805 = vrot.slane %v2801, 4
  %v2807 = vshrl.u32 %v2390, 16
  %v2809 = vrot.slane %v2807, 7
  %v2810 = vshll.u32 %v2390, 16
  %v2812 = vor.u32 %v2809, %v2810
  %v2813 = vrot.slane %v2809, 4
  %v2815 = vshrl.u32 %v2391, 16
  %v2817 = vrot.slane %v2815, 7
  %v2818 = vshll.u32 %v2391, 16
  %v2820 = vor.u32 %v2817, %v2818
  %v2821 = vrot.slane %v2817, 4
  %v2823 = vshrl.u32 %v2392, 16
  %v2825 = vrot.slane %v2823, 7
  %v2826 = vshll.u32 %v2392, 16
  %v2828 = vor.u32 %v2825, %v2826
  %v2829 = vrot.slane %v2825, 4
  %v2831 = vshrl.u32 %v2393, 16
  %v2833 = vrot.slane %v2831, 7
  %v2834 = vshll.u32 %v2393, 16
  %v2836 = vor.u32 %v2833, %v2834
  %v2837 = vrot.slane %v2833, 4
  %v2839 = vshrl.u32 %v2394, 16
  %v2841 = vrot.slane %v2839, 7
  %v2842 = vshll.u32 %v2394, 16
  %v2844 = vor.u32 %v2841, %v2842
  %v2845 = vrot.slane %v2841, 4
  %s2878 = scalar_lea.vmem [#allocation3], 8
  %v2879 = vld [vmem:[%s2878] sm:$0xf]
  %v2880 = vsel %vm2604, %v2724, %v2879
  %2881 = vst [vmem:[%s2878] sm:$0xf] %v2880
  %v2882 = vld [vmem:[%s2878 + $0x4] sm:$0x1]
  %v2883 = vsel %vm56, %v2725, %v2882
  %2884 = vst [vmem:[%s2878 + $0x4] sm:$0x1] %v2883
  %v2885 = vld [vmem:[%s2878 + $0x8] sm:$0xf]
  %v2886 = vsel %vm2604, %v2732, %v2885
  %2887 = vst [vmem:[%s2878 + $0x8] sm:$0xf] %v2886
  %v2888 = vld [vmem:[%s2878 + $0xc] sm:$0x1]
  %v2889 = vsel %vm56, %v2733, %v2888
  %2890 = vst [vmem:[%s2878 + $0xc] sm:$0x1] %v2889
  %v2891 = vld [vmem:[%s2878 + $0x10] sm:$0xf]
  %v2892 = vsel %vm2604, %v2740, %v2891
  %2893 = vst [vmem:[%s2878 + $0x10] sm:$0xf] %v2892
  %v2894 = vld [vmem:[%s2878 + $0x14] sm:$0x1]
  %v2895 = vsel %vm56, %v2741, %v2894
  %2896 = vst [vmem:[%s2878 + $0x14] sm:$0x1] %v2895
  %v2897 = vld [vmem:[%s2878 + $0x18] sm:$0xf]
  %v2898 = vsel %vm2604, %v2748, %v2897
  %2899 = vst [vmem:[%s2878 + $0x18] sm:$0xf] %v2898
  %v2900 = vld [vmem:[%s2878 + $0x1c] sm:$0x1]
  %v2901 = vsel %vm56, %v2749, %v2900
  %2902 = vst [vmem:[%s2878 + $0x1c] sm:$0x1] %v2901
  %v2903 = vld [vmem:[%s2878 + $0x20] sm:$0xf]
  %v2904 = vsel %vm2604, %v2756, %v2903
  %2905 = vst [vmem:[%s2878 + $0x20] sm:$0xf] %v2904
  %v2906 = vld [vmem:[%s2878 + $0x24] sm:$0x1]
  %v2907 = vsel %vm56, %v2757, %v2906
  %2908 = vst [vmem:[%s2878 + $0x24] sm:$0x1] %v2907
  %v2909 = vld [vmem:[%s2878 + $0x28] sm:$0xf]
  %v2910 = vsel %vm2604, %v2764, %v2909
  %2911 = vst [vmem:[%s2878 + $0x28] sm:$0xf] %v2910
  %v2912 = vld [vmem:[%s2878 + $0x2c] sm:$0x1]
  %v2913 = vsel %vm56, %v2765, %v2912
  %2914 = vst [vmem:[%s2878 + $0x2c] sm:$0x1] %v2913
  %v2915 = vld [vmem:[%s2878 + $0x30] sm:$0xf]
  %v2916 = vsel %vm2604, %v2772, %v2915
  %2917 = vst [vmem:[%s2878 + $0x30] sm:$0xf] %v2916
  %v2918 = vld [vmem:[%s2878 + $0x34] sm:$0x1]
  %v2919 = vsel %vm56, %v2773, %v2918
  %2920 = vst [vmem:[%s2878 + $0x34] sm:$0x1] %v2919
  %v2921 = vld [vmem:[%s2878 + $0x38] sm:$0xf]
  %v2922 = vsel %vm2604, %v2780, %v2921
  %2923 = vst [vmem:[%s2878 + $0x38] sm:$0xf] %v2922
  %v2924 = vld [vmem:[%s2878 + $0x3c] sm:$0x1]
  %v2925 = vsel %vm56, %v2781, %v2924
  %2926 = vst [vmem:[%s2878 + $0x3c] sm:$0x1] %v2925
  %v2927 = vld [vmem:[%s2878 + $0x48] sm:$0xf]
  %v2928 = vsel %vm2604, %v2788, %v2927
  %2929 = vst [vmem:[%s2878 + $0x48] sm:$0xf] %v2928
  %v2930 = vld [vmem:[%s2878 + $0x4c] sm:$0x1]
  %v2931 = vsel %vm56, %v2789, %v2930
  %2932 = vst [vmem:[%s2878 + $0x4c] sm:$0x1] %v2931
  %v2933 = vld [vmem:[%s2878 + $0x50] sm:$0xf]
  %v2934 = vsel %vm2604, %v2796, %v2933
  %2935 = vst [vmem:[%s2878 + $0x50] sm:$0xf] %v2934
  %v2936 = vld [vmem:[%s2878 + $0x54] sm:$0x1]
  %v2937 = vsel %vm56, %v2797, %v2936
  %2938 = vst [vmem:[%s2878 + $0x54] sm:$0x1] %v2937
  %v2939 = vld [vmem:[%s2878 + $0x58] sm:$0xf]
  %v2940 = vsel %vm2604, %v2804, %v2939
  %2941 = vst [vmem:[%s2878 + $0x58] sm:$0xf] %v2940
  %v2942 = vld [vmem:[%s2878 + $0x5c] sm:$0x1]
  %v2943 = vsel %vm56, %v2805, %v2942
  %2944 = vst [vmem:[%s2878 + $0x5c] sm:$0x1] %v2943
  %v2945 = vld [vmem:[%s2878 + $0x60] sm:$0xf]
  %v2946 = vsel %vm2604, %v2812, %v2945
  %2947 = vst [vmem:[%s2878 + $0x60] sm:$0xf] %v2946
  %v2948 = vld [vmem:[%s2878 + $0x64] sm:$0x1]
  %v2949 = vsel %vm56, %v2813, %v2948
  %2950 = vst [vmem:[%s2878 + $0x64] sm:$0x1] %v2949
  %v2951 = vld [vmem:[%s2878 + $0x68] sm:$0xf]
  %v2952 = vsel %vm2604, %v2820, %v2951
  %2953 = vst [vmem:[%s2878 + $0x68] sm:$0xf] %v2952
  %v2954 = vld [vmem:[%s2878 + $0x6c] sm:$0x1]
  %v2955 = vsel %vm56, %v2821, %v2954
  %2956 = vst [vmem:[%s2878 + $0x6c] sm:$0x1] %v2955
  %v2957 = vld [vmem:[%s2878 + $0x70] sm:$0xf]
  %v2958 = vsel %vm2604, %v2828, %v2957
  %2959 = vst [vmem:[%s2878 + $0x70] sm:$0xf] %v2958
  %v2960 = vld [vmem:[%s2878 + $0x74] sm:$0x1]
  %v2961 = vsel %vm56, %v2829, %v2960
  %2962 = vst [vmem:[%s2878 + $0x74] sm:$0x1] %v2961
  %v2963 = vld [vmem:[%s2878 + $0x78] sm:$0xf]
  %v2964 = vsel %vm2604, %v2836, %v2963
  %2965 = vst [vmem:[%s2878 + $0x78] sm:$0xf] %v2964
  %v2966 = vld [vmem:[%s2878 + $0x7c] sm:$0x1]
  %v2967 = vsel %vm56, %v2837, %v2966
  %2968 = vst [vmem:[%s2878 + $0x7c] sm:$0x1] %v2967
  %v2969 = vld [vmem:[%s2878 + $0x80] sm:$0xf]
  %v2970 = vsel %vm2604, %v2844, %v2969
  %2971 = vst [vmem:[%s2878 + $0x80] sm:$0xf] %v2970
  %v2972 = vld [vmem:[%s2878 + $0x84] sm:$0x1]
  %v2973 = vsel %vm56, %v2845, %v2972
  %2974 = vst [vmem:[%s2878 + $0x84] sm:$0x1] %v2973
  %v2975 = vld [vmem:[#allocation3] sm:$0xf]
  %v2976 = vld [vmem:[#allocation3 + $0x8] sm:$0xf]
  %v2977 = vld [vmem:[#allocation3 + $0x10] sm:$0xf]
  %v2978 = vld [vmem:[#allocation3 + $0x18] sm:$0xf]
  %v2979 = vld [vmem:[#allocation3 + $0x20] sm:$0xf]
  %v2980 = vld [vmem:[#allocation3 + $0x28] sm:$0xf]
  %v2981 = vld [vmem:[#allocation3 + $0x30] sm:$0xf]
  %v2982 = vld [vmem:[#allocation3 + $0x38] sm:$0xf]
  %v2983 = vld [vmem:[#allocation3 + $0x48] sm:$0xf]
  %v2984 = vld [vmem:[#allocation3 + $0x50] sm:$0xf]
  %v2985 = vld [vmem:[#allocation3 + $0x58] sm:$0xf]
  %v2986 = vld [vmem:[#allocation3 + $0x60] sm:$0xf]
  %v2987 = vld [vmem:[#allocation3 + $0x68] sm:$0xf]
  %v2988 = vld [vmem:[#allocation3 + $0x70] sm:$0xf]
  %v2989 = vld [vmem:[#allocation3 + $0x78] sm:$0xf]
  %v2990 = vld [vmem:[#allocation3 + $0x80] sm:$0xf]
  %v2991 = vld [vmem:[%s183] sm:$0xf]
  %v2992 = vld [vmem:[%s183 + $0x8] sm:$0xf]
  %v2993 = vld [vmem:[%s183 + $0x10] sm:$0xf]
  %v2994 = vld [vmem:[%s183 + $0x18] sm:$0xf]
  %v2995 = vld [vmem:[%s183 + $0x20] sm:$0xf]
  %v2996 = vld [vmem:[%s183 + $0x28] sm:$0xf]
  %v2997 = vld [vmem:[%s183 + $0x30] sm:$0xf]
  %v2998 = vld [vmem:[%s183 + $0x38] sm:$0xf]
  %v2999 = vld [vmem:[%s183 + $0x48] sm:$0xf]
  %v3000 = vld [vmem:[%s183 + $0x50] sm:$0xf]
  %v3001 = vld [vmem:[%s183 + $0x58] sm:$0xf]
  %v3002 = vld [vmem:[%s183 + $0x60] sm:$0xf]
  %v3003 = vld [vmem:[%s183 + $0x68] sm:$0xf]
  %v3004 = vld [vmem:[%s183 + $0x70] sm:$0xf]
  %v3005 = vld [vmem:[%s183 + $0x78] sm:$0xf]
  %v3006 = vld [vmem:[%s183 + $0x80] sm:$0xf]
  %v3007 = vld [vmem:[#allocation3 + $0x4] sm:$0x1]
  %v3008 = vld [vmem:[#allocation3 + $0xc] sm:$0x1]
  %v3009 = vld [vmem:[#allocation3 + $0x14] sm:$0x1]
  %v3010 = vld [vmem:[#allocation3 + $0x1c] sm:$0x1]
  %v3011 = vld [vmem:[#allocation3 + $0x24] sm:$0x1]
  %v3012 = vld [vmem:[#allocation3 + $0x2c] sm:$0x1]
  %v3013 = vld [vmem:[#allocation3 + $0x34] sm:$0x1]
  %v3014 = vld [vmem:[#allocation3 + $0x3c] sm:$0x1]
  %v3015 = vld [vmem:[#allocation3 + $0x4c] sm:$0x1]
  %v3016 = vld [vmem:[#allocation3 + $0x54] sm:$0x1]
  %v3017 = vld [vmem:[#allocation3 + $0x5c] sm:$0x1]
  %v3018 = vld [vmem:[#allocation3 + $0x64] sm:$0x1]
  %v3019 = vld [vmem:[#allocation3 + $0x6c] sm:$0x1]
  %v3020 = vld [vmem:[#allocation3 + $0x74] sm:$0x1]
  %v3021 = vld [vmem:[#allocation3 + $0x7c] sm:$0x1]
  %v3022 = vld [vmem:[#allocation3 + $0x84] sm:$0x1]
  %vm3023 = vsmask.f32 3328
  %vm3024 = vsmask.f32 7440
  %vm3025 = vmor %vm3023, %vm3024
  %v3027 = vshrl.u32 %v2975, 16
  %v3029 = vrot.slane %v3027, 4
  %v3030 = vshll.u32 %v2975, 16
  %v3032 = vrot.slane %v3030, 5
  %v3033 = vor.u32 %v3029, %v3032
  %v3034 = vrot.slane %v3033, 4
  %v3036 = vshll.u32 %v3007, 16
  %v3038 = vrot.slane %v3036, 5
  %v3039 = vsel %vm3025, %v3034, %v3038
  %v3041 = vshrl.u32 %v2976, 16
  %v3043 = vrot.slane %v3041, 4
  %v3044 = vshll.u32 %v2976, 16
  %v3046 = vrot.slane %v3044, 5
  %v3047 = vor.u32 %v3043, %v3046
  %v3048 = vrot.slane %v3047, 4
  %v3050 = vshll.u32 %v3008, 16
  %v3052 = vrot.slane %v3050, 5
  %v3053 = vsel %vm3025, %v3048, %v3052
  %v3055 = vshrl.u32 %v2977, 16
  %v3057 = vrot.slane %v3055, 4
  %v3058 = vshll.u32 %v2977, 16
  %v3060 = vrot.slane %v3058, 5
  %v3061 = vor.u32 %v3057, %v3060
  %v3062 = vrot.slane %v3061, 4
  %v3064 = vshll.u32 %v3009, 16
  %v3066 = vrot.slane %v3064, 5
  %v3067 = vsel %vm3025, %v3062, %v3066
  %v3069 = vshrl.u32 %v2978, 16
  %v3071 = vrot.slane %v3069, 4
  %v3072 = vshll.u32 %v2978, 16
  %v3074 = vrot.slane %v3072, 5
  %v3075 = vor.u32 %v3071, %v3074
  %v3076 = vrot.slane %v3075, 4
  %v3078 = vshll.u32 %v3010, 16
  %v3080 = vrot.slane %v3078, 5
  %v3081 = vsel %vm3025, %v3076, %v3080
  %v3083 = vshrl.u32 %v2979, 16
  %v3085 = vrot.slane %v3083, 4
  %v3086 = vshll.u32 %v2979, 16
  %v3088 = vrot.slane %v3086, 5
  %v3089 = vor.u32 %v3085, %v3088
  %v3090 = vrot.slane %v3089, 4
  %v3092 = vshll.u32 %v3011, 16
  %v3094 = vrot.slane %v3092, 5
  %v3095 = vsel %vm3025, %v3090, %v3094
  %v3097 = vshrl.u32 %v2980, 16
  %v3099 = vrot.slane %v3097, 4
  %v3100 = vshll.u32 %v2980, 16
  %v3102 = vrot.slane %v3100, 5
  %v3103 = vor.u32 %v3099, %v3102
  %v3104 = vrot.slane %v3103, 4
  %v3106 = vshll.u32 %v3012, 16
  %v3108 = vrot.slane %v3106, 5
  %v3109 = vsel %vm3025, %v3104, %v3108
  %v3111 = vshrl.u32 %v2981, 16
  %v3113 = vrot.slane %v3111, 4
  %v3114 = vshll.u32 %v2981, 16
  %v3116 = vrot.slane %v3114, 5
  %v3117 = vor.u32 %v3113, %v3116
  %v3118 = vrot.slane %v3117, 4
  %v3120 = vshll.u32 %v3013, 16
  %v3122 = vrot.slane %v3120, 5
  %v3123 = vsel %vm3025, %v3118, %v3122
  %v3125 = vshrl.u32 %v2982, 16
  %v3127 = vrot.slane %v3125, 4
  %v3128 = vshll.u32 %v2982, 16
  %v3130 = vrot.slane %v3128, 5
  %v3131 = vor.u32 %v3127, %v3130
  %v3132 = vrot.slane %v3131, 4
  %v3134 = vshll.u32 %v3014, 16
  %v3136 = vrot.slane %v3134, 5
  %v3137 = vsel %vm3025, %v3132, %v3136
  %v3139 = vshrl.u32 %v2983, 16
  %v3141 = vrot.slane %v3139, 4
  %v3142 = vshll.u32 %v2983, 16
  %v3144 = vrot.slane %v3142, 5
  %v3145 = vor.u32 %v3141, %v3144
  %v3146 = vrot.slane %v3145, 4
  %v3148 = vshll.u32 %v3015, 16
  %v3150 = vrot.slane %v3148, 5
  %v3151 = vsel %vm3025, %v3146, %v3150
  %v3153 = vshrl.u32 %v2984, 16
  %v3155 = vrot.slane %v3153, 4
  %v3156 = vshll.u32 %v2984, 16
  %v3158 = vrot.slane %v3156, 5
  %v3159 = vor.u32 %v3155, %v3158
  %v3160 = vrot.slane %v3159, 4
  %v3162 = vshll.u32 %v3016, 16
  %v3164 = vrot.slane %v3162, 5
  %v3165 = vsel %vm3025, %v3160, %v3164
  %v3167 = vshrl.u32 %v2985, 16
  %v3169 = vrot.slane %v3167, 4
  %v3170 = vshll.u32 %v2985, 16
  %v3172 = vrot.slane %v3170, 5
  %v3173 = vor.u32 %v3169, %v3172
  %v3174 = vrot.slane %v3173, 4
  %v3176 = vshll.u32 %v3017, 16
  %v3178 = vrot.slane %v3176, 5
  %v3179 = vsel %vm3025, %v3174, %v3178
  %v3181 = vshrl.u32 %v2986, 16
  %v3183 = vrot.slane %v3181, 4
  %v3184 = vshll.u32 %v2986, 16
  %v3186 = vrot.slane %v3184, 5
  %v3187 = vor.u32 %v3183, %v3186
  %v3188 = vrot.slane %v3187, 4
  %v3190 = vshll.u32 %v3018, 16
  %v3192 = vrot.slane %v3190, 5
  %v3193 = vsel %vm3025, %v3188, %v3192
  %v3195 = vshrl.u32 %v2987, 16
  %v3197 = vrot.slane %v3195, 4
  %v3198 = vshll.u32 %v2987, 16
  %v3200 = vrot.slane %v3198, 5
  %v3201 = vor.u32 %v3197, %v3200
  %v3202 = vrot.slane %v3201, 4
  %v3204 = vshll.u32 %v3019, 16
  %v3206 = vrot.slane %v3204, 5
  %v3207 = vsel %vm3025, %v3202, %v3206
  %v3209 = vshrl.u32 %v2988, 16
  %v3211 = vrot.slane %v3209, 4
  %v3212 = vshll.u32 %v2988, 16
  %v3214 = vrot.slane %v3212, 5
  %v3215 = vor.u32 %v3211, %v3214
  %v3216 = vrot.slane %v3215, 4
  %v3218 = vshll.u32 %v3020, 16
  %v3220 = vrot.slane %v3218, 5
  %v3221 = vsel %vm3025, %v3216, %v3220
  %v3223 = vshrl.u32 %v2989, 16
  %v3225 = vrot.slane %v3223, 4
  %v3226 = vshll.u32 %v2989, 16
  %v3228 = vrot.slane %v3226, 5
  %v3229 = vor.u32 %v3225, %v3228
  %v3230 = vrot.slane %v3229, 4
  %v3232 = vshll.u32 %v3021, 16
  %v3234 = vrot.slane %v3232, 5
  %v3235 = vsel %vm3025, %v3230, %v3234
  %v3237 = vshrl.u32 %v2990, 16
  %v3239 = vrot.slane %v3237, 4
  %v3240 = vshll.u32 %v2990, 16
  %v3242 = vrot.slane %v3240, 5
  %v3243 = vor.u32 %v3239, %v3242
  %v3244 = vrot.slane %v3243, 4
  %v3246 = vshll.u32 %v3022, 16
  %v3248 = vrot.slane %v3246, 5
  %v3249 = vsel %vm3025, %v3244, %v3248
  %v3250 = vld [vmem:[%s128] sm:$0xf]
  %v3251 = vld [vmem:[%s128 + $0x8] sm:$0xf]
  %v3252 = vld [vmem:[%s128 + $0x10] sm:$0xf]
  %v3253 = vld [vmem:[%s128 + $0x18] sm:$0xf]
  %v3254 = vld [vmem:[%s128 + $0x20] sm:$0xf]
  %v3255 = vld [vmem:[%s128 + $0x28] sm:$0xf]
  %v3256 = vld [vmem:[%s128 + $0x30] sm:$0xf]
  %v3257 = vld [vmem:[%s128 + $0x38] sm:$0xf]
  %v3258 = vld [vmem:[%s128 + $0x48] sm:$0xf]
  %v3259 = vld [vmem:[%s128 + $0x50] sm:$0xf]
  %v3260 = vld [vmem:[%s128 + $0x58] sm:$0xf]
  %v3261 = vld [vmem:[%s128 + $0x60] sm:$0xf]
  %v3262 = vld [vmem:[%s128 + $0x68] sm:$0xf]
  %v3263 = vld [vmem:[%s128 + $0x70] sm:$0xf]
  %v3264 = vld [vmem:[%s128 + $0x78] sm:$0xf]
  %v3265 = vld [vmem:[%s128 + $0x80] sm:$0xf]
  %v3266 = vld [vmem:[%s64] sm:$0xf]
  %v3267 = vld [vmem:[%s64 + $0x8] sm:$0xf]
  %v3268 = vld [vmem:[%s64 + $0x10] sm:$0xf]
  %v3269 = vld [vmem:[%s64 + $0x18] sm:$0xf]
  %v3270 = vld [vmem:[%s64 + $0x20] sm:$0xf]
  %v3271 = vld [vmem:[%s64 + $0x28] sm:$0xf]
  %v3272 = vld [vmem:[%s64 + $0x30] sm:$0xf]
  %v3273 = vld [vmem:[%s64 + $0x38] sm:$0xf]
  %v3274 = vld [vmem:[%s64 + $0x48] sm:$0xf]
  %v3275 = vld [vmem:[%s64 + $0x50] sm:$0xf]
  %v3276 = vld [vmem:[%s64 + $0x58] sm:$0xf]
  %v3277 = vld [vmem:[%s64 + $0x60] sm:$0xf]
  %v3278 = vld [vmem:[%s64 + $0x68] sm:$0xf]
  %v3279 = vld [vmem:[%s64 + $0x70] sm:$0xf]
  %v3280 = vld [vmem:[%s64 + $0x78] sm:$0xf]
  %v3281 = vld [vmem:[%s64 + $0x80] sm:$0xf]
  %v3282 = vld [vmem:[%s128 + $0x4] sm:$0x1]
  %v3283 = vld [vmem:[%s128 + $0xc] sm:$0x1]
  %v3284 = vld [vmem:[%s128 + $0x14] sm:$0x1]
  %v3285 = vld [vmem:[%s128 + $0x1c] sm:$0x1]
  %v3286 = vld [vmem:[%s128 + $0x24] sm:$0x1]
  %v3287 = vld [vmem:[%s128 + $0x2c] sm:$0x1]
  %v3288 = vld [vmem:[%s128 + $0x34] sm:$0x1]
  %v3289 = vld [vmem:[%s128 + $0x3c] sm:$0x1]
  %v3290 = vld [vmem:[%s128 + $0x4c] sm:$0x1]
  %v3291 = vld [vmem:[%s128 + $0x54] sm:$0x1]
  %v3292 = vld [vmem:[%s128 + $0x5c] sm:$0x1]
  %v3293 = vld [vmem:[%s128 + $0x64] sm:$0x1]
  %v3294 = vld [vmem:[%s128 + $0x6c] sm:$0x1]
  %v3295 = vld [vmem:[%s128 + $0x74] sm:$0x1]
  %v3296 = vld [vmem:[%s128 + $0x7c] sm:$0x1]
  %v3297 = vld [vmem:[%s128 + $0x84] sm:$0x1]
  %v3299 = vshrl.u32 %v3250, 16
  %v3301 = vrot.slane %v3299, 4
  %v3302 = vshll.u32 %v3250, 16
  %v3304 = vrot.slane %v3302, 5
  %v3305 = vor.u32 %v3301, %v3304
  %v3306 = vrot.slane %v3305, 4
  %v3308 = vshll.u32 %v3282, 16
  %v3310 = vrot.slane %v3308, 5
  %v3311 = vsel %vm3025, %v3306, %v3310
  %v3313 = vshrl.u32 %v3251, 16
  %v3315 = vrot.slane %v3313, 4
  %v3316 = vshll.u32 %v3251, 16
  %v3318 = vrot.slane %v3316, 5
  %v3319 = vor.u32 %v3315, %v3318
  %v3320 = vrot.slane %v3319, 4
  %v3322 = vshll.u32 %v3283, 16
  %v3324 = vrot.slane %v3322, 5
  %v3325 = vsel %vm3025, %v3320, %v3324
  %v3327 = vshrl.u32 %v3252, 16
  %v3329 = vrot.slane %v3327, 4
  %v3330 = vshll.u32 %v3252, 16
  %v3332 = vrot.slane %v3330, 5
  %v3333 = vor.u32 %v3329, %v3332
  %v3334 = vrot.slane %v3333, 4
  %v3336 = vshll.u32 %v3284, 16
  %v3338 = vrot.slane %v3336, 5
  %v3339 = vsel %vm3025, %v3334, %v3338
  %v3341 = vshrl.u32 %v3253, 16
  %v3343 = vrot.slane %v3341, 4
  %v3344 = vshll.u32 %v3253, 16
  %v3346 = vrot.slane %v3344, 5
  %v3347 = vor.u32 %v3343, %v3346
  %v3348 = vrot.slane %v3347, 4
  %v3350 = vshll.u32 %v3285, 16
  %v3352 = vrot.slane %v3350, 5
  %v3353 = vsel %vm3025, %v3348, %v3352
  %v3355 = vshrl.u32 %v3254, 16
  %v3357 = vrot.slane %v3355, 4
  %v3358 = vshll.u32 %v3254, 16
  %v3360 = vrot.slane %v3358, 5
  %v3361 = vor.u32 %v3357, %v3360
  %v3362 = vrot.slane %v3361, 4
  %v3364 = vshll.u32 %v3286, 16
  %v3366 = vrot.slane %v3364, 5
  %v3367 = vsel %vm3025, %v3362, %v3366
  %v3369 = vshrl.u32 %v3255, 16
  %v3371 = vrot.slane %v3369, 4
  %v3372 = vshll.u32 %v3255, 16
  %v3374 = vrot.slane %v3372, 5
  %v3375 = vor.u32 %v3371, %v3374
  %v3376 = vrot.slane %v3375, 4
  %v3378 = vshll.u32 %v3287, 16
  %v3380 = vrot.slane %v3378, 5
  %v3381 = vsel %vm3025, %v3376, %v3380
  %v3383 = vshrl.u32 %v3256, 16
  %v3385 = vrot.slane %v3383, 4
  %v3386 = vshll.u32 %v3256, 16
  %v3388 = vrot.slane %v3386, 5
  %v3389 = vor.u32 %v3385, %v3388
  %v3390 = vrot.slane %v3389, 4
  %v3392 = vshll.u32 %v3288, 16
  %v3394 = vrot.slane %v3392, 5
  %v3395 = vsel %vm3025, %v3390, %v3394
  %v3397 = vshrl.u32 %v3257, 16
  %v3399 = vrot.slane %v3397, 4
  %v3400 = vshll.u32 %v3257, 16
  %v3402 = vrot.slane %v3400, 5
  %v3403 = vor.u32 %v3399, %v3402
  %v3404 = vrot.slane %v3403, 4
  %v3406 = vshll.u32 %v3289, 16
  %v3408 = vrot.slane %v3406, 5
  %v3409 = vsel %vm3025, %v3404, %v3408
  %v3411 = vshrl.u32 %v3258, 16
  %v3413 = vrot.slane %v3411, 4
  %v3414 = vshll.u32 %v3258, 16
  %v3416 = vrot.slane %v3414, 5
  %v3417 = vor.u32 %v3413, %v3416
  %v3418 = vrot.slane %v3417, 4
  %v3420 = vshll.u32 %v3290, 16
  %v3422 = vrot.slane %v3420, 5
  %v3423 = vsel %vm3025, %v3418, %v3422
  %v3425 = vshrl.u32 %v3259, 16
  %v3427 = vrot.slane %v3425, 4
  %v3428 = vshll.u32 %v3259, 16
  %v3430 = vrot.slane %v3428, 5
  %v3431 = vor.u32 %v3427, %v3430
  %v3432 = vrot.slane %v3431, 4
  %v3434 = vshll.u32 %v3291, 16
  %v3436 = vrot.slane %v3434, 5
  %v3437 = vsel %vm3025, %v3432, %v3436
  %v3439 = vshrl.u32 %v3260, 16
  %v3441 = vrot.slane %v3439, 4
  %v3442 = vshll.u32 %v3260, 16
  %v3444 = vrot.slane %v3442, 5
  %v3445 = vor.u32 %v3441, %v3444
  %v3446 = vrot.slane %v3445, 4
  %v3448 = vshll.u32 %v3292, 16
  %v3450 = vrot.slane %v3448, 5
  %v3451 = vsel %vm3025, %v3446, %v3450
  %v3453 = vshrl.u32 %v3261, 16
  %v3455 = vrot.slane %v3453, 4
  %v3456 = vshll.u32 %v3261, 16
  %v3458 = vrot.slane %v3456, 5
  %v3459 = vor.u32 %v3455, %v3458
  %v3460 = vrot.slane %v3459, 4
  %v3462 = vshll.u32 %v3293, 16
  %v3464 = vrot.slane %v3462, 5
  %v3465 = vsel %vm3025, %v3460, %v3464
  %v3467 = vshrl.u32 %v3262, 16
  %v3469 = vrot.slane %v3467, 4
  %v3470 = vshll.u32 %v3262, 16
  %v3472 = vrot.slane %v3470, 5
  %v3473 = vor.u32 %v3469, %v3472
  %v3474 = vrot.slane %v3473, 4
  %v3476 = vshll.u32 %v3294, 16
  %v3478 = vrot.slane %v3476, 5
  %v3479 = vsel %vm3025, %v3474, %v3478
  %v3481 = vshrl.u32 %v3263, 16
  %v3483 = vrot.slane %v3481, 4
  %v3484 = vshll.u32 %v3263, 16
  %v3486 = vrot.slane %v3484, 5
  %v3487 = vor.u32 %v3483, %v3486
  %v3488 = vrot.slane %v3487, 4
  %v3490 = vshll.u32 %v3295, 16
  %v3492 = vrot.slane %v3490, 5
  %v3493 = vsel %vm3025, %v3488, %v3492
  %v3495 = vshrl.u32 %v3264, 16
  %v3497 = vrot.slane %v3495, 4
  %v3498 = vshll.u32 %v3264, 16
  %v3500 = vrot.slane %v3498, 5
  %v3501 = vor.u32 %v3497, %v3500
  %v3502 = vrot.slane %v3501, 4
  %v3504 = vshll.u32 %v3296, 16
  %v3506 = vrot.slane %v3504, 5
  %v3507 = vsel %vm3025, %v3502, %v3506
  %v3509 = vshrl.u32 %v3265, 16
  %v3511 = vrot.slane %v3509, 4
  %v3512 = vshll.u32 %v3265, 16
  %v3514 = vrot.slane %v3512, 5
  %v3515 = vor.u32 %v3511, %v3514
  %v3516 = vrot.slane %v3515, 4
  %v3518 = vshll.u32 %v3297, 16
  %v3520 = vrot.slane %v3518, 5
  %v3521 = vsel %vm3025, %v3516, %v3520
  %v3522 = vld [vmem:[%s2878] sm:$0xf]
  %v3523 = vld [vmem:[%s2878 + $0x8] sm:$0xf]
  %v3524 = vld [vmem:[%s2878 + $0x10] sm:$0xf]
  %v3525 = vld [vmem:[%s2878 + $0x18] sm:$0xf]
  %v3526 = vld [vmem:[%s2878 + $0x20] sm:$0xf]
  %v3527 = vld [vmem:[%s2878 + $0x28] sm:$0xf]
  %v3528 = vld [vmem:[%s2878 + $0x30] sm:$0xf]
  %v3529 = vld [vmem:[%s2878 + $0x38] sm:$0xf]
  %v3530 = vld [vmem:[%s2878 + $0x48] sm:$0xf]
  %v3531 = vld [vmem:[%s2878 + $0x50] sm:$0xf]
  %v3532 = vld [vmem:[%s2878 + $0x58] sm:$0xf]
  %v3533 = vld [vmem:[%s2878 + $0x60] sm:$0xf]
  %v3534 = vld [vmem:[%s2878 + $0x68] sm:$0xf]
  %v3535 = vld [vmem:[%s2878 + $0x70] sm:$0xf]
  %v3536 = vld [vmem:[%s2878 + $0x78] sm:$0xf]
  %v3537 = vld [vmem:[%s2878 + $0x80] sm:$0xf]
  %v3538 = vld [vmem:[%s2701] sm:$0xf]
  %v3539 = vld [vmem:[%s2701 + $0x8] sm:$0xf]
  %v3540 = vld [vmem:[%s2701 + $0x10] sm:$0xf]
  %v3541 = vld [vmem:[%s2701 + $0x18] sm:$0xf]
  %v3542 = vld [vmem:[%s2701 + $0x20] sm:$0xf]
  %v3543 = vld [vmem:[%s2701 + $0x28] sm:$0xf]
  %v3544 = vld [vmem:[%s2701 + $0x30] sm:$0xf]
  %v3545 = vld [vmem:[%s2701 + $0x38] sm:$0xf]
  %v3546 = vld [vmem:[%s2701 + $0x48] sm:$0xf]
  %v3547 = vld [vmem:[%s2701 + $0x50] sm:$0xf]
  %v3548 = vld [vmem:[%s2701 + $0x58] sm:$0xf]
  %v3549 = vld [vmem:[%s2701 + $0x60] sm:$0xf]
  %v3550 = vld [vmem:[%s2701 + $0x68] sm:$0xf]
  %v3551 = vld [vmem:[%s2701 + $0x70] sm:$0xf]
  %v3552 = vld [vmem:[%s2701 + $0x78] sm:$0xf]
  %v3553 = vld [vmem:[%s2701 + $0x80] sm:$0xf]
  %v3554 = vld [vmem:[%s2878 + $0x4] sm:$0x1]
  %v3555 = vld [vmem:[%s2878 + $0xc] sm:$0x1]
  %v3556 = vld [vmem:[%s2878 + $0x14] sm:$0x1]
  %v3557 = vld [vmem:[%s2878 + $0x1c] sm:$0x1]
  %v3558 = vld [vmem:[%s2878 + $0x24] sm:$0x1]
  %v3559 = vld [vmem:[%s2878 + $0x2c] sm:$0x1]
  %v3560 = vld [vmem:[%s2878 + $0x34] sm:$0x1]
  %v3561 = vld [vmem:[%s2878 + $0x3c] sm:$0x1]
  %v3562 = vld [vmem:[%s2878 + $0x4c] sm:$0x1]
  %v3563 = vld [vmem:[%s2878 + $0x54] sm:$0x1]
  %v3564 = vld [vmem:[%s2878 + $0x5c] sm:$0x1]
  %v3565 = vld [vmem:[%s2878 + $0x64] sm:$0x1]
  %v3566 = vld [vmem:[%s2878 + $0x6c] sm:$0x1]
  %v3567 = vld [vmem:[%s2878 + $0x74] sm:$0x1]
  %v3568 = vld [vmem:[%s2878 + $0x7c] sm:$0x1]
  %v3569 = vld [vmem:[%s2878 + $0x84] sm:$0x1]
  %v3571 = vshrl.u32 %v3522, 16
  %v3573 = vrot.slane %v3571, 4
  %v3574 = vshll.u32 %v3522, 16
  %v3576 = vrot.slane %v3574, 5
  %v3577 = vor.u32 %v3573, %v3576
  %v3578 = vrot.slane %v3577, 4
  %v3580 = vshll.u32 %v3554, 16
  %v3582 = vrot.slane %v3580, 5
  %v3583 = vsel %vm3025, %v3578, %v3582
  %v3585 = vshrl.u32 %v3523, 16
  %v3587 = vrot.slane %v3585, 4
  %v3588 = vshll.u32 %v3523, 16
  %v3590 = vrot.slane %v3588, 5
  %v3591 = vor.u32 %v3587, %v3590
  %v3592 = vrot.slane %v3591, 4
  %v3594 = vshll.u32 %v3555, 16
  %v3596 = vrot.slane %v3594, 5
  %v3597 = vsel %vm3025, %v3592, %v3596
  %v3599 = vshrl.u32 %v3524, 16
  %v3601 = vrot.slane %v3599, 4
  %v3602 = vshll.u32 %v3524, 16
  %v3604 = vrot.slane %v3602, 5
  %v3605 = vor.u32 %v3601, %v3604
  %v3606 = vrot.slane %v3605, 4
  %v3608 = vshll.u32 %v3556, 16
  %v3610 = vrot.slane %v3608, 5
  %v3611 = vsel %vm3025, %v3606, %v3610
  %v3613 = vshrl.u32 %v3525, 16
  %v3615 = vrot.slane %v3613, 4
  %v3616 = vshll.u32 %v3525, 16
  %v3618 = vrot.slane %v3616, 5
  %v3619 = vor.u32 %v3615, %v3618
  %v3620 = vrot.slane %v3619, 4
  %v3622 = vshll.u32 %v3557, 16
  %v3624 = vrot.slane %v3622, 5
  %v3625 = vsel %vm3025, %v3620, %v3624
  %v3627 = vshrl.u32 %v3526, 16
  %v3629 = vrot.slane %v3627, 4
  %v3630 = vshll.u32 %v3526, 16
  %v3632 = vrot.slane %v3630, 5
  %v3633 = vor.u32 %v3629, %v3632
  %v3634 = vrot.slane %v3633, 4
  %v3636 = vshll.u32 %v3558, 16
  %v3638 = vrot.slane %v3636, 5
  %v3639 = vsel %vm3025, %v3634, %v3638
  %v3641 = vshrl.u32 %v3527, 16
  %v3643 = vrot.slane %v3641, 4
  %v3644 = vshll.u32 %v3527, 16
  %v3646 = vrot.slane %v3644, 5
  %v3647 = vor.u32 %v3643, %v3646
  %v3648 = vrot.slane %v3647, 4
  %v3650 = vshll.u32 %v3559, 16
  %v3652 = vrot.slane %v3650, 5
  %v3653 = vsel %vm3025, %v3648, %v3652
  %v3655 = vshrl.u32 %v3528, 16
  %v3657 = vrot.slane %v3655, 4
  %v3658 = vshll.u32 %v3528, 16
  %v3660 = vrot.slane %v3658, 5
  %v3661 = vor.u32 %v3657, %v3660
  %v3662 = vrot.slane %v3661, 4
  %v3664 = vshll.u32 %v3560, 16
  %v3666 = vrot.slane %v3664, 5
  %v3667 = vsel %vm3025, %v3662, %v3666
  %v3669 = vshrl.u32 %v3529, 16
  %v3671 = vrot.slane %v3669, 4
  %v3672 = vshll.u32 %v3529, 16
  %v3674 = vrot.slane %v3672, 5
  %v3675 = vor.u32 %v3671, %v3674
  %v3676 = vrot.slane %v3675, 4
  %v3678 = vshll.u32 %v3561, 16
  %v3680 = vrot.slane %v3678, 5
  %v3681 = vsel %vm3025, %v3676, %v3680
  %v3683 = vshrl.u32 %v3530, 16
  %v3685 = vrot.slane %v3683, 4
  %v3686 = vshll.u32 %v3530, 16
  %v3688 = vrot.slane %v3686, 5
  %v3689 = vor.u32 %v3685, %v3688
  %v3690 = vrot.slane %v3689, 4
  %v3692 = vshll.u32 %v3562, 16
  %v3694 = vrot.slane %v3692, 5
  %v3695 = vsel %vm3025, %v3690, %v3694
  %v3697 = vshrl.u32 %v3531, 16
  %v3699 = vrot.slane %v3697, 4
  %v3700 = vshll.u32 %v3531, 16
  %v3702 = vrot.slane %v3700, 5
  %v3703 = vor.u32 %v3699, %v3702
  %v3704 = vrot.slane %v3703, 4
  %v3706 = vshll.u32 %v3563, 16
  %v3708 = vrot.slane %v3706, 5
  %v3709 = vsel %vm3025, %v3704, %v3708
  %v3711 = vshrl.u32 %v3532, 16
  %v3713 = vrot.slane %v3711, 4
  %v3714 = vshll.u32 %v3532, 16
  %v3716 = vrot.slane %v3714, 5
  %v3717 = vor.u32 %v3713, %v3716
  %v3718 = vrot.slane %v3717, 4
  %v3720 = vshll.u32 %v3564, 16
  %v3722 = vrot.slane %v3720, 5
  %v3723 = vsel %vm3025, %v3718, %v3722
  %v3725 = vshrl.u32 %v3533, 16
  %v3727 = vrot.slane %v3725, 4
  %v3728 = vshll.u32 %v3533, 16
  %v3730 = vrot.slane %v3728, 5
  %v3731 = vor.u32 %v3727, %v3730
  %v3732 = vrot.slane %v3731, 4
  %v3734 = vshll.u32 %v3565, 16
  %v3736 = vrot.slane %v3734, 5
  %v3737 = vsel %vm3025, %v3732, %v3736
  %v3739 = vshrl.u32 %v3534, 16
  %v3741 = vrot.slane %v3739, 4
  %v3742 = vshll.u32 %v3534, 16
  %v3744 = vrot.slane %v3742, 5
  %v3745 = vor.u32 %v3741, %v3744
  %v3746 = vrot.slane %v3745, 4
  %v3748 = vshll.u32 %v3566, 16
  %v3750 = vrot.slane %v3748, 5
  %v3751 = vsel %vm3025, %v3746, %v3750
  %v3753 = vshrl.u32 %v3535, 16
  %v3755 = vrot.slane %v3753, 4
  %v3756 = vshll.u32 %v3535, 16
  %v3758 = vrot.slane %v3756, 5
  %v3759 = vor.u32 %v3755, %v3758
  %v3760 = vrot.slane %v3759, 4
  %v3762 = vshll.u32 %v3567, 16
  %v3764 = vrot.slane %v3762, 5
  %v3765 = vsel %vm3025, %v3760, %v3764
  %v3767 = vshrl.u32 %v3536, 16
  %v3769 = vrot.slane %v3767, 4
  %v3770 = vshll.u32 %v3536, 16
  %v3772 = vrot.slane %v3770, 5
  %v3773 = vor.u32 %v3769, %v3772
  %v3774 = vrot.slane %v3773, 4
  %v3776 = vshll.u32 %v3568, 16
  %v3778 = vrot.slane %v3776, 5
  %v3779 = vsel %vm3025, %v3774, %v3778
  %v3781 = vshrl.u32 %v3537, 16
  %v3783 = vrot.slane %v3781, 4
  %v3784 = vshll.u32 %v3537, 16
  %v3786 = vrot.slane %v3784, 5
  %v3787 = vor.u32 %v3783, %v3786
  %v3788 = vrot.slane %v3787, 4
  %v3790 = vshll.u32 %v3569, 16
  %v3792 = vrot.slane %v3790, 5
  %v3793 = vsel %vm3025, %v3788, %v3792
  %v3810 = vunpack.c.l.b16 %v2975
  %v3811 = vunpack.c.l.b16 %v2976
  %v3812 = vunpack.c.l.b16 %v2977
  %v3813 = vunpack.c.l.b16 %v2978
  %v3814 = vunpack.c.l.b16 %v2979
  %v3815 = vunpack.c.l.b16 %v2980
  %v3816 = vunpack.c.l.b16 %v2981
  %v3817 = vunpack.c.l.b16 %v2982
  %v3818 = vunpack.c.l.b16 %v2983
  %v3819 = vunpack.c.l.b16 %v2984
  %v3820 = vunpack.c.l.b16 %v2985
  %v3821 = vunpack.c.l.b16 %v2986
  %v3822 = vunpack.c.l.b16 %v2987
  %v3823 = vunpack.c.l.b16 %v2988
  %v3824 = vunpack.c.l.b16 %v2989
  %v3825 = vunpack.c.l.b16 %v2990
  %v3826 = vpack.c.b16 %v3811, %v3810
  %v3827 = vpack.c.b16 %v3813, %v3812
  %v3828 = vpack.c.b16 %v3815, %v3814
  %v3829 = vpack.c.b16 %v3817, %v3816
  %v3830 = vpack.c.b16 %v3819, %v3818
  %v3831 = vpack.c.b16 %v3821, %v3820
  %v3832 = vpack.c.b16 %v3823, %v3822
  %v3833 = vpack.c.b16 %v3825, %v3824
  %v3858 = vunpack.c.l.b16 %v2991
  %v3859 = vunpack.c.l.b16 %v2992
  %v3860 = vunpack.c.l.b16 %v2993
  %v3861 = vunpack.c.l.b16 %v2994
  %v3862 = vunpack.c.l.b16 %v2995
  %v3863 = vunpack.c.l.b16 %v2996
  %v3864 = vunpack.c.l.b16 %v2997
  %v3865 = vunpack.c.l.b16 %v2998
  %v3866 = vunpack.c.l.b16 %v2999
  %v3867 = vunpack.c.l.b16 %v3000
  %v3868 = vunpack.c.l.b16 %v3001
  %v3869 = vunpack.c.l.b16 %v3002
  %v3870 = vunpack.c.l.b16 %v3003
  %v3871 = vunpack.c.l.b16 %v3004
  %v3872 = vunpack.c.l.b16 %v3005
  %v3873 = vunpack.c.l.b16 %v3006
  %v3874 = vpack.c.b16 %v3859, %v3858
  %v3875 = vpack.c.b16 %v3861, %v3860
  %v3876 = vpack.c.b16 %v3863, %v3862
  %v3877 = vpack.c.b16 %v3865, %v3864
  %v3878 = vpack.c.b16 %v3867, %v3866
  %v3879 = vpack.c.b16 %v3869, %v3868
  %v3880 = vpack.c.b16 %v3871, %v3870
  %v3881 = vpack.c.b16 %v3873, %v3872
  %v3890 = vunpack.c.l.b16 %v3039
  %v3891 = vunpack.c.l.b16 %v3053
  %v3892 = vunpack.c.l.b16 %v3067
  %v3893 = vunpack.c.l.b16 %v3081
  %v3894 = vunpack.c.l.b16 %v3095
  %v3895 = vunpack.c.l.b16 %v3109
  %v3896 = vunpack.c.l.b16 %v3123
  %v3897 = vunpack.c.l.b16 %v3137
  %v3898 = vunpack.c.l.b16 %v3151
  %v3899 = vunpack.c.l.b16 %v3165
  %v3900 = vunpack.c.l.b16 %v3179
  %v3901 = vunpack.c.l.b16 %v3193
  %v3902 = vunpack.c.l.b16 %v3207
  %v3903 = vunpack.c.l.b16 %v3221
  %v3904 = vunpack.c.l.b16 %v3235
  %v3905 = vunpack.c.l.b16 %v3249
  %v3906 = vpack.c.b16 %v3891, %v3890
  %v3907 = vpack.c.b16 %v3893, %v3892
  %v3908 = vpack.c.b16 %v3895, %v3894
  %v3909 = vpack.c.b16 %v3897, %v3896
  %v3910 = vpack.c.b16 %v3899, %v3898
  %v3911 = vpack.c.b16 %v3901, %v3900
  %v3912 = vpack.c.b16 %v3903, %v3902
  %v3913 = vpack.c.b16 %v3905, %v3904
  %v3938 = vunpack.c.l.b16 %v3250
  %v3939 = vunpack.c.l.b16 %v3251
  %v3940 = vunpack.c.l.b16 %v3252
  %v3941 = vunpack.c.l.b16 %v3253
  %v3942 = vunpack.c.l.b16 %v3254
  %v3943 = vunpack.c.l.b16 %v3255
  %v3944 = vunpack.c.l.b16 %v3256
  %v3945 = vunpack.c.l.b16 %v3257
  %v3946 = vunpack.c.l.b16 %v3258
  %v3947 = vunpack.c.l.b16 %v3259
  %v3948 = vunpack.c.l.b16 %v3260
  %v3949 = vunpack.c.l.b16 %v3261
  %v3950 = vunpack.c.l.b16 %v3262
  %v3951 = vunpack.c.l.b16 %v3263
  %v3952 = vunpack.c.l.b16 %v3264
  %v3953 = vunpack.c.l.b16 %v3265
  %v3954 = vpack.c.b16 %v3939, %v3938
  %v3955 = vpack.c.b16 %v3941, %v3940
  %v3956 = vpack.c.b16 %v3943, %v3942
  %v3957 = vpack.c.b16 %v3945, %v3944
  %v3958 = vpack.c.b16 %v3947, %v3946
  %v3959 = vpack.c.b16 %v3949, %v3948
  %v3960 = vpack.c.b16 %v3951, %v3950
  %v3961 = vpack.c.b16 %v3953, %v3952
  %v3986 = vunpack.c.l.b16 %v3266
  %v3987 = vunpack.c.l.b16 %v3267
  %v3988 = vunpack.c.l.b16 %v3268
  %v3989 = vunpack.c.l.b16 %v3269
  %v3990 = vunpack.c.l.b16 %v3270
  %v3991 = vunpack.c.l.b16 %v3271
  %v3992 = vunpack.c.l.b16 %v3272
  %v3993 = vunpack.c.l.b16 %v3273
  %v3994 = vunpack.c.l.b16 %v3274
  %v3995 = vunpack.c.l.b16 %v3275
  %v3996 = vunpack.c.l.b16 %v3276
  %v3997 = vunpack.c.l.b16 %v3277
  %v3998 = vunpack.c.l.b16 %v3278
  %v3999 = vunpack.c.l.b16 %v3279
  %v4000 = vunpack.c.l.b16 %v3280
  %v4001 = vunpack.c.l.b16 %v3281
  %v4002 = vpack.c.b16 %v3987, %v3986
  %v4003 = vpack.c.b16 %v3989, %v3988
  %v4004 = vpack.c.b16 %v3991, %v3990
  %v4005 = vpack.c.b16 %v3993, %v3992
  %v4006 = vpack.c.b16 %v3995, %v3994
  %v4007 = vpack.c.b16 %v3997, %v3996
  %v4008 = vpack.c.b16 %v3999, %v3998
  %v4009 = vpack.c.b16 %v4001, %v4000
  %v4018 = vunpack.c.l.b16 %v3311
  %v4019 = vunpack.c.l.b16 %v3325
  %v4020 = vunpack.c.l.b16 %v3339
  %v4021 = vunpack.c.l.b16 %v3353
  %v4022 = vunpack.c.l.b16 %v3367
  %v4023 = vunpack.c.l.b16 %v3381
  %v4024 = vunpack.c.l.b16 %v3395
  %v4025 = vunpack.c.l.b16 %v3409
  %v4026 = vunpack.c.l.b16 %v3423
  %v4027 = vunpack.c.l.b16 %v3437
  %v4028 = vunpack.c.l.b16 %v3451
  %v4029 = vunpack.c.l.b16 %v3465
  %v4030 = vunpack.c.l.b16 %v3479
  %v4031 = vunpack.c.l.b16 %v3493
  %v4032 = vunpack.c.l.b16 %v3507
  %v4033 = vunpack.c.l.b16 %v3521
  %v4034 = vpack.c.b16 %v4019, %v4018
  %v4035 = vpack.c.b16 %v4021, %v4020
  %v4036 = vpack.c.b16 %v4023, %v4022
  %v4037 = vpack.c.b16 %v4025, %v4024
  %v4038 = vpack.c.b16 %v4027, %v4026
  %v4039 = vpack.c.b16 %v4029, %v4028
  %v4040 = vpack.c.b16 %v4031, %v4030
  %v4041 = vpack.c.b16 %v4033, %v4032
  %v4066 = vunpack.c.l.b16 %v3522
  %v4067 = vunpack.c.l.b16 %v3523
  %v4068 = vunpack.c.l.b16 %v3524
  %v4069 = vunpack.c.l.b16 %v3525
  %v4070 = vunpack.c.l.b16 %v3526
  %v4071 = vunpack.c.l.b16 %v3527
  %v4072 = vunpack.c.l.b16 %v3528
  %v4073 = vunpack.c.l.b16 %v3529
  %v4074 = vunpack.c.l.b16 %v3530
  %v4075 = vunpack.c.l.b16 %v3531
  %v4076 = vunpack.c.l.b16 %v3532
  %v4077 = vunpack.c.l.b16 %v3533
  %v4078 = vunpack.c.l.b16 %v3534
  %v4079 = vunpack.c.l.b16 %v3535
  %v4080 = vunpack.c.l.b16 %v3536
  %v4081 = vunpack.c.l.b16 %v3537
  %v4082 = vpack.c.b16 %v4067, %v4066
  %v4083 = vpack.c.b16 %v4069, %v4068
  %v4084 = vpack.c.b16 %v4071, %v4070
  %v4085 = vpack.c.b16 %v4073, %v4072
  %v4086 = vpack.c.b16 %v4075, %v4074
  %v4087 = vpack.c.b16 %v4077, %v4076
  %v4088 = vpack.c.b16 %v4079, %v4078
  %v4089 = vpack.c.b16 %v4081, %v4080
  %v4114 = vunpack.c.l.b16 %v3538
  %v4115 = vunpack.c.l.b16 %v3539
  %v4116 = vunpack.c.l.b16 %v3540
  %v4117 = vunpack.c.l.b16 %v3541
  %v4118 = vunpack.c.l.b16 %v3542
  %v4119 = vunpack.c.l.b16 %v3543
  %v4120 = vunpack.c.l.b16 %v3544
  %v4121 = vunpack.c.l.b16 %v3545
  %v4122 = vunpack.c.l.b16 %v3546
  %v4123 = vunpack.c.l.b16 %v3547
  %v4124 = vunpack.c.l.b16 %v3548
  %v4125 = vunpack.c.l.b16 %v3549
  %v4126 = vunpack.c.l.b16 %v3550
  %v4127 = vunpack.c.l.b16 %v3551
  %v4128 = vunpack.c.l.b16 %v3552
  %v4129 = vunpack.c.l.b16 %v3553
  %v4130 = vpack.c.b16 %v4115, %v4114
  %v4131 = vpack.c.b16 %v4117, %v4116
  %v4132 = vpack.c.b16 %v4119, %v4118
  %v4133 = vpack.c.b16 %v4121, %v4120
  %v4134 = vpack.c.b16 %v4123, %v4122
  %v4135 = vpack.c.b16 %v4125, %v4124
  %v4136 = vpack.c.b16 %v4127, %v4126
  %v4137 = vpack.c.b16 %v4129, %v4128
  %v4146 = vunpack.c.l.b16 %v3583
  %v4147 = vunpack.c.l.b16 %v3597
  %v4148 = vunpack.c.l.b16 %v3611
  %v4149 = vunpack.c.l.b16 %v3625
  %v4150 = vunpack.c.l.b16 %v3639
  %v4151 = vunpack.c.l.b16 %v3653
  %v4152 = vunpack.c.l.b16 %v3667
  %v4153 = vunpack.c.l.b16 %v3681
  %v4154 = vunpack.c.l.b16 %v3695
  %v4155 = vunpack.c.l.b16 %v3709
  %v4156 = vunpack.c.l.b16 %v3723
  %v4157 = vunpack.c.l.b16 %v3737
  %v4158 = vunpack.c.l.b16 %v3751
  %v4159 = vunpack.c.l.b16 %v3765
  %v4160 = vunpack.c.l.b16 %v3779
  %v4161 = vunpack.c.l.b16 %v3793
  %v4162 = vpack.c.b16 %v4147, %v4146
  %v4163 = vpack.c.b16 %v4149, %v4148
  %v4164 = vpack.c.b16 %v4151, %v4150
  %v4165 = vpack.c.b16 %v4153, %v4152
  %v4166 = vpack.c.b16 %v4155, %v4154
  %v4167 = vpack.c.b16 %v4157, %v4156
  %v4168 = vpack.c.b16 %v4159, %v4158
  %v4169 = vpack.c.b16 %v4161, %v4160
  %v4178 = vld [vmem:[%s4] sm:$0xf]
  %v4179 = vld [vmem:[%s4 + $0x4] sm:$0xf]
  %v4180 = vld [vmem:[%s4 + $0x8] sm:$0xf]
  %v4181 = vld [vmem:[%s4 + $0xc] sm:$0xf]
  %v4182 = vld [vmem:[%s4 + $0x10] sm:$0xf]
  %v4183 = vld [vmem:[%s4 + $0x14] sm:$0xf]
  %v4184 = vld [vmem:[%s4 + $0x18] sm:$0xf]
  %v4185 = vld [vmem:[%s4 + $0x1c] sm:$0xf]
  %v4186 = vld [vmem:[%s4 + $0x20] sm:$0xf]
  %v4187 = vld [vmem:[%s4 + $0x24] sm:$0xf]
  %v4188 = vld [vmem:[%s4 + $0x28] sm:$0xf]
  %v4189 = vld [vmem:[%s4 + $0x2c] sm:$0xf]
  %v4190 = vld [vmem:[%s4 + $0x30] sm:$0xf]
  %v4191 = vld [vmem:[%s4 + $0x34] sm:$0xf]
  %v4192 = vld [vmem:[%s4 + $0x38] sm:$0xf]
  %v4193 = vld [vmem:[%s4 + $0x3c] sm:$0xf]
  %v4194 = vld [vmem:[%s4 + $0x40] sm:$0xf]
  %v4195 = vld [vmem:[%s4 + $0x44] sm:$0xf]
  %v4196 = vld [vmem:[%s4 + $0x48] sm:$0xf]
  %v4197 = vld [vmem:[%s4 + $0x4c] sm:$0xf]
  %v4198 = vld [vmem:[%s4 + $0x50] sm:$0xf]
  %v4199 = vld [vmem:[%s4 + $0x54] sm:$0xf]
  %v4200 = vld [vmem:[%s4 + $0x58] sm:$0xf]
  %v4201 = vld [vmem:[%s4 + $0x5c] sm:$0xf]
  %v4202 = vld [vmem:[%s4 + $0x60] sm:$0xf]
  %v4203 = vld [vmem:[%s4 + $0x64] sm:$0xf]
  %v4204 = vld [vmem:[%s4 + $0x68] sm:$0xf]
  %v4205 = vld [vmem:[%s4 + $0x6c] sm:$0xf]
  %v4206 = vld [vmem:[%s4 + $0x70] sm:$0xf]
  %v4207 = vld [vmem:[%s4 + $0x74] sm:$0xf]
  %v4208 = vld [vmem:[%s4 + $0x78] sm:$0xf]
  %v4209 = vld [vmem:[%s4 + $0x7c] sm:$0xf]
  %v4210 = vld [vmem:[%s4 + $0x80] sm:$0xf]
  %v4211 = vld [vmem:[%s4 + $0x84] sm:$0xf]
  %v4212 = vld [vmem:[%s4 + $0x88] sm:$0xf]
  %v4213 = vld [vmem:[%s4 + $0x8c] sm:$0xf]
  %v4214 = vld [vmem:[%s4 + $0x90] sm:$0xf]
  %v4215 = vld [vmem:[%s4 + $0x94] sm:$0xf]
  %v4216 = vld [vmem:[%s4 + $0x98] sm:$0xf]
  %v4217 = vld [vmem:[%s4 + $0x9c] sm:$0xf]
  %v4218 = vld [vmem:[%s4 + $0xa0] sm:$0xf]
  %v4219 = vld [vmem:[%s4 + $0xa4] sm:$0xf]
  %v4220 = vld [vmem:[%s4 + $0xa8] sm:$0xf]
  %v4221 = vld [vmem:[%s4 + $0xac] sm:$0xf]
  %v4222 = vld [vmem:[%s4 + $0xb0] sm:$0xf]
  %v4223 = vld [vmem:[%s4 + $0xb4] sm:$0xf]
  %v4224 = vld [vmem:[%s4 + $0xb8] sm:$0xf]
  %v4225 = vld [vmem:[%s4 + $0xbc] sm:$0xf]
  %v4226 = vld [vmem:[%s4 + $0xc0] sm:$0xf]
  %v4227 = vld [vmem:[%s4 + $0xc4] sm:$0xf]
  %v4228 = vld [vmem:[%s4 + $0xc8] sm:$0xf]
  %v4229 = vld [vmem:[%s4 + $0xcc] sm:$0xf]
  %v4230 = vld [vmem:[%s4 + $0xd0] sm:$0xf]
  %v4231 = vld [vmem:[%s4 + $0xd4] sm:$0xf]
  %v4232 = vld [vmem:[%s4 + $0xd8] sm:$0xf]
  %v4233 = vld [vmem:[%s4 + $0xdc] sm:$0xf]
  %v4234 = vld [vmem:[%s4 + $0xe0] sm:$0xf]
  %v4235 = vld [vmem:[%s4 + $0xe4] sm:$0xf]
  %v4236 = vld [vmem:[%s4 + $0xe8] sm:$0xf]
  %v4237 = vld [vmem:[%s4 + $0xec] sm:$0xf]
  %v4238 = vld [vmem:[%s4 + $0xf0] sm:$0xf]
  %v4239 = vld [vmem:[%s4 + $0xf4] sm:$0xf]
  %v4240 = vld [vmem:[%s4 + $0xf8] sm:$0xf]
  %v4241 = vld [vmem:[%s4 + $0xfc] sm:$0xf]
  %v4242 = vld [vmem:[%s4 + $0x100] sm:$0xf]
  %v4243 = vld [vmem:[%s4 + $0x104] sm:$0xf]
  %v4244 = vld [vmem:[%s4 + $0x108] sm:$0xf]
  %v4245 = vld [vmem:[%s4 + $0x10c] sm:$0xf]
  %v4246 = vld [vmem:[%s4 + $0x110] sm:$0xf]
  %v4247 = vld [vmem:[%s4 + $0x114] sm:$0xf]
  %v4248 = vld [vmem:[%s4 + $0x118] sm:$0xf]
  %v4249 = vld [vmem:[%s4 + $0x11c] sm:$0xf]
  %v4250 = vld [vmem:[%s4 + $0x120] sm:$0xf]
  %v4251 = vld [vmem:[%s4 + $0x124] sm:$0xf]
  %v4252 = vld [vmem:[%s4 + $0x128] sm:$0xf]
  %v4253 = vld [vmem:[%s4 + $0x12c] sm:$0xf]
  %v4254 = vld [vmem:[%s4 + $0x130] sm:$0xf]
  %v4255 = vld [vmem:[%s4 + $0x134] sm:$0xf]
  %v4256 = vld [vmem:[%s4 + $0x138] sm:$0xf]
  %v4257 = vld [vmem:[%s4 + $0x13c] sm:$0xf]
  %v4258 = vld [vmem:[%s4 + $0x140] sm:$0xf]
  %v4259 = vld [vmem:[%s4 + $0x144] sm:$0xf]
  %v4260 = vld [vmem:[%s4 + $0x148] sm:$0xf]
  %v4261 = vld [vmem:[%s4 + $0x14c] sm:$0xf]
  %v4262 = vld [vmem:[%s4 + $0x150] sm:$0xf]
  %v4263 = vld [vmem:[%s4 + $0x154] sm:$0xf]
  %v4264 = vld [vmem:[%s4 + $0x158] sm:$0xf]
  %v4265 = vld [vmem:[%s4 + $0x15c] sm:$0xf]
  %v4266 = vld [vmem:[%s4 + $0x160] sm:$0xf]
  %v4267 = vld [vmem:[%s4 + $0x164] sm:$0xf]
  %v4268 = vld [vmem:[%s4 + $0x168] sm:$0xf]
  %v4269 = vld [vmem:[%s4 + $0x16c] sm:$0xf]
  %v4270 = vld [vmem:[%s4 + $0x170] sm:$0xf]
  %v4271 = vld [vmem:[%s4 + $0x174] sm:$0xf]
  %v4272 = vld [vmem:[%s4 + $0x178] sm:$0xf]
  %v4273 = vld [vmem:[%s4 + $0x17c] sm:$0xf]
  %v4274 = vld [vmem:[%s4 + $0x180] sm:$0xf]
  %v4275 = vld [vmem:[%s4 + $0x184] sm:$0xf]
  %v4276 = vld [vmem:[%s4 + $0x188] sm:$0xf]
  %v4277 = vld [vmem:[%s4 + $0x18c] sm:$0xf]
  %v4278 = vld [vmem:[%s4 + $0x190] sm:$0xf]
  %v4279 = vld [vmem:[%s4 + $0x194] sm:$0xf]
  %v4280 = vld [vmem:[%s4 + $0x198] sm:$0xf]
  %v4281 = vld [vmem:[%s4 + $0x19c] sm:$0xf]
  %v4282 = vld [vmem:[%s4 + $0x1a0] sm:$0xf]
  %v4283 = vld [vmem:[%s4 + $0x1a4] sm:$0xf]
  %v4284 = vld [vmem:[%s4 + $0x1a8] sm:$0xf]
  %v4285 = vld [vmem:[%s4 + $0x1ac] sm:$0xf]
  %v4286 = vld [vmem:[%s4 + $0x1b0] sm:$0xf]
  %v4287 = vld [vmem:[%s4 + $0x1b4] sm:$0xf]
  %v4288 = vld [vmem:[%s4 + $0x1b8] sm:$0xf]
  %v4289 = vld [vmem:[%s4 + $0x1bc] sm:$0xf]
  %v4290 = vld [vmem:[%s4 + $0x1c0] sm:$0xf]
  %v4291 = vld [vmem:[%s4 + $0x1c4] sm:$0xf]
  %v4292 = vld [vmem:[%s4 + $0x1c8] sm:$0xf]
  %v4293 = vld [vmem:[%s4 + $0x1cc] sm:$0xf]
  %v4294 = vld [vmem:[%s4 + $0x1d0] sm:$0xf]
  %v4295 = vld [vmem:[%s4 + $0x1d4] sm:$0xf]
  %v4296 = vld [vmem:[%s4 + $0x1d8] sm:$0xf]
  %v4297 = vld [vmem:[%s4 + $0x1dc] sm:$0xf]
  %v4298 = vld [vmem:[%s4 + $0x1e0] sm:$0xf]
  %v4299 = vld [vmem:[%s4 + $0x1e4] sm:$0xf]
  %v4300 = vld [vmem:[%s4 + $0x1e8] sm:$0xf]
  %v4301 = vld [vmem:[%s4 + $0x1ec] sm:$0xf]
  %v4302 = vld [vmem:[%s4 + $0x1f0] sm:$0xf]
  %v4303 = vld [vmem:[%s4 + $0x1f4] sm:$0xf]
  %v4304 = vld [vmem:[%s4 + $0x1f8] sm:$0xf]
  %v4305 = vld [vmem:[%s4 + $0x1fc] sm:$0xf]
  %v4306 = vld [vmem:[%s4 + $0x200] sm:$0xf]
  %v4307 = vld [vmem:[%s4 + $0x204] sm:$0xf]
  %v4308 = vld [vmem:[%s4 + $0x208] sm:$0xf]
  %v4309 = vld [vmem:[%s4 + $0x20c] sm:$0xf]
  %v4310 = vld [vmem:[%s4 + $0x210] sm:$0xf]
  %v4311 = vld [vmem:[%s4 + $0x214] sm:$0xf]
  %v4312 = vld [vmem:[%s4 + $0x218] sm:$0xf]
  %v4313 = vld [vmem:[%s4 + $0x21c] sm:$0xf]
  %v4314 = vld [vmem:[%s4 + $0x220] sm:$0xf]
  %v4315 = vld [vmem:[%s4 + $0x224] sm:$0xf]
  %v4316 = vld [vmem:[%s4 + $0x228] sm:$0xf]
  %v4317 = vld [vmem:[%s4 + $0x22c] sm:$0xf]
  %v4318 = vld [vmem:[%s4 + $0x230] sm:$0xf]
  %v4319 = vld [vmem:[%s4 + $0x234] sm:$0xf]
  %v4320 = vld [vmem:[%s4 + $0x238] sm:$0xf]
  %v4321 = vld [vmem:[%s4 + $0x23c] sm:$0xf]
  %v4466 = vunpack.c.l.b16 %v4178
  %v4467 = vunpack.c.l.b16 %v4179
  %v4468 = vunpack.c.l.b16 %v4180
  %v4469 = vunpack.c.l.b16 %v4181
  %v4470 = vunpack.c.l.b16 %v4182
  %v4471 = vunpack.c.l.b16 %v4183
  %v4472 = vunpack.c.l.b16 %v4184
  %v4473 = vunpack.c.l.b16 %v4185
  %v4474 = vunpack.c.l.b16 %v4186
  %v4475 = vunpack.c.l.b16 %v4187
  %v4476 = vunpack.c.l.b16 %v4188
  %v4477 = vunpack.c.l.b16 %v4189
  %v4478 = vunpack.c.l.b16 %v4190
  %v4479 = vunpack.c.l.b16 %v4191
  %v4480 = vunpack.c.l.b16 %v4192
  %v4481 = vunpack.c.l.b16 %v4193
  %v4482 = vunpack.c.l.b16 %v4194
  %v4483 = vunpack.c.l.b16 %v4195
  %v4484 = vunpack.c.l.b16 %v4196
  %v4485 = vunpack.c.l.b16 %v4197
  %v4486 = vunpack.c.l.b16 %v4198
  %v4487 = vunpack.c.l.b16 %v4199
  %v4488 = vunpack.c.l.b16 %v4200
  %v4489 = vunpack.c.l.b16 %v4201
  %v4490 = vunpack.c.l.b16 %v4202
  %v4491 = vunpack.c.l.b16 %v4203
  %v4492 = vunpack.c.l.b16 %v4204
  %v4493 = vunpack.c.l.b16 %v4205
  %v4494 = vunpack.c.l.b16 %v4206
  %v4495 = vunpack.c.l.b16 %v4207
  %v4496 = vunpack.c.l.b16 %v4208
  %v4497 = vunpack.c.l.b16 %v4209
  %v4498 = vunpack.c.l.b16 %v4210
  %v4499 = vunpack.c.l.b16 %v4211
  %v4500 = vunpack.c.l.b16 %v4212
  %v4501 = vunpack.c.l.b16 %v4213
  %v4502 = vunpack.c.l.b16 %v4214
  %v4503 = vunpack.c.l.b16 %v4215
  %v4504 = vunpack.c.l.b16 %v4216
  %v4505 = vunpack.c.l.b16 %v4217
  %v4506 = vunpack.c.l.b16 %v4218
  %v4507 = vunpack.c.l.b16 %v4219
  %v4508 = vunpack.c.l.b16 %v4220
  %v4509 = vunpack.c.l.b16 %v4221
  %v4510 = vunpack.c.l.b16 %v4222
  %v4511 = vunpack.c.l.b16 %v4223
  %v4512 = vunpack.c.l.b16 %v4224
  %v4513 = vunpack.c.l.b16 %v4225
  %v4514 = vunpack.c.l.b16 %v4226
  %v4515 = vunpack.c.l.b16 %v4227
  %v4516 = vunpack.c.l.b16 %v4228
  %v4517 = vunpack.c.l.b16 %v4229
  %v4518 = vunpack.c.l.b16 %v4230
  %v4519 = vunpack.c.l.b16 %v4231
  %v4520 = vunpack.c.l.b16 %v4232
  %v4521 = vunpack.c.l.b16 %v4233
  %v4522 = vunpack.c.l.b16 %v4234
  %v4523 = vunpack.c.l.b16 %v4235
  %v4524 = vunpack.c.l.b16 %v4236
  %v4525 = vunpack.c.l.b16 %v4237
  %v4526 = vunpack.c.l.b16 %v4238
  %v4527 = vunpack.c.l.b16 %v4239
  %v4528 = vunpack.c.l.b16 %v4240
  %v4529 = vunpack.c.l.b16 %v4241
  %v4530 = vunpack.c.l.b16 %v4242
  %v4531 = vunpack.c.l.b16 %v4243
  %v4532 = vunpack.c.l.b16 %v4244
  %v4533 = vunpack.c.l.b16 %v4245
  %v4534 = vunpack.c.l.b16 %v4246
  %v4535 = vunpack.c.l.b16 %v4247
  %v4536 = vunpack.c.l.b16 %v4248
  %v4537 = vunpack.c.l.b16 %v4249
  %v4538 = vunpack.c.l.b16 %v4250
  %v4539 = vunpack.c.l.b16 %v4251
  %v4540 = vunpack.c.l.b16 %v4252
  %v4541 = vunpack.c.l.b16 %v4253
  %v4542 = vunpack.c.l.b16 %v4254
  %v4543 = vunpack.c.l.b16 %v4255
  %v4544 = vunpack.c.l.b16 %v4256
  %v4545 = vunpack.c.l.b16 %v4257
  %v4546 = vunpack.c.l.b16 %v4258
  %v4547 = vunpack.c.l.b16 %v4259
  %v4548 = vunpack.c.l.b16 %v4260
  %v4549 = vunpack.c.l.b16 %v4261
  %v4550 = vunpack.c.l.b16 %v4262
  %v4551 = vunpack.c.l.b16 %v4263
  %v4552 = vunpack.c.l.b16 %v4264
  %v4553 = vunpack.c.l.b16 %v4265
  %v4554 = vunpack.c.l.b16 %v4266
  %v4555 = vunpack.c.l.b16 %v4267
  %v4556 = vunpack.c.l.b16 %v4268
  %v4557 = vunpack.c.l.b16 %v4269
  %v4558 = vunpack.c.l.b16 %v4270
  %v4559 = vunpack.c.l.b16 %v4271
  %v4560 = vunpack.c.l.b16 %v4272
  %v4561 = vunpack.c.l.b16 %v4273
  %v4562 = vunpack.c.l.b16 %v4274
  %v4563 = vunpack.c.l.b16 %v4275
  %v4564 = vunpack.c.l.b16 %v4276
  %v4565 = vunpack.c.l.b16 %v4277
  %v4566 = vunpack.c.l.b16 %v4278
  %v4567 = vunpack.c.l.b16 %v4279
  %v4568 = vunpack.c.l.b16 %v4280
  %v4569 = vunpack.c.l.b16 %v4281
  %v4570 = vunpack.c.l.b16 %v4282
  %v4571 = vunpack.c.l.b16 %v4283
  %v4572 = vunpack.c.l.b16 %v4284
  %v4573 = vunpack.c.l.b16 %v4285
  %v4574 = vunpack.c.l.b16 %v4286
  %v4575 = vunpack.c.l.b16 %v4287
  %v4576 = vunpack.c.l.b16 %v4288
  %v4577 = vunpack.c.l.b16 %v4289
  %v4578 = vunpack.c.l.b16 %v4290
  %v4579 = vunpack.c.l.b16 %v4291
  %v4580 = vunpack.c.l.b16 %v4292
  %v4581 = vunpack.c.l.b16 %v4293
  %v4582 = vunpack.c.l.b16 %v4294
  %v4583 = vunpack.c.l.b16 %v4295
  %v4584 = vunpack.c.l.b16 %v4296
  %v4585 = vunpack.c.l.b16 %v4297
  %v4586 = vunpack.c.l.b16 %v4298
  %v4587 = vunpack.c.l.b16 %v4299
  %v4588 = vunpack.c.l.b16 %v4300
  %v4589 = vunpack.c.l.b16 %v4301
  %v4590 = vunpack.c.l.b16 %v4302
  %v4591 = vunpack.c.l.b16 %v4303
  %v4592 = vunpack.c.l.b16 %v4304
  %v4593 = vunpack.c.l.b16 %v4305
  %v4594 = vunpack.c.l.b16 %v4306
  %v4595 = vunpack.c.l.b16 %v4307
  %v4596 = vunpack.c.l.b16 %v4308
  %v4597 = vunpack.c.l.b16 %v4309
  %v4598 = vunpack.c.l.b16 %v4310
  %v4599 = vunpack.c.l.b16 %v4311
  %v4600 = vunpack.c.l.b16 %v4312
  %v4601 = vunpack.c.l.b16 %v4313
  %v4602 = vunpack.c.l.b16 %v4314
  %v4603 = vunpack.c.l.b16 %v4315
  %v4604 = vunpack.c.l.b16 %v4316
  %v4605 = vunpack.c.l.b16 %v4317
  %v4606 = vunpack.c.l.b16 %v4318
  %v4607 = vunpack.c.l.b16 %v4319
  %v4608 = vunpack.c.l.b16 %v4320
  %v4609 = vunpack.c.l.b16 %v4321
  %v4610 = vpack.c.b16 %v4467, %v4466
  %v4611 = vpack.c.b16 %v4469, %v4468
  %v4612 = vpack.c.b16 %v4471, %v4470
  %v4613 = vpack.c.b16 %v4473, %v4472
  %v4614 = vpack.c.b16 %v4475, %v4474
  %v4615 = vpack.c.b16 %v4477, %v4476
  %v4616 = vpack.c.b16 %v4479, %v4478
  %v4617 = vpack.c.b16 %v4481, %v4480
  %v4618 = vpack.c.b16 %v4483, %v4482
  %v4619 = vpack.c.b16 %v4485, %v4484
  %v4620 = vpack.c.b16 %v4487, %v4486
  %v4621 = vpack.c.b16 %v4489, %v4488
  %v4622 = vpack.c.b16 %v4491, %v4490
  %v4623 = vpack.c.b16 %v4493, %v4492
  %v4624 = vpack.c.b16 %v4495, %v4494
  %v4625 = vpack.c.b16 %v4497, %v4496
  %v4626 = vpack.c.b16 %v4499, %v4498
  %v4627 = vpack.c.b16 %v4501, %v4500
  %v4628 = vpack.c.b16 %v4503, %v4502
  %v4629 = vpack.c.b16 %v4505, %v4504
  %v4630 = vpack.c.b16 %v4507, %v4506
  %v4631 = vpack.c.b16 %v4509, %v4508
  %v4632 = vpack.c.b16 %v4511, %v4510
  %v4633 = vpack.c.b16 %v4513, %v4512
  %v4634 = vpack.c.b16 %v4515, %v4514
  %v4635 = vpack.c.b16 %v4517, %v4516
  %v4636 = vpack.c.b16 %v4519, %v4518
  %v4637 = vpack.c.b16 %v4521, %v4520
  %v4638 = vpack.c.b16 %v4523, %v4522
  %v4639 = vpack.c.b16 %v4525, %v4524
  %v4640 = vpack.c.b16 %v4527, %v4526
  %v4641 = vpack.c.b16 %v4529, %v4528
  %v4642 = vpack.c.b16 %v4531, %v4530
  %v4643 = vpack.c.b16 %v4533, %v4532
  %v4644 = vpack.c.b16 %v4535, %v4534
  %v4645 = vpack.c.b16 %v4537, %v4536
  %v4646 = vpack.c.b16 %v4539, %v4538
  %v4647 = vpack.c.b16 %v4541, %v4540
  %v4648 = vpack.c.b16 %v4543, %v4542
  %v4649 = vpack.c.b16 %v4545, %v4544
  %v4650 = vpack.c.b16 %v4547, %v4546
  %v4651 = vpack.c.b16 %v4549, %v4548
  %v4652 = vpack.c.b16 %v4551, %v4550
  %v4653 = vpack.c.b16 %v4553, %v4552
  %v4654 = vpack.c.b16 %v4555, %v4554
  %v4655 = vpack.c.b16 %v4557, %v4556
  %v4656 = vpack.c.b16 %v4559, %v4558
  %v4657 = vpack.c.b16 %v4561, %v4560
  %v4658 = vpack.c.b16 %v4563, %v4562
  %v4659 = vpack.c.b16 %v4565, %v4564
  %v4660 = vpack.c.b16 %v4567, %v4566
  %v4661 = vpack.c.b16 %v4569, %v4568
  %v4662 = vpack.c.b16 %v4571, %v4570
  %v4663 = vpack.c.b16 %v4573, %v4572
  %v4664 = vpack.c.b16 %v4575, %v4574
  %v4665 = vpack.c.b16 %v4577, %v4576
  %v4666 = vpack.c.b16 %v4579, %v4578
  %v4667 = vpack.c.b16 %v4581, %v4580
  %v4668 = vpack.c.b16 %v4583, %v4582
  %v4669 = vpack.c.b16 %v4585, %v4584
  %v4670 = vpack.c.b16 %v4587, %v4586
  %v4671 = vpack.c.b16 %v4589, %v4588
  %v4672 = vpack.c.b16 %v4591, %v4590
  %v4673 = vpack.c.b16 %v4593, %v4592
  %v4674 = vpack.c.b16 %v4595, %v4594
  %v4675 = vpack.c.b16 %v4597, %v4596
  %v4676 = vpack.c.b16 %v4599, %v4598
  %v4677 = vpack.c.b16 %v4601, %v4600
  %v4678 = vpack.c.b16 %v4603, %v4602
  %v4679 = vpack.c.b16 %v4605, %v4604
  %v4680 = vpack.c.b16 %v4607, %v4606
  %v4681 = vpack.c.b16 %v4609, %v4608
  %4754 = vmatprep.subr.bf16.mxu0 0
  %4755 = vmatpush1.bf16.msra.mxu0 %v4617
  %4756 = vmatprep.subr.bf16.mxu0 0
  %4757 = vmatpush1.bf16.msra.mxu0 %v4616
  %4758 = vmatprep.subr.bf16.mxu0 0
  %4759 = vmatpush1.bf16.msra.mxu0 %v4615
  %4760 = vmatprep.subr.bf16.mxu0 0
  %4761 = vmatpush1.bf16.msra.mxu0 %v4614
  %4762 = vmatprep.subr.bf16.mxu0 0
  %4763 = vmatpush1.bf16.msra.mxu0 %v4613
  %4764 = vmatprep.subr.bf16.mxu0 0
  %4765 = vmatpush1.bf16.msra.mxu0 %v4612
  %4766 = vmatprep.subr.bf16.mxu0 0
  %4767 = vmatpush1.bf16.msra.mxu0 %v4611
  %4768 = vmatprep.subr.bf16.mxu0 0
  %4769 = vmatpush1.bf16.msra.mxu0 %v4610
  %4770 = vmatprep.subr.bf16.mxu0 0
  %4771 = vmatpush2.bf16.msra.mxu0 %v4625
  %4772 = vmatprep.subr.bf16.mxu0 0
  %4773 = vmatpush2.bf16.msra.mxu0 %v4624
  %4774 = vmatprep.subr.bf16.mxu0 0
  %4775 = vmatpush2.bf16.msra.mxu0 %v4623
  %4776 = vmatprep.subr.bf16.mxu0 0
  %4777 = vmatpush2.bf16.msra.mxu0 %v4622
  %4778 = vmatprep.subr.bf16.mxu0 0
  %4779 = vmatpush2.bf16.msra.mxu0 %v4621
  %4780 = vmatprep.subr.bf16.mxu0 0
  %4781 = vmatpush2.bf16.msra.mxu0 %v4620
  %4782 = vmatprep.subr.bf16.mxu0 0
  %4783 = vmatpush2.bf16.msra.mxu0 %v4619
  %4784 = vmatprep.subr.bf16.mxu0 0
  %4785 = vmatpush2.bf16.msra.mxu0 %v4618
  %4786 = vmatprep.mubr.bf16.mxu0 %v3874
  %4787 = vmatmul.mubr.bf16.gmra.mxu0 %v3826
  %v4788 = vpop.f32.mrf.mxu0
  %v4789 = vadd.f32 0.0, %v4788
  %v4790 = vpop.f32.mrf.mxu0
  %v4791 = vpop.f32.mrf.mxu0
  %v4792 = vadd.f32 0.0, %v4791
  %v4793 = vpop.f32.mrf.mxu0
  %4794 = vmatprep.mubr.bf16.mxu0 %v3875
  %4795 = vmatmul.mubr.bf16.gmra.mxu0 %v3827
  %v4796 = vpop.f32.mrf.mxu0
  %v4797 = vadd.f32 0.0, %v4796
  %v4798 = vpop.f32.mrf.mxu0
  %v4799 = vpop.f32.mrf.mxu0
  %v4800 = vadd.f32 0.0, %v4799
  %v4801 = vpop.f32.mrf.mxu0
  %4802 = vmatprep.mubr.bf16.mxu0 %v3876
  %4803 = vmatmul.mubr.bf16.gmra.mxu0 %v3828
  %v4804 = vpop.f32.mrf.mxu0
  %v4805 = vadd.f32 0.0, %v4804
  %v4806 = vpop.f32.mrf.mxu0
  %v4807 = vpop.f32.mrf.mxu0
  %v4808 = vadd.f32 0.0, %v4807
  %v4809 = vpop.f32.mrf.mxu0
  %4810 = vmatprep.mubr.bf16.mxu0 %v3877
  %4811 = vmatmul.mubr.bf16.gmra.mxu0 %v3829
  %v4812 = vpop.f32.mrf.mxu0
  %v4813 = vadd.f32 0.0, %v4812
  %v4814 = vpop.f32.mrf.mxu0
  %v4815 = vpop.f32.mrf.mxu0
  %v4816 = vadd.f32 0.0, %v4815
  %v4817 = vpop.f32.mrf.mxu0
  %4818 = vmatprep.mubr.bf16.mxu0 %v3878
  %4819 = vmatmul.mubr.bf16.gmra.mxu0 %v3830
  %v4820 = vpop.f32.mrf.mxu0
  %v4821 = vadd.f32 0.0, %v4820
  %v4822 = vpop.f32.mrf.mxu0
  %v4823 = vpop.f32.mrf.mxu0
  %v4824 = vadd.f32 0.0, %v4823
  %v4825 = vpop.f32.mrf.mxu0
  %4826 = vmatprep.mubr.bf16.mxu0 %v3879
  %4827 = vmatmul.mubr.bf16.gmra.mxu0 %v3831
  %v4828 = vpop.f32.mrf.mxu0
  %v4829 = vadd.f32 0.0, %v4828
  %v4830 = vpop.f32.mrf.mxu0
  %v4831 = vpop.f32.mrf.mxu0
  %v4832 = vadd.f32 0.0, %v4831
  %v4833 = vpop.f32.mrf.mxu0
  %4834 = vmatprep.mubr.bf16.mxu0 %v3880
  %4835 = vmatmul.mubr.bf16.gmra.mxu0 %v3832
  %v4836 = vpop.f32.mrf.mxu0
  %v4837 = vadd.f32 0.0, %v4836
  %v4838 = vpop.f32.mrf.mxu0
  %v4839 = vpop.f32.mrf.mxu0
  %v4840 = vadd.f32 0.0, %v4839
  %v4841 = vpop.f32.mrf.mxu0
  %4842 = vmatprep.mubr.bf16.mxu0 %v3881
  %4843 = vmatmul.mubr.bf16.gmra.mxu0 %v3833
  %v4844 = vpop.f32.mrf.mxu0
  %v4845 = vadd.f32 0.0, %v4844
  %v4846 = vpop.f32.mrf.mxu0
  %v4847 = vpop.f32.mrf.mxu0
  %v4848 = vadd.f32 0.0, %v4847
  %v4849 = vpop.f32.mrf.mxu0
  %4850 = vdwg.mxu0
  %4851 = vmatprep.subr.bf16.mxu0 0
  %4852 = vmatpush1.bf16.msra.mxu0 %v4633
  %4853 = vmatprep.subr.bf16.mxu0 0
  %4854 = vmatpush1.bf16.msra.mxu0 %v4632
  %4855 = vmatprep.subr.bf16.mxu0 0
  %4856 = vmatpush1.bf16.msra.mxu0 %v4631
  %4857 = vmatprep.subr.bf16.mxu0 0
  %4858 = vmatpush1.bf16.msra.mxu0 %v4630
  %4859 = vmatprep.subr.bf16.mxu0 0
  %4860 = vmatpush1.bf16.msra.mxu0 %v4629
  %4861 = vmatprep.subr.bf16.mxu0 0
  %4862 = vmatpush1.bf16.msra.mxu0 %v4628
  %4863 = vmatprep.subr.bf16.mxu0 0
  %4864 = vmatpush1.bf16.msra.mxu0 %v4627
  %4865 = vmatprep.subr.bf16.mxu0 0
  %4866 = vmatpush1.bf16.msra.mxu0 %v4626
  %4867 = vmatprep.subr.bf16.mxu0 0
  %4868 = vmatpush2.bf16.msra.mxu0 %v4641
  %4869 = vmatprep.subr.bf16.mxu0 0
  %4870 = vmatpush2.bf16.msra.mxu0 %v4640
  %4871 = vmatprep.subr.bf16.mxu0 0
  %4872 = vmatpush2.bf16.msra.mxu0 %v4639
  %4873 = vmatprep.subr.bf16.mxu0 0
  %4874 = vmatpush2.bf16.msra.mxu0 %v4638
  %4875 = vmatprep.subr.bf16.mxu0 0
  %4876 = vmatpush2.bf16.msra.mxu0 %v4637
  %4877 = vmatprep.subr.bf16.mxu0 0
  %4878 = vmatpush2.bf16.msra.mxu0 %v4636
  %4879 = vmatprep.subr.bf16.mxu0 0
  %4880 = vmatpush2.bf16.msra.mxu0 %v4635
  %4881 = vmatprep.subr.bf16.mxu0 0
  %4882 = vmatpush2.bf16.msra.mxu0 %v4634
  %4883 = vmatprep.mubr.bf16.mxu0 %v3954
  %4884 = vmatmul.mubr.bf16.gmra.mxu0 %v3906
  %v4885 = vpop.f32.mrf.mxu0
  %v4886 = vadd.f32 %v4789, %v4885
  %v4887 = vpop.f32.mrf.mxu0
  %v4888 = vpop.f32.mrf.mxu0
  %v4889 = vadd.f32 %v4792, %v4888
  %v4890 = vpop.f32.mrf.mxu0
  %4891 = vmatprep.mubr.bf16.mxu0 %v3955
  %4892 = vmatmul.mubr.bf16.gmra.mxu0 %v3907
  %v4893 = vpop.f32.mrf.mxu0
  %v4894 = vadd.f32 %v4797, %v4893
  %v4895 = vpop.f32.mrf.mxu0
  %v4896 = vpop.f32.mrf.mxu0
  %v4897 = vadd.f32 %v4800, %v4896
  %v4898 = vpop.f32.mrf.mxu0
  %4899 = vmatprep.mubr.bf16.mxu0 %v3956
  %4900 = vmatmul.mubr.bf16.gmra.mxu0 %v3908
  %v4901 = vpop.f32.mrf.mxu0
  %v4902 = vadd.f32 %v4805, %v4901
  %v4903 = vpop.f32.mrf.mxu0
  %v4904 = vpop.f32.mrf.mxu0
  %v4905 = vadd.f32 %v4808, %v4904
  %v4906 = vpop.f32.mrf.mxu0
  %4907 = vmatprep.mubr.bf16.mxu0 %v3957
  %4908 = vmatmul.mubr.bf16.gmra.mxu0 %v3909
  %v4909 = vpop.f32.mrf.mxu0
  %v4910 = vadd.f32 %v4813, %v4909
  %v4911 = vpop.f32.mrf.mxu0
  %v4912 = vpop.f32.mrf.mxu0
  %v4913 = vadd.f32 %v4816, %v4912
  %v4914 = vpop.f32.mrf.mxu0
  %4915 = vmatprep.mubr.bf16.mxu0 %v3958
  %4916 = vmatmul.mubr.bf16.gmra.mxu0 %v3910
  %v4917 = vpop.f32.mrf.mxu0
  %v4918 = vadd.f32 %v4821, %v4917
  %v4919 = vpop.f32.mrf.mxu0
  %v4920 = vpop.f32.mrf.mxu0
  %v4921 = vadd.f32 %v4824, %v4920
  %v4922 = vpop.f32.mrf.mxu0
  %4923 = vmatprep.mubr.bf16.mxu0 %v3959
  %4924 = vmatmul.mubr.bf16.gmra.mxu0 %v3911
  %v4925 = vpop.f32.mrf.mxu0
  %v4926 = vadd.f32 %v4829, %v4925
  %v4927 = vpop.f32.mrf.mxu0
  %v4928 = vpop.f32.mrf.mxu0
  %v4929 = vadd.f32 %v4832, %v4928
  %v4930 = vpop.f32.mrf.mxu0
  %4931 = vmatprep.mubr.bf16.mxu0 %v3960
  %4932 = vmatmul.mubr.bf16.gmra.mxu0 %v3912
  %v4933 = vpop.f32.mrf.mxu0
  %v4934 = vadd.f32 %v4837, %v4933
  %v4935 = vpop.f32.mrf.mxu0
  %v4936 = vpop.f32.mrf.mxu0
  %v4937 = vadd.f32 %v4840, %v4936
  %v4938 = vpop.f32.mrf.mxu0
  %4939 = vmatprep.mubr.bf16.mxu0 %v3961
  %4940 = vmatmul.mubr.bf16.gmra.mxu0 %v3913
  %v4941 = vpop.f32.mrf.mxu0
  %v4942 = vadd.f32 %v4845, %v4941
  %v4943 = vpop.f32.mrf.mxu0
  %v4944 = vpop.f32.mrf.mxu0
  %v4945 = vadd.f32 %v4848, %v4944
  %v4946 = vpop.f32.mrf.mxu0
  %4947 = vdwg.mxu0
  %4948 = vmatprep.subr.bf16.mxu0 0
  %4949 = vmatpush1.bf16.msra.mxu0 %v4649
  %4950 = vmatprep.subr.bf16.mxu0 0
  %4951 = vmatpush1.bf16.msra.mxu0 %v4648
  %4952 = vmatprep.subr.bf16.mxu0 0
  %4953 = vmatpush1.bf16.msra.mxu0 %v4647
  %4954 = vmatprep.subr.bf16.mxu0 0
  %4955 = vmatpush1.bf16.msra.mxu0 %v4646
  %4956 = vmatprep.subr.bf16.mxu0 0
  %4957 = vmatpush1.bf16.msra.mxu0 %v4645
  %4958 = vmatprep.subr.bf16.mxu0 0
  %4959 = vmatpush1.bf16.msra.mxu0 %v4644
  %4960 = vmatprep.subr.bf16.mxu0 0
  %4961 = vmatpush1.bf16.msra.mxu0 %v4643
  %4962 = vmatprep.subr.bf16.mxu0 0
  %4963 = vmatpush1.bf16.msra.mxu0 %v4642
  %4964 = vmatprep.subr.bf16.mxu0 0
  %4965 = vmatpush2.bf16.msra.mxu0 %v4657
  %4966 = vmatprep.subr.bf16.mxu0 0
  %4967 = vmatpush2.bf16.msra.mxu0 %v4656
  %4968 = vmatprep.subr.bf16.mxu0 0
  %4969 = vmatpush2.bf16.msra.mxu0 %v4655
  %4970 = vmatprep.subr.bf16.mxu0 0
  %4971 = vmatpush2.bf16.msra.mxu0 %v4654
  %4972 = vmatprep.subr.bf16.mxu0 0
  %4973 = vmatpush2.bf16.msra.mxu0 %v4653
  %4974 = vmatprep.subr.bf16.mxu0 0
  %4975 = vmatpush2.bf16.msra.mxu0 %v4652
  %4976 = vmatprep.subr.bf16.mxu0 0
  %4977 = vmatpush2.bf16.msra.mxu0 %v4651
  %4978 = vmatprep.subr.bf16.mxu0 0
  %4979 = vmatpush2.bf16.msra.mxu0 %v4650
  %4980 = vmatprep.mubr.bf16.mxu0 %v4034
  %4981 = vmatmul.mubr.bf16.gmra.mxu0 %v4002
  %v4982 = vpop.f32.mrf.mxu0
  %v4983 = vadd.f32 %v4886, %v4982
  %v4984 = vpop.f32.mrf.mxu0
  %v4985 = vpop.f32.mrf.mxu0
  %v4986 = vadd.f32 %v4889, %v4985
  %v4987 = vpop.f32.mrf.mxu0
  %4988 = vmatprep.mubr.bf16.mxu0 %v4035
  %4989 = vmatmul.mubr.bf16.gmra.mxu0 %v4003
  %v4990 = vpop.f32.mrf.mxu0
  %v4991 = vadd.f32 %v4894, %v4990
  %v4992 = vpop.f32.mrf.mxu0
  %v4993 = vpop.f32.mrf.mxu0
  %v4994 = vadd.f32 %v4897, %v4993
  %v4995 = vpop.f32.mrf.mxu0
  %4996 = vmatprep.mubr.bf16.mxu0 %v4036
  %4997 = vmatmul.mubr.bf16.gmra.mxu0 %v4004
  %v4998 = vpop.f32.mrf.mxu0
  %v4999 = vadd.f32 %v4902, %v4998
  %v5000 = vpop.f32.mrf.mxu0
  %v5001 = vpop.f32.mrf.mxu0
  %v5002 = vadd.f32 %v4905, %v5001
  %v5003 = vpop.f32.mrf.mxu0
  %5004 = vmatprep.mubr.bf16.mxu0 %v4037
  %5005 = vmatmul.mubr.bf16.gmra.mxu0 %v4005
  %v5006 = vpop.f32.mrf.mxu0
  %v5007 = vadd.f32 %v4910, %v5006
  %v5008 = vpop.f32.mrf.mxu0
  %v5009 = vpop.f32.mrf.mxu0
  %v5010 = vadd.f32 %v4913, %v5009
  %v5011 = vpop.f32.mrf.mxu0
  %5012 = vmatprep.mubr.bf16.mxu0 %v4038
  %5013 = vmatmul.mubr.bf16.gmra.mxu0 %v4006
  %v5014 = vpop.f32.mrf.mxu0
  %v5015 = vadd.f32 %v4918, %v5014
  %v5016 = vpop.f32.mrf.mxu0
  %v5017 = vpop.f32.mrf.mxu0
  %v5018 = vadd.f32 %v4921, %v5017
  %v5019 = vpop.f32.mrf.mxu0
  %5020 = vmatprep.mubr.bf16.mxu0 %v4039
  %5021 = vmatmul.mubr.bf16.gmra.mxu0 %v4007
  %v5022 = vpop.f32.mrf.mxu0
  %v5023 = vadd.f32 %v4926, %v5022
  %v5024 = vpop.f32.mrf.mxu0
  %v5025 = vpop.f32.mrf.mxu0
  %v5026 = vadd.f32 %v4929, %v5025
  %v5027 = vpop.f32.mrf.mxu0
  %5028 = vmatprep.mubr.bf16.mxu0 %v4040
  %5029 = vmatmul.mubr.bf16.gmra.mxu0 %v4008
  %v5030 = vpop.f32.mrf.mxu0
  %v5031 = vadd.f32 %v4934, %v5030
  %v5032 = vpop.f32.mrf.mxu0
  %v5033 = vpop.f32.mrf.mxu0
  %v5034 = vadd.f32 %v4937, %v5033
  %v5035 = vpop.f32.mrf.mxu0
  %5036 = vmatprep.mubr.bf16.mxu0 %v4041
  %5037 = vmatmul.mubr.bf16.gmra.mxu0 %v4009
  %v5038 = vpop.f32.mrf.mxu0
  %v5039 = vadd.f32 %v4942, %v5038
  %v5040 = vpop.f32.mrf.mxu0
  %v5041 = vpop.f32.mrf.mxu0
  %v5042 = vadd.f32 %v4945, %v5041
  %v5043 = vpop.f32.mrf.mxu0
  %5044 = vdwg.mxu0
  %5045 = vmatprep.subr.bf16.mxu0 0
  %5046 = vmatpush1.bf16.msra.mxu0 %v4665
  %5047 = vmatprep.subr.bf16.mxu0 0
  %5048 = vmatpush1.bf16.msra.mxu0 %v4664
  %5049 = vmatprep.subr.bf16.mxu0 0
  %5050 = vmatpush1.bf16.msra.mxu0 %v4663
  %5051 = vmatprep.subr.bf16.mxu0 0
  %5052 = vmatpush1.bf16.msra.mxu0 %v4662
  %5053 = vmatprep.subr.bf16.mxu0 0
  %5054 = vmatpush1.bf16.msra.mxu0 %v4661
  %5055 = vmatprep.subr.bf16.mxu0 0
  %5056 = vmatpush1.bf16.msra.mxu0 %v4660
  %5057 = vmatprep.subr.bf16.mxu0 0
  %5058 = vmatpush1.bf16.msra.mxu0 %v4659
  %5059 = vmatprep.subr.bf16.mxu0 0
  %5060 = vmatpush1.bf16.msra.mxu0 %v4658
  %5061 = vmatprep.subr.bf16.mxu0 0
  %5062 = vmatpush2.bf16.msra.mxu0 %v4673
  %5063 = vmatprep.subr.bf16.mxu0 0
  %5064 = vmatpush2.bf16.msra.mxu0 %v4672
  %5065 = vmatprep.subr.bf16.mxu0 0
  %5066 = vmatpush2.bf16.msra.mxu0 %v4671
  %5067 = vmatprep.subr.bf16.mxu0 0
  %5068 = vmatpush2.bf16.msra.mxu0 %v4670
  %5069 = vmatprep.subr.bf16.mxu0 0
  %5070 = vmatpush2.bf16.msra.mxu0 %v4669
  %5071 = vmatprep.subr.bf16.mxu0 0
  %5072 = vmatpush2.bf16.msra.mxu0 %v4668
  %5073 = vmatprep.subr.bf16.mxu0 0
  %5074 = vmatpush2.bf16.msra.mxu0 %v4667
  %5075 = vmatprep.subr.bf16.mxu0 0
  %5076 = vmatpush2.bf16.msra.mxu0 %v4666
  %5077 = vmatprep.mubr.bf16.mxu0 %v4130
  %5078 = vmatmul.mubr.bf16.gmra.mxu0 %v4082
  %v5079 = vpop.f32.mrf.mxu0
  %v5080 = vadd.f32 %v4983, %v5079
  %v5081 = vpop.f32.mrf.mxu0
  %v5082 = vpop.f32.mrf.mxu0
  %v5083 = vadd.f32 %v4986, %v5082
  %v5084 = vpop.f32.mrf.mxu0
  %5085 = vmatprep.mubr.bf16.mxu0 %v4131
  %5086 = vmatmul.mubr.bf16.gmra.mxu0 %v4083
  %v5087 = vpop.f32.mrf.mxu0
  %v5088 = vadd.f32 %v4991, %v5087
  %v5089 = vpop.f32.mrf.mxu0
  %v5090 = vpop.f32.mrf.mxu0
  %v5091 = vadd.f32 %v4994, %v5090
  %v5092 = vpop.f32.mrf.mxu0
  %5093 = vmatprep.mubr.bf16.mxu0 %v4132
  %5094 = vmatmul.mubr.bf16.gmra.mxu0 %v4084
  %v5095 = vpop.f32.mrf.mxu0
  %v5096 = vadd.f32 %v4999, %v5095
  %v5097 = vpop.f32.mrf.mxu0
  %v5098 = vpop.f32.mrf.mxu0
  %v5099 = vadd.f32 %v5002, %v5098
  %v5100 = vpop.f32.mrf.mxu0
  %5101 = vmatprep.mubr.bf16.mxu0 %v4133
  %5102 = vmatmul.mubr.bf16.gmra.mxu0 %v4085
  %v5103 = vpop.f32.mrf.mxu0
  %v5104 = vadd.f32 %v5007, %v5103
  %v5105 = vpop.f32.mrf.mxu0
  %v5106 = vpop.f32.mrf.mxu0
  %v5107 = vadd.f32 %v5010, %v5106
  %v5108 = vpop.f32.mrf.mxu0
  %5109 = vmatprep.mubr.bf16.mxu0 %v4134
  %5110 = vmatmul.mubr.bf16.gmra.mxu0 %v4086
  %v5111 = vpop.f32.mrf.mxu0
  %v5112 = vadd.f32 %v5015, %v5111
  %v5113 = vpop.f32.mrf.mxu0
  %v5114 = vpop.f32.mrf.mxu0
  %v5115 = vadd.f32 %v5018, %v5114
  %v5116 = vpop.f32.mrf.mxu0
  %5117 = vmatprep.mubr.bf16.mxu0 %v4135
  %5118 = vmatmul.mubr.bf16.gmra.mxu0 %v4087
  %v5119 = vpop.f32.mrf.mxu0
  %v5120 = vadd.f32 %v5023, %v5119
  %v5121 = vpop.f32.mrf.mxu0
  %v5122 = vpop.f32.mrf.mxu0
  %v5123 = vadd.f32 %v5026, %v5122
  %v5124 = vpop.f32.mrf.mxu0
  %5125 = vmatprep.mubr.bf16.mxu0 %v4136
  %5126 = vmatmul.mubr.bf16.gmra.mxu0 %v4088
  %v5127 = vpop.f32.mrf.mxu0
  %v5128 = vadd.f32 %v5031, %v5127
  %v5129 = vpop.f32.mrf.mxu0
  %v5130 = vpop.f32.mrf.mxu0
  %v5131 = vadd.f32 %v5034, %v5130
  %v5132 = vpop.f32.mrf.mxu0
  %5133 = vmatprep.mubr.bf16.mxu0 %v4137
  %5134 = vmatmul.mubr.bf16.gmra.mxu0 %v4089
  %v5135 = vpop.f32.mrf.mxu0
  %v5136 = vadd.f32 %v5039, %v5135
  %v5137 = vpop.f32.mrf.mxu0
  %v5138 = vpop.f32.mrf.mxu0
  %v5139 = vadd.f32 %v5042, %v5138
  %v5140 = vpop.f32.mrf.mxu0
  %5141 = vdwg.mxu0
  %5142 = vmatprep.subr.bf16.mxu0 0
  %5143 = vmatpush1.bf16.msra.mxu0 %v4681
  %5144 = vmatprep.subr.bf16.mxu0 0
  %5145 = vmatpush1.bf16.msra.mxu0 %v4680
  %5146 = vmatprep.subr.bf16.mxu0 0
  %5147 = vmatpush1.bf16.msra.mxu0 %v4679
  %5148 = vmatprep.subr.bf16.mxu0 0
  %5149 = vmatpush1.bf16.msra.mxu0 %v4678
  %5150 = vmatprep.subr.bf16.mxu0 0
  %5151 = vmatpush1.bf16.msra.mxu0 %v4677
  %5152 = vmatprep.subr.bf16.mxu0 0
  %5153 = vmatpush1.bf16.msra.mxu0 %v4676
  %5154 = vmatprep.subr.bf16.mxu0 0
  %5155 = vmatpush1.bf16.msra.mxu0 %v4675
  %5156 = vmatprep.subr.bf16.mxu0 0
  %5157 = vmatpush1.bf16.msra.mxu0 %v4674
  %5158 = vmatprep.subr.bf16.mxu0 0
  %5159 = vmatpush2.bf16.msra.mxu0 0
  %5160 = vmatprep.subr.bf16.mxu0 0
  %5161 = vmatpush2.bf16.msra.mxu0 0
  %5162 = vmatprep.subr.bf16.mxu0 0
  %5163 = vmatpush2.bf16.msra.mxu0 0
  %5164 = vmatprep.subr.bf16.mxu0 0
  %5165 = vmatpush2.bf16.msra.mxu0 0
  %5166 = vmatprep.subr.bf16.mxu0 0
  %5167 = vmatpush2.bf16.msra.mxu0 0
  %5168 = vmatprep.subr.bf16.mxu0 0
  %5169 = vmatpush2.bf16.msra.mxu0 0
  %5170 = vmatprep.subr.bf16.mxu0 0
  %5171 = vmatpush2.bf16.msra.mxu0 0
  %5172 = vmatprep.subr.bf16.mxu0 0
  %5173 = vmatpush2.bf16.msra.mxu0 0
  %5174 = vmatprep.mubr.bf16.mxu0 0
  %5175 = vmatmul.mubr.bf16.gmra.mxu0 %v4162
  %v5176 = vpop.f32.mrf.mxu0
  %v5177 = vadd.f32 %v5080, %v5176
  %v5178 = vpop.f32.mrf.mxu0
  %v5179 = vpop.f32.mrf.mxu0
  %v5180 = vadd.f32 %v5083, %v5179
  %v5181 = vpop.f32.mrf.mxu0
  %5182 = vmatprep.mubr.bf16.mxu0 0
  %5183 = vmatmul.mubr.bf16.gmra.mxu0 %v4163
  %v5184 = vpop.f32.mrf.mxu0
  %v5185 = vadd.f32 %v5088, %v5184
  %v5186 = vpop.f32.mrf.mxu0
  %v5187 = vpop.f32.mrf.mxu0
  %v5188 = vadd.f32 %v5091, %v5187
  %v5189 = vpop.f32.mrf.mxu0
  %5190 = vmatprep.mubr.bf16.mxu0 0
  %5191 = vmatmul.mubr.bf16.gmra.mxu0 %v4164
  %v5192 = vpop.f32.mrf.mxu0
  %v5193 = vadd.f32 %v5096, %v5192
  %v5194 = vpop.f32.mrf.mxu0
  %v5195 = vpop.f32.mrf.mxu0
  %v5196 = vadd.f32 %v5099, %v5195
  %v5197 = vpop.f32.mrf.mxu0
  %5198 = vmatprep.mubr.bf16.mxu0 0
  %5199 = vmatmul.mubr.bf16.gmra.mxu0 %v4165
  %v5200 = vpop.f32.mrf.mxu0
  %v5201 = vadd.f32 %v5104, %v5200
  %v5202 = vpop.f32.mrf.mxu0
  %v5203 = vpop.f32.mrf.mxu0
  %v5204 = vadd.f32 %v5107, %v5203
  %v5205 = vpop.f32.mrf.mxu0
  %5206 = vmatprep.mubr.bf16.mxu0 0
  %5207 = vmatmul.mubr.bf16.gmra.mxu0 %v4166
  %v5208 = vpop.f32.mrf.mxu0
  %v5209 = vadd.f32 %v5112, %v5208
  %v5210 = vpop.f32.mrf.mxu0
  %v5211 = vpop.f32.mrf.mxu0
  %v5212 = vadd.f32 %v5115, %v5211
  %v5213 = vpop.f32.mrf.mxu0
  %5214 = vmatprep.mubr.bf16.mxu0 0
  %5215 = vmatmul.mubr.bf16.gmra.mxu0 %v4167
  %v5216 = vpop.f32.mrf.mxu0
  %v5217 = vadd.f32 %v5120, %v5216
  %v5218 = vpop.f32.mrf.mxu0
  %v5219 = vpop.f32.mrf.mxu0
  %v5220 = vadd.f32 %v5123, %v5219
  %v5221 = vpop.f32.mrf.mxu0
  %5222 = vmatprep.mubr.bf16.mxu0 0
  %5223 = vmatmul.mubr.bf16.gmra.mxu0 %v4168
  %v5224 = vpop.f32.mrf.mxu0
  %v5225 = vadd.f32 %v5128, %v5224
  %v5226 = vpop.f32.mrf.mxu0
  %v5227 = vpop.f32.mrf.mxu0
  %v5228 = vadd.f32 %v5131, %v5227
  %v5229 = vpop.f32.mrf.mxu0
  %5230 = vmatprep.mubr.bf16.mxu0 0
  %5231 = vmatmul.mubr.bf16.gmra.mxu0 %v4169
  %v5232 = vpop.f32.mrf.mxu0
  %v5233 = vadd.f32 %v5136, %v5232
  %v5234 = vpop.f32.mrf.mxu0
  %v5235 = vpop.f32.mrf.mxu0
  %v5236 = vadd.f32 %v5139, %v5235
  %v5237 = vpop.f32.mrf.mxu0
  %5238 = vdwg.mxu0
  %v5239 = vld [vmem:[%s5] sm:$0x1]
  %v5241 = vlaneseq
  %v5242 = vshrl.u32 %v5241, 7
  %v5243 = vsub.s32 0, %v5242
  %v5244 = vrot.slane %v5239, %v5243
  %v5246 = vmul.f32 %v5177, %v5244
  %v5247 = vmul.f32 %v5180, %v5244
  %v5248 = vmul.f32 %v5185, %v5244
  %v5249 = vmul.f32 %v5188, %v5244
  %v5250 = vmul.f32 %v5193, %v5244
  %v5251 = vmul.f32 %v5196, %v5244
  %v5252 = vmul.f32 %v5201, %v5244
  %v5253 = vmul.f32 %v5204, %v5244
  %v5254 = vmul.f32 %v5209, %v5244
  %v5255 = vmul.f32 %v5212, %v5244
  %v5256 = vmul.f32 %v5217, %v5244
  %v5257 = vmul.f32 %v5220, %v5244
  %v5258 = vmul.f32 %v5225, %v5244
  %v5259 = vmul.f32 %v5228, %v5244
  %v5260 = vmul.f32 %v5233, %v5244
  %v5261 = vmul.f32 %v5236, %v5244
  %v5262 = vld [vmem:[%s6] sm:$0x1]
  %v5264 = vlaneseq
  %v5265 = vshrl.u32 %v5264, 7
  %v5266 = vsub.s32 0, %v5265
  %v5267 = vrot.slane %v5262, %v5266
  %v5269 = vadd.f32 %v5246, %v5267
  %v5270 = vadd.f32 %v5247, %v5267
  %v5271 = vadd.f32 %v5248, %v5267
  %v5272 = vadd.f32 %v5249, %v5267
  %v5273 = vadd.f32 %v5250, %v5267
  %v5274 = vadd.f32 %v5251, %v5267
  %v5275 = vadd.f32 %v5252, %v5267
  %v5276 = vadd.f32 %v5253, %v5267
  %v5277 = vadd.f32 %v5254, %v5267
  %v5278 = vadd.f32 %v5255, %v5267
  %v5279 = vadd.f32 %v5256, %v5267
  %v5280 = vadd.f32 %v5257, %v5267
  %v5281 = vadd.f32 %v5258, %v5267
  %v5282 = vadd.f32 %v5259, %v5267
  %v5283 = vadd.f32 %v5260, %v5267
  %v5284 = vadd.f32 %v5261, %v5267
  %v5285 = vmax.f32 %v5269, 0.0
  %v5286 = vmax.f32 %v5270, 0.0
  %v5287 = vmax.f32 %v5271, 0.0
  %v5288 = vmax.f32 %v5272, 0.0
  %v5289 = vmax.f32 %v5273, 0.0
  %v5290 = vmax.f32 %v5274, 0.0
  %v5291 = vmax.f32 %v5275, 0.0
  %v5292 = vmax.f32 %v5276, 0.0
  %v5293 = vmax.f32 %v5277, 0.0
  %v5294 = vmax.f32 %v5278, 0.0
  %v5295 = vmax.f32 %v5279, 0.0
  %v5296 = vmax.f32 %v5280, 0.0
  %v5297 = vmax.f32 %v5281, 0.0
  %v5298 = vmax.f32 %v5282, 0.0
  %v5299 = vmax.f32 %v5283, 0.0
  %v5300 = vmax.f32 %v5284, 0.0
  %v5301 = vpack.c.bf16 %v5286, %v5285
  %v5302 = vpack.c.bf16 %v5288, %v5287
  %v5303 = vpack.c.bf16 %v5290, %v5289
  %v5304 = vpack.c.bf16 %v5292, %v5291
  %v5305 = vpack.c.bf16 %v5294, %v5293
  %v5306 = vpack.c.bf16 %v5296, %v5295
  %v5307 = vpack.c.bf16 %v5298, %v5297
  %v5308 = vpack.c.bf16 %v5300, %v5299
  %v5317 = vunpack.c.l.b16 %v5301
  %v5318 = vunpack.c.h.b16 %v5301
  %v5319 = vunpack.c.l.b16 %v5302
  %v5320 = vunpack.c.h.b16 %v5302
  %v5321 = vunpack.c.l.b16 %v5303
  %v5322 = vunpack.c.h.b16 %v5303
  %v5323 = vunpack.c.l.b16 %v5304
  %v5324 = vunpack.c.h.b16 %v5304
  %v5325 = vunpack.c.l.b16 %v5305
  %v5326 = vunpack.c.h.b16 %v5305
  %v5327 = vunpack.c.l.b16 %v5306
  %v5328 = vunpack.c.h.b16 %v5306
  %v5329 = vunpack.c.l.b16 %v5307
  %v5330 = vunpack.c.h.b16 %v5307
  %v5331 = vunpack.c.l.b16 %v5308
  %v5332 = vunpack.c.h.b16 %v5308
  %v5333 = vpack.c.b16 %v5317, %v5317
  %v5334 = vpack.c.b16 %v5318, %v5318
  %v5335 = vpack.c.b16 %v5319, %v5319
  %v5336 = vpack.c.b16 %v5320, %v5320
  %v5337 = vpack.c.b16 %v5321, %v5321
  %v5338 = vpack.c.b16 %v5322, %v5322
  %v5339 = vpack.c.b16 %v5323, %v5323
  %v5340 = vpack.c.b16 %v5324, %v5324
  %v5341 = vpack.c.b16 %v5325, %v5325
  %v5342 = vpack.c.b16 %v5326, %v5326
  %v5343 = vpack.c.b16 %v5327, %v5327
  %v5344 = vpack.c.b16 %v5328, %v5328
  %v5345 = vpack.c.b16 %v5329, %v5329
  %v5346 = vpack.c.b16 %v5330, %v5330
  %v5347 = vpack.c.b16 %v5331, %v5331
  %v5348 = vpack.c.b16 %v5332, %v5332
  %v5350 = vshrl.u32 %v5333, 16
  %v5352 = vrot.slane %v5350, 7
  %v5353 = vshll.u32 %v5333, 16
  %v5355 = vor.u32 %v5352, %v5353
  %v5356 = vrot.slane %v5352, 4
  %v5358 = vshrl.u32 %v5334, 16
  %v5360 = vrot.slane %v5358, 7
  %v5361 = vshll.u32 %v5334, 16
  %v5363 = vor.u32 %v5360, %v5361
  %v5364 = vrot.slane %v5360, 4
  %v5366 = vshrl.u32 %v5335, 16
  %v5368 = vrot.slane %v5366, 7
  %v5369 = vshll.u32 %v5335, 16
  %v5371 = vor.u32 %v5368, %v5369
  %v5372 = vrot.slane %v5368, 4
  %v5374 = vshrl.u32 %v5336, 16
  %v5376 = vrot.slane %v5374, 7
  %v5377 = vshll.u32 %v5336, 16
  %v5379 = vor.u32 %v5376, %v5377
  %v5380 = vrot.slane %v5376, 4
  %v5382 = vshrl.u32 %v5337, 16
  %v5384 = vrot.slane %v5382, 7
  %v5385 = vshll.u32 %v5337, 16
  %v5387 = vor.u32 %v5384, %v5385
  %v5388 = vrot.slane %v5384, 4
  %v5390 = vshrl.u32 %v5338, 16
  %v5392 = vrot.slane %v5390, 7
  %v5393 = vshll.u32 %v5338, 16
  %v5395 = vor.u32 %v5392, %v5393
  %v5396 = vrot.slane %v5392, 4
  %v5398 = vshrl.u32 %v5339, 16
  %v5400 = vrot.slane %v5398, 7
  %v5401 = vshll.u32 %v5339, 16
  %v5403 = vor.u32 %v5400, %v5401
  %v5404 = vrot.slane %v5400, 4
  %v5406 = vshrl.u32 %v5340, 16
  %v5408 = vrot.slane %v5406, 7
  %v5409 = vshll.u32 %v5340, 16
  %v5411 = vor.u32 %v5408, %v5409
  %v5412 = vrot.slane %v5408, 4
  %v5414 = vshrl.u32 %v5341, 16
  %v5416 = vrot.slane %v5414, 7
  %v5417 = vshll.u32 %v5341, 16
  %v5419 = vor.u32 %v5416, %v5417
  %v5420 = vrot.slane %v5416, 4
  %v5422 = vshrl.u32 %v5342, 16
  %v5424 = vrot.slane %v5422, 7
  %v5425 = vshll.u32 %v5342, 16
  %v5427 = vor.u32 %v5424, %v5425
  %v5428 = vrot.slane %v5424, 4
  %v5430 = vshrl.u32 %v5343, 16
  %v5432 = vrot.slane %v5430, 7
  %v5433 = vshll.u32 %v5343, 16
  %v5435 = vor.u32 %v5432, %v5433
  %v5436 = vrot.slane %v5432, 4
  %v5438 = vshrl.u32 %v5344, 16
  %v5440 = vrot.slane %v5438, 7
  %v5441 = vshll.u32 %v5344, 16
  %v5443 = vor.u32 %v5440, %v5441
  %v5444 = vrot.slane %v5440, 4
  %v5446 = vshrl.u32 %v5345, 16
  %v5448 = vrot.slane %v5446, 7
  %v5449 = vshll.u32 %v5345, 16
  %v5451 = vor.u32 %v5448, %v5449
  %v5452 = vrot.slane %v5448, 4
  %v5454 = vshrl.u32 %v5346, 16
  %v5456 = vrot.slane %v5454, 7
  %v5457 = vshll.u32 %v5346, 16
  %v5459 = vor.u32 %v5456, %v5457
  %v5460 = vrot.slane %v5456, 4
  %v5462 = vshrl.u32 %v5347, 16
  %v5464 = vrot.slane %v5462, 7
  %v5465 = vshll.u32 %v5347, 16
  %v5467 = vor.u32 %v5464, %v5465
  %v5468 = vrot.slane %v5464, 4
  %v5470 = vshrl.u32 %v5348, 16
  %v5472 = vrot.slane %v5470, 7
  %v5473 = vshll.u32 %v5348, 16
  %v5475 = vor.u32 %v5472, %v5473
  %v5476 = vrot.slane %v5472, 4
  %s5509 = scalar_lea.vmem [#allocation4], 8
  %vm5510 = vcmask 519168
  %vm5511 = vmand %vm5510, %vm381
  %v5512 = vld [vmem:[%s5509] sm:$0xf]
  %v5513 = vsel %vm5511, %v5355, %v5512
  %5514 = vst [vmem:[%s5509] sm:$0xf] %v5513
  %v5515 = vld [vmem:[%s5509 + $0x4] sm:$0x1]
  %v5516 = vsel %vm320, %v5356, %v5515
  %5517 = vst [vmem:[%s5509 + $0x4] sm:$0x1] %v5516
  %v5518 = vld [vmem:[%s5509 + $0x8] sm:$0xf]
  %v5519 = vsel %vm5511, %v5363, %v5518
  %5520 = vst [vmem:[%s5509 + $0x8] sm:$0xf] %v5519
  %v5521 = vld [vmem:[%s5509 + $0xc] sm:$0x1]
  %v5522 = vsel %vm320, %v5364, %v5521
  %5523 = vst [vmem:[%s5509 + $0xc] sm:$0x1] %v5522
  %v5524 = vld [vmem:[%s5509 + $0x10] sm:$0xf]
  %v5525 = vsel %vm5511, %v5371, %v5524
  %5526 = vst [vmem:[%s5509 + $0x10] sm:$0xf] %v5525
  %v5527 = vld [vmem:[%s5509 + $0x14] sm:$0x1]
  %v5528 = vsel %vm320, %v5372, %v5527
  %5529 = vst [vmem:[%s5509 + $0x14] sm:$0x1] %v5528
  %v5530 = vld [vmem:[%s5509 + $0x18] sm:$0xf]
  %v5531 = vsel %vm5511, %v5379, %v5530
  %5532 = vst [vmem:[%s5509 + $0x18] sm:$0xf] %v5531
  %v5533 = vld [vmem:[%s5509 + $0x1c] sm:$0x1]
  %v5534 = vsel %vm320, %v5380, %v5533
  %5535 = vst [vmem:[%s5509 + $0x1c] sm:$0x1] %v5534
  %v5536 = vld [vmem:[%s5509 + $0x20] sm:$0xf]
  %v5537 = vsel %vm5511, %v5387, %v5536
  %5538 = vst [vmem:[%s5509 + $0x20] sm:$0xf] %v5537
  %v5539 = vld [vmem:[%s5509 + $0x24] sm:$0x1]
  %v5540 = vsel %vm320, %v5388, %v5539
  %5541 = vst [vmem:[%s5509 + $0x24] sm:$0x1] %v5540
  %v5542 = vld [vmem:[%s5509 + $0x28] sm:$0xf]
  %v5543 = vsel %vm5511, %v5395, %v5542
  %5544 = vst [vmem:[%s5509 + $0x28] sm:$0xf] %v5543
  %v5545 = vld [vmem:[%s5509 + $0x2c] sm:$0x1]
  %v5546 = vsel %vm320, %v5396, %v5545
  %5547 = vst [vmem:[%s5509 + $0x2c] sm:$0x1] %v5546
  %v5548 = vld [vmem:[%s5509 + $0x30] sm:$0xf]
  %v5549 = vsel %vm5511, %v5403, %v5548
  %5550 = vst [vmem:[%s5509 + $0x30] sm:$0xf] %v5549
  %v5551 = vld [vmem:[%s5509 + $0x34] sm:$0x1]
  %v5552 = vsel %vm320, %v5404, %v5551
  %5553 = vst [vmem:[%s5509 + $0x34] sm:$0x1] %v5552
  %v5554 = vld [vmem:[%s5509 + $0x38] sm:$0xf]
  %v5555 = vsel %vm5511, %v5411, %v5554
  %5556 = vst [vmem:[%s5509 + $0x38] sm:$0xf] %v5555
  %v5557 = vld [vmem:[%s5509 + $0x3c] sm:$0x1]
  %v5558 = vsel %vm320, %v5412, %v5557
  %5559 = vst [vmem:[%s5509 + $0x3c] sm:$0x1] %v5558
  %v5560 = vld [vmem:[%s5509 + $0x50] sm:$0xf]
  %v5561 = vsel %vm5511, %v5419, %v5560
  %5562 = vst [vmem:[%s5509 + $0x50] sm:$0xf] %v5561
  %v5563 = vld [vmem:[%s5509 + $0x54] sm:$0x1]
  %v5564 = vsel %vm320, %v5420, %v5563
  %5565 = vst [vmem:[%s5509 + $0x54] sm:$0x1] %v5564
  %v5566 = vld [vmem:[%s5509 + $0x58] sm:$0xf]
  %v5567 = vsel %vm5511, %v5427, %v5566
  %5568 = vst [vmem:[%s5509 + $0x58] sm:$0xf] %v5567
  %v5569 = vld [vmem:[%s5509 + $0x5c] sm:$0x1]
  %v5570 = vsel %vm320, %v5428, %v5569
  %5571 = vst [vmem:[%s5509 + $0x5c] sm:$0x1] %v5570
  %v5572 = vld [vmem:[%s5509 + $0x60] sm:$0xf]
  %v5573 = vsel %vm5511, %v5435, %v5572
  %5574 = vst [vmem:[%s5509 + $0x60] sm:$0xf] %v5573
  %v5575 = vld [vmem:[%s5509 + $0x64] sm:$0x1]
  %v5576 = vsel %vm320, %v5436, %v5575
  %5577 = vst [vmem:[%s5509 + $0x64] sm:$0x1] %v5576
  %v5578 = vld [vmem:[%s5509 + $0x68] sm:$0xf]
  %v5579 = vsel %vm5511, %v5443, %v5578
  %5580 = vst [vmem:[%s5509 + $0x68] sm:$0xf] %v5579
  %v5581 = vld [vmem:[%s5509 + $0x6c] sm:$0x1]
  %v5582 = vsel %vm320, %v5444, %v5581
  %5583 = vst [vmem:[%s5509 + $0x6c] sm:$0x1] %v5582
  %v5584 = vld [vmem:[%s5509 + $0x70] sm:$0xf]
  %v5585 = vsel %vm5511, %v5451, %v5584
  %5586 = vst [vmem:[%s5509 + $0x70] sm:$0xf] %v5585
  %v5587 = vld [vmem:[%s5509 + $0x74] sm:$0x1]
  %v5588 = vsel %vm320, %v5452, %v5587
  %5589 = vst [vmem:[%s5509 + $0x74] sm:$0x1] %v5588
  %v5590 = vld [vmem:[%s5509 + $0x78] sm:$0xf]
  %v5591 = vsel %vm5511, %v5459, %v5590
  %5592 = vst [vmem:[%s5509 + $0x78] sm:$0xf] %v5591
  %v5593 = vld [vmem:[%s5509 + $0x7c] sm:$0x1]
  %v5594 = vsel %vm320, %v5460, %v5593
  %5595 = vst [vmem:[%s5509 + $0x7c] sm:$0x1] %v5594
  %v5596 = vld [vmem:[%s5509 + $0x80] sm:$0xf]
  %v5597 = vsel %vm5511, %v5467, %v5596
  %5598 = vst [vmem:[%s5509 + $0x80] sm:$0xf] %v5597
  %v5599 = vld [vmem:[%s5509 + $0x84] sm:$0x1]
  %v5600 = vsel %vm320, %v5468, %v5599
  %5601 = vst [vmem:[%s5509 + $0x84] sm:$0x1] %v5600
  %v5602 = vld [vmem:[%s5509 + $0x88] sm:$0xf]
  %v5603 = vsel %vm5511, %v5475, %v5602
  %5604 = vst [vmem:[%s5509 + $0x88] sm:$0xf] %v5603
  %v5605 = vld [vmem:[%s5509 + $0x8c] sm:$0x1]
  %v5606 = vsel %vm320, %v5476, %v5605
  %5607 = vst [vmem:[%s5509 + $0x8c] sm:$0x1] %v5606
  %v5608 = vld [vmem:[#allocation4] sm:$0xf]
  %v5609 = vld [vmem:[#allocation4 + $0x8] sm:$0xf]
  %v5610 = vld [vmem:[#allocation4 + $0x10] sm:$0xf]
  %v5611 = vld [vmem:[#allocation4 + $0x18] sm:$0xf]
  %v5612 = vld [vmem:[#allocation4 + $0x20] sm:$0xf]
  %v5613 = vld [vmem:[#allocation4 + $0x28] sm:$0xf]
  %v5614 = vld [vmem:[#allocation4 + $0x30] sm:$0xf]
  %v5615 = vld [vmem:[#allocation4 + $0x38] sm:$0xf]
  %v5616 = vld [vmem:[#allocation4 + $0x50] sm:$0xf]
  %v5617 = vld [vmem:[#allocation4 + $0x58] sm:$0xf]
  %v5618 = vld [vmem:[#allocation4 + $0x60] sm:$0xf]
  %v5619 = vld [vmem:[#allocation4 + $0x68] sm:$0xf]
  %v5620 = vld [vmem:[#allocation4 + $0x70] sm:$0xf]
  %v5621 = vld [vmem:[#allocation4 + $0x78] sm:$0xf]
  %v5622 = vld [vmem:[#allocation4 + $0x80] sm:$0xf]
  %v5623 = vld [vmem:[#allocation4 + $0x88] sm:$0xf]
  %v5624 = vld [vmem:[#allocation4 + $0x4] sm:$0x1]
  %v5625 = vld [vmem:[#allocation4 + $0xc] sm:$0x1]
  %v5626 = vld [vmem:[#allocation4 + $0x14] sm:$0x1]
  %v5627 = vld [vmem:[#allocation4 + $0x1c] sm:$0x1]
  %v5628 = vld [vmem:[#allocation4 + $0x24] sm:$0x1]
  %v5629 = vld [vmem:[#allocation4 + $0x2c] sm:$0x1]
  %v5630 = vld [vmem:[#allocation4 + $0x34] sm:$0x1]
  %v5631 = vld [vmem:[#allocation4 + $0x3c] sm:$0x1]
  %v5632 = vld [vmem:[#allocation4 + $0x54] sm:$0x1]
  %v5633 = vld [vmem:[#allocation4 + $0x5c] sm:$0x1]
  %v5634 = vld [vmem:[#allocation4 + $0x64] sm:$0x1]
  %v5635 = vld [vmem:[#allocation4 + $0x6c] sm:$0x1]
  %v5636 = vld [vmem:[#allocation4 + $0x74] sm:$0x1]
  %v5637 = vld [vmem:[#allocation4 + $0x7c] sm:$0x1]
  %v5638 = vld [vmem:[#allocation4 + $0x84] sm:$0x1]
  %v5639 = vld [vmem:[#allocation4 + $0x8c] sm:$0x1]
  %v5641 = vshrl.u32 %v5608, 16
  %v5643 = vrot.slane %v5641, 4
  %v5644 = vshll.u32 %v5608, 16
  %v5646 = vrot.slane %v5644, 5
  %v5647 = vor.u32 %v5643, %v5646
  %v5648 = vrot.slane %v5647, 4
  %v5650 = vshll.u32 %v5624, 16
  %v5652 = vrot.slane %v5650, 5
  %v5653 = vsel %vm3025, %v5648, %v5652
  %v5655 = vshrl.u32 %v5609, 16
  %v5657 = vrot.slane %v5655, 4
  %v5658 = vshll.u32 %v5609, 16
  %v5660 = vrot.slane %v5658, 5
  %v5661 = vor.u32 %v5657, %v5660
  %v5662 = vrot.slane %v5661, 4
  %v5664 = vshll.u32 %v5625, 16
  %v5666 = vrot.slane %v5664, 5
  %v5667 = vsel %vm3025, %v5662, %v5666
  %v5669 = vshrl.u32 %v5610, 16
  %v5671 = vrot.slane %v5669, 4
  %v5672 = vshll.u32 %v5610, 16
  %v5674 = vrot.slane %v5672, 5
  %v5675 = vor.u32 %v5671, %v5674
  %v5676 = vrot.slane %v5675, 4
  %v5678 = vshll.u32 %v5626, 16
  %v5680 = vrot.slane %v5678, 5
  %v5681 = vsel %vm3025, %v5676, %v5680
  %v5683 = vshrl.u32 %v5611, 16
  %v5685 = vrot.slane %v5683, 4
  %v5686 = vshll.u32 %v5611, 16
  %v5688 = vrot.slane %v5686, 5
  %v5689 = vor.u32 %v5685, %v5688
  %v5690 = vrot.slane %v5689, 4
  %v5692 = vshll.u32 %v5627, 16
  %v5694 = vrot.slane %v5692, 5
  %v5695 = vsel %vm3025, %v5690, %v5694
  %v5697 = vshrl.u32 %v5612, 16
  %v5699 = vrot.slane %v5697, 4
  %v5700 = vshll.u32 %v5612, 16
  %v5702 = vrot.slane %v5700, 5
  %v5703 = vor.u32 %v5699, %v5702
  %v5704 = vrot.slane %v5703, 4
  %v5706 = vshll.u32 %v5628, 16
  %v5708 = vrot.slane %v5706, 5
  %v5709 = vsel %vm3025, %v5704, %v5708
  %v5711 = vshrl.u32 %v5613, 16
  %v5713 = vrot.slane %v5711, 4
  %v5714 = vshll.u32 %v5613, 16
  %v5716 = vrot.slane %v5714, 5
  %v5717 = vor.u32 %v5713, %v5716
  %v5718 = vrot.slane %v5717, 4
  %v5720 = vshll.u32 %v5629, 16
  %v5722 = vrot.slane %v5720, 5
  %v5723 = vsel %vm3025, %v5718, %v5722
  %v5725 = vshrl.u32 %v5614, 16
  %v5727 = vrot.slane %v5725, 4
  %v5728 = vshll.u32 %v5614, 16
  %v5730 = vrot.slane %v5728, 5
  %v5731 = vor.u32 %v5727, %v5730
  %v5732 = vrot.slane %v5731, 4
  %v5734 = vshll.u32 %v5630, 16
  %v5736 = vrot.slane %v5734, 5
  %v5737 = vsel %vm3025, %v5732, %v5736
  %v5739 = vshrl.u32 %v5615, 16
  %v5741 = vrot.slane %v5739, 4
  %v5742 = vshll.u32 %v5615, 16
  %v5744 = vrot.slane %v5742, 5
  %v5745 = vor.u32 %v5741, %v5744
  %v5746 = vrot.slane %v5745, 4
  %v5748 = vshll.u32 %v5631, 16
  %v5750 = vrot.slane %v5748, 5
  %v5751 = vsel %vm3025, %v5746, %v5750
  %v5753 = vshrl.u32 %v5616, 16
  %v5755 = vrot.slane %v5753, 4
  %v5756 = vshll.u32 %v5616, 16
  %v5758 = vrot.slane %v5756, 5
  %v5759 = vor.u32 %v5755, %v5758
  %v5760 = vrot.slane %v5759, 4
  %v5762 = vshll.u32 %v5632, 16
  %v5764 = vrot.slane %v5762, 5
  %v5765 = vsel %vm3025, %v5760, %v5764
  %v5767 = vshrl.u32 %v5617, 16
  %v5769 = vrot.slane %v5767, 4
  %v5770 = vshll.u32 %v5617, 16
  %v5772 = vrot.slane %v5770, 5
  %v5773 = vor.u32 %v5769, %v5772
  %v5774 = vrot.slane %v5773, 4
  %v5776 = vshll.u32 %v5633, 16
  %v5778 = vrot.slane %v5776, 5
  %v5779 = vsel %vm3025, %v5774, %v5778
  %v5781 = vshrl.u32 %v5618, 16
  %v5783 = vrot.slane %v5781, 4
  %v5784 = vshll.u32 %v5618, 16
  %v5786 = vrot.slane %v5784, 5
  %v5787 = vor.u32 %v5783, %v5786
  %v5788 = vrot.slane %v5787, 4
  %v5790 = vshll.u32 %v5634, 16
  %v5792 = vrot.slane %v5790, 5
  %v5793 = vsel %vm3025, %v5788, %v5792
  %v5795 = vshrl.u32 %v5619, 16
  %v5797 = vrot.slane %v5795, 4
  %v5798 = vshll.u32 %v5619, 16
  %v5800 = vrot.slane %v5798, 5
  %v5801 = vor.u32 %v5797, %v5800
  %v5802 = vrot.slane %v5801, 4
  %v5804 = vshll.u32 %v5635, 16
  %v5806 = vrot.slane %v5804, 5
  %v5807 = vsel %vm3025, %v5802, %v5806
  %v5809 = vshrl.u32 %v5620, 16
  %v5811 = vrot.slane %v5809, 4
  %v5812 = vshll.u32 %v5620, 16
  %v5814 = vrot.slane %v5812, 5
  %v5815 = vor.u32 %v5811, %v5814
  %v5816 = vrot.slane %v5815, 4
  %v5818 = vshll.u32 %v5636, 16
  %v5820 = vrot.slane %v5818, 5
  %v5821 = vsel %vm3025, %v5816, %v5820
  %v5823 = vshrl.u32 %v5621, 16
  %v5825 = vrot.slane %v5823, 4
  %v5826 = vshll.u32 %v5621, 16
  %v5828 = vrot.slane %v5826, 5
  %v5829 = vor.u32 %v5825, %v5828
  %v5830 = vrot.slane %v5829, 4
  %v5832 = vshll.u32 %v5637, 16
  %v5834 = vrot.slane %v5832, 5
  %v5835 = vsel %vm3025, %v5830, %v5834
  %v5837 = vshrl.u32 %v5622, 16
  %v5839 = vrot.slane %v5837, 4
  %v5840 = vshll.u32 %v5622, 16
  %v5842 = vrot.slane %v5840, 5
  %v5843 = vor.u32 %v5839, %v5842
  %v5844 = vrot.slane %v5843, 4
  %v5846 = vshll.u32 %v5638, 16
  %v5848 = vrot.slane %v5846, 5
  %v5849 = vsel %vm3025, %v5844, %v5848
  %v5851 = vshrl.u32 %v5623, 16
  %v5853 = vrot.slane %v5851, 4
  %v5854 = vshll.u32 %v5623, 16
  %v5856 = vrot.slane %v5854, 5
  %v5857 = vor.u32 %v5853, %v5856
  %v5858 = vrot.slane %v5857, 4
  %v5860 = vshll.u32 %v5639, 16
  %v5862 = vrot.slane %v5860, 5
  %v5863 = vsel %vm3025, %v5858, %v5862
  %v5864 = vld [vmem:[#allocation4] sm:$0xe]
  %v5865 = vld [vmem:[#allocation4 + $0x8] sm:$0xe]
  %v5866 = vld [vmem:[#allocation4 + $0x10] sm:$0xe]
  %v5867 = vld [vmem:[#allocation4 + $0x18] sm:$0xe]
  %v5868 = vld [vmem:[#allocation4 + $0x20] sm:$0xe]
  %v5869 = vld [vmem:[#allocation4 + $0x28] sm:$0xe]
  %v5870 = vld [vmem:[#allocation4 + $0x30] sm:$0xe]
  %v5871 = vld [vmem:[#allocation4 + $0x38] sm:$0xe]
  %v5872 = vld [vmem:[#allocation4 + $0x50] sm:$0xe]
  %v5873 = vld [vmem:[#allocation4 + $0x58] sm:$0xe]
  %v5874 = vld [vmem:[#allocation4 + $0x60] sm:$0xe]
  %v5875 = vld [vmem:[#allocation4 + $0x68] sm:$0xe]
  %v5876 = vld [vmem:[#allocation4 + $0x70] sm:$0xe]
  %v5877 = vld [vmem:[#allocation4 + $0x78] sm:$0xe]
  %v5878 = vld [vmem:[#allocation4 + $0x80] sm:$0xe]
  %v5879 = vld [vmem:[#allocation4 + $0x88] sm:$0xe]
  %vm5912 = vcmask 1042432
  %vm5913 = vcmask 1046532
  %vm5914 = vmor %vm5912, %vm5913
  %v5915 = vrot.slane %v5864, 5
  %v5916 = vrot.slane %v5915, 4
  %v5917 = vrot.slane %v5624, 5
  %v5918 = vsel %vm5914, %v5916, %v5917
  %v5919 = vrot.slane %v5865, 5
  %v5920 = vrot.slane %v5919, 4
  %v5921 = vrot.slane %v5625, 5
  %v5922 = vsel %vm5914, %v5920, %v5921
  %v5923 = vrot.slane %v5866, 5
  %v5924 = vrot.slane %v5923, 4
  %v5925 = vrot.slane %v5626, 5
  %v5926 = vsel %vm5914, %v5924, %v5925
  %v5927 = vrot.slane %v5867, 5
  %v5928 = vrot.slane %v5927, 4
  %v5929 = vrot.slane %v5627, 5
  %v5930 = vsel %vm5914, %v5928, %v5929
  %v5931 = vrot.slane %v5868, 5
  %v5932 = vrot.slane %v5931, 4
  %v5933 = vrot.slane %v5628, 5
  %v5934 = vsel %vm5914, %v5932, %v5933
  %v5935 = vrot.slane %v5869, 5
  %v5936 = vrot.slane %v5935, 4
  %v5937 = vrot.slane %v5629, 5
  %v5938 = vsel %vm5914, %v5936, %v5937
  %v5939 = vrot.slane %v5870, 5
  %v5940 = vrot.slane %v5939, 4
  %v5941 = vrot.slane %v5630, 5
  %v5942 = vsel %vm5914, %v5940, %v5941
  %v5943 = vrot.slane %v5871, 5
  %v5944 = vrot.slane %v5943, 4
  %v5945 = vrot.slane %v5631, 5
  %v5946 = vsel %vm5914, %v5944, %v5945
  %v5947 = vrot.slane %v5872, 5
  %v5948 = vrot.slane %v5947, 4
  %v5949 = vrot.slane %v5632, 5
  %v5950 = vsel %vm5914, %v5948, %v5949
  %v5951 = vrot.slane %v5873, 5
  %v5952 = vrot.slane %v5951, 4
  %v5953 = vrot.slane %v5633, 5
  %v5954 = vsel %vm5914, %v5952, %v5953
  %v5955 = vrot.slane %v5874, 5
  %v5956 = vrot.slane %v5955, 4
  %v5957 = vrot.slane %v5634, 5
  %v5958 = vsel %vm5914, %v5956, %v5957
  %v5959 = vrot.slane %v5875, 5
  %v5960 = vrot.slane %v5959, 4
  %v5961 = vrot.slane %v5635, 5
  %v5962 = vsel %vm5914, %v5960, %v5961
  %v5963 = vrot.slane %v5876, 5
  %v5964 = vrot.slane %v5963, 4
  %v5965 = vrot.slane %v5636, 5
  %v5966 = vsel %vm5914, %v5964, %v5965
  %v5967 = vrot.slane %v5877, 5
  %v5968 = vrot.slane %v5967, 4
  %v5969 = vrot.slane %v5637, 5
  %v5970 = vsel %vm5914, %v5968, %v5969
  %v5971 = vrot.slane %v5878, 5
  %v5972 = vrot.slane %v5971, 4
  %v5973 = vrot.slane %v5638, 5
  %v5974 = vsel %vm5914, %v5972, %v5973
  %v5975 = vrot.slane %v5879, 5
  %v5976 = vrot.slane %v5975, 4
  %v5977 = vrot.slane %v5639, 5
  %v5978 = vsel %vm5914, %v5976, %v5977
  %v5979 = vld [vmem:[%s5509] sm:$0xf]
  %v5980 = vld [vmem:[%s5509 + $0x8] sm:$0xf]
  %v5981 = vld [vmem:[%s5509 + $0x10] sm:$0xf]
  %v5982 = vld [vmem:[%s5509 + $0x18] sm:$0xf]
  %v5983 = vld [vmem:[%s5509 + $0x20] sm:$0xf]
  %v5984 = vld [vmem:[%s5509 + $0x28] sm:$0xf]
  %v5985 = vld [vmem:[%s5509 + $0x30] sm:$0xf]
  %v5986 = vld [vmem:[%s5509 + $0x38] sm:$0xf]
  %v5987 = vld [vmem:[%s5509 + $0x50] sm:$0xf]
  %v5988 = vld [vmem:[%s5509 + $0x58] sm:$0xf]
  %v5989 = vld [vmem:[%s5509 + $0x60] sm:$0xf]
  %v5990 = vld [vmem:[%s5509 + $0x68] sm:$0xf]
  %v5991 = vld [vmem:[%s5509 + $0x70] sm:$0xf]
  %v5992 = vld [vmem:[%s5509 + $0x78] sm:$0xf]
  %v5993 = vld [vmem:[%s5509 + $0x80] sm:$0xf]
  %v5994 = vld [vmem:[%s5509 + $0x88] sm:$0xf]
  %v5995 = vld [vmem:[%s5509 + $0x4] sm:$0x1]
  %v5996 = vld [vmem:[%s5509 + $0xc] sm:$0x1]
  %v5997 = vld [vmem:[%s5509 + $0x14] sm:$0x1]
  %v5998 = vld [vmem:[%s5509 + $0x1c] sm:$0x1]
  %v5999 = vld [vmem:[%s5509 + $0x24] sm:$0x1]
  %v6000 = vld [vmem:[%s5509 + $0x2c] sm:$0x1]
  %v6001 = vld [vmem:[%s5509 + $0x34] sm:$0x1]
  %v6002 = vld [vmem:[%s5509 + $0x3c] sm:$0x1]
  %v6003 = vld [vmem:[%s5509 + $0x54] sm:$0x1]
  %v6004 = vld [vmem:[%s5509 + $0x5c] sm:$0x1]
  %v6005 = vld [vmem:[%s5509 + $0x64] sm:$0x1]
  %v6006 = vld [vmem:[%s5509 + $0x6c] sm:$0x1]
  %v6007 = vld [vmem:[%s5509 + $0x74] sm:$0x1]
  %v6008 = vld [vmem:[%s5509 + $0x7c] sm:$0x1]
  %v6009 = vld [vmem:[%s5509 + $0x84] sm:$0x1]
  %v6010 = vld [vmem:[%s5509 + $0x8c] sm:$0x1]
  %v6012 = vshrl.u32 %v5979, 16
  %v6014 = vrot.slane %v6012, 4
  %v6015 = vshll.u32 %v5979, 16
  %v6017 = vrot.slane %v6015, 5
  %v6018 = vor.u32 %v6014, %v6017
  %v6019 = vrot.slane %v6018, 4
  %v6021 = vshll.u32 %v5995, 16
  %v6023 = vrot.slane %v6021, 5
  %v6024 = vsel %vm3025, %v6019, %v6023
  %v6026 = vshrl.u32 %v5980, 16
  %v6028 = vrot.slane %v6026, 4
  %v6029 = vshll.u32 %v5980, 16
  %v6031 = vrot.slane %v6029, 5
  %v6032 = vor.u32 %v6028, %v6031
  %v6033 = vrot.slane %v6032, 4
  %v6035 = vshll.u32 %v5996, 16
  %v6037 = vrot.slane %v6035, 5
  %v6038 = vsel %vm3025, %v6033, %v6037
  %v6040 = vshrl.u32 %v5981, 16
  %v6042 = vrot.slane %v6040, 4
  %v6043 = vshll.u32 %v5981, 16
  %v6045 = vrot.slane %v6043, 5
  %v6046 = vor.u32 %v6042, %v6045
  %v6047 = vrot.slane %v6046, 4
  %v6049 = vshll.u32 %v5997, 16
  %v6051 = vrot.slane %v6049, 5
  %v6052 = vsel %vm3025, %v6047, %v6051
  %v6054 = vshrl.u32 %v5982, 16
  %v6056 = vrot.slane %v6054, 4
  %v6057 = vshll.u32 %v5982, 16
  %v6059 = vrot.slane %v6057, 5
  %v6060 = vor.u32 %v6056, %v6059
  %v6061 = vrot.slane %v6060, 4
  %v6063 = vshll.u32 %v5998, 16
  %v6065 = vrot.slane %v6063, 5
  %v6066 = vsel %vm3025, %v6061, %v6065
  %v6068 = vshrl.u32 %v5983, 16
  %v6070 = vrot.slane %v6068, 4
  %v6071 = vshll.u32 %v5983, 16
  %v6073 = vrot.slane %v6071, 5
  %v6074 = vor.u32 %v6070, %v6073
  %v6075 = vrot.slane %v6074, 4
  %v6077 = vshll.u32 %v5999, 16
  %v6079 = vrot.slane %v6077, 5
  %v6080 = vsel %vm3025, %v6075, %v6079
  %v6082 = vshrl.u32 %v5984, 16
  %v6084 = vrot.slane %v6082, 4
  %v6085 = vshll.u32 %v5984, 16
  %v6087 = vrot.slane %v6085, 5
  %v6088 = vor.u32 %v6084, %v6087
  %v6089 = vrot.slane %v6088, 4
  %v6091 = vshll.u32 %v6000, 16
  %v6093 = vrot.slane %v6091, 5
  %v6094 = vsel %vm3025, %v6089, %v6093
  %v6096 = vshrl.u32 %v5985, 16
  %v6098 = vrot.slane %v6096, 4
  %v6099 = vshll.u32 %v5985, 16
  %v6101 = vrot.slane %v6099, 5
  %v6102 = vor.u32 %v6098, %v6101
  %v6103 = vrot.slane %v6102, 4
  %v6105 = vshll.u32 %v6001, 16
  %v6107 = vrot.slane %v6105, 5
  %v6108 = vsel %vm3025, %v6103, %v6107
  %v6110 = vshrl.u32 %v5986, 16
  %v6112 = vrot.slane %v6110, 4
  %v6113 = vshll.u32 %v5986, 16
  %v6115 = vrot.slane %v6113, 5
  %v6116 = vor.u32 %v6112, %v6115
  %v6117 = vrot.slane %v6116, 4
  %v6119 = vshll.u32 %v6002, 16
  %v6121 = vrot.slane %v6119, 5
  %v6122 = vsel %vm3025, %v6117, %v6121
  %v6124 = vshrl.u32 %v5987, 16
  %v6126 = vrot.slane %v6124, 4
  %v6127 = vshll.u32 %v5987, 16
  %v6129 = vrot.slane %v6127, 5
  %v6130 = vor.u32 %v6126, %v6129
  %v6131 = vrot.slane %v6130, 4
  %v6133 = vshll.u32 %v6003, 16
  %v6135 = vrot.slane %v6133, 5
  %v6136 = vsel %vm3025, %v6131, %v6135
  %v6138 = vshrl.u32 %v5988, 16
  %v6140 = vrot.slane %v6138, 4
  %v6141 = vshll.u32 %v5988, 16
  %v6143 = vrot.slane %v6141, 5
  %v6144 = vor.u32 %v6140, %v6143
  %v6145 = vrot.slane %v6144, 4
  %v6147 = vshll.u32 %v6004, 16
  %v6149 = vrot.slane %v6147, 5
  %v6150 = vsel %vm3025, %v6145, %v6149
  %v6152 = vshrl.u32 %v5989, 16
  %v6154 = vrot.slane %v6152, 4
  %v6155 = vshll.u32 %v5989, 16
  %v6157 = vrot.slane %v6155, 5
  %v6158 = vor.u32 %v6154, %v6157
  %v6159 = vrot.slane %v6158, 4
  %v6161 = vshll.u32 %v6005, 16
  %v6163 = vrot.slane %v6161, 5
  %v6164 = vsel %vm3025, %v6159, %v6163
  %v6166 = vshrl.u32 %v5990, 16
  %v6168 = vrot.slane %v6166, 4
  %v6169 = vshll.u32 %v5990, 16
  %v6171 = vrot.slane %v6169, 5
  %v6172 = vor.u32 %v6168, %v6171
  %v6173 = vrot.slane %v6172, 4
  %v6175 = vshll.u32 %v6006, 16
  %v6177 = vrot.slane %v6175, 5
  %v6178 = vsel %vm3025, %v6173, %v6177
  %v6180 = vshrl.u32 %v5991, 16
  %v6182 = vrot.slane %v6180, 4
  %v6183 = vshll.u32 %v5991, 16
  %v6185 = vrot.slane %v6183, 5
  %v6186 = vor.u32 %v6182, %v6185
  %v6187 = vrot.slane %v6186, 4
  %v6189 = vshll.u32 %v6007, 16
  %v6191 = vrot.slane %v6189, 5
  %v6192 = vsel %vm3025, %v6187, %v6191
  %v6194 = vshrl.u32 %v5992, 16
  %v6196 = vrot.slane %v6194, 4
  %v6197 = vshll.u32 %v5992, 16
  %v6199 = vrot.slane %v6197, 5
  %v6200 = vor.u32 %v6196, %v6199
  %v6201 = vrot.slane %v6200, 4
  %v6203 = vshll.u32 %v6008, 16
  %v6205 = vrot.slane %v6203, 5
  %v6206 = vsel %vm3025, %v6201, %v6205
  %v6208 = vshrl.u32 %v5993, 16
  %v6210 = vrot.slane %v6208, 4
  %v6211 = vshll.u32 %v5993, 16
  %v6213 = vrot.slane %v6211, 5
  %v6214 = vor.u32 %v6210, %v6213
  %v6215 = vrot.slane %v6214, 4
  %v6217 = vshll.u32 %v6009, 16
  %v6219 = vrot.slane %v6217, 5
  %v6220 = vsel %vm3025, %v6215, %v6219
  %v6222 = vshrl.u32 %v5994, 16
  %v6224 = vrot.slane %v6222, 4
  %v6225 = vshll.u32 %v5994, 16
  %v6227 = vrot.slane %v6225, 5
  %v6228 = vor.u32 %v6224, %v6227
  %v6229 = vrot.slane %v6228, 4
  %v6231 = vshll.u32 %v6010, 16
  %v6233 = vrot.slane %v6231, 5
  %v6234 = vsel %vm3025, %v6229, %v6233
  %v6235 = vld [vmem:[%s5509] sm:$0xe]
  %v6236 = vld [vmem:[%s5509 + $0x8] sm:$0xe]
  %v6237 = vld [vmem:[%s5509 + $0x10] sm:$0xe]
  %v6238 = vld [vmem:[%s5509 + $0x18] sm:$0xe]
  %v6239 = vld [vmem:[%s5509 + $0x20] sm:$0xe]
  %v6240 = vld [vmem:[%s5509 + $0x28] sm:$0xe]
  %v6241 = vld [vmem:[%s5509 + $0x30] sm:$0xe]
  %v6242 = vld [vmem:[%s5509 + $0x38] sm:$0xe]
  %v6243 = vld [vmem:[%s5509 + $0x50] sm:$0xe]
  %v6244 = vld [vmem:[%s5509 + $0x58] sm:$0xe]
  %v6245 = vld [vmem:[%s5509 + $0x60] sm:$0xe]
  %v6246 = vld [vmem:[%s5509 + $0x68] sm:$0xe]
  %v6247 = vld [vmem:[%s5509 + $0x70] sm:$0xe]
  %v6248 = vld [vmem:[%s5509 + $0x78] sm:$0xe]
  %v6249 = vld [vmem:[%s5509 + $0x80] sm:$0xe]
  %v6250 = vld [vmem:[%s5509 + $0x88] sm:$0xe]
  %v6283 = vrot.slane %v6235, 5
  %v6284 = vrot.slane %v6283, 4
  %v6285 = vrot.slane %v5995, 5
  %v6286 = vsel %vm5914, %v6284, %v6285
  %v6287 = vrot.slane %v6236, 5
  %v6288 = vrot.slane %v6287, 4
  %v6289 = vrot.slane %v5996, 5
  %v6290 = vsel %vm5914, %v6288, %v6289
  %v6291 = vrot.slane %v6237, 5
  %v6292 = vrot.slane %v6291, 4
  %v6293 = vrot.slane %v5997, 5
  %v6294 = vsel %vm5914, %v6292, %v6293
  %v6295 = vrot.slane %v6238, 5
  %v6296 = vrot.slane %v6295, 4
  %v6297 = vrot.slane %v5998, 5
  %v6298 = vsel %vm5914, %v6296, %v6297
  %v6299 = vrot.slane %v6239, 5
  %v6300 = vrot.slane %v6299, 4
  %v6301 = vrot.slane %v5999, 5
  %v6302 = vsel %vm5914, %v6300, %v6301
  %v6303 = vrot.slane %v6240, 5
  %v6304 = vrot.slane %v6303, 4
  %v6305 = vrot.slane %v6000, 5
  %v6306 = vsel %vm5914, %v6304, %v6305
  %v6307 = vrot.slane %v6241, 5
  %v6308 = vrot.slane %v6307, 4
  %v6309 = vrot.slane %v6001, 5
  %v6310 = vsel %vm5914, %v6308, %v6309
  %v6311 = vrot.slane %v6242, 5
  %v6312 = vrot.slane %v6311, 4
  %v6313 = vrot.slane %v6002, 5
  %v6314 = vsel %vm5914, %v6312, %v6313
  %v6315 = vrot.slane %v6243, 5
  %v6316 = vrot.slane %v6315, 4
  %v6317 = vrot.slane %v6003, 5
  %v6318 = vsel %vm5914, %v6316, %v6317
  %v6319 = vrot.slane %v6244, 5
  %v6320 = vrot.slane %v6319, 4
  %v6321 = vrot.slane %v6004, 5
  %v6322 = vsel %vm5914, %v6320, %v6321
  %v6323 = vrot.slane %v6245, 5
  %v6324 = vrot.slane %v6323, 4
  %v6325 = vrot.slane %v6005, 5
  %v6326 = vsel %vm5914, %v6324, %v6325
  %v6327 = vrot.slane %v6246, 5
  %v6328 = vrot.slane %v6327, 4
  %v6329 = vrot.slane %v6006, 5
  %v6330 = vsel %vm5914, %v6328, %v6329
  %v6331 = vrot.slane %v6247, 5
  %v6332 = vrot.slane %v6331, 4
  %v6333 = vrot.slane %v6007, 5
  %v6334 = vsel %vm5914, %v6332, %v6333
  %v6335 = vrot.slane %v6248, 5
  %v6336 = vrot.slane %v6335, 4
  %v6337 = vrot.slane %v6008, 5
  %v6338 = vsel %vm5914, %v6336, %v6337
  %v6339 = vrot.slane %v6249, 5
  %v6340 = vrot.slane %v6339, 4
  %v6341 = vrot.slane %v6009, 5
  %v6342 = vsel %vm5914, %v6340, %v6341
  %v6343 = vrot.slane %v6250, 5
  %v6344 = vrot.slane %v6343, 4
  %v6345 = vrot.slane %v6010, 5
  %v6346 = vsel %vm5914, %v6344, %v6345
  %s6347 = scalar_lea.vmem [#allocation4], 16
  %v6348 = vld [vmem:[%s6347] sm:$0xf]
  %v6349 = vld [vmem:[%s6347 + $0x8] sm:$0xf]
  %v6350 = vld [vmem:[%s6347 + $0x10] sm:$0xf]
  %v6351 = vld [vmem:[%s6347 + $0x18] sm:$0xf]
  %v6352 = vld [vmem:[%s6347 + $0x20] sm:$0xf]
  %v6353 = vld [vmem:[%s6347 + $0x28] sm:$0xf]
  %v6354 = vld [vmem:[%s6347 + $0x30] sm:$0xf]
  %v6355 = vld [vmem:[%s6347 + $0x38] sm:$0xf]
  %v6356 = vld [vmem:[%s6347 + $0x50] sm:$0xf]
  %v6357 = vld [vmem:[%s6347 + $0x58] sm:$0xf]
  %v6358 = vld [vmem:[%s6347 + $0x60] sm:$0xf]
  %v6359 = vld [vmem:[%s6347 + $0x68] sm:$0xf]
  %v6360 = vld [vmem:[%s6347 + $0x70] sm:$0xf]
  %v6361 = vld [vmem:[%s6347 + $0x78] sm:$0xf]
  %v6362 = vld [vmem:[%s6347 + $0x80] sm:$0xf]
  %v6363 = vld [vmem:[%s6347 + $0x88] sm:$0xf]
  %v6364 = vld [vmem:[%s6347 + $0x4] sm:$0x1]
  %v6365 = vld [vmem:[%s6347 + $0xc] sm:$0x1]
  %v6366 = vld [vmem:[%s6347 + $0x14] sm:$0x1]
  %v6367 = vld [vmem:[%s6347 + $0x1c] sm:$0x1]
  %v6368 = vld [vmem:[%s6347 + $0x24] sm:$0x1]
  %v6369 = vld [vmem:[%s6347 + $0x2c] sm:$0x1]
  %v6370 = vld [vmem:[%s6347 + $0x34] sm:$0x1]
  %v6371 = vld [vmem:[%s6347 + $0x3c] sm:$0x1]
  %v6372 = vld [vmem:[%s6347 + $0x54] sm:$0x1]
  %v6373 = vld [vmem:[%s6347 + $0x5c] sm:$0x1]
  %v6374 = vld [vmem:[%s6347 + $0x64] sm:$0x1]
  %v6375 = vld [vmem:[%s6347 + $0x6c] sm:$0x1]
  %v6376 = vld [vmem:[%s6347 + $0x74] sm:$0x1]
  %v6377 = vld [vmem:[%s6347 + $0x7c] sm:$0x1]
  %v6378 = vld [vmem:[%s6347 + $0x84] sm:$0x1]
  %v6379 = vld [vmem:[%s6347 + $0x8c] sm:$0x1]
  %v6381 = vshrl.u32 %v6348, 16
  %v6383 = vrot.slane %v6381, 4
  %v6384 = vshll.u32 %v6348, 16
  %v6386 = vrot.slane %v6384, 5
  %v6387 = vor.u32 %v6383, %v6386
  %v6388 = vrot.slane %v6387, 4
  %v6390 = vshll.u32 %v6364, 16
  %v6392 = vrot.slane %v6390, 5
  %v6393 = vsel %vm3025, %v6388, %v6392
  %v6395 = vshrl.u32 %v6349, 16
  %v6397 = vrot.slane %v6395, 4
  %v6398 = vshll.u32 %v6349, 16
  %v6400 = vrot.slane %v6398, 5
  %v6401 = vor.u32 %v6397, %v6400
  %v6402 = vrot.slane %v6401, 4
  %v6404 = vshll.u32 %v6365, 16
  %v6406 = vrot.slane %v6404, 5
  %v6407 = vsel %vm3025, %v6402, %v6406
  %v6409 = vshrl.u32 %v6350, 16
  %v6411 = vrot.slane %v6409, 4
  %v6412 = vshll.u32 %v6350, 16
  %v6414 = vrot.slane %v6412, 5
  %v6415 = vor.u32 %v6411, %v6414
  %v6416 = vrot.slane %v6415, 4
  %v6418 = vshll.u32 %v6366, 16
  %v6420 = vrot.slane %v6418, 5
  %v6421 = vsel %vm3025, %v6416, %v6420
  %v6423 = vshrl.u32 %v6351, 16
  %v6425 = vrot.slane %v6423, 4
  %v6426 = vshll.u32 %v6351, 16
  %v6428 = vrot.slane %v6426, 5
  %v6429 = vor.u32 %v6425, %v6428
  %v6430 = vrot.slane %v6429, 4
  %v6432 = vshll.u32 %v6367, 16
  %v6434 = vrot.slane %v6432, 5
  %v6435 = vsel %vm3025, %v6430, %v6434
  %v6437 = vshrl.u32 %v6352, 16
  %v6439 = vrot.slane %v6437, 4
  %v6440 = vshll.u32 %v6352, 16
  %v6442 = vrot.slane %v6440, 5
  %v6443 = vor.u32 %v6439, %v6442
  %v6444 = vrot.slane %v6443, 4
  %v6446 = vshll.u32 %v6368, 16
  %v6448 = vrot.slane %v6446, 5
  %v6449 = vsel %vm3025, %v6444, %v6448
  %v6451 = vshrl.u32 %v6353, 16
  %v6453 = vrot.slane %v6451, 4
  %v6454 = vshll.u32 %v6353, 16
  %v6456 = vrot.slane %v6454, 5
  %v6457 = vor.u32 %v6453, %v6456
  %v6458 = vrot.slane %v6457, 4
  %v6460 = vshll.u32 %v6369, 16
  %v6462 = vrot.slane %v6460, 5
  %v6463 = vsel %vm3025, %v6458, %v6462
  %v6465 = vshrl.u32 %v6354, 16
  %v6467 = vrot.slane %v6465, 4
  %v6468 = vshll.u32 %v6354, 16
  %v6470 = vrot.slane %v6468, 5
  %v6471 = vor.u32 %v6467, %v6470
  %v6472 = vrot.slane %v6471, 4
  %v6474 = vshll.u32 %v6370, 16
  %v6476 = vrot.slane %v6474, 5
  %v6477 = vsel %vm3025, %v6472, %v6476
  %v6479 = vshrl.u32 %v6355, 16
  %v6481 = vrot.slane %v6479, 4
  %v6482 = vshll.u32 %v6355, 16
  %v6484 = vrot.slane %v6482, 5
  %v6485 = vor.u32 %v6481, %v6484
  %v6486 = vrot.slane %v6485, 4
  %v6488 = vshll.u32 %v6371, 16
  %v6490 = vrot.slane %v6488, 5
  %v6491 = vsel %vm3025, %v6486, %v6490
  %v6493 = vshrl.u32 %v6356, 16
  %v6495 = vrot.slane %v6493, 4
  %v6496 = vshll.u32 %v6356, 16
  %v6498 = vrot.slane %v6496, 5
  %v6499 = vor.u32 %v6495, %v6498
  %v6500 = vrot.slane %v6499, 4
  %v6502 = vshll.u32 %v6372, 16
  %v6504 = vrot.slane %v6502, 5
  %v6505 = vsel %vm3025, %v6500, %v6504
  %v6507 = vshrl.u32 %v6357, 16
  %v6509 = vrot.slane %v6507, 4
  %v6510 = vshll.u32 %v6357, 16
  %v6512 = vrot.slane %v6510, 5
  %v6513 = vor.u32 %v6509, %v6512
  %v6514 = vrot.slane %v6513, 4
  %v6516 = vshll.u32 %v6373, 16
  %v6518 = vrot.slane %v6516, 5
  %v6519 = vsel %vm3025, %v6514, %v6518
  %v6521 = vshrl.u32 %v6358, 16
  %v6523 = vrot.slane %v6521, 4
  %v6524 = vshll.u32 %v6358, 16
  %v6526 = vrot.slane %v6524, 5
  %v6527 = vor.u32 %v6523, %v6526
  %v6528 = vrot.slane %v6527, 4
  %v6530 = vshll.u32 %v6374, 16
  %v6532 = vrot.slane %v6530, 5
  %v6533 = vsel %vm3025, %v6528, %v6532
  %v6535 = vshrl.u32 %v6359, 16
  %v6537 = vrot.slane %v6535, 4
  %v6538 = vshll.u32 %v6359, 16
  %v6540 = vrot.slane %v6538, 5
  %v6541 = vor.u32 %v6537, %v6540
  %v6542 = vrot.slane %v6541, 4
  %v6544 = vshll.u32 %v6375, 16
  %v6546 = vrot.slane %v6544, 5
  %v6547 = vsel %vm3025, %v6542, %v6546
  %v6549 = vshrl.u32 %v6360, 16
  %v6551 = vrot.slane %v6549, 4
  %v6552 = vshll.u32 %v6360, 16
  %v6554 = vrot.slane %v6552, 5
  %v6555 = vor.u32 %v6551, %v6554
  %v6556 = vrot.slane %v6555, 4
  %v6558 = vshll.u32 %v6376, 16
  %v6560 = vrot.slane %v6558, 5
  %v6561 = vsel %vm3025, %v6556, %v6560
  %v6563 = vshrl.u32 %v6361, 16
  %v6565 = vrot.slane %v6563, 4
  %v6566 = vshll.u32 %v6361, 16
  %v6568 = vrot.slane %v6566, 5
  %v6569 = vor.u32 %v6565, %v6568
  %v6570 = vrot.slane %v6569, 4
  %v6572 = vshll.u32 %v6377, 16
  %v6574 = vrot.slane %v6572, 5
  %v6575 = vsel %vm3025, %v6570, %v6574
  %v6577 = vshrl.u32 %v6362, 16
  %v6579 = vrot.slane %v6577, 4
  %v6580 = vshll.u32 %v6362, 16
  %v6582 = vrot.slane %v6580, 5
  %v6583 = vor.u32 %v6579, %v6582
  %v6584 = vrot.slane %v6583, 4
  %v6586 = vshll.u32 %v6378, 16
  %v6588 = vrot.slane %v6586, 5
  %v6589 = vsel %vm3025, %v6584, %v6588
  %v6591 = vshrl.u32 %v6363, 16
  %v6593 = vrot.slane %v6591, 4
  %v6594 = vshll.u32 %v6363, 16
  %v6596 = vrot.slane %v6594, 5
  %v6597 = vor.u32 %v6593, %v6596
  %v6598 = vrot.slane %v6597, 4
  %v6600 = vshll.u32 %v6379, 16
  %v6602 = vrot.slane %v6600, 5
  %v6603 = vsel %vm3025, %v6598, %v6602
  %v6604 = vld [vmem:[%s6347] sm:$0xe]
  %v6605 = vld [vmem:[%s6347 + $0x8] sm:$0xe]
  %v6606 = vld [vmem:[%s6347 + $0x10] sm:$0xe]
  %v6607 = vld [vmem:[%s6347 + $0x18] sm:$0xe]
  %v6608 = vld [vmem:[%s6347 + $0x20] sm:$0xe]
  %v6609 = vld [vmem:[%s6347 + $0x28] sm:$0xe]
  %v6610 = vld [vmem:[%s6347 + $0x30] sm:$0xe]
  %v6611 = vld [vmem:[%s6347 + $0x38] sm:$0xe]
  %v6612 = vld [vmem:[%s6347 + $0x50] sm:$0xe]
  %v6613 = vld [vmem:[%s6347 + $0x58] sm:$0xe]
  %v6614 = vld [vmem:[%s6347 + $0x60] sm:$0xe]
  %v6615 = vld [vmem:[%s6347 + $0x68] sm:$0xe]
  %v6616 = vld [vmem:[%s6347 + $0x70] sm:$0xe]
  %v6617 = vld [vmem:[%s6347 + $0x78] sm:$0xe]
  %v6618 = vld [vmem:[%s6347 + $0x80] sm:$0xe]
  %v6619 = vld [vmem:[%s6347 + $0x88] sm:$0xe]
  %v6652 = vrot.slane %v6604, 5
  %v6653 = vrot.slane %v6652, 4
  %v6654 = vrot.slane %v6364, 5
  %v6655 = vsel %vm5914, %v6653, %v6654
  %v6656 = vrot.slane %v6605, 5
  %v6657 = vrot.slane %v6656, 4
  %v6658 = vrot.slane %v6365, 5
  %v6659 = vsel %vm5914, %v6657, %v6658
  %v6660 = vrot.slane %v6606, 5
  %v6661 = vrot.slane %v6660, 4
  %v6662 = vrot.slane %v6366, 5
  %v6663 = vsel %vm5914, %v6661, %v6662
  %v6664 = vrot.slane %v6607, 5
  %v6665 = vrot.slane %v6664, 4
  %v6666 = vrot.slane %v6367, 5
  %v6667 = vsel %vm5914, %v6665, %v6666
  %v6668 = vrot.slane %v6608, 5
  %v6669 = vrot.slane %v6668, 4
  %v6670 = vrot.slane %v6368, 5
  %v6671 = vsel %vm5914, %v6669, %v6670
  %v6672 = vrot.slane %v6609, 5
  %v6673 = vrot.slane %v6672, 4
  %v6674 = vrot.slane %v6369, 5
  %v6675 = vsel %vm5914, %v6673, %v6674
  %v6676 = vrot.slane %v6610, 5
  %v6677 = vrot.slane %v6676, 4
  %v6678 = vrot.slane %v6370, 5
  %v6679 = vsel %vm5914, %v6677, %v6678
  %v6680 = vrot.slane %v6611, 5
  %v6681 = vrot.slane %v6680, 4
  %v6682 = vrot.slane %v6371, 5
  %v6683 = vsel %vm5914, %v6681, %v6682
  %v6684 = vrot.slane %v6612, 5
  %v6685 = vrot.slane %v6684, 4
  %v6686 = vrot.slane %v6372, 5
  %v6687 = vsel %vm5914, %v6685, %v6686
  %v6688 = vrot.slane %v6613, 5
  %v6689 = vrot.slane %v6688, 4
  %v6690 = vrot.slane %v6373, 5
  %v6691 = vsel %vm5914, %v6689, %v6690
  %v6692 = vrot.slane %v6614, 5
  %v6693 = vrot.slane %v6692, 4
  %v6694 = vrot.slane %v6374, 5
  %v6695 = vsel %vm5914, %v6693, %v6694
  %v6696 = vrot.slane %v6615, 5
  %v6697 = vrot.slane %v6696, 4
  %v6698 = vrot.slane %v6375, 5
  %v6699 = vsel %vm5914, %v6697, %v6698
  %v6700 = vrot.slane %v6616, 5
  %v6701 = vrot.slane %v6700, 4
  %v6702 = vrot.slane %v6376, 5
  %v6703 = vsel %vm5914, %v6701, %v6702
  %v6704 = vrot.slane %v6617, 5
  %v6705 = vrot.slane %v6704, 4
  %v6706 = vrot.slane %v6377, 5
  %v6707 = vsel %vm5914, %v6705, %v6706
  %v6708 = vrot.slane %v6618, 5
  %v6709 = vrot.slane %v6708, 4
  %v6710 = vrot.slane %v6378, 5
  %v6711 = vsel %vm5914, %v6709, %v6710
  %v6712 = vrot.slane %v6619, 5
  %v6713 = vrot.slane %v6712, 4
  %v6714 = vrot.slane %v6379, 5
  %v6715 = vsel %vm5914, %v6713, %v6714
  %v6732 = vunpack.c.l.b16 %v5608
  %v6733 = vunpack.c.l.b16 %v5609
  %v6734 = vunpack.c.l.b16 %v5610
  %v6735 = vunpack.c.l.b16 %v5611
  %v6736 = vunpack.c.l.b16 %v5612
  %v6737 = vunpack.c.l.b16 %v5613
  %v6738 = vunpack.c.l.b16 %v5614
  %v6739 = vunpack.c.l.b16 %v5615
  %v6740 = vunpack.c.l.b16 %v5616
  %v6741 = vunpack.c.l.b16 %v5617
  %v6742 = vunpack.c.l.b16 %v5618
  %v6743 = vunpack.c.l.b16 %v5619
  %v6744 = vunpack.c.l.b16 %v5620
  %v6745 = vunpack.c.l.b16 %v5621
  %v6746 = vunpack.c.l.b16 %v5622
  %v6747 = vunpack.c.l.b16 %v5623
  %v6748 = vpack.c.b16 %v6733, %v6732
  %v6749 = vpack.c.b16 %v6735, %v6734
  %v6750 = vpack.c.b16 %v6737, %v6736
  %v6751 = vpack.c.b16 %v6739, %v6738
  %v6752 = vpack.c.b16 %v6741, %v6740
  %v6753 = vpack.c.b16 %v6743, %v6742
  %v6754 = vpack.c.b16 %v6745, %v6744
  %v6755 = vpack.c.b16 %v6747, %v6746
  %v6756 = vunpack.c.l.b16 %v5653
  %v6757 = vunpack.c.l.b16 %v5667
  %v6758 = vunpack.c.l.b16 %v5681
  %v6759 = vunpack.c.l.b16 %v5695
  %v6760 = vunpack.c.l.b16 %v5709
  %v6761 = vunpack.c.l.b16 %v5723
  %v6762 = vunpack.c.l.b16 %v5737
  %v6763 = vunpack.c.l.b16 %v5751
  %v6764 = vunpack.c.l.b16 %v5765
  %v6765 = vunpack.c.l.b16 %v5779
  %v6766 = vunpack.c.l.b16 %v5793
  %v6767 = vunpack.c.l.b16 %v5807
  %v6768 = vunpack.c.l.b16 %v5821
  %v6769 = vunpack.c.l.b16 %v5835
  %v6770 = vunpack.c.l.b16 %v5849
  %v6771 = vunpack.c.l.b16 %v5863
  %v6772 = vpack.c.b16 %v6757, %v6756
  %v6773 = vpack.c.b16 %v6759, %v6758
  %v6774 = vpack.c.b16 %v6761, %v6760
  %v6775 = vpack.c.b16 %v6763, %v6762
  %v6776 = vpack.c.b16 %v6765, %v6764
  %v6777 = vpack.c.b16 %v6767, %v6766
  %v6778 = vpack.c.b16 %v6769, %v6768
  %v6779 = vpack.c.b16 %v6771, %v6770
  %6780 = vrot.lane.b32.xlu0 %v6772, 64
  %v6781 = vpop.permute.xlu0 %6780
  %6782 = vrot.lane.b32.xlu0 %v6773, 64
  %v6783 = vpop.permute.xlu0 %6782
  %6784 = vrot.lane.b32.xlu0 %v6774, 64
  %v6785 = vpop.permute.xlu0 %6784
  %6786 = vrot.lane.b32.xlu0 %v6775, 64
  %v6787 = vpop.permute.xlu0 %6786
  %6788 = vrot.lane.b32.xlu0 %v6776, 64
  %v6789 = vpop.permute.xlu0 %6788
  %6790 = vrot.lane.b32.xlu0 %v6777, 64
  %v6791 = vpop.permute.xlu0 %6790
  %6792 = vrot.lane.b32.xlu0 %v6778, 64
  %v6793 = vpop.permute.xlu0 %6792
  %6794 = vrot.lane.b32.xlu0 %v6779, 64
  %v6795 = vpop.permute.xlu0 %6794
  %v6796 = vunpack.c.l.b16 %v5918
  %v6797 = vunpack.c.l.b16 %v5922
  %v6798 = vunpack.c.l.b16 %v5926
  %v6799 = vunpack.c.l.b16 %v5930
  %v6800 = vunpack.c.l.b16 %v5934
  %v6801 = vunpack.c.l.b16 %v5938
  %v6802 = vunpack.c.l.b16 %v5942
  %v6803 = vunpack.c.l.b16 %v5946
  %v6804 = vunpack.c.l.b16 %v5950
  %v6805 = vunpack.c.l.b16 %v5954
  %v6806 = vunpack.c.l.b16 %v5958
  %v6807 = vunpack.c.l.b16 %v5962
  %v6808 = vunpack.c.l.b16 %v5966
  %v6809 = vunpack.c.l.b16 %v5970
  %v6810 = vunpack.c.l.b16 %v5974
  %v6811 = vunpack.c.l.b16 %v5978
  %v6812 = vpack.c.b16 %v6797, %v6796
  %v6813 = vpack.c.b16 %v6799, %v6798
  %v6814 = vpack.c.b16 %v6801, %v6800
  %v6815 = vpack.c.b16 %v6803, %v6802
  %v6816 = vpack.c.b16 %v6805, %v6804
  %v6817 = vpack.c.b16 %v6807, %v6806
  %v6818 = vpack.c.b16 %v6809, %v6808
  %v6819 = vpack.c.b16 %v6811, %v6810
  %v6836 = vunpack.c.l.b16 %v5979
  %v6837 = vunpack.c.l.b16 %v5980
  %v6838 = vunpack.c.l.b16 %v5981
  %v6839 = vunpack.c.l.b16 %v5982
  %v6840 = vunpack.c.l.b16 %v5983
  %v6841 = vunpack.c.l.b16 %v5984
  %v6842 = vunpack.c.l.b16 %v5985
  %v6843 = vunpack.c.l.b16 %v5986
  %v6844 = vunpack.c.l.b16 %v5987
  %v6845 = vunpack.c.l.b16 %v5988
  %v6846 = vunpack.c.l.b16 %v5989
  %v6847 = vunpack.c.l.b16 %v5990
  %v6848 = vunpack.c.l.b16 %v5991
  %v6849 = vunpack.c.l.b16 %v5992
  %v6850 = vunpack.c.l.b16 %v5993
  %v6851 = vunpack.c.l.b16 %v5994
  %v6852 = vpack.c.b16 %v6837, %v6836
  %v6853 = vpack.c.b16 %v6839, %v6838
  %v6854 = vpack.c.b16 %v6841, %v6840
  %v6855 = vpack.c.b16 %v6843, %v6842
  %v6856 = vpack.c.b16 %v6845, %v6844
  %v6857 = vpack.c.b16 %v6847, %v6846
  %v6858 = vpack.c.b16 %v6849, %v6848
  %v6859 = vpack.c.b16 %v6851, %v6850
  %6860 = vrot.lane.b32.xlu0 %v6852, 64
  %v6861 = vpop.permute.xlu0 %6860
  %6862 = vrot.lane.b32.xlu0 %v6853, 64
  %v6863 = vpop.permute.xlu0 %6862
  %6864 = vrot.lane.b32.xlu0 %v6854, 64
  %v6865 = vpop.permute.xlu0 %6864
  %6866 = vrot.lane.b32.xlu0 %v6855, 64
  %v6867 = vpop.permute.xlu0 %6866
  %6868 = vrot.lane.b32.xlu0 %v6856, 64
  %v6869 = vpop.permute.xlu0 %6868
  %6870 = vrot.lane.b32.xlu0 %v6857, 64
  %v6871 = vpop.permute.xlu0 %6870
  %6872 = vrot.lane.b32.xlu0 %v6858, 64
  %v6873 = vpop.permute.xlu0 %6872
  %6874 = vrot.lane.b32.xlu0 %v6859, 64
  %v6875 = vpop.permute.xlu0 %6874
  %v6876 = vunpack.c.l.b16 %v6024
  %v6877 = vunpack.c.l.b16 %v6038
  %v6878 = vunpack.c.l.b16 %v6052
  %v6879 = vunpack.c.l.b16 %v6066
  %v6880 = vunpack.c.l.b16 %v6080
  %v6881 = vunpack.c.l.b16 %v6094
  %v6882 = vunpack.c.l.b16 %v6108
  %v6883 = vunpack.c.l.b16 %v6122
  %v6884 = vunpack.c.l.b16 %v6136
  %v6885 = vunpack.c.l.b16 %v6150
  %v6886 = vunpack.c.l.b16 %v6164
  %v6887 = vunpack.c.l.b16 %v6178
  %v6888 = vunpack.c.l.b16 %v6192
  %v6889 = vunpack.c.l.b16 %v6206
  %v6890 = vunpack.c.l.b16 %v6220
  %v6891 = vunpack.c.l.b16 %v6234
  %v6892 = vpack.c.b16 %v6877, %v6876
  %v6893 = vpack.c.b16 %v6879, %v6878
  %v6894 = vpack.c.b16 %v6881, %v6880
  %v6895 = vpack.c.b16 %v6883, %v6882
  %v6896 = vpack.c.b16 %v6885, %v6884
  %v6897 = vpack.c.b16 %v6887, %v6886
  %v6898 = vpack.c.b16 %v6889, %v6888
  %v6899 = vpack.c.b16 %v6891, %v6890
  %v6900 = vunpack.c.l.b16 %v6286
  %v6901 = vunpack.c.l.b16 %v6290
  %v6902 = vunpack.c.l.b16 %v6294
  %v6903 = vunpack.c.l.b16 %v6298
  %v6904 = vunpack.c.l.b16 %v6302
  %v6905 = vunpack.c.l.b16 %v6306
  %v6906 = vunpack.c.l.b16 %v6310
  %v6907 = vunpack.c.l.b16 %v6314
  %v6908 = vunpack.c.l.b16 %v6318
  %v6909 = vunpack.c.l.b16 %v6322
  %v6910 = vunpack.c.l.b16 %v6326
  %v6911 = vunpack.c.l.b16 %v6330
  %v6912 = vunpack.c.l.b16 %v6334
  %v6913 = vunpack.c.l.b16 %v6338
  %v6914 = vunpack.c.l.b16 %v6342
  %v6915 = vunpack.c.l.b16 %v6346
  %v6916 = vpack.c.b16 %v6901, %v6900
  %v6917 = vpack.c.b16 %v6903, %v6902
  %v6918 = vpack.c.b16 %v6905, %v6904
  %v6919 = vpack.c.b16 %v6907, %v6906
  %v6920 = vpack.c.b16 %v6909, %v6908
  %v6921 = vpack.c.b16 %v6911, %v6910
  %v6922 = vpack.c.b16 %v6913, %v6912
  %v6923 = vpack.c.b16 %v6915, %v6914
  %6924 = vrot.lane.b32.xlu0 %v6916, 64
  %v6925 = vpop.permute.xlu0 %6924
  %6926 = vrot.lane.b32.xlu0 %v6917, 64
  %v6927 = vpop.permute.xlu0 %6926
  %6928 = vrot.lane.b32.xlu0 %v6918, 64
  %v6929 = vpop.permute.xlu0 %6928
  %6930 = vrot.lane.b32.xlu0 %v6919, 64
  %v6931 = vpop.permute.xlu0 %6930
  %6932 = vrot.lane.b32.xlu0 %v6920, 64
  %v6933 = vpop.permute.xlu0 %6932
  %6934 = vrot.lane.b32.xlu0 %v6921, 64
  %v6935 = vpop.permute.xlu0 %6934
  %6936 = vrot.lane.b32.xlu0 %v6922, 64
  %v6937 = vpop.permute.xlu0 %6936
  %6938 = vrot.lane.b32.xlu0 %v6923, 64
  %v6939 = vpop.permute.xlu0 %6938
  %v6956 = vunpack.c.l.b16 %v6348
  %v6957 = vunpack.c.l.b16 %v6349
  %v6958 = vunpack.c.l.b16 %v6350
  %v6959 = vunpack.c.l.b16 %v6351
  %v6960 = vunpack.c.l.b16 %v6352
  %v6961 = vunpack.c.l.b16 %v6353
  %v6962 = vunpack.c.l.b16 %v6354
  %v6963 = vunpack.c.l.b16 %v6355
  %v6964 = vunpack.c.l.b16 %v6356
  %v6965 = vunpack.c.l.b16 %v6357
  %v6966 = vunpack.c.l.b16 %v6358
  %v6967 = vunpack.c.l.b16 %v6359
  %v6968 = vunpack.c.l.b16 %v6360
  %v6969 = vunpack.c.l.b16 %v6361
  %v6970 = vunpack.c.l.b16 %v6362
  %v6971 = vunpack.c.l.b16 %v6363
  %v6972 = vpack.c.b16 %v6957, %v6956
  %v6973 = vpack.c.b16 %v6959, %v6958
  %v6974 = vpack.c.b16 %v6961, %v6960
  %v6975 = vpack.c.b16 %v6963, %v6962
  %v6976 = vpack.c.b16 %v6965, %v6964
  %v6977 = vpack.c.b16 %v6967, %v6966
  %v6978 = vpack.c.b16 %v6969, %v6968
  %v6979 = vpack.c.b16 %v6971, %v6970
  %v6980 = vunpack.c.l.b16 %v6393
  %v6981 = vunpack.c.l.b16 %v6407
  %v6982 = vunpack.c.l.b16 %v6421
  %v6983 = vunpack.c.l.b16 %v6435
  %v6984 = vunpack.c.l.b16 %v6449
  %v6985 = vunpack.c.l.b16 %v6463
  %v6986 = vunpack.c.l.b16 %v6477
  %v6987 = vunpack.c.l.b16 %v6491
  %v6988 = vunpack.c.l.b16 %v6505
  %v6989 = vunpack.c.l.b16 %v6519
  %v6990 = vunpack.c.l.b16 %v6533
  %v6991 = vunpack.c.l.b16 %v6547
  %v6992 = vunpack.c.l.b16 %v6561
  %v6993 = vunpack.c.l.b16 %v6575
  %v6994 = vunpack.c.l.b16 %v6589
  %v6995 = vunpack.c.l.b16 %v6603
  %v6996 = vpack.c.b16 %v6981, %v6980
  %v6997 = vpack.c.b16 %v6983, %v6982
  %v6998 = vpack.c.b16 %v6985, %v6984
  %v6999 = vpack.c.b16 %v6987, %v6986
  %v7000 = vpack.c.b16 %v6989, %v6988
  %v7001 = vpack.c.b16 %v6991, %v6990
  %v7002 = vpack.c.b16 %v6993, %v6992
  %v7003 = vpack.c.b16 %v6995, %v6994
  %7004 = vrot.lane.b32.xlu0 %v6996, 64
  %v7005 = vpop.permute.xlu0 %7004
  %7006 = vrot.lane.b32.xlu0 %v6997, 64
  %v7007 = vpop.permute.xlu0 %7006
  %7008 = vrot.lane.b32.xlu0 %v6998, 64
  %v7009 = vpop.permute.xlu0 %7008
  %7010 = vrot.lane.b32.xlu0 %v6999, 64
  %v7011 = vpop.permute.xlu0 %7010
  %7012 = vrot.lane.b32.xlu0 %v7000, 64
  %v7013 = vpop.permute.xlu0 %7012
  %7014 = vrot.lane.b32.xlu0 %v7001, 64
  %v7015 = vpop.permute.xlu0 %7014
  %7016 = vrot.lane.b32.xlu0 %v7002, 64
  %v7017 = vpop.permute.xlu0 %7016
  %7018 = vrot.lane.b32.xlu0 %v7003, 64
  %v7019 = vpop.permute.xlu0 %7018
  %v7020 = vunpack.c.l.b16 %v6655
  %v7021 = vunpack.c.l.b16 %v6659
  %v7022 = vunpack.c.l.b16 %v6663
  %v7023 = vunpack.c.l.b16 %v6667
  %v7024 = vunpack.c.l.b16 %v6671
  %v7025 = vunpack.c.l.b16 %v6675
  %v7026 = vunpack.c.l.b16 %v6679
  %v7027 = vunpack.c.l.b16 %v6683
  %v7028 = vunpack.c.l.b16 %v6687
  %v7029 = vunpack.c.l.b16 %v6691
  %v7030 = vunpack.c.l.b16 %v6695
  %v7031 = vunpack.c.l.b16 %v6699
  %v7032 = vunpack.c.l.b16 %v6703
  %v7033 = vunpack.c.l.b16 %v6707
  %v7034 = vunpack.c.l.b16 %v6711
  %v7035 = vunpack.c.l.b16 %v6715
  %v7036 = vpack.c.b16 %v7021, %v7020
  %v7037 = vpack.c.b16 %v7023, %v7022
  %v7038 = vpack.c.b16 %v7025, %v7024
  %v7039 = vpack.c.b16 %v7027, %v7026
  %v7040 = vpack.c.b16 %v7029, %v7028
  %v7041 = vpack.c.b16 %v7031, %v7030
  %v7042 = vpack.c.b16 %v7033, %v7032
  %v7043 = vpack.c.b16 %v7035, %v7034
  %vm7044 = vcmask 523264
  %v7047 = vsel %vm7044, %v6748, %v6781
  %v7051 = vsel %vm7044, %v6749, %v6783
  %v7055 = vsel %vm7044, %v6750, %v6785
  %v7059 = vsel %vm7044, %v6751, %v6787
  %v7063 = vsel %vm7044, %v6752, %v6789
  %v7067 = vsel %vm7044, %v6753, %v6791
  %v7071 = vsel %vm7044, %v6754, %v6793
  %v7075 = vsel %vm7044, %v6755, %v6795
  %v7079 = vsel %vm7044, %v6812, %v6861
  %v7083 = vsel %vm7044, %v6813, %v6863
  %v7087 = vsel %vm7044, %v6814, %v6865
  %v7091 = vsel %vm7044, %v6815, %v6867
  %v7095 = vsel %vm7044, %v6816, %v6869
  %v7099 = vsel %vm7044, %v6817, %v6871
  %v7103 = vsel %vm7044, %v6818, %v6873
  %v7107 = vsel %vm7044, %v6819, %v6875
  %v7111 = vsel %vm7044, %v6892, %v6925
  %v7115 = vsel %vm7044, %v6893, %v6927
  %v7119 = vsel %vm7044, %v6894, %v6929
  %v7123 = vsel %vm7044, %v6895, %v6931
  %v7127 = vsel %vm7044, %v6896, %v6933
  %v7131 = vsel %vm7044, %v6897, %v6935
  %v7135 = vsel %vm7044, %v6898, %v6937
  %v7139 = vsel %vm7044, %v6899, %v6939
  %v7143 = vsel %vm7044, %v6972, %v7005
  %v7147 = vsel %vm7044, %v6973, %v7007
  %v7151 = vsel %vm7044, %v6974, %v7009
  %v7155 = vsel %vm7044, %v6975, %v7011
  %v7159 = vsel %vm7044, %v6976, %v7013
  %v7163 = vsel %vm7044, %v6977, %v7015
  %v7167 = vsel %vm7044, %v6978, %v7017
  %v7171 = vsel %vm7044, %v6979, %v7019
  %v7173 = vld [vmem:[%s7] sm:$0xf]
  %v7174 = vld [vmem:[%s7 + $0x4] sm:$0xf]
  %v7175 = vld [vmem:[%s7 + $0x8] sm:$0xf]
  %v7176 = vld [vmem:[%s7 + $0xc] sm:$0xf]
  %v7177 = vld [vmem:[%s7 + $0x10] sm:$0xf]
  %v7178 = vld [vmem:[%s7 + $0x14] sm:$0xf]
  %v7179 = vld [vmem:[%s7 + $0x18] sm:$0xf]
  %v7180 = vld [vmem:[%s7 + $0x1c] sm:$0xf]
  %v7181 = vld [vmem:[%s7 + $0x20] sm:$0xf]
  %v7182 = vld [vmem:[%s7 + $0x24] sm:$0xf]
  %v7183 = vld [vmem:[%s7 + $0x28] sm:$0xf]
  %v7184 = vld [vmem:[%s7 + $0x2c] sm:$0xf]
  %v7185 = vld [vmem:[%s7 + $0x30] sm:$0xf]
  %v7186 = vld [vmem:[%s7 + $0x34] sm:$0xf]
  %v7187 = vld [vmem:[%s7 + $0x38] sm:$0xf]
  %v7188 = vld [vmem:[%s7 + $0x3c] sm:$0xf]
  %v7189 = vld [vmem:[%s7 + $0x40] sm:$0xf]
  %v7190 = vld [vmem:[%s7 + $0x44] sm:$0xf]
  %v7191 = vld [vmem:[%s7 + $0x48] sm:$0xf]
  %v7192 = vld [vmem:[%s7 + $0x4c] sm:$0xf]
  %v7193 = vld [vmem:[%s7 + $0x50] sm:$0xf]
  %v7194 = vld [vmem:[%s7 + $0x54] sm:$0xf]
  %v7195 = vld [vmem:[%s7 + $0x58] sm:$0xf]
  %v7196 = vld [vmem:[%s7 + $0x5c] sm:$0xf]
  %v7197 = vld [vmem:[%s7 + $0x60] sm:$0xf]
  %v7198 = vld [vmem:[%s7 + $0x64] sm:$0xf]
  %v7199 = vld [vmem:[%s7 + $0x68] sm:$0xf]
  %v7200 = vld [vmem:[%s7 + $0x6c] sm:$0xf]
  %v7201 = vld [vmem:[%s7 + $0x70] sm:$0xf]
  %v7202 = vld [vmem:[%s7 + $0x74] sm:$0xf]
  %v7203 = vld [vmem:[%s7 + $0x78] sm:$0xf]
  %v7204 = vld [vmem:[%s7 + $0x7c] sm:$0xf]
  %v7205 = vld [vmem:[%s7 + $0x80] sm:$0xf]
  %v7206 = vld [vmem:[%s7 + $0x84] sm:$0xf]
  %v7207 = vld [vmem:[%s7 + $0x88] sm:$0xf]
  %v7208 = vld [vmem:[%s7 + $0x8c] sm:$0xf]
  %v7209 = vld [vmem:[%s7 + $0x90] sm:$0xf]
  %v7210 = vld [vmem:[%s7 + $0x94] sm:$0xf]
  %v7211 = vld [vmem:[%s7 + $0x98] sm:$0xf]
  %v7212 = vld [vmem:[%s7 + $0x9c] sm:$0xf]
  %v7213 = vld [vmem:[%s7 + $0xa0] sm:$0xf]
  %v7214 = vld [vmem:[%s7 + $0xa4] sm:$0xf]
  %v7215 = vld [vmem:[%s7 + $0xa8] sm:$0xf]
  %v7216 = vld [vmem:[%s7 + $0xac] sm:$0xf]
  %v7217 = vld [vmem:[%s7 + $0xb0] sm:$0xf]
  %v7218 = vld [vmem:[%s7 + $0xb4] sm:$0xf]
  %v7219 = vld [vmem:[%s7 + $0xb8] sm:$0xf]
  %v7220 = vld [vmem:[%s7 + $0xbc] sm:$0xf]
  %v7221 = vld [vmem:[%s7 + $0xc0] sm:$0xf]
  %v7222 = vld [vmem:[%s7 + $0xc4] sm:$0xf]
  %v7223 = vld [vmem:[%s7 + $0xc8] sm:$0xf]
  %v7224 = vld [vmem:[%s7 + $0xcc] sm:$0xf]
  %v7225 = vld [vmem:[%s7 + $0xd0] sm:$0xf]
  %v7226 = vld [vmem:[%s7 + $0xd4] sm:$0xf]
  %v7227 = vld [vmem:[%s7 + $0xd8] sm:$0xf]
  %v7228 = vld [vmem:[%s7 + $0xdc] sm:$0xf]
  %v7229 = vld [vmem:[%s7 + $0xe0] sm:$0xf]
  %v7230 = vld [vmem:[%s7 + $0xe4] sm:$0xf]
  %v7231 = vld [vmem:[%s7 + $0xe8] sm:$0xf]
  %v7232 = vld [vmem:[%s7 + $0xec] sm:$0xf]
  %v7233 = vld [vmem:[%s7 + $0xf0] sm:$0xf]
  %v7234 = vld [vmem:[%s7 + $0xf4] sm:$0xf]
  %v7235 = vld [vmem:[%s7 + $0xf8] sm:$0xf]
  %v7236 = vld [vmem:[%s7 + $0xfc] sm:$0xf]
  %v7237 = vld [vmem:[%s7 + $0x100] sm:$0xf]
  %v7238 = vld [vmem:[%s7 + $0x104] sm:$0xf]
  %v7239 = vld [vmem:[%s7 + $0x108] sm:$0xf]
  %v7240 = vld [vmem:[%s7 + $0x10c] sm:$0xf]
  %v7241 = vld [vmem:[%s7 + $0x110] sm:$0xf]
  %v7242 = vld [vmem:[%s7 + $0x114] sm:$0xf]
  %v7243 = vld [vmem:[%s7 + $0x118] sm:$0xf]
  %v7244 = vld [vmem:[%s7 + $0x11c] sm:$0xf]
  %v7317 = vunpack.c.l.b16 %v7173
  %v7318 = vunpack.c.l.b16 %v7174
  %v7319 = vunpack.c.l.b16 %v7175
  %v7320 = vunpack.c.l.b16 %v7176
  %v7321 = vunpack.c.l.b16 %v7177
  %v7322 = vunpack.c.l.b16 %v7178
  %v7323 = vunpack.c.l.b16 %v7179
  %v7324 = vunpack.c.l.b16 %v7180
  %v7325 = vunpack.c.l.b16 %v7181
  %v7326 = vunpack.c.l.b16 %v7182
  %v7327 = vunpack.c.l.b16 %v7183
  %v7328 = vunpack.c.l.b16 %v7184
  %v7329 = vunpack.c.l.b16 %v7185
  %v7330 = vunpack.c.l.b16 %v7186
  %v7331 = vunpack.c.l.b16 %v7187
  %v7332 = vunpack.c.l.b16 %v7188
  %v7333 = vunpack.c.l.b16 %v7189
  %v7334 = vunpack.c.l.b16 %v7190
  %v7335 = vunpack.c.l.b16 %v7191
  %v7336 = vunpack.c.l.b16 %v7192
  %v7337 = vunpack.c.l.b16 %v7193
  %v7338 = vunpack.c.l.b16 %v7194
  %v7339 = vunpack.c.l.b16 %v7195
  %v7340 = vunpack.c.l.b16 %v7196
  %v7341 = vunpack.c.l.b16 %v7197
  %v7342 = vunpack.c.l.b16 %v7198
  %v7343 = vunpack.c.l.b16 %v7199
  %v7344 = vunpack.c.l.b16 %v7200
  %v7345 = vunpack.c.l.b16 %v7201
  %v7346 = vunpack.c.l.b16 %v7202
  %v7347 = vunpack.c.l.b16 %v7203
  %v7348 = vunpack.c.l.b16 %v7204
  %v7349 = vunpack.c.l.b16 %v7205
  %v7350 = vunpack.c.l.b16 %v7206
  %v7351 = vunpack.c.l.b16 %v7207
  %v7352 = vunpack.c.l.b16 %v7208
  %v7353 = vunpack.c.l.b16 %v7209
  %v7354 = vunpack.c.l.b16 %v7210
  %v7355 = vunpack.c.l.b16 %v7211
  %v7356 = vunpack.c.l.b16 %v7212
  %v7357 = vunpack.c.l.b16 %v7213
  %v7358 = vunpack.c.l.b16 %v7214
  %v7359 = vunpack.c.l.b16 %v7215
  %v7360 = vunpack.c.l.b16 %v7216
  %v7361 = vunpack.c.l.b16 %v7217
  %v7362 = vunpack.c.l.b16 %v7218
  %v7363 = vunpack.c.l.b16 %v7219
  %v7364 = vunpack.c.l.b16 %v7220
  %v7365 = vunpack.c.l.b16 %v7221
  %v7366 = vunpack.c.l.b16 %v7222
  %v7367 = vunpack.c.l.b16 %v7223
  %v7368 = vunpack.c.l.b16 %v7224
  %v7369 = vunpack.c.l.b16 %v7225
  %v7370 = vunpack.c.l.b16 %v7226
  %v7371 = vunpack.c.l.b16 %v7227
  %v7372 = vunpack.c.l.b16 %v7228
  %v7373 = vunpack.c.l.b16 %v7229
  %v7374 = vunpack.c.l.b16 %v7230
  %v7375 = vunpack.c.l.b16 %v7231
  %v7376 = vunpack.c.l.b16 %v7232
  %v7377 = vunpack.c.l.b16 %v7233
  %v7378 = vunpack.c.l.b16 %v7234
  %v7379 = vunpack.c.l.b16 %v7235
  %v7380 = vunpack.c.l.b16 %v7236
  %v7381 = vunpack.c.l.b16 %v7237
  %v7382 = vunpack.c.l.b16 %v7238
  %v7383 = vunpack.c.l.b16 %v7239
  %v7384 = vunpack.c.l.b16 %v7240
  %v7385 = vunpack.c.l.b16 %v7241
  %v7386 = vunpack.c.l.b16 %v7242
  %v7387 = vunpack.c.l.b16 %v7243
  %v7388 = vunpack.c.l.b16 %v7244
  %v7389 = vpack.c.b16 %v7318, %v7317
  %v7390 = vpack.c.b16 %v7320, %v7319
  %v7391 = vpack.c.b16 %v7322, %v7321
  %v7392 = vpack.c.b16 %v7324, %v7323
  %v7393 = vpack.c.b16 %v7326, %v7325
  %v7394 = vpack.c.b16 %v7328, %v7327
  %v7395 = vpack.c.b16 %v7330, %v7329
  %v7396 = vpack.c.b16 %v7332, %v7331
  %v7397 = vpack.c.b16 %v7334, %v7333
  %v7398 = vpack.c.b16 %v7336, %v7335
  %v7399 = vpack.c.b16 %v7338, %v7337
  %v7400 = vpack.c.b16 %v7340, %v7339
  %v7401 = vpack.c.b16 %v7342, %v7341
  %v7402 = vpack.c.b16 %v7344, %v7343
  %v7403 = vpack.c.b16 %v7346, %v7345
  %v7404 = vpack.c.b16 %v7348, %v7347
  %v7405 = vpack.c.b16 %v7350, %v7349
  %v7406 = vpack.c.b16 %v7352, %v7351
  %v7407 = vpack.c.b16 %v7354, %v7353
  %v7408 = vpack.c.b16 %v7356, %v7355
  %v7409 = vpack.c.b16 %v7358, %v7357
  %v7410 = vpack.c.b16 %v7360, %v7359
  %v7411 = vpack.c.b16 %v7362, %v7361
  %v7412 = vpack.c.b16 %v7364, %v7363
  %v7413 = vpack.c.b16 %v7366, %v7365
  %v7414 = vpack.c.b16 %v7368, %v7367
  %v7415 = vpack.c.b16 %v7370, %v7369
  %v7416 = vpack.c.b16 %v7372, %v7371
  %v7417 = vpack.c.b16 %v7374, %v7373
  %v7418 = vpack.c.b16 %v7376, %v7375
  %v7419 = vpack.c.b16 %v7378, %v7377
  %v7420 = vpack.c.b16 %v7380, %v7379
  %v7421 = vpack.c.b16 %v7382, %v7381
  %v7422 = vpack.c.b16 %v7384, %v7383
  %v7423 = vpack.c.b16 %v7386, %v7385
  %v7424 = vpack.c.b16 %v7388, %v7387
  %v7462 = vsel %vm7044, %v7036, 0
  %v7465 = vsel %vm7044, %v7037, 0
  %v7468 = vsel %vm7044, %v7038, 0
  %v7471 = vsel %vm7044, %v7039, 0
  %v7474 = vsel %vm7044, %v7040, 0
  %v7477 = vsel %vm7044, %v7041, 0
  %v7480 = vsel %vm7044, %v7042, 0
  %v7483 = vsel %vm7044, %v7043, 0
  %7485 = vmatprep.subr.bf16.mxu0 0
  %7486 = vmatpush1.bf16.msra.mxu0 %v7396
  %7487 = vmatprep.subr.bf16.mxu0 0
  %7488 = vmatpush1.bf16.msra.mxu0 %v7395
  %7489 = vmatprep.subr.bf16.mxu0 0
  %7490 = vmatpush1.bf16.msra.mxu0 %v7394
  %7491 = vmatprep.subr.bf16.mxu0 0
  %7492 = vmatpush1.bf16.msra.mxu0 %v7393
  %7493 = vmatprep.subr.bf16.mxu0 0
  %7494 = vmatpush1.bf16.msra.mxu0 %v7392
  %7495 = vmatprep.subr.bf16.mxu0 0
  %7496 = vmatpush1.bf16.msra.mxu0 %v7391
  %7497 = vmatprep.subr.bf16.mxu0 0
  %7498 = vmatpush1.bf16.msra.mxu0 %v7390
  %7499 = vmatprep.subr.bf16.mxu0 0
  %7500 = vmatpush1.bf16.msra.mxu0 %v7389
  %7501 = vmatprep.subr.bf16.mxu0 0
  %7502 = vmatpush2.bf16.msra.mxu0 %v7404
  %7503 = vmatprep.subr.bf16.mxu0 0
  %7504 = vmatpush2.bf16.msra.mxu0 %v7403
  %7505 = vmatprep.subr.bf16.mxu0 0
  %7506 = vmatpush2.bf16.msra.mxu0 %v7402
  %7507 = vmatprep.subr.bf16.mxu0 0
  %7508 = vmatpush2.bf16.msra.mxu0 %v7401
  %7509 = vmatprep.subr.bf16.mxu0 0
  %7510 = vmatpush2.bf16.msra.mxu0 %v7400
  %7511 = vmatprep.subr.bf16.mxu0 0
  %7512 = vmatpush2.bf16.msra.mxu0 %v7399
  %7513 = vmatprep.subr.bf16.mxu0 0
  %7514 = vmatpush2.bf16.msra.mxu0 %v7398
  %7515 = vmatprep.subr.bf16.mxu0 0
  %7516 = vmatpush2.bf16.msra.mxu0 %v7397
  %7517 = vmatprep.mubr.bf16.mxu0 %v7079
  %7518 = vmatmul.mubr.bf16.gmra.mxu0 %v7047
  %v7519 = vpop.f32.mrf.mxu0
  %v7520 = vadd.f32 0.0, %v7519
  %v7521 = vpop.f32.mrf.mxu0
  %v7522 = vpop.f32.mrf.mxu0
  %v7523 = vadd.f32 0.0, %v7522
  %v7524 = vpop.f32.mrf.mxu0
  %7525 = vmatprep.mubr.bf16.mxu0 %v7083
  %7526 = vmatmul.mubr.bf16.gmra.mxu0 %v7051
  %v7527 = vpop.f32.mrf.mxu0
  %v7528 = vadd.f32 0.0, %v7527
  %v7529 = vpop.f32.mrf.mxu0
  %v7530 = vpop.f32.mrf.mxu0
  %v7531 = vadd.f32 0.0, %v7530
  %v7532 = vpop.f32.mrf.mxu0
  %7533 = vmatprep.mubr.bf16.mxu0 %v7087
  %7534 = vmatmul.mubr.bf16.gmra.mxu0 %v7055
  %v7535 = vpop.f32.mrf.mxu0
  %v7536 = vadd.f32 0.0, %v7535
  %v7537 = vpop.f32.mrf.mxu0
  %v7538 = vpop.f32.mrf.mxu0
  %v7539 = vadd.f32 0.0, %v7538
  %v7540 = vpop.f32.mrf.mxu0
  %7541 = vmatprep.mubr.bf16.mxu0 %v7091
  %7542 = vmatmul.mubr.bf16.gmra.mxu0 %v7059
  %v7543 = vpop.f32.mrf.mxu0
  %v7544 = vadd.f32 0.0, %v7543
  %v7545 = vpop.f32.mrf.mxu0
  %v7546 = vpop.f32.mrf.mxu0
  %v7547 = vadd.f32 0.0, %v7546
  %v7548 = vpop.f32.mrf.mxu0
  %7549 = vmatprep.mubr.bf16.mxu0 %v7095
  %7550 = vmatmul.mubr.bf16.gmra.mxu0 %v7063
  %v7551 = vpop.f32.mrf.mxu0
  %v7552 = vadd.f32 0.0, %v7551
  %v7553 = vpop.f32.mrf.mxu0
  %v7554 = vpop.f32.mrf.mxu0
  %v7555 = vadd.f32 0.0, %v7554
  %v7556 = vpop.f32.mrf.mxu0
  %7557 = vmatprep.mubr.bf16.mxu0 %v7099
  %7558 = vmatmul.mubr.bf16.gmra.mxu0 %v7067
  %v7559 = vpop.f32.mrf.mxu0
  %v7560 = vadd.f32 0.0, %v7559
  %v7561 = vpop.f32.mrf.mxu0
  %v7562 = vpop.f32.mrf.mxu0
  %v7563 = vadd.f32 0.0, %v7562
  %v7564 = vpop.f32.mrf.mxu0
  %7565 = vmatprep.mubr.bf16.mxu0 %v7103
  %7566 = vmatmul.mubr.bf16.gmra.mxu0 %v7071
  %v7567 = vpop.f32.mrf.mxu0
  %v7568 = vadd.f32 0.0, %v7567
  %v7569 = vpop.f32.mrf.mxu0
  %v7570 = vpop.f32.mrf.mxu0
  %v7571 = vadd.f32 0.0, %v7570
  %v7572 = vpop.f32.mrf.mxu0
  %7573 = vmatprep.mubr.bf16.mxu0 %v7107
  %7574 = vmatmul.mubr.bf16.gmra.mxu0 %v7075
  %v7575 = vpop.f32.mrf.mxu0
  %v7576 = vadd.f32 0.0, %v7575
  %v7577 = vpop.f32.mrf.mxu0
  %v7578 = vpop.f32.mrf.mxu0
  %v7579 = vadd.f32 0.0, %v7578
  %v7580 = vpop.f32.mrf.mxu0
  %7581 = vdwg.mxu0
  %7582 = vmatprep.subr.bf16.mxu0 0
  %7583 = vmatpush1.bf16.msra.mxu0 %v7412
  %7584 = vmatprep.subr.bf16.mxu0 0
  %7585 = vmatpush1.bf16.msra.mxu0 %v7411
  %7586 = vmatprep.subr.bf16.mxu0 0
  %7587 = vmatpush1.bf16.msra.mxu0 %v7410
  %7588 = vmatprep.subr.bf16.mxu0 0
  %7589 = vmatpush1.bf16.msra.mxu0 %v7409
  %7590 = vmatprep.subr.bf16.mxu0 0
  %7591 = vmatpush1.bf16.msra.mxu0 %v7408
  %7592 = vmatprep.subr.bf16.mxu0 0
  %7593 = vmatpush1.bf16.msra.mxu0 %v7407
  %7594 = vmatprep.subr.bf16.mxu0 0
  %7595 = vmatpush1.bf16.msra.mxu0 %v7406
  %7596 = vmatprep.subr.bf16.mxu0 0
  %7597 = vmatpush1.bf16.msra.mxu0 %v7405
  %7598 = vmatprep.subr.bf16.mxu0 0
  %7599 = vmatpush2.bf16.msra.mxu0 %v7420
  %7600 = vmatprep.subr.bf16.mxu0 0
  %7601 = vmatpush2.bf16.msra.mxu0 %v7419
  %7602 = vmatprep.subr.bf16.mxu0 0
  %7603 = vmatpush2.bf16.msra.mxu0 %v7418
  %7604 = vmatprep.subr.bf16.mxu0 0
  %7605 = vmatpush2.bf16.msra.mxu0 %v7417
  %7606 = vmatprep.subr.bf16.mxu0 0
  %7607 = vmatpush2.bf16.msra.mxu0 %v7416
  %7608 = vmatprep.subr.bf16.mxu0 0
  %7609 = vmatpush2.bf16.msra.mxu0 %v7415
  %7610 = vmatprep.subr.bf16.mxu0 0
  %7611 = vmatpush2.bf16.msra.mxu0 %v7414
  %7612 = vmatprep.subr.bf16.mxu0 0
  %7613 = vmatpush2.bf16.msra.mxu0 %v7413
  %7614 = vmatprep.mubr.bf16.mxu0 %v7143
  %7615 = vmatmul.mubr.bf16.gmra.mxu0 %v7111
  %v7616 = vpop.f32.mrf.mxu0
  %v7617 = vadd.f32 %v7520, %v7616
  %v7618 = vpop.f32.mrf.mxu0
  %v7619 = vpop.f32.mrf.mxu0
  %v7620 = vadd.f32 %v7523, %v7619
  %v7621 = vpop.f32.mrf.mxu0
  %7622 = vmatprep.mubr.bf16.mxu0 %v7147
  %7623 = vmatmul.mubr.bf16.gmra.mxu0 %v7115
  %v7624 = vpop.f32.mrf.mxu0
  %v7625 = vadd.f32 %v7528, %v7624
  %v7626 = vpop.f32.mrf.mxu0
  %v7627 = vpop.f32.mrf.mxu0
  %v7628 = vadd.f32 %v7531, %v7627
  %v7629 = vpop.f32.mrf.mxu0
  %7630 = vmatprep.mubr.bf16.mxu0 %v7151
  %7631 = vmatmul.mubr.bf16.gmra.mxu0 %v7119
  %v7632 = vpop.f32.mrf.mxu0
  %v7633 = vadd.f32 %v7536, %v7632
  %v7634 = vpop.f32.mrf.mxu0
  %v7635 = vpop.f32.mrf.mxu0
  %v7636 = vadd.f32 %v7539, %v7635
  %v7637 = vpop.f32.mrf.mxu0
  %7638 = vmatprep.mubr.bf16.mxu0 %v7155
  %7639 = vmatmul.mubr.bf16.gmra.mxu0 %v7123
  %v7640 = vpop.f32.mrf.mxu0
  %v7641 = vadd.f32 %v7544, %v7640
  %v7642 = vpop.f32.mrf.mxu0
  %v7643 = vpop.f32.mrf.mxu0
  %v7644 = vadd.f32 %v7547, %v7643
  %v7645 = vpop.f32.mrf.mxu0
  %7646 = vmatprep.mubr.bf16.mxu0 %v7159
  %7647 = vmatmul.mubr.bf16.gmra.mxu0 %v7127
  %v7648 = vpop.f32.mrf.mxu0
  %v7649 = vadd.f32 %v7552, %v7648
  %v7650 = vpop.f32.mrf.mxu0
  %v7651 = vpop.f32.mrf.mxu0
  %v7652 = vadd.f32 %v7555, %v7651
  %v7653 = vpop.f32.mrf.mxu0
  %7654 = vmatprep.mubr.bf16.mxu0 %v7163
  %7655 = vmatmul.mubr.bf16.gmra.mxu0 %v7131
  %v7656 = vpop.f32.mrf.mxu0
  %v7657 = vadd.f32 %v7560, %v7656
  %v7658 = vpop.f32.mrf.mxu0
  %v7659 = vpop.f32.mrf.mxu0
  %v7660 = vadd.f32 %v7563, %v7659
  %v7661 = vpop.f32.mrf.mxu0
  %7662 = vmatprep.mubr.bf16.mxu0 %v7167
  %7663 = vmatmul.mubr.bf16.gmra.mxu0 %v7135
  %v7664 = vpop.f32.mrf.mxu0
  %v7665 = vadd.f32 %v7568, %v7664
  %v7666 = vpop.f32.mrf.mxu0
  %v7667 = vpop.f32.mrf.mxu0
  %v7668 = vadd.f32 %v7571, %v7667
  %v7669 = vpop.f32.mrf.mxu0
  %7670 = vmatprep.mubr.bf16.mxu0 %v7171
  %7671 = vmatmul.mubr.bf16.gmra.mxu0 %v7139
  %v7672 = vpop.f32.mrf.mxu0
  %v7673 = vadd.f32 %v7576, %v7672
  %v7674 = vpop.f32.mrf.mxu0
  %v7675 = vpop.f32.mrf.mxu0
  %v7676 = vadd.f32 %v7579, %v7675
  %v7677 = vpop.f32.mrf.mxu0
  %7678 = vdwg.mxu0
  %7679 = vmatprep.subr.bf16.mxu0 0
  %7680 = vmatpush1.bf16.msra.mxu0 0
  %7681 = vmatprep.subr.bf16.mxu0 0
  %7682 = vmatpush1.bf16.msra.mxu0 0
  %7683 = vmatprep.subr.bf16.mxu0 0
  %7684 = vmatpush1.bf16.msra.mxu0 0
  %7685 = vmatprep.subr.bf16.mxu0 0
  %7686 = vmatpush1.bf16.msra.mxu0 0
  %7687 = vmatprep.subr.bf16.mxu0 0
  %7688 = vmatpush1.bf16.msra.mxu0 %v7424
  %7689 = vmatprep.subr.bf16.mxu0 0
  %7690 = vmatpush1.bf16.msra.mxu0 %v7423
  %7691 = vmatprep.subr.bf16.mxu0 0
  %7692 = vmatpush1.bf16.msra.mxu0 %v7422
  %7693 = vmatprep.subr.bf16.mxu0 0
  %7694 = vmatpush1.bf16.msra.mxu0 %v7421
  %7695 = vmatprep.subr.bf16.mxu0 0
  %7696 = vmatpush2.bf16.msra.mxu0 0
  %7697 = vmatprep.subr.bf16.mxu0 0
  %7698 = vmatpush2.bf16.msra.mxu0 0
  %7699 = vmatprep.subr.bf16.mxu0 0
  %7700 = vmatpush2.bf16.msra.mxu0 0
  %7701 = vmatprep.subr.bf16.mxu0 0
  %7702 = vmatpush2.bf16.msra.mxu0 0
  %7703 = vmatprep.subr.bf16.mxu0 0
  %7704 = vmatpush2.bf16.msra.mxu0 0
  %7705 = vmatprep.subr.bf16.mxu0 0
  %7706 = vmatpush2.bf16.msra.mxu0 0
  %7707 = vmatprep.subr.bf16.mxu0 0
  %7708 = vmatpush2.bf16.msra.mxu0 0
  %7709 = vmatprep.subr.bf16.mxu0 0
  %7710 = vmatpush2.bf16.msra.mxu0 0
  %7711 = vmatprep.mubr.bf16.mxu0 0
  %7712 = vmatmul.mubr.bf16.gmra.mxu0 %v7462
  %v7713 = vpop.f32.mrf.mxu0
  %v7714 = vadd.f32 %v7617, %v7713
  %v7715 = vpop.f32.mrf.mxu0
  %v7716 = vpop.f32.mrf.mxu0
  %v7717 = vadd.f32 %v7620, %v7716
  %v7718 = vpop.f32.mrf.mxu0
  %7719 = vmatprep.mubr.bf16.mxu0 0
  %7720 = vmatmul.mubr.bf16.gmra.mxu0 %v7465
  %v7721 = vpop.f32.mrf.mxu0
  %v7722 = vadd.f32 %v7625, %v7721
  %v7723 = vpop.f32.mrf.mxu0
  %v7724 = vpop.f32.mrf.mxu0
  %v7725 = vadd.f32 %v7628, %v7724
  %v7726 = vpop.f32.mrf.mxu0
  %7727 = vmatprep.mubr.bf16.mxu0 0
  %7728 = vmatmul.mubr.bf16.gmra.mxu0 %v7468
  %v7729 = vpop.f32.mrf.mxu0
  %v7730 = vadd.f32 %v7633, %v7729
  %v7731 = vpop.f32.mrf.mxu0
  %v7732 = vpop.f32.mrf.mxu0
  %v7733 = vadd.f32 %v7636, %v7732
  %v7734 = vpop.f32.mrf.mxu0
  %7735 = vmatprep.mubr.bf16.mxu0 0
  %7736 = vmatmul.mubr.bf16.gmra.mxu0 %v7471
  %v7737 = vpop.f32.mrf.mxu0
  %v7738 = vadd.f32 %v7641, %v7737
  %v7739 = vpop.f32.mrf.mxu0
  %v7740 = vpop.f32.mrf.mxu0
  %v7741 = vadd.f32 %v7644, %v7740
  %v7742 = vpop.f32.mrf.mxu0
  %7743 = vmatprep.mubr.bf16.mxu0 0
  %7744 = vmatmul.mubr.bf16.gmra.mxu0 %v7474
  %v7745 = vpop.f32.mrf.mxu0
  %v7746 = vadd.f32 %v7649, %v7745
  %v7747 = vpop.f32.mrf.mxu0
  %v7748 = vpop.f32.mrf.mxu0
  %v7749 = vadd.f32 %v7652, %v7748
  %v7750 = vpop.f32.mrf.mxu0
  %7751 = vmatprep.mubr.bf16.mxu0 0
  %7752 = vmatmul.mubr.bf16.gmra.mxu0 %v7477
  %v7753 = vpop.f32.mrf.mxu0
  %v7754 = vadd.f32 %v7657, %v7753
  %v7755 = vpop.f32.mrf.mxu0
  %v7756 = vpop.f32.mrf.mxu0
  %v7757 = vadd.f32 %v7660, %v7756
  %v7758 = vpop.f32.mrf.mxu0
  %7759 = vmatprep.mubr.bf16.mxu0 0
  %7760 = vmatmul.mubr.bf16.gmra.mxu0 %v7480
  %v7761 = vpop.f32.mrf.mxu0
  %v7762 = vadd.f32 %v7665, %v7761
  %v7763 = vpop.f32.mrf.mxu0
  %v7764 = vpop.f32.mrf.mxu0
  %v7765 = vadd.f32 %v7668, %v7764
  %v7766 = vpop.f32.mrf.mxu0
  %7767 = vmatprep.mubr.bf16.mxu0 0
  %7768 = vmatmul.mubr.bf16.gmra.mxu0 %v7483
  %v7769 = vpop.f32.mrf.mxu0
  %v7770 = vadd.f32 %v7673, %v7769
  %v7771 = vpop.f32.mrf.mxu0
  %v7772 = vpop.f32.mrf.mxu0
  %v7773 = vadd.f32 %v7676, %v7772
  %v7774 = vpop.f32.mrf.mxu0
  %7775 = vdwg.mxu0
  %v7776 = vld [vmem:[%s8] sm:$0x1]
  %v7778 = vlaneseq
  %v7779 = vshrl.u32 %v7778, 7
  %v7780 = vsub.s32 0, %v7779
  %v7781 = vrot.slane %v7776, %v7780
  %v7783 = vmul.f32 %v7714, %v7781
  %v7784 = vmul.f32 %v7717, %v7781
  %v7785 = vmul.f32 %v7722, %v7781
  %v7786 = vmul.f32 %v7725, %v7781
  %v7787 = vmul.f32 %v7730, %v7781
  %v7788 = vmul.f32 %v7733, %v7781
  %v7789 = vmul.f32 %v7738, %v7781
  %v7790 = vmul.f32 %v7741, %v7781
  %v7791 = vmul.f32 %v7746, %v7781
  %v7792 = vmul.f32 %v7749, %v7781
  %v7793 = vmul.f32 %v7754, %v7781
  %v7794 = vmul.f32 %v7757, %v7781
  %v7795 = vmul.f32 %v7762, %v7781
  %v7796 = vmul.f32 %v7765, %v7781
  %v7797 = vmul.f32 %v7770, %v7781
  %v7798 = vmul.f32 %v7773, %v7781
  %v7799 = vld [vmem:[%s9] sm:$0x1]
  %v7801 = vlaneseq
  %v7802 = vshrl.u32 %v7801, 7
  %v7803 = vsub.s32 0, %v7802
  %v7804 = vrot.slane %v7799, %v7803
  %v7806 = vadd.f32 %v7783, %v7804
  %v7807 = vadd.f32 %v7784, %v7804
  %v7808 = vadd.f32 %v7785, %v7804
  %v7809 = vadd.f32 %v7786, %v7804
  %v7810 = vadd.f32 %v7787, %v7804
  %v7811 = vadd.f32 %v7788, %v7804
  %v7812 = vadd.f32 %v7789, %v7804
  %v7813 = vadd.f32 %v7790, %v7804
  %v7814 = vadd.f32 %v7791, %v7804
  %v7815 = vadd.f32 %v7792, %v7804
  %v7816 = vadd.f32 %v7793, %v7804
  %v7817 = vadd.f32 %v7794, %v7804
  %v7818 = vadd.f32 %v7795, %v7804
  %v7819 = vadd.f32 %v7796, %v7804
  %v7820 = vadd.f32 %v7797, %v7804
  %v7821 = vadd.f32 %v7798, %v7804
  %v7822 = vmax.f32 %v7806, 0.0
  %v7823 = vmax.f32 %v7807, 0.0
  %v7824 = vmax.f32 %v7808, 0.0
  %v7825 = vmax.f32 %v7809, 0.0
  %v7826 = vmax.f32 %v7810, 0.0
  %v7827 = vmax.f32 %v7811, 0.0
  %v7828 = vmax.f32 %v7812, 0.0
  %v7829 = vmax.f32 %v7813, 0.0
  %v7830 = vmax.f32 %v7814, 0.0
  %v7831 = vmax.f32 %v7815, 0.0
  %v7832 = vmax.f32 %v7816, 0.0
  %v7833 = vmax.f32 %v7817, 0.0
  %v7834 = vmax.f32 %v7818, 0.0
  %v7835 = vmax.f32 %v7819, 0.0
  %v7836 = vmax.f32 %v7820, 0.0
  %v7837 = vmax.f32 %v7821, 0.0
  %v7838 = vpack.c.bf16 %v7823, %v7822
  %v7839 = vpack.c.bf16 %v7825, %v7824
  %v7840 = vpack.c.bf16 %v7827, %v7826
  %v7841 = vpack.c.bf16 %v7829, %v7828
  %v7842 = vpack.c.bf16 %v7831, %v7830
  %v7843 = vpack.c.bf16 %v7833, %v7832
  %v7844 = vpack.c.bf16 %v7835, %v7834
  %v7845 = vpack.c.bf16 %v7837, %v7836
  %v7854 = vunpack.c.l.b16 %v7838
  %v7855 = vunpack.c.h.b16 %v7838
  %v7856 = vunpack.c.l.b16 %v7839
  %v7857 = vunpack.c.h.b16 %v7839
  %v7858 = vunpack.c.l.b16 %v7840
  %v7859 = vunpack.c.h.b16 %v7840
  %v7860 = vunpack.c.l.b16 %v7841
  %v7861 = vunpack.c.h.b16 %v7841
  %v7862 = vunpack.c.l.b16 %v7842
  %v7863 = vunpack.c.h.b16 %v7842
  %v7864 = vunpack.c.l.b16 %v7843
  %v7865 = vunpack.c.h.b16 %v7843
  %v7866 = vunpack.c.l.b16 %v7844
  %v7867 = vunpack.c.h.b16 %v7844
  %v7868 = vunpack.c.l.b16 %v7845
  %v7869 = vunpack.c.h.b16 %v7845
  %v7870 = vpack.c.b16 %v7854, %v7854
  %v7871 = vpack.c.b16 %v7855, %v7855
  %v7872 = vpack.c.b16 %v7856, %v7856
  %v7873 = vpack.c.b16 %v7857, %v7857
  %v7874 = vpack.c.b16 %v7858, %v7858
  %v7875 = vpack.c.b16 %v7859, %v7859
  %v7876 = vpack.c.b16 %v7860, %v7860
  %v7877 = vpack.c.b16 %v7861, %v7861
  %v7878 = vpack.c.b16 %v7862, %v7862
  %v7879 = vpack.c.b16 %v7863, %v7863
  %v7880 = vpack.c.b16 %v7864, %v7864
  %v7881 = vpack.c.b16 %v7865, %v7865
  %v7882 = vpack.c.b16 %v7866, %v7866
  %v7883 = vpack.c.b16 %v7867, %v7867
  %v7884 = vpack.c.b16 %v7868, %v7868
  %v7885 = vpack.c.b16 %v7869, %v7869
  %7902 = vst.msk [vmem:[#allocation5] sm:$0xf] %vm308, %v7870
  %7903 = vst.msk [vmem:[#allocation5 + $0x8] sm:$0xf] %vm308, %v7871
  %7904 = vst.msk [vmem:[#allocation5 + $0x10] sm:$0xf] %vm308, %v7872
  %7905 = vst.msk [vmem:[#allocation5 + $0x18] sm:$0xf] %vm308, %v7873
  %7906 = vst.msk [vmem:[#allocation5 + $0x20] sm:$0xf] %vm308, %v7874
  %7907 = vst.msk [vmem:[#allocation5 + $0x28] sm:$0xf] %vm308, %v7875
  %7908 = vst.msk [vmem:[#allocation5 + $0x30] sm:$0xf] %vm308, %v7876
  %7909 = vst.msk [vmem:[#allocation5 + $0x38] sm:$0xf] %vm308, %v7877
  %7910 = vst.msk [vmem:[#allocation5 + $0x48] sm:$0xf] %vm308, %v7878
  %7911 = vst.msk [vmem:[#allocation5 + $0x50] sm:$0xf] %vm308, %v7879
  %7912 = vst.msk [vmem:[#allocation5 + $0x58] sm:$0xf] %vm308, %v7880
  %7913 = vst.msk [vmem:[#allocation5 + $0x60] sm:$0xf] %vm308, %v7881
  %7914 = vst.msk [vmem:[#allocation5 + $0x68] sm:$0xf] %vm308, %v7882
  %7915 = vst.msk [vmem:[#allocation5 + $0x70] sm:$0xf] %vm308, %v7883
  %7916 = vst.msk [vmem:[#allocation5 + $0x78] sm:$0xf] %vm308, %v7884
  %7917 = vst.msk [vmem:[#allocation5 + $0x80] sm:$0xf] %vm308, %v7885
  %v7918 = vld [vmem:[%s11] sm:$0x1]
  %v7919 = vld [vmem:[%s12] sm:$0x1]
  %v7920 = vld [vmem:[%s13] sm:$0x1]
  %s7921 = sld [smem:[#allocation6]]
  %v7922 = vlaneseq
  %v7923 = vand.u32 %v7922, 127
  %v7924 = vld [vmem:[#allocation5] sm:$0xf]
  %v7925 = vld [vmem:[#allocation5 + $0x8] sm:$0xf]
  %v7926 = vld [vmem:[#allocation5 + $0x10] sm:$0xf]
  %v7927 = vld [vmem:[#allocation5 + $0x18] sm:$0xf]
  %v7928 = vld [vmem:[#allocation5 + $0x20] sm:$0xf]
  %v7929 = vld [vmem:[#allocation5 + $0x28] sm:$0xf]
  %v7930 = vld [vmem:[#allocation5 + $0x30] sm:$0xf]
  %v7931 = vld [vmem:[#allocation5 + $0x38] sm:$0xf]
  %v7932 = vld [vmem:[#allocation5 + $0x48] sm:$0xf]
  %v7933 = vld [vmem:[#allocation5 + $0x50] sm:$0xf]
  %v7934 = vld [vmem:[#allocation5 + $0x58] sm:$0xf]
  %v7935 = vld [vmem:[#allocation5 + $0x60] sm:$0xf]
  %v7936 = vld [vmem:[#allocation5 + $0x68] sm:$0xf]
  %v7937 = vld [vmem:[#allocation5 + $0x70] sm:$0xf]
  %v7938 = vld [vmem:[#allocation5 + $0x78] sm:$0xf]
  %v7939 = vld [vmem:[#allocation5 + $0x80] sm:$0xf]
  %v7940 = vld [vmem:[%s10] sm:$0xf]
  %v7941 = vld [vmem:[%s10 + $0x4] sm:$0xf]
  %v7942 = vld [vmem:[%s10 + $0x8] sm:$0xf]
  %v7943 = vld [vmem:[%s10 + $0xc] sm:$0xf]
  %v7944 = vld [vmem:[%s10 + $0x10] sm:$0xf]
  %v7945 = vld [vmem:[%s10 + $0x14] sm:$0xf]
  %v7946 = vld [vmem:[%s10 + $0x18] sm:$0xf]
  %v7947 = vld [vmem:[%s10 + $0x1c] sm:$0xf]
  %v7964 = vunpack.c.l.b16 %v7924
  %v7965 = vunpack.c.l.b16 %v7925
  %v7966 = vunpack.c.l.b16 %v7926
  %v7967 = vunpack.c.l.b16 %v7927
  %v7968 = vunpack.c.l.b16 %v7928
  %v7969 = vunpack.c.l.b16 %v7929
  %v7970 = vunpack.c.l.b16 %v7930
  %v7971 = vunpack.c.l.b16 %v7931
  %v7972 = vunpack.c.l.b16 %v7932
  %v7973 = vunpack.c.l.b16 %v7933
  %v7974 = vunpack.c.l.b16 %v7934
  %v7975 = vunpack.c.l.b16 %v7935
  %v7976 = vunpack.c.l.b16 %v7936
  %v7977 = vunpack.c.l.b16 %v7937
  %v7978 = vunpack.c.l.b16 %v7938
  %v7979 = vunpack.c.l.b16 %v7939
  %v7980 = vpack.c.b16 %v7965, %v7964
  %v7981 = vpack.c.b16 %v7967, %v7966
  %v7982 = vpack.c.b16 %v7969, %v7968
  %v7983 = vpack.c.b16 %v7971, %v7970
  %v7984 = vpack.c.b16 %v7973, %v7972
  %v7985 = vpack.c.b16 %v7975, %v7974
  %v7986 = vpack.c.b16 %v7977, %v7976
  %v7987 = vpack.c.b16 %v7979, %v7978
  %v7996 = vunpack.c.l.b16 %v7940
  %v7997 = vunpack.c.l.b16 %v7941
  %v7998 = vunpack.c.l.b16 %v7942
  %v7999 = vunpack.c.l.b16 %v7943
  %v8000 = vunpack.c.l.b16 %v7944
  %v8001 = vunpack.c.l.b16 %v7945
  %v8002 = vunpack.c.l.b16 %v7946
  %v8003 = vunpack.c.l.b16 %v7947
  %v8004 = vpack.c.b16 %v7997, %v7996
  %v8005 = vpack.c.b16 %v7999, %v7998
  %v8006 = vpack.c.b16 %v8001, %v8000
  %v8007 = vpack.c.b16 %v8003, %v8002
  %v8013 = vsel %vm7044, %v7980, 0
  %v8016 = vsel %vm7044, %v7981, 0
  %v8019 = vsel %vm7044, %v7982, 0
  %v8022 = vsel %vm7044, %v7983, 0
  %v8025 = vsel %vm7044, %v7984, 0
  %v8028 = vsel %vm7044, %v7985, 0
  %v8031 = vsel %vm7044, %v7986, 0
  %v8034 = vsel %vm7044, %v7987, 0
  %8036 = vmatprep.subr.bf16.mxu0 0
  %8037 = vmatpush1.bf16.msra.mxu0 0
  %8038 = vmatprep.subr.bf16.mxu0 0
  %8039 = vmatpush1.bf16.msra.mxu0 0
  %8040 = vmatprep.subr.bf16.mxu0 0
  %8041 = vmatpush1.bf16.msra.mxu0 0
  %8042 = vmatprep.subr.bf16.mxu0 0
  %8043 = vmatpush1.bf16.msra.mxu0 0
  %8044 = vmatprep.subr.bf16.mxu0 0
  %8045 = vmatpush1.bf16.msra.mxu0 %v8007
  %8046 = vmatprep.subr.bf16.mxu0 0
  %8047 = vmatpush1.bf16.msra.mxu0 %v8006
  %8048 = vmatprep.subr.bf16.mxu0 0
  %8049 = vmatpush1.bf16.msra.mxu0 %v8005
  %8050 = vmatprep.subr.bf16.mxu0 0
  %8051 = vmatpush1.bf16.msra.mxu0 %v8004
  %8052 = vmatprep.subr.bf16.mxu0 0
  %8053 = vmatpush2.bf16.msra.mxu0 0
  %8054 = vmatprep.subr.bf16.mxu0 0
  %8055 = vmatpush2.bf16.msra.mxu0 0
  %8056 = vmatprep.subr.bf16.mxu0 0
  %8057 = vmatpush2.bf16.msra.mxu0 0
  %8058 = vmatprep.subr.bf16.mxu0 0
  %8059 = vmatpush2.bf16.msra.mxu0 0
  %8060 = vmatprep.subr.bf16.mxu0 0
  %8061 = vmatpush2.bf16.msra.mxu0 0
  %8062 = vmatprep.subr.bf16.mxu0 0
  %8063 = vmatpush2.bf16.msra.mxu0 0
  %8064 = vmatprep.subr.bf16.mxu0 0
  %8065 = vmatpush2.bf16.msra.mxu0 0
  %8066 = vmatprep.subr.bf16.mxu0 0
  %8067 = vmatpush2.bf16.msra.mxu0 0
  %8068 = vmatprep.mubr.bf16.mxu0 0
  %8069 = vmatmul.mubr.bf16.gmra.mxu0 %v8013
  %v8070 = vpop.f32.mrf.mxu0
  %v8071 = vadd.f32 0.0, %v8070
  %v8072 = vpop.f32.mrf.mxu0
  %v8073 = vpop.f32.mrf.mxu0
  %v8074 = vadd.f32 0.0, %v8073
  %v8075 = vpop.f32.mrf.mxu0
  %8076 = vmatprep.mubr.bf16.mxu0 0
  %8077 = vmatmul.mubr.bf16.gmra.mxu0 %v8016
  %v8078 = vpop.f32.mrf.mxu0
  %v8079 = vadd.f32 0.0, %v8078
  %v8080 = vpop.f32.mrf.mxu0
  %v8081 = vpop.f32.mrf.mxu0
  %v8082 = vadd.f32 0.0, %v8081
  %v8083 = vpop.f32.mrf.mxu0
  %8084 = vmatprep.mubr.bf16.mxu0 0
  %8085 = vmatmul.mubr.bf16.gmra.mxu0 %v8019
  %v8086 = vpop.f32.mrf.mxu0
  %v8087 = vadd.f32 0.0, %v8086
  %v8088 = vpop.f32.mrf.mxu0
  %v8089 = vpop.f32.mrf.mxu0
  %v8090 = vadd.f32 0.0, %v8089
  %v8091 = vpop.f32.mrf.mxu0
  %8092 = vmatprep.mubr.bf16.mxu0 0
  %8093 = vmatmul.mubr.bf16.gmra.mxu0 %v8022
  %v8094 = vpop.f32.mrf.mxu0
  %v8095 = vadd.f32 0.0, %v8094
  %v8096 = vpop.f32.mrf.mxu0
  %v8097 = vpop.f32.mrf.mxu0
  %v8098 = vadd.f32 0.0, %v8097
  %v8099 = vpop.f32.mrf.mxu0
  %8100 = vmatprep.mubr.bf16.mxu0 0
  %8101 = vmatmul.mubr.bf16.gmra.mxu0 %v8025
  %v8102 = vpop.f32.mrf.mxu0
  %v8103 = vadd.f32 0.0, %v8102
  %v8104 = vpop.f32.mrf.mxu0
  %v8105 = vpop.f32.mrf.mxu0
  %v8106 = vadd.f32 0.0, %v8105
  %v8107 = vpop.f32.mrf.mxu0
  %8108 = vmatprep.mubr.bf16.mxu0 0
  %8109 = vmatmul.mubr.bf16.gmra.mxu0 %v8028
  %v8110 = vpop.f32.mrf.mxu0
  %v8111 = vadd.f32 0.0, %v8110
  %v8112 = vpop.f32.mrf.mxu0
  %v8113 = vpop.f32.mrf.mxu0
  %v8114 = vadd.f32 0.0, %v8113
  %v8115 = vpop.f32.mrf.mxu0
  %8116 = vmatprep.mubr.bf16.mxu0 0
  %8117 = vmatmul.mubr.bf16.gmra.mxu0 %v8031
  %v8118 = vpop.f32.mrf.mxu0
  %v8119 = vadd.f32 0.0, %v8118
  %v8120 = vpop.f32.mrf.mxu0
  %v8121 = vpop.f32.mrf.mxu0
  %v8122 = vadd.f32 0.0, %v8121
  %v8123 = vpop.f32.mrf.mxu0
  %8124 = vmatprep.mubr.bf16.mxu0 0
  %8125 = vmatmul.mubr.bf16.gmra.mxu0 %v8034
  %v8126 = vpop.f32.mrf.mxu0
  %v8127 = vadd.f32 0.0, %v8126
  %v8128 = vpop.f32.mrf.mxu0
  %v8129 = vpop.f32.mrf.mxu0
  %v8130 = vadd.f32 0.0, %v8129
  %v8131 = vpop.f32.mrf.mxu0
  %8132 = vdwg.mxu0
  %v8134 = vlaneseq
  %v8135 = vshrl.u32 %v8134, 7
  %v8136 = vsub.s32 0, %v8135
  %v8137 = vrot.slane %v7918, %v8136
  %v8139 = vmul.f32 %v8071, %v8137
  %v8140 = vmul.f32 %v8074, %v8137
  %v8141 = vmul.f32 %v8079, %v8137
  %v8142 = vmul.f32 %v8082, %v8137
  %v8143 = vmul.f32 %v8087, %v8137
  %v8144 = vmul.f32 %v8090, %v8137
  %v8145 = vmul.f32 %v8095, %v8137
  %v8146 = vmul.f32 %v8098, %v8137
  %v8147 = vmul.f32 %v8103, %v8137
  %v8148 = vmul.f32 %v8106, %v8137
  %v8149 = vmul.f32 %v8111, %v8137
  %v8150 = vmul.f32 %v8114, %v8137
  %v8151 = vmul.f32 %v8119, %v8137
  %v8152 = vmul.f32 %v8122, %v8137
  %v8153 = vmul.f32 %v8127, %v8137
  %v8154 = vmul.f32 %v8130, %v8137
  %v8156 = vlaneseq
  %v8157 = vshrl.u32 %v8156, 7
  %v8158 = vsub.s32 0, %v8157
  %v8159 = vrot.slane %v7919, %v8158
  %v8161 = vadd.f32 %v8139, %v8159
  %v8162 = vadd.f32 %v8140, %v8159
  %v8163 = vadd.f32 %v8141, %v8159
  %v8164 = vadd.f32 %v8142, %v8159
  %v8165 = vadd.f32 %v8143, %v8159
  %v8166 = vadd.f32 %v8144, %v8159
  %v8167 = vadd.f32 %v8145, %v8159
  %v8168 = vadd.f32 %v8146, %v8159
  %v8169 = vadd.f32 %v8147, %v8159
  %v8170 = vadd.f32 %v8148, %v8159
  %v8171 = vadd.f32 %v8149, %v8159
  %v8172 = vadd.f32 %v8150, %v8159
  %v8173 = vadd.f32 %v8151, %v8159
  %v8174 = vadd.f32 %v8152, %v8159
  %v8175 = vadd.f32 %v8153, %v8159
  %v8176 = vadd.f32 %v8154, %v8159
  %v8177 = vmax.f32 %v8161, 0.0
  %v8178 = vmax.f32 %v8162, 0.0
  %v8179 = vmax.f32 %v8163, 0.0
  %v8180 = vmax.f32 %v8164, 0.0
  %v8181 = vmax.f32 %v8165, 0.0
  %v8182 = vmax.f32 %v8166, 0.0
  %v8183 = vmax.f32 %v8167, 0.0
  %v8184 = vmax.f32 %v8168, 0.0
  %v8185 = vmax.f32 %v8169, 0.0
  %v8186 = vmax.f32 %v8170, 0.0
  %v8187 = vmax.f32 %v8171, 0.0
  %v8188 = vmax.f32 %v8172, 0.0
  %v8189 = vmax.f32 %v8173, 0.0
  %v8190 = vmax.f32 %v8174, 0.0
  %v8191 = vmax.f32 %v8175, 0.0
  %v8192 = vmax.f32 %v8176, 0.0
  %v8193 = vld [vmem:[#allocation2] sm:$0xff]
  %v8194 = vld [vmem:[#allocation2 + $0x8] sm:$0xff]
  %v8195 = vld [vmem:[#allocation2 + $0x10] sm:$0xff]
  %v8196 = vld [vmem:[#allocation2 + $0x18] sm:$0xff]
  %v8197 = vld [vmem:[#allocation2 + $0x20] sm:$0xff]
  %v8198 = vld [vmem:[#allocation2 + $0x28] sm:$0xff]
  %v8199 = vld [vmem:[#allocation2 + $0x30] sm:$0xff]
  %v8200 = vld [vmem:[#allocation2 + $0x38] sm:$0xff]
  %v8201 = vld [vmem:[#allocation2 + $0x40] sm:$0xff]
  %v8202 = vld [vmem:[#allocation2 + $0x48] sm:$0xff]
  %v8203 = vld [vmem:[#allocation2 + $0x50] sm:$0xff]
  %v8204 = vld [vmem:[#allocation2 + $0x58] sm:$0xff]
  %v8205 = vld [vmem:[#allocation2 + $0x60] sm:$0xff]
  %v8206 = vld [vmem:[#allocation2 + $0x68] sm:$0xff]
  %v8207 = vld [vmem:[#allocation2 + $0x70] sm:$0xff]
  %v8208 = vld [vmem:[#allocation2 + $0x78] sm:$0xff]
  %v8209 = vadd.f32 %v8177, %v8193
  %v8210 = vadd.f32 %v8178, %v8194
  %v8211 = vadd.f32 %v8179, %v8195
  %v8212 = vadd.f32 %v8180, %v8196
  %v8213 = vadd.f32 %v8181, %v8197
  %v8214 = vadd.f32 %v8182, %v8198
  %v8215 = vadd.f32 %v8183, %v8199
  %v8216 = vadd.f32 %v8184, %v8200
  %v8217 = vadd.f32 %v8185, %v8201
  %v8218 = vadd.f32 %v8186, %v8202
  %v8219 = vadd.f32 %v8187, %v8203
  %v8220 = vadd.f32 %v8188, %v8204
  %v8221 = vadd.f32 %v8189, %v8205
  %v8222 = vadd.f32 %v8190, %v8206
  %v8223 = vadd.f32 %v8191, %v8207
  %v8224 = vadd.f32 %v8192, %v8208
  %v8226 = vlaneseq
  %v8227 = vshrl.u32 %v8226, 7
  %v8228 = vsub.s32 0, %v8227
  %v8229 = vrot.slane %v7920, %v8228
  %v8231 = vmul.f32 %v8209, %v8229
  %v8232 = vmul.f32 %v8210, %v8229
  %v8233 = vmul.f32 %v8211, %v8229
  %v8234 = vmul.f32 %v8212, %v8229
  %v8235 = vmul.f32 %v8213, %v8229
  %v8236 = vmul.f32 %v8214, %v8229
  %v8237 = vmul.f32 %v8215, %v8229
  %v8238 = vmul.f32 %v8216, %v8229
  %v8239 = vmul.f32 %v8217, %v8229
  %v8240 = vmul.f32 %v8218, %v8229
  %v8241 = vmul.f32 %v8219, %v8229
  %v8242 = vmul.f32 %v8220, %v8229
  %v8243 = vmul.f32 %v8221, %v8229
  %v8244 = vmul.f32 %v8222, %v8229
  %v8245 = vmul.f32 %v8223, %v8229
  %v8246 = vmul.f32 %v8224, %v8229
  %8247 = vadd.xlane.f32.xlu0 %v8231
  %v8248 = vpop.xlane.xlu0 %8247
  %8249 = vadd.xlane.f32.xlu0 %v8232
  %v8250 = vpop.xlane.xlu0 %8249
  %8251 = vadd.xlane.f32.xlu0 %v8233
  %v8252 = vpop.xlane.xlu0 %8251
  %8253 = vadd.xlane.f32.xlu0 %v8234
  %v8254 = vpop.xlane.xlu0 %8253
  %8255 = vadd.xlane.f32.xlu0 %v8235
  %v8256 = vpop.xlane.xlu0 %8255
  %8257 = vadd.xlane.f32.xlu0 %v8236
  %v8258 = vpop.xlane.xlu0 %8257
  %8259 = vadd.xlane.f32.xlu0 %v8237
  %v8260 = vpop.xlane.xlu0 %8259
  %8261 = vadd.xlane.f32.xlu0 %v8238
  %v8262 = vpop.xlane.xlu0 %8261
  %8263 = vadd.xlane.f32.xlu0 %v8239
  %v8264 = vpop.xlane.xlu0 %8263
  %8265 = vadd.xlane.f32.xlu0 %v8240
  %v8266 = vpop.xlane.xlu0 %8265
  %8267 = vadd.xlane.f32.xlu0 %v8241
  %v8268 = vpop.xlane.xlu0 %8267
  %8269 = vadd.xlane.f32.xlu0 %v8242
  %v8270 = vpop.xlane.xlu0 %8269
  %8271 = vadd.xlane.f32.xlu0 %v8243
  %v8272 = vpop.xlane.xlu0 %8271
  %8273 = vadd.xlane.f32.xlu0 %v8244
  %v8274 = vpop.xlane.xlu0 %8273
  %8275 = vadd.xlane.f32.xlu0 %v8245
  %v8276 = vpop.xlane.xlu0 %8275
  %8277 = vadd.xlane.f32.xlu0 %v8246
  %v8278 = vpop.xlane.xlu0 %8277
  %v8279 = vstv %s7921
  %v8280 = vadd.f32 %v8248, %v8279
  %v8281 = vadd.f32 %v8250, %v8279
  %v8282 = vadd.f32 %v8252, %v8279
  %v8283 = vadd.f32 %v8254, %v8279
  %v8284 = vadd.f32 %v8256, %v8279
  %v8285 = vadd.f32 %v8258, %v8279
  %v8286 = vadd.f32 %v8260, %v8279
  %v8287 = vadd.f32 %v8262, %v8279
  %v8288 = vadd.f32 %v8264, %v8279
  %v8289 = vadd.f32 %v8266, %v8279
  %v8290 = vadd.f32 %v8268, %v8279
  %v8291 = vadd.f32 %v8270, %v8279
  %v8292 = vadd.f32 %v8272, %v8279
  %v8293 = vadd.f32 %v8274, %v8279
  %v8294 = vadd.f32 %v8276, %v8279
  %v8295 = vadd.f32 %v8278, %v8279
  %vm8296 = vcmp.eq.s32.totalorder %v7923, 0
  %v8297 = vsel %vm8296, 1, 0
  %vm8298 = vcmp.eq.s32.totalorder %v8297, 1
  %v8299 = vsel %vm8298, %v8280, 0.0
  %v8300 = vsel %vm8298, %v8281, 0.0
  %v8301 = vsel %vm8298, %v8282, 0.0
  %v8302 = vsel %vm8298, %v8283, 0.0
  %v8303 = vsel %vm8298, %v8284, 0.0
  %v8304 = vsel %vm8298, %v8285, 0.0
  %v8305 = vsel %vm8298, %v8286, 0.0
  %v8306 = vsel %vm8298, %v8287, 0.0
  %v8307 = vsel %vm8298, %v8288, 0.0
  %v8308 = vsel %vm8298, %v8289, 0.0
  %v8309 = vsel %vm8298, %v8290, 0.0
  %v8310 = vsel %vm8298, %v8291, 0.0
  %v8311 = vsel %vm8298, %v8292, 0.0
  %v8312 = vsel %vm8298, %v8293, 0.0
  %v8313 = vsel %vm8298, %v8294, 0.0
  %v8314 = vsel %vm8298, %v8295, 0.0
  %v8315 = vadd.f32 %v8299, 0.0
  %v8316 = vadd.f32 %v8300, 0.0
  %v8317 = vadd.f32 %v8301, 0.0
  %v8318 = vadd.f32 %v8302, 0.0
  %v8319 = vadd.f32 %v8303, 0.0
  %v8320 = vadd.f32 %v8304, 0.0
  %v8321 = vadd.f32 %v8305, 0.0
  %v8322 = vadd.f32 %v8306, 0.0
  %v8323 = vadd.f32 %v8307, 0.0
  %v8324 = vadd.f32 %v8308, 0.0
  %v8325 = vadd.f32 %v8309, 0.0
  %v8326 = vadd.f32 %v8310, 0.0
  %v8327 = vadd.f32 %v8311, 0.0
  %v8328 = vadd.f32 %v8312, 0.0
  %v8329 = vadd.f32 %v8313, 0.0
  %v8330 = vadd.f32 %v8314, 0.0
  %v8331 = vld [vmem:[#allocation5] sm:$0xf]
  %v8332 = vld [vmem:[#allocation5 + $0x4] sm:$0x1]
  %v8333 = vld [vmem:[#allocation5 + $0x8] sm:$0xf]
  %v8334 = vld [vmem:[#allocation5 + $0xc] sm:$0x1]
  %v8335 = vld [vmem:[#allocation5 + $0x10] sm:$0xf]
  %v8336 = vld [vmem:[#allocation5 + $0x14] sm:$0x1]
  %v8337 = vld [vmem:[#allocation5 + $0x18] sm:$0xf]
  %v8338 = vld [vmem:[#allocation5 + $0x1c] sm:$0x1]
  %v8339 = vld [vmem:[#allocation5 + $0x20] sm:$0xf]
  %v8340 = vld [vmem:[#allocation5 + $0x24] sm:$0x1]
  %v8341 = vld [vmem:[#allocation5 + $0x28] sm:$0xf]
  %v8342 = vld [vmem:[#allocation5 + $0x2c] sm:$0x1]
  %v8343 = vld [vmem:[#allocation5 + $0x30] sm:$0xf]
  %v8344 = vld [vmem:[#allocation5 + $0x34] sm:$0x1]
  %v8345 = vld [vmem:[#allocation5 + $0x38] sm:$0xf]
  %v8346 = vld [vmem:[#allocation5 + $0x3c] sm:$0x1]
  %v8347 = vld [vmem:[#allocation5 + $0x48] sm:$0xf]
  %v8348 = vld [vmem:[#allocation5 + $0x4c] sm:$0x1]
  %v8349 = vld [vmem:[#allocation5 + $0x50] sm:$0xf]
  %v8350 = vld [vmem:[#allocation5 + $0x54] sm:$0x1]
  %v8351 = vld [vmem:[#allocation5 + $0x58] sm:$0xf]
  %v8352 = vld [vmem:[#allocation5 + $0x5c] sm:$0x1]
  %v8353 = vld [vmem:[#allocation5 + $0x60] sm:$0xf]
  %v8354 = vld [vmem:[#allocation5 + $0x64] sm:$0x1]
  %v8355 = vld [vmem:[#allocation5 + $0x68] sm:$0xf]
  %v8356 = vld [vmem:[#allocation5 + $0x6c] sm:$0x1]
  %v8357 = vld [vmem:[#allocation5 + $0x70] sm:$0xf]
  %v8358 = vld [vmem:[#allocation5 + $0x74] sm:$0x1]
  %v8359 = vld [vmem:[#allocation5 + $0x78] sm:$0xf]
  %v8360 = vld [vmem:[#allocation5 + $0x7c] sm:$0x1]
  %v8361 = vld [vmem:[#allocation5 + $0x80] sm:$0xf]
  %v8362 = vld [vmem:[#allocation5 + $0x84] sm:$0x1]
  %v8364 = vshrl.u32 %v8331, 16
  %v8366 = vrot.slane %v8364, 4
  %v8367 = vshll.u32 %v8331, 16
  %v8369 = vrot.slane %v8367, 5
  %v8370 = vor.u32 %v8366, %v8369
  %v8371 = vrot.slane %v8370, 4
  %v8373 = vshll.u32 %v8332, 16
  %v8375 = vrot.slane %v8373, 5
  %v8376 = vsel %vm3025, %v8371, %v8375
  %v8378 = vshrl.u32 %v8333, 16
  %v8380 = vrot.slane %v8378, 4
  %v8381 = vshll.u32 %v8333, 16
  %v8383 = vrot.slane %v8381, 5
  %v8384 = vor.u32 %v8380, %v8383
  %v8385 = vrot.slane %v8384, 4
  %v8387 = vshll.u32 %v8334, 16
  %v8389 = vrot.slane %v8387, 5
  %v8390 = vsel %vm3025, %v8385, %v8389
  %v8392 = vshrl.u32 %v8335, 16
  %v8394 = vrot.slane %v8392, 4
  %v8395 = vshll.u32 %v8335, 16
  %v8397 = vrot.slane %v8395, 5
  %v8398 = vor.u32 %v8394, %v8397
  %v8399 = vrot.slane %v8398, 4
  %v8401 = vshll.u32 %v8336, 16
  %v8403 = vrot.slane %v8401, 5
  %v8404 = vsel %vm3025, %v8399, %v8403
  %v8406 = vshrl.u32 %v8337, 16
  %v8408 = vrot.slane %v8406, 4
  %v8409 = vshll.u32 %v8337, 16
  %v8411 = vrot.slane %v8409, 5
  %v8412 = vor.u32 %v8408, %v8411
  %v8413 = vrot.slane %v8412, 4
  %v8415 = vshll.u32 %v8338, 16
  %v8417 = vrot.slane %v8415, 5
  %v8418 = vsel %vm3025, %v8413, %v8417
  %v8420 = vshrl.u32 %v8339, 16
  %v8422 = vrot.slane %v8420, 4
  %v8423 = vshll.u32 %v8339, 16
  %v8425 = vrot.slane %v8423, 5
  %v8426 = vor.u32 %v8422, %v8425
  %v8427 = vrot.slane %v8426, 4
  %v8429 = vshll.u32 %v8340, 16
  %v8431 = vrot.slane %v8429, 5
  %v8432 = vsel %vm3025, %v8427, %v8431
  %v8434 = vshrl.u32 %v8341, 16
  %v8436 = vrot.slane %v8434, 4
  %v8437 = vshll.u32 %v8341, 16
  %v8439 = vrot.slane %v8437, 5
  %v8440 = vor.u32 %v8436, %v8439
  %v8441 = vrot.slane %v8440, 4
  %v8443 = vshll.u32 %v8342, 16
  %v8445 = vrot.slane %v8443, 5
  %v8446 = vsel %vm3025, %v8441, %v8445
  %v8448 = vshrl.u32 %v8343, 16
  %v8450 = vrot.slane %v8448, 4
  %v8451 = vshll.u32 %v8343, 16
  %v8453 = vrot.slane %v8451, 5
  %v8454 = vor.u32 %v8450, %v8453
  %v8455 = vrot.slane %v8454, 4
  %v8457 = vshll.u32 %v8344, 16
  %v8459 = vrot.slane %v8457, 5
  %v8460 = vsel %vm3025, %v8455, %v8459
  %v8462 = vshrl.u32 %v8345, 16
  %v8464 = vrot.slane %v8462, 4
  %v8465 = vshll.u32 %v8345, 16
  %v8467 = vrot.slane %v8465, 5
  %v8468 = vor.u32 %v8464, %v8467
  %v8469 = vrot.slane %v8468, 4
  %v8471 = vshll.u32 %v8346, 16
  %v8473 = vrot.slane %v8471, 5
  %v8474 = vsel %vm3025, %v8469, %v8473
  %v8476 = vshrl.u32 %v8347, 16
  %v8478 = vrot.slane %v8476, 4
  %v8479 = vshll.u32 %v8347, 16
  %v8481 = vrot.slane %v8479, 5
  %v8482 = vor.u32 %v8478, %v8481
  %v8483 = vrot.slane %v8482, 4
  %v8485 = vshll.u32 %v8348, 16
  %v8487 = vrot.slane %v8485, 5
  %v8488 = vsel %vm3025, %v8483, %v8487
  %v8490 = vshrl.u32 %v8349, 16
  %v8492 = vrot.slane %v8490, 4
  %v8493 = vshll.u32 %v8349, 16
  %v8495 = vrot.slane %v8493, 5
  %v8496 = vor.u32 %v8492, %v8495
  %v8497 = vrot.slane %v8496, 4
  %v8499 = vshll.u32 %v8350, 16
  %v8501 = vrot.slane %v8499, 5
  %v8502 = vsel %vm3025, %v8497, %v8501
  %v8504 = vshrl.u32 %v8351, 16
  %v8506 = vrot.slane %v8504, 4
  %v8507 = vshll.u32 %v8351, 16
  %v8509 = vrot.slane %v8507, 5
  %v8510 = vor.u32 %v8506, %v8509
  %v8511 = vrot.slane %v8510, 4
  %v8513 = vshll.u32 %v8352, 16
  %v8515 = vrot.slane %v8513, 5
  %v8516 = vsel %vm3025, %v8511, %v8515
  %v8518 = vshrl.u32 %v8353, 16
  %v8520 = vrot.slane %v8518, 4
  %v8521 = vshll.u32 %v8353, 16
  %v8523 = vrot.slane %v8521, 5
  %v8524 = vor.u32 %v8520, %v8523
  %v8525 = vrot.slane %v8524, 4
  %v8527 = vshll.u32 %v8354, 16
  %v8529 = vrot.slane %v8527, 5
  %v8530 = vsel %vm3025, %v8525, %v8529
  %v8532 = vshrl.u32 %v8355, 16
  %v8534 = vrot.slane %v8532, 4
  %v8535 = vshll.u32 %v8355, 16
  %v8537 = vrot.slane %v8535, 5
  %v8538 = vor.u32 %v8534, %v8537
  %v8539 = vrot.slane %v8538, 4
  %v8541 = vshll.u32 %v8356, 16
  %v8543 = vrot.slane %v8541, 5
  %v8544 = vsel %vm3025, %v8539, %v8543
  %v8546 = vshrl.u32 %v8357, 16
  %v8548 = vrot.slane %v8546, 4
  %v8549 = vshll.u32 %v8357, 16
  %v8551 = vrot.slane %v8549, 5
  %v8552 = vor.u32 %v8548, %v8551
  %v8553 = vrot.slane %v8552, 4
  %v8555 = vshll.u32 %v8358, 16
  %v8557 = vrot.slane %v8555, 5
  %v8558 = vsel %vm3025, %v8553, %v8557
  %v8560 = vshrl.u32 %v8359, 16
  %v8562 = vrot.slane %v8560, 4
  %v8563 = vshll.u32 %v8359, 16
  %v8565 = vrot.slane %v8563, 5
  %v8566 = vor.u32 %v8562, %v8565
  %v8567 = vrot.slane %v8566, 4
  %v8569 = vshll.u32 %v8360, 16
  %v8571 = vrot.slane %v8569, 5
  %v8572 = vsel %vm3025, %v8567, %v8571
  %v8574 = vshrl.u32 %v8361, 16
  %v8576 = vrot.slane %v8574, 4
  %v8577 = vshll.u32 %v8361, 16
  %v8579 = vrot.slane %v8577, 5
  %v8580 = vor.u32 %v8576, %v8579
  %v8581 = vrot.slane %v8580, 4
  %v8583 = vshll.u32 %v8362, 16
  %v8585 = vrot.slane %v8583, 5
  %v8586 = vsel %vm3025, %v8581, %v8585
  %v8587 = vunpack.c.l.b16 %v8376
  %v8588 = vunpack.c.l.b16 %v8390
  %v8589 = vunpack.c.l.b16 %v8404
  %v8590 = vunpack.c.l.b16 %v8418
  %v8591 = vunpack.c.l.b16 %v8432
  %v8592 = vunpack.c.l.b16 %v8446
  %v8593 = vunpack.c.l.b16 %v8460
  %v8594 = vunpack.c.l.b16 %v8474
  %v8595 = vunpack.c.l.b16 %v8488
  %v8596 = vunpack.c.l.b16 %v8502
  %v8597 = vunpack.c.l.b16 %v8516
  %v8598 = vunpack.c.l.b16 %v8530
  %v8599 = vunpack.c.l.b16 %v8544
  %v8600 = vunpack.c.l.b16 %v8558
  %v8601 = vunpack.c.l.b16 %v8572
  %v8602 = vunpack.c.l.b16 %v8586
  %v8603 = vpack.c.b16 %v8588, %v8587
  %v8604 = vpack.c.b16 %v8590, %v8589
  %v8605 = vpack.c.b16 %v8592, %v8591
  %v8606 = vpack.c.b16 %v8594, %v8593
  %v8607 = vpack.c.b16 %v8596, %v8595
  %v8608 = vpack.c.b16 %v8598, %v8597
  %v8609 = vpack.c.b16 %v8600, %v8599
  %v8610 = vpack.c.b16 %v8602, %v8601
  %8611 = vrot.lane.b32.xlu0 %v8603, 64
  %v8612 = vpop.permute.xlu0 %8611
  %8613 = vrot.lane.b32.xlu0 %v8604, 64
  %v8614 = vpop.permute.xlu0 %8613
  %8615 = vrot.lane.b32.xlu0 %v8605, 64
  %v8616 = vpop.permute.xlu0 %8615
  %8617 = vrot.lane.b32.xlu0 %v8606, 64
  %v8618 = vpop.permute.xlu0 %8617
  %8619 = vrot.lane.b32.xlu0 %v8607, 64
  %v8620 = vpop.permute.xlu0 %8619
  %8621 = vrot.lane.b32.xlu0 %v8608, 64
  %v8622 = vpop.permute.xlu0 %8621
  %8623 = vrot.lane.b32.xlu0 %v8609, 64
  %v8624 = vpop.permute.xlu0 %8623
  %8625 = vrot.lane.b32.xlu0 %v8610, 64
  %v8626 = vpop.permute.xlu0 %8625
  %v8628 = vsel %vm7044, %v7980, %v8612
  %v8631 = vsel %vm7044, %v7981, %v8614
  %v8634 = vsel %vm7044, %v7982, %v8616
  %v8637 = vsel %vm7044, %v7983, %v8618
  %v8640 = vsel %vm7044, %v7984, %v8620
  %v8643 = vsel %vm7044, %v7985, %v8622
  %v8646 = vsel %vm7044, %v7986, %v8624
  %v8649 = vsel %vm7044, %v7987, %v8626
  %s8651 = scalar_lea.vmem %s10, 128
  %v8652 = vld [vmem:[%s8651] sm:$0xf]
  %v8653 = vld [vmem:[%s8651 + $0x4] sm:$0xf]
  %v8654 = vld [vmem:[%s8651 + $0x8] sm:$0xf]
  %v8655 = vld [vmem:[%s8651 + $0xc] sm:$0xf]
  %v8656 = vld [vmem:[%s8651 + $0x10] sm:$0xf]
  %v8657 = vld [vmem:[%s8651 + $0x14] sm:$0xf]
  %v8658 = vld [vmem:[%s8651 + $0x18] sm:$0xf]
  %v8659 = vld [vmem:[%s8651 + $0x1c] sm:$0xf]
  %v8660 = vld [vmem:[%s8651 + $0x20] sm:$0xf]
  %v8661 = vld [vmem:[%s8651 + $0x24] sm:$0xf]
  %v8662 = vld [vmem:[%s8651 + $0x28] sm:$0xf]
  %v8663 = vld [vmem:[%s8651 + $0x2c] sm:$0xf]
  %v8664 = vld [vmem:[%s8651 + $0x30] sm:$0xf]
  %v8665 = vld [vmem:[%s8651 + $0x34] sm:$0xf]
  %v8666 = vld [vmem:[%s8651 + $0x38] sm:$0xf]
  %v8667 = vld [vmem:[%s8651 + $0x3c] sm:$0xf]
  %v8684 = vunpack.c.l.b16 %v8652
  %v8685 = vunpack.c.l.b16 %v8653
  %v8686 = vunpack.c.l.b16 %v8654
  %v8687 = vunpack.c.l.b16 %v8655
  %v8688 = vunpack.c.l.b16 %v8656
  %v8689 = vunpack.c.l.b16 %v8657
  %v8690 = vunpack.c.l.b16 %v8658
  %v8691 = vunpack.c.l.b16 %v8659
  %v8692 = vunpack.c.l.b16 %v8660
  %v8693 = vunpack.c.l.b16 %v8661
  %v8694 = vunpack.c.l.b16 %v8662
  %v8695 = vunpack.c.l.b16 %v8663
  %v8696 = vunpack.c.l.b16 %v8664
  %v8697 = vunpack.c.l.b16 %v8665
  %v8698 = vunpack.c.l.b16 %v8666
  %v8699 = vunpack.c.l.b16 %v8667
  %v8700 = vpack.c.b16 %v8685, %v8684
  %v8701 = vpack.c.b16 %v8687, %v8686
  %v8702 = vpack.c.b16 %v8689, %v8688
  %v8703 = vpack.c.b16 %v8691, %v8690
  %v8704 = vpack.c.b16 %v8693, %v8692
  %v8705 = vpack.c.b16 %v8695, %v8694
  %v8706 = vpack.c.b16 %v8697, %v8696
  %v8707 = vpack.c.b16 %v8699, %v8698
  %8716 = vmatprep.subr.bf16.mxu0 0
  %8717 = vmatpush1.bf16.msra.mxu0 %v8707
  %8718 = vmatprep.subr.bf16.mxu0 0
  %8719 = vmatpush1.bf16.msra.mxu0 %v8706
  %8720 = vmatprep.subr.bf16.mxu0 0
  %8721 = vmatpush1.bf16.msra.mxu0 %v8705
  %8722 = vmatprep.subr.bf16.mxu0 0
  %8723 = vmatpush1.bf16.msra.mxu0 %v8704
  %8724 = vmatprep.subr.bf16.mxu0 0
  %8725 = vmatpush1.bf16.msra.mxu0 %v8703
  %8726 = vmatprep.subr.bf16.mxu0 0
  %8727 = vmatpush1.bf16.msra.mxu0 %v8702
  %8728 = vmatprep.subr.bf16.mxu0 0
  %8729 = vmatpush1.bf16.msra.mxu0 %v8701
  %8730 = vmatprep.subr.bf16.mxu0 0
  %8731 = vmatpush1.bf16.msra.mxu0 %v8700
  %8732 = vmatprep.subr.bf16.mxu0 0
  %8733 = vmatpush2.bf16.msra.mxu0 0
  %8734 = vmatprep.subr.bf16.mxu0 0
  %8735 = vmatpush2.bf16.msra.mxu0 0
  %8736 = vmatprep.subr.bf16.mxu0 0
  %8737 = vmatpush2.bf16.msra.mxu0 0
  %8738 = vmatprep.subr.bf16.mxu0 0
  %8739 = vmatpush2.bf16.msra.mxu0 0
  %8740 = vmatprep.subr.bf16.mxu0 0
  %8741 = vmatpush2.bf16.msra.mxu0 0
  %8742 = vmatprep.subr.bf16.mxu0 0
  %8743 = vmatpush2.bf16.msra.mxu0 0
  %8744 = vmatprep.subr.bf16.mxu0 0
  %8745 = vmatpush2.bf16.msra.mxu0 0
  %8746 = vmatprep.subr.bf16.mxu0 0
  %8747 = vmatpush2.bf16.msra.mxu0 0
  %8748 = vmatprep.mubr.bf16.mxu0 0
  %8749 = vmatmul.mubr.bf16.gmra.mxu0 %v8628
  %v8750 = vpop.f32.mrf.mxu0
  %v8751 = vadd.f32 0.0, %v8750
  %v8752 = vpop.f32.mrf.mxu0
  %v8753 = vpop.f32.mrf.mxu0
  %v8754 = vadd.f32 0.0, %v8753
  %v8755 = vpop.f32.mrf.mxu0
  %8756 = vmatprep.mubr.bf16.mxu0 0
  %8757 = vmatmul.mubr.bf16.gmra.mxu0 %v8631
  %v8758 = vpop.f32.mrf.mxu0
  %v8759 = vadd.f32 0.0, %v8758
  %v8760 = vpop.f32.mrf.mxu0
  %v8761 = vpop.f32.mrf.mxu0
  %v8762 = vadd.f32 0.0, %v8761
  %v8763 = vpop.f32.mrf.mxu0
  %8764 = vmatprep.mubr.bf16.mxu0 0
  %8765 = vmatmul.mubr.bf16.gmra.mxu0 %v8634
  %v8766 = vpop.f32.mrf.mxu0
  %v8767 = vadd.f32 0.0, %v8766
  %v8768 = vpop.f32.mrf.mxu0
  %v8769 = vpop.f32.mrf.mxu0
  %v8770 = vadd.f32 0.0, %v8769
  %v8771 = vpop.f32.mrf.mxu0
  %8772 = vmatprep.mubr.bf16.mxu0 0
  %8773 = vmatmul.mubr.bf16.gmra.mxu0 %v8637
  %v8774 = vpop.f32.mrf.mxu0
  %v8775 = vadd.f32 0.0, %v8774
  %v8776 = vpop.f32.mrf.mxu0
  %v8777 = vpop.f32.mrf.mxu0
  %v8778 = vadd.f32 0.0, %v8777
  %v8779 = vpop.f32.mrf.mxu0
  %8780 = vmatprep.mubr.bf16.mxu0 0
  %8781 = vmatmul.mubr.bf16.gmra.mxu0 %v8640
  %v8782 = vpop.f32.mrf.mxu0
  %v8783 = vadd.f32 0.0, %v8782
  %v8784 = vpop.f32.mrf.mxu0
  %v8785 = vpop.f32.mrf.mxu0
  %v8786 = vadd.f32 0.0, %v8785
  %v8787 = vpop.f32.mrf.mxu0
  %8788 = vmatprep.mubr.bf16.mxu0 0
  %8789 = vmatmul.mubr.bf16.gmra.mxu0 %v8643
  %v8790 = vpop.f32.mrf.mxu0
  %v8791 = vadd.f32 0.0, %v8790
  %v8792 = vpop.f32.mrf.mxu0
  %v8793 = vpop.f32.mrf.mxu0
  %v8794 = vadd.f32 0.0, %v8793
  %v8795 = vpop.f32.mrf.mxu0
  %8796 = vmatprep.mubr.bf16.mxu0 0
  %8797 = vmatmul.mubr.bf16.gmra.mxu0 %v8646
  %v8798 = vpop.f32.mrf.mxu0
  %v8799 = vadd.f32 0.0, %v8798
  %v8800 = vpop.f32.mrf.mxu0
  %v8801 = vpop.f32.mrf.mxu0
  %v8802 = vadd.f32 0.0, %v8801
  %v8803 = vpop.f32.mrf.mxu0
  %8804 = vmatprep.mubr.bf16.mxu0 0
  %8805 = vmatmul.mubr.bf16.gmra.mxu0 %v8649
  %v8806 = vpop.f32.mrf.mxu0
  %v8807 = vadd.f32 0.0, %v8806
  %v8808 = vpop.f32.mrf.mxu0
  %v8809 = vpop.f32.mrf.mxu0
  %v8810 = vadd.f32 0.0, %v8809
  %v8811 = vpop.f32.mrf.mxu0
  %8812 = vdwg.mxu0
  %v8813 = vmul.f32 %v8751, %v8137
  %v8814 = vmul.f32 %v8754, %v8137
  %v8815 = vmul.f32 %v8759, %v8137
  %v8816 = vmul.f32 %v8762, %v8137
  %v8817 = vmul.f32 %v8767, %v8137
  %v8818 = vmul.f32 %v8770, %v8137
  %v8819 = vmul.f32 %v8775, %v8137
  %v8820 = vmul.f32 %v8778, %v8137
  %v8821 = vmul.f32 %v8783, %v8137
  %v8822 = vmul.f32 %v8786, %v8137
  %v8823 = vmul.f32 %v8791, %v8137
  %v8824 = vmul.f32 %v8794, %v8137
  %v8825 = vmul.f32 %v8799, %v8137
  %v8826 = vmul.f32 %v8802, %v8137
  %v8827 = vmul.f32 %v8807, %v8137
  %v8828 = vmul.f32 %v8810, %v8137
  %v8829 = vadd.f32 %v8813, %v8159
  %v8830 = vadd.f32 %v8814, %v8159
  %v8831 = vadd.f32 %v8815, %v8159
  %v8832 = vadd.f32 %v8816, %v8159
  %v8833 = vadd.f32 %v8817, %v8159
  %v8834 = vadd.f32 %v8818, %v8159
  %v8835 = vadd.f32 %v8819, %v8159
  %v8836 = vadd.f32 %v8820, %v8159
  %v8837 = vadd.f32 %v8821, %v8159
  %v8838 = vadd.f32 %v8822, %v8159
  %v8839 = vadd.f32 %v8823, %v8159
  %v8840 = vadd.f32 %v8824, %v8159
  %v8841 = vadd.f32 %v8825, %v8159
  %v8842 = vadd.f32 %v8826, %v8159
  %v8843 = vadd.f32 %v8827, %v8159
  %v8844 = vadd.f32 %v8828, %v8159
  %v8845 = vmax.f32 %v8829, 0.0
  %v8846 = vmax.f32 %v8830, 0.0
  %v8847 = vmax.f32 %v8831, 0.0
  %v8848 = vmax.f32 %v8832, 0.0
  %v8849 = vmax.f32 %v8833, 0.0
  %v8850 = vmax.f32 %v8834, 0.0
  %v8851 = vmax.f32 %v8835, 0.0
  %v8852 = vmax.f32 %v8836, 0.0
  %v8853 = vmax.f32 %v8837, 0.0
  %v8854 = vmax.f32 %v8838, 0.0
  %v8855 = vmax.f32 %v8839, 0.0
  %v8856 = vmax.f32 %v8840, 0.0
  %v8857 = vmax.f32 %v8841, 0.0
  %v8858 = vmax.f32 %v8842, 0.0
  %v8859 = vmax.f32 %v8843, 0.0
  %v8860 = vmax.f32 %v8844, 0.0
  %s8861 = scalar_lea.vmem [#allocation2], 128
  %v8862 = vld [vmem:[%s8861] sm:$0xff]
  %v8863 = vld [vmem:[%s8861 + $0x8] sm:$0xff]
  %v8864 = vld [vmem:[%s8861 + $0x10] sm:$0xff]
  %v8865 = vld [vmem:[%s8861 + $0x18] sm:$0xff]
  %v8866 = vld [vmem:[%s8861 + $0x20] sm:$0xff]
  %v8867 = vld [vmem:[%s8861 + $0x28] sm:$0xff]
  %v8868 = vld [vmem:[%s8861 + $0x30] sm:$0xff]
  %v8869 = vld [vmem:[%s8861 + $0x38] sm:$0xff]
  %v8870 = vld [vmem:[%s8861 + $0x40] sm:$0xff]
  %v8871 = vld [vmem:[%s8861 + $0x48] sm:$0xff]
  %v8872 = vld [vmem:[%s8861 + $0x50] sm:$0xff]
  %v8873 = vld [vmem:[%s8861 + $0x58] sm:$0xff]
  %v8874 = vld [vmem:[%s8861 + $0x60] sm:$0xff]
  %v8875 = vld [vmem:[%s8861 + $0x68] sm:$0xff]
  %v8876 = vld [vmem:[%s8861 + $0x70] sm:$0xff]
  %v8877 = vld [vmem:[%s8861 + $0x78] sm:$0xff]
  %v8878 = vadd.f32 %v8845, %v8862
  %v8879 = vadd.f32 %v8846, %v8863
  %v8880 = vadd.f32 %v8847, %v8864
  %v8881 = vadd.f32 %v8848, %v8865
  %v8882 = vadd.f32 %v8849, %v8866
  %v8883 = vadd.f32 %v8850, %v8867
  %v8884 = vadd.f32 %v8851, %v8868
  %v8885 = vadd.f32 %v8852, %v8869
  %v8886 = vadd.f32 %v8853, %v8870
  %v8887 = vadd.f32 %v8854, %v8871
  %v8888 = vadd.f32 %v8855, %v8872
  %v8889 = vadd.f32 %v8856, %v8873
  %v8890 = vadd.f32 %v8857, %v8874
  %v8891 = vadd.f32 %v8858, %v8875
  %v8892 = vadd.f32 %v8859, %v8876
  %v8893 = vadd.f32 %v8860, %v8877
  %v8894 = vmul.f32 %v8878, %v8229
  %v8895 = vmul.f32 %v8879, %v8229
  %v8896 = vmul.f32 %v8880, %v8229
  %v8897 = vmul.f32 %v8881, %v8229
  %v8898 = vmul.f32 %v8882, %v8229
  %v8899 = vmul.f32 %v8883, %v8229
  %v8900 = vmul.f32 %v8884, %v8229
  %v8901 = vmul.f32 %v8885, %v8229
  %v8902 = vmul.f32 %v8886, %v8229
  %v8903 = vmul.f32 %v8887, %v8229
  %v8904 = vmul.f32 %v8888, %v8229
  %v8905 = vmul.f32 %v8889, %v8229
  %v8906 = vmul.f32 %v8890, %v8229
  %v8907 = vmul.f32 %v8891, %v8229
  %v8908 = vmul.f32 %v8892, %v8229
  %v8909 = vmul.f32 %v8893, %v8229
  %8910 = vadd.xlane.f32.xlu0 %v8894
  %v8911 = vpop.xlane.xlu0 %8910
  %8912 = vadd.xlane.f32.xlu0 %v8895
  %v8913 = vpop.xlane.xlu0 %8912
  %8914 = vadd.xlane.f32.xlu0 %v8896
  %v8915 = vpop.xlane.xlu0 %8914
  %8916 = vadd.xlane.f32.xlu0 %v8897
  %v8917 = vpop.xlane.xlu0 %8916
  %8918 = vadd.xlane.f32.xlu0 %v8898
  %v8919 = vpop.xlane.xlu0 %8918
  %8920 = vadd.xlane.f32.xlu0 %v8899
  %v8921 = vpop.xlane.xlu0 %8920
  %8922 = vadd.xlane.f32.xlu0 %v8900
  %v8923 = vpop.xlane.xlu0 %8922
  %8924 = vadd.xlane.f32.xlu0 %v8901
  %v8925 = vpop.xlane.xlu0 %8924
  %8926 = vadd.xlane.f32.xlu0 %v8902
  %v8927 = vpop.xlane.xlu0 %8926
  %8928 = vadd.xlane.f32.xlu0 %v8903
  %v8929 = vpop.xlane.xlu0 %8928
  %8930 = vadd.xlane.f32.xlu0 %v8904
  %v8931 = vpop.xlane.xlu0 %8930
  %8932 = vadd.xlane.f32.xlu0 %v8905
  %v8933 = vpop.xlane.xlu0 %8932
  %8934 = vadd.xlane.f32.xlu0 %v8906
  %v8935 = vpop.xlane.xlu0 %8934
  %8936 = vadd.xlane.f32.xlu0 %v8907
  %v8937 = vpop.xlane.xlu0 %8936
  %8938 = vadd.xlane.f32.xlu0 %v8908
  %v8939 = vpop.xlane.xlu0 %8938
  %8940 = vadd.xlane.f32.xlu0 %v8909
  %v8941 = vpop.xlane.xlu0 %8940
  %v8942 = vadd.f32 %v8911, %v8279
  %v8943 = vadd.f32 %v8913, %v8279
  %v8944 = vadd.f32 %v8915, %v8279
  %v8945 = vadd.f32 %v8917, %v8279
  %v8946 = vadd.f32 %v8919, %v8279
  %v8947 = vadd.f32 %v8921, %v8279
  %v8948 = vadd.f32 %v8923, %v8279
  %v8949 = vadd.f32 %v8925, %v8279
  %v8950 = vadd.f32 %v8927, %v8279
  %v8951 = vadd.f32 %v8929, %v8279
  %v8952 = vadd.f32 %v8931, %v8279
  %v8953 = vadd.f32 %v8933, %v8279
  %v8954 = vadd.f32 %v8935, %v8279
  %v8955 = vadd.f32 %v8937, %v8279
  %v8956 = vadd.f32 %v8939, %v8279
  %v8957 = vadd.f32 %v8941, %v8279
  %vm8958 = vcmp.eq.s32.totalorder %v7923, 1
  %v8959 = vsel %vm8958, 1, 0
  %vm8960 = vcmp.eq.s32.totalorder %v8959, 1
  %v8961 = vsel %vm8960, %v8942, 0.0
  %v8962 = vsel %vm8960, %v8943, 0.0
  %v8963 = vsel %vm8960, %v8944, 0.0
  %v8964 = vsel %vm8960, %v8945, 0.0
  %v8965 = vsel %vm8960, %v8946, 0.0
  %v8966 = vsel %vm8960, %v8947, 0.0
  %v8967 = vsel %vm8960, %v8948, 0.0
  %v8968 = vsel %vm8960, %v8949, 0.0
  %v8969 = vsel %vm8960, %v8950, 0.0
  %v8970 = vsel %vm8960, %v8951, 0.0
  %v8971 = vsel %vm8960, %v8952, 0.0
  %v8972 = vsel %vm8960, %v8953, 0.0
  %v8973 = vsel %vm8960, %v8954, 0.0
  %v8974 = vsel %vm8960, %v8955, 0.0
  %v8975 = vsel %vm8960, %v8956, 0.0
  %v8976 = vsel %vm8960, %v8957, 0.0
  %v8977 = vadd.f32 %v8315, %v8961
  %v8978 = vadd.f32 %v8316, %v8962
  %v8979 = vadd.f32 %v8317, %v8963
  %v8980 = vadd.f32 %v8318, %v8964
  %v8981 = vadd.f32 %v8319, %v8965
  %v8982 = vadd.f32 %v8320, %v8966
  %v8983 = vadd.f32 %v8321, %v8967
  %v8984 = vadd.f32 %v8322, %v8968
  %v8985 = vadd.f32 %v8323, %v8969
  %v8986 = vadd.f32 %v8324, %v8970
  %v8987 = vadd.f32 %v8325, %v8971
  %v8988 = vadd.f32 %v8326, %v8972
  %v8989 = vadd.f32 %v8327, %v8973
  %v8990 = vadd.f32 %v8328, %v8974
  %v8991 = vadd.f32 %v8329, %v8975
  %v8992 = vadd.f32 %v8330, %v8976
  %s8993 = scalar_lea.vmem [#allocation5], 8
  %v8994 = vld [vmem:[%s8993] sm:$0xf]
  %v8995 = vld [vmem:[%s8993 + $0x8] sm:$0xf]
  %v8996 = vld [vmem:[%s8993 + $0x10] sm:$0xf]
  %v8997 = vld [vmem:[%s8993 + $0x18] sm:$0xf]
  %v8998 = vld [vmem:[%s8993 + $0x20] sm:$0xf]
  %v8999 = vld [vmem:[%s8993 + $0x28] sm:$0xf]
  %v9000 = vld [vmem:[%s8993 + $0x30] sm:$0xf]
  %v9001 = vld [vmem:[%s8993 + $0x38] sm:$0xf]
  %v9002 = vld [vmem:[%s8993 + $0x48] sm:$0xf]
  %v9003 = vld [vmem:[%s8993 + $0x50] sm:$0xf]
  %v9004 = vld [vmem:[%s8993 + $0x58] sm:$0xf]
  %v9005 = vld [vmem:[%s8993 + $0x60] sm:$0xf]
  %v9006 = vld [vmem:[%s8993 + $0x68] sm:$0xf]
  %v9007 = vld [vmem:[%s8993 + $0x70] sm:$0xf]
  %v9008 = vld [vmem:[%s8993 + $0x78] sm:$0xf]
  %v9009 = vld [vmem:[%s8993 + $0x80] sm:$0xf]
  %v9026 = vunpack.c.l.b16 %v8994
  %v9027 = vunpack.c.l.b16 %v8995
  %v9028 = vunpack.c.l.b16 %v8996
  %v9029 = vunpack.c.l.b16 %v8997
  %v9030 = vunpack.c.l.b16 %v8998
  %v9031 = vunpack.c.l.b16 %v8999
  %v9032 = vunpack.c.l.b16 %v9000
  %v9033 = vunpack.c.l.b16 %v9001
  %v9034 = vunpack.c.l.b16 %v9002
  %v9035 = vunpack.c.l.b16 %v9003
  %v9036 = vunpack.c.l.b16 %v9004
  %v9037 = vunpack.c.l.b16 %v9005
  %v9038 = vunpack.c.l.b16 %v9006
  %v9039 = vunpack.c.l.b16 %v9007
  %v9040 = vunpack.c.l.b16 %v9008
  %v9041 = vunpack.c.l.b16 %v9009
  %v9042 = vpack.c.b16 %v9027, %v9026
  %v9043 = vpack.c.b16 %v9029, %v9028
  %v9044 = vpack.c.b16 %v9031, %v9030
  %v9045 = vpack.c.b16 %v9033, %v9032
  %v9046 = vpack.c.b16 %v9035, %v9034
  %v9047 = vpack.c.b16 %v9037, %v9036
  %v9048 = vpack.c.b16 %v9039, %v9038
  %v9049 = vpack.c.b16 %v9041, %v9040
  %9050 = vrot.lane.b32.xlu0 %v9042, 64
  %v9051 = vpop.permute.xlu0 %9050
  %9052 = vrot.lane.b32.xlu0 %v9043, 64
  %v9053 = vpop.permute.xlu0 %9052
  %9054 = vrot.lane.b32.xlu0 %v9044, 64
  %v9055 = vpop.permute.xlu0 %9054
  %9056 = vrot.lane.b32.xlu0 %v9045, 64
  %v9057 = vpop.permute.xlu0 %9056
  %9058 = vrot.lane.b32.xlu0 %v9046, 64
  %v9059 = vpop.permute.xlu0 %9058
  %9060 = vrot.lane.b32.xlu0 %v9047, 64
  %v9061 = vpop.permute.xlu0 %9060
  %9062 = vrot.lane.b32.xlu0 %v9048, 64
  %v9063 = vpop.permute.xlu0 %9062
  %9064 = vrot.lane.b32.xlu0 %v9049, 64
  %v9065 = vpop.permute.xlu0 %9064
  %v9067 = vsel %vm7044, %v7980, %v9051
  %v9070 = vsel %vm7044, %v7981, %v9053
  %v9073 = vsel %vm7044, %v7982, %v9055
  %v9076 = vsel %vm7044, %v7983, %v9057
  %v9079 = vsel %vm7044, %v7984, %v9059
  %v9082 = vsel %vm7044, %v7985, %v9061
  %v9085 = vsel %vm7044, %v7986, %v9063
  %v9088 = vsel %vm7044, %v7987, %v9065
  %s9090 = scalar_lea.vmem %s10, 256
  %v9091 = vld [vmem:[%s9090] sm:$0xf]
  %v9092 = vld [vmem:[%s9090 + $0x4] sm:$0xf]
  %v9093 = vld [vmem:[%s9090 + $0x8] sm:$0xf]
  %v9094 = vld [vmem:[%s9090 + $0xc] sm:$0xf]
  %v9095 = vld [vmem:[%s9090 + $0x10] sm:$0xf]
  %v9096 = vld [vmem:[%s9090 + $0x14] sm:$0xf]
  %v9097 = vld [vmem:[%s9090 + $0x18] sm:$0xf]
  %v9098 = vld [vmem:[%s9090 + $0x1c] sm:$0xf]
  %v9099 = vld [vmem:[%s9090 + $0x20] sm:$0xf]
  %v9100 = vld [vmem:[%s9090 + $0x24] sm:$0xf]
  %v9101 = vld [vmem:[%s9090 + $0x28] sm:$0xf]
  %v9102 = vld [vmem:[%s9090 + $0x2c] sm:$0xf]
  %v9103 = vld [vmem:[%s9090 + $0x30] sm:$0xf]
  %v9104 = vld [vmem:[%s9090 + $0x34] sm:$0xf]
  %v9105 = vld [vmem:[%s9090 + $0x38] sm:$0xf]
  %v9106 = vld [vmem:[%s9090 + $0x3c] sm:$0xf]
  %v9123 = vunpack.c.l.b16 %v9091
  %v9124 = vunpack.c.l.b16 %v9092
  %v9125 = vunpack.c.l.b16 %v9093
  %v9126 = vunpack.c.l.b16 %v9094
  %v9127 = vunpack.c.l.b16 %v9095
  %v9128 = vunpack.c.l.b16 %v9096
  %v9129 = vunpack.c.l.b16 %v9097
  %v9130 = vunpack.c.l.b16 %v9098
  %v9131 = vunpack.c.l.b16 %v9099
  %v9132 = vunpack.c.l.b16 %v9100
  %v9133 = vunpack.c.l.b16 %v9101
  %v9134 = vunpack.c.l.b16 %v9102
  %v9135 = vunpack.c.l.b16 %v9103
  %v9136 = vunpack.c.l.b16 %v9104
  %v9137 = vunpack.c.l.b16 %v9105
  %v9138 = vunpack.c.l.b16 %v9106
  %v9139 = vpack.c.b16 %v9124, %v9123
  %v9140 = vpack.c.b16 %v9126, %v9125
  %v9141 = vpack.c.b16 %v9128, %v9127
  %v9142 = vpack.c.b16 %v9130, %v9129
  %v9143 = vpack.c.b16 %v9132, %v9131
  %v9144 = vpack.c.b16 %v9134, %v9133
  %v9145 = vpack.c.b16 %v9136, %v9135
  %v9146 = vpack.c.b16 %v9138, %v9137
  %9155 = vmatprep.subr.bf16.mxu0 0
  %9156 = vmatpush1.bf16.msra.mxu0 %v9146
  %9157 = vmatprep.subr.bf16.mxu0 0
  %9158 = vmatpush1.bf16.msra.mxu0 %v9145
  %9159 = vmatprep.subr.bf16.mxu0 0
  %9160 = vmatpush1.bf16.msra.mxu0 %v9144
  %9161 = vmatprep.subr.bf16.mxu0 0
  %9162 = vmatpush1.bf16.msra.mxu0 %v9143
  %9163 = vmatprep.subr.bf16.mxu0 0
  %9164 = vmatpush1.bf16.msra.mxu0 %v9142
  %9165 = vmatprep.subr.bf16.mxu0 0
  %9166 = vmatpush1.bf16.msra.mxu0 %v9141
  %9167 = vmatprep.subr.bf16.mxu0 0
  %9168 = vmatpush1.bf16.msra.mxu0 %v9140
  %9169 = vmatprep.subr.bf16.mxu0 0
  %9170 = vmatpush1.bf16.msra.mxu0 %v9139
  %9171 = vmatprep.subr.bf16.mxu0 0
  %9172 = vmatpush2.bf16.msra.mxu0 0
  %9173 = vmatprep.subr.bf16.mxu0 0
  %9174 = vmatpush2.bf16.msra.mxu0 0
  %9175 = vmatprep.subr.bf16.mxu0 0
  %9176 = vmatpush2.bf16.msra.mxu0 0
  %9177 = vmatprep.subr.bf16.mxu0 0
  %9178 = vmatpush2.bf16.msra.mxu0 0
  %9179 = vmatprep.subr.bf16.mxu0 0
  %9180 = vmatpush2.bf16.msra.mxu0 0
  %9181 = vmatprep.subr.bf16.mxu0 0
  %9182 = vmatpush2.bf16.msra.mxu0 0
  %9183 = vmatprep.subr.bf16.mxu0 0
  %9184 = vmatpush2.bf16.msra.mxu0 0
  %9185 = vmatprep.subr.bf16.mxu0 0
  %9186 = vmatpush2.bf16.msra.mxu0 0
  %9187 = vmatprep.mubr.bf16.mxu0 0
  %9188 = vmatmul.mubr.bf16.gmra.mxu0 %v9067
  %v9189 = vpop.f32.mrf.mxu0
  %v9190 = vadd.f32 0.0, %v9189
  %v9191 = vpop.f32.mrf.mxu0
  %v9192 = vpop.f32.mrf.mxu0
  %v9193 = vadd.f32 0.0, %v9192
  %v9194 = vpop.f32.mrf.mxu0
  %9195 = vmatprep.mubr.bf16.mxu0 0
  %9196 = vmatmul.mubr.bf16.gmra.mxu0 %v9070
  %v9197 = vpop.f32.mrf.mxu0
  %v9198 = vadd.f32 0.0, %v9197
  %v9199 = vpop.f32.mrf.mxu0
  %v9200 = vpop.f32.mrf.mxu0
  %v9201 = vadd.f32 0.0, %v9200
  %v9202 = vpop.f32.mrf.mxu0
  %9203 = vmatprep.mubr.bf16.mxu0 0
  %9204 = vmatmul.mubr.bf16.gmra.mxu0 %v9073
  %v9205 = vpop.f32.mrf.mxu0
  %v9206 = vadd.f32 0.0, %v9205
  %v9207 = vpop.f32.mrf.mxu0
  %v9208 = vpop.f32.mrf.mxu0
  %v9209 = vadd.f32 0.0, %v9208
  %v9210 = vpop.f32.mrf.mxu0
  %9211 = vmatprep.mubr.bf16.mxu0 0
  %9212 = vmatmul.mubr.bf16.gmra.mxu0 %v9076
  %v9213 = vpop.f32.mrf.mxu0
  %v9214 = vadd.f32 0.0, %v9213
  %v9215 = vpop.f32.mrf.mxu0
  %v9216 = vpop.f32.mrf.mxu0
  %v9217 = vadd.f32 0.0, %v9216
  %v9218 = vpop.f32.mrf.mxu0
  %9219 = vmatprep.mubr.bf16.mxu0 0
  %9220 = vmatmul.mubr.bf16.gmra.mxu0 %v9079
  %v9221 = vpop.f32.mrf.mxu0
  %v9222 = vadd.f32 0.0, %v9221
  %v9223 = vpop.f32.mrf.mxu0
  %v9224 = vpop.f32.mrf.mxu0
  %v9225 = vadd.f32 0.0, %v9224
  %v9226 = vpop.f32.mrf.mxu0
  %9227 = vmatprep.mubr.bf16.mxu0 0
  %9228 = vmatmul.mubr.bf16.gmra.mxu0 %v9082
  %v9229 = vpop.f32.mrf.mxu0
  %v9230 = vadd.f32 0.0, %v9229
  %v9231 = vpop.f32.mrf.mxu0
  %v9232 = vpop.f32.mrf.mxu0
  %v9233 = vadd.f32 0.0, %v9232
  %v9234 = vpop.f32.mrf.mxu0
  %9235 = vmatprep.mubr.bf16.mxu0 0
  %9236 = vmatmul.mubr.bf16.gmra.mxu0 %v9085
  %v9237 = vpop.f32.mrf.mxu0
  %v9238 = vadd.f32 0.0, %v9237
  %v9239 = vpop.f32.mrf.mxu0
  %v9240 = vpop.f32.mrf.mxu0
  %v9241 = vadd.f32 0.0, %v9240
  %v9242 = vpop.f32.mrf.mxu0
  %9243 = vmatprep.mubr.bf16.mxu0 0
  %9244 = vmatmul.mubr.bf16.gmra.mxu0 %v9088
  %v9245 = vpop.f32.mrf.mxu0
  %v9246 = vadd.f32 0.0, %v9245
  %v9247 = vpop.f32.mrf.mxu0
  %v9248 = vpop.f32.mrf.mxu0
  %v9249 = vadd.f32 0.0, %v9248
  %v9250 = vpop.f32.mrf.mxu0
  %9251 = vdwg.mxu0
  %v9252 = vmul.f32 %v9190, %v8137
  %v9253 = vmul.f32 %v9193, %v8137
  %v9254 = vmul.f32 %v9198, %v8137
  %v9255 = vmul.f32 %v9201, %v8137
  %v9256 = vmul.f32 %v9206, %v8137
  %v9257 = vmul.f32 %v9209, %v8137
  %v9258 = vmul.f32 %v9214, %v8137
  %v9259 = vmul.f32 %v9217, %v8137
  %v9260 = vmul.f32 %v9222, %v8137
  %v9261 = vmul.f32 %v9225, %v8137
  %v9262 = vmul.f32 %v9230, %v8137
  %v9263 = vmul.f32 %v9233, %v8137
  %v9264 = vmul.f32 %v9238, %v8137
  %v9265 = vmul.f32 %v9241, %v8137
  %v9266 = vmul.f32 %v9246, %v8137
  %v9267 = vmul.f32 %v9249, %v8137
  %v9268 = vadd.f32 %v9252, %v8159
  %v9269 = vadd.f32 %v9253, %v8159
  %v9270 = vadd.f32 %v9254, %v8159
  %v9271 = vadd.f32 %v9255, %v8159
  %v9272 = vadd.f32 %v9256, %v8159
  %v9273 = vadd.f32 %v9257, %v8159
  %v9274 = vadd.f32 %v9258, %v8159
  %v9275 = vadd.f32 %v9259, %v8159
  %v9276 = vadd.f32 %v9260, %v8159
  %v9277 = vadd.f32 %v9261, %v8159
  %v9278 = vadd.f32 %v9262, %v8159
  %v9279 = vadd.f32 %v9263, %v8159
  %v9280 = vadd.f32 %v9264, %v8159
  %v9281 = vadd.f32 %v9265, %v8159
  %v9282 = vadd.f32 %v9266, %v8159
  %v9283 = vadd.f32 %v9267, %v8159
  %v9284 = vmax.f32 %v9268, 0.0
  %v9285 = vmax.f32 %v9269, 0.0
  %v9286 = vmax.f32 %v9270, 0.0
  %v9287 = vmax.f32 %v9271, 0.0
  %v9288 = vmax.f32 %v9272, 0.0
  %v9289 = vmax.f32 %v9273, 0.0
  %v9290 = vmax.f32 %v9274, 0.0
  %v9291 = vmax.f32 %v9275, 0.0
  %v9292 = vmax.f32 %v9276, 0.0
  %v9293 = vmax.f32 %v9277, 0.0
  %v9294 = vmax.f32 %v9278, 0.0
  %v9295 = vmax.f32 %v9279, 0.0
  %v9296 = vmax.f32 %v9280, 0.0
  %v9297 = vmax.f32 %v9281, 0.0
  %v9298 = vmax.f32 %v9282, 0.0
  %v9299 = vmax.f32 %v9283, 0.0
  %s9300 = scalar_lea.vmem [#allocation2], 256
  %v9301 = vld [vmem:[%s9300] sm:$0xff]
  %v9302 = vld [vmem:[%s9300 + $0x8] sm:$0xff]
  %v9303 = vld [vmem:[%s9300 + $0x10] sm:$0xff]
  %v9304 = vld [vmem:[%s9300 + $0x18] sm:$0xff]
  %v9305 = vld [vmem:[%s9300 + $0x20] sm:$0xff]
  %v9306 = vld [vmem:[%s9300 + $0x28] sm:$0xff]
  %v9307 = vld [vmem:[%s9300 + $0x30] sm:$0xff]
  %v9308 = vld [vmem:[%s9300 + $0x38] sm:$0xff]
  %v9309 = vld [vmem:[%s9300 + $0x40] sm:$0xff]
  %v9310 = vld [vmem:[%s9300 + $0x48] sm:$0xff]
  %v9311 = vld [vmem:[%s9300 + $0x50] sm:$0xff]
  %v9312 = vld [vmem:[%s9300 + $0x58] sm:$0xff]
  %v9313 = vld [vmem:[%s9300 + $0x60] sm:$0xff]
  %v9314 = vld [vmem:[%s9300 + $0x68] sm:$0xff]
  %v9315 = vld [vmem:[%s9300 + $0x70] sm:$0xff]
  %v9316 = vld [vmem:[%s9300 + $0x78] sm:$0xff]
  %v9317 = vadd.f32 %v9284, %v9301
  %v9318 = vadd.f32 %v9285, %v9302
  %v9319 = vadd.f32 %v9286, %v9303
  %v9320 = vadd.f32 %v9287, %v9304
  %v9321 = vadd.f32 %v9288, %v9305
  %v9322 = vadd.f32 %v9289, %v9306
  %v9323 = vadd.f32 %v9290, %v9307
  %v9324 = vadd.f32 %v9291, %v9308
  %v9325 = vadd.f32 %v9292, %v9309
  %v9326 = vadd.f32 %v9293, %v9310
  %v9327 = vadd.f32 %v9294, %v9311
  %v9328 = vadd.f32 %v9295, %v9312
  %v9329 = vadd.f32 %v9296, %v9313
  %v9330 = vadd.f32 %v9297, %v9314
  %v9331 = vadd.f32 %v9298, %v9315
  %v9332 = vadd.f32 %v9299, %v9316
  %v9333 = vmul.f32 %v9317, %v8229
  %v9334 = vmul.f32 %v9318, %v8229
  %v9335 = vmul.f32 %v9319, %v8229
  %v9336 = vmul.f32 %v9320, %v8229
  %v9337 = vmul.f32 %v9321, %v8229
  %v9338 = vmul.f32 %v9322, %v8229
  %v9339 = vmul.f32 %v9323, %v8229
  %v9340 = vmul.f32 %v9324, %v8229
  %v9341 = vmul.f32 %v9325, %v8229
  %v9342 = vmul.f32 %v9326, %v8229
  %v9343 = vmul.f32 %v9327, %v8229
  %v9344 = vmul.f32 %v9328, %v8229
  %v9345 = vmul.f32 %v9329, %v8229
  %v9346 = vmul.f32 %v9330, %v8229
  %v9347 = vmul.f32 %v9331, %v8229
  %v9348 = vmul.f32 %v9332, %v8229
  %9349 = vadd.xlane.f32.xlu0 %v9333
  %v9350 = vpop.xlane.xlu0 %9349
  %9351 = vadd.xlane.f32.xlu0 %v9334
  %v9352 = vpop.xlane.xlu0 %9351
  %9353 = vadd.xlane.f32.xlu0 %v9335
  %v9354 = vpop.xlane.xlu0 %9353
  %9355 = vadd.xlane.f32.xlu0 %v9336
  %v9356 = vpop.xlane.xlu0 %9355
  %9357 = vadd.xlane.f32.xlu0 %v9337
  %v9358 = vpop.xlane.xlu0 %9357
  %9359 = vadd.xlane.f32.xlu0 %v9338
  %v9360 = vpop.xlane.xlu0 %9359
  %9361 = vadd.xlane.f32.xlu0 %v9339
  %v9362 = vpop.xlane.xlu0 %9361
  %9363 = vadd.xlane.f32.xlu0 %v9340
  %v9364 = vpop.xlane.xlu0 %9363
  %9365 = vadd.xlane.f32.xlu0 %v9341
  %v9366 = vpop.xlane.xlu0 %9365
  %9367 = vadd.xlane.f32.xlu0 %v9342
  %v9368 = vpop.xlane.xlu0 %9367
  %9369 = vadd.xlane.f32.xlu0 %v9343
  %v9370 = vpop.xlane.xlu0 %9369
  %9371 = vadd.xlane.f32.xlu0 %v9344
  %v9372 = vpop.xlane.xlu0 %9371
  %9373 = vadd.xlane.f32.xlu0 %v9345
  %v9374 = vpop.xlane.xlu0 %9373
  %9375 = vadd.xlane.f32.xlu0 %v9346
  %v9376 = vpop.xlane.xlu0 %9375
  %9377 = vadd.xlane.f32.xlu0 %v9347
  %v9378 = vpop.xlane.xlu0 %9377
  %9379 = vadd.xlane.f32.xlu0 %v9348
  %v9380 = vpop.xlane.xlu0 %9379
  %v9381 = vadd.f32 %v9350, %v8279
  %v9382 = vadd.f32 %v9352, %v8279
  %v9383 = vadd.f32 %v9354, %v8279
  %v9384 = vadd.f32 %v9356, %v8279
  %v9385 = vadd.f32 %v9358, %v8279
  %v9386 = vadd.f32 %v9360, %v8279
  %v9387 = vadd.f32 %v9362, %v8279
  %v9388 = vadd.f32 %v9364, %v8279
  %v9389 = vadd.f32 %v9366, %v8279
  %v9390 = vadd.f32 %v9368, %v8279
  %v9391 = vadd.f32 %v9370, %v8279
  %v9392 = vadd.f32 %v9372, %v8279
  %v9393 = vadd.f32 %v9374, %v8279
  %v9394 = vadd.f32 %v9376, %v8279
  %v9395 = vadd.f32 %v9378, %v8279
  %v9396 = vadd.f32 %v9380, %v8279
  %vm9397 = vcmp.eq.s32.totalorder %v7923, 2
  %v9398 = vsel %vm9397, 1, 0
  %vm9399 = vcmp.eq.s32.totalorder %v9398, 1
  %v9400 = vsel %vm9399, %v9381, 0.0
  %v9401 = vsel %vm9399, %v9382, 0.0
  %v9402 = vsel %vm9399, %v9383, 0.0
  %v9403 = vsel %vm9399, %v9384, 0.0
  %v9404 = vsel %vm9399, %v9385, 0.0
  %v9405 = vsel %vm9399, %v9386, 0.0
  %v9406 = vsel %vm9399, %v9387, 0.0
  %v9407 = vsel %vm9399, %v9388, 0.0
  %v9408 = vsel %vm9399, %v9389, 0.0
  %v9409 = vsel %vm9399, %v9390, 0.0
  %v9410 = vsel %vm9399, %v9391, 0.0
  %v9411 = vsel %vm9399, %v9392, 0.0
  %v9412 = vsel %vm9399, %v9393, 0.0
  %v9413 = vsel %vm9399, %v9394, 0.0
  %v9414 = vsel %vm9399, %v9395, 0.0
  %v9415 = vsel %vm9399, %v9396, 0.0
  %v9416 = vadd.f32 %v8977, %v9400
  %v9417 = vadd.f32 %v8978, %v9401
  %v9418 = vadd.f32 %v8979, %v9402
  %v9419 = vadd.f32 %v8980, %v9403
  %v9420 = vadd.f32 %v8981, %v9404
  %v9421 = vadd.f32 %v8982, %v9405
  %v9422 = vadd.f32 %v8983, %v9406
  %v9423 = vadd.f32 %v8984, %v9407
  %v9424 = vadd.f32 %v8985, %v9408
  %v9425 = vadd.f32 %v8986, %v9409
  %v9426 = vadd.f32 %v8987, %v9410
  %v9427 = vadd.f32 %v8988, %v9411
  %v9428 = vadd.f32 %v8989, %v9412
  %v9429 = vadd.f32 %v8990, %v9413
  %v9430 = vadd.f32 %v8991, %v9414
  %v9431 = vadd.f32 %v8992, %v9415
  %v9432 = vld [vmem:[%s8993] sm:$0xf]
  %v9433 = vld [vmem:[%s8993 + $0x4] sm:$0x1]
  %v9434 = vld [vmem:[%s8993 + $0x8] sm:$0xf]
  %v9435 = vld [vmem:[%s8993 + $0xc] sm:$0x1]
  %v9436 = vld [vmem:[%s8993 + $0x10] sm:$0xf]
  %v9437 = vld [vmem:[%s8993 + $0x14] sm:$0x1]
  %v9438 = vld [vmem:[%s8993 + $0x18] sm:$0xf]
  %v9439 = vld [vmem:[%s8993 + $0x1c] sm:$0x1]
  %v9440 = vld [vmem:[%s8993 + $0x20] sm:$0xf]
  %v9441 = vld [vmem:[%s8993 + $0x24] sm:$0x1]
  %v9442 = vld [vmem:[%s8993 + $0x28] sm:$0xf]
  %v9443 = vld [vmem:[%s8993 + $0x2c] sm:$0x1]
  %v9444 = vld [vmem:[%s8993 + $0x30] sm:$0xf]
  %v9445 = vld [vmem:[%s8993 + $0x34] sm:$0x1]
  %v9446 = vld [vmem:[%s8993 + $0x38] sm:$0xf]
  %v9447 = vld [vmem:[%s8993 + $0x3c] sm:$0x1]
  %v9448 = vld [vmem:[%s8993 + $0x48] sm:$0xf]
  %v9449 = vld [vmem:[%s8993 + $0x4c] sm:$0x1]
  %v9450 = vld [vmem:[%s8993 + $0x50] sm:$0xf]
  %v9451 = vld [vmem:[%s8993 + $0x54] sm:$0x1]
  %v9452 = vld [vmem:[%s8993 + $0x58] sm:$0xf]
  %v9453 = vld [vmem:[%s8993 + $0x5c] sm:$0x1]
  %v9454 = vld [vmem:[%s8993 + $0x60] sm:$0xf]
  %v9455 = vld [vmem:[%s8993 + $0x64] sm:$0x1]
  %v9456 = vld [vmem:[%s8993 + $0x68] sm:$0xf]
  %v9457 = vld [vmem:[%s8993 + $0x6c] sm:$0x1]
  %v9458 = vld [vmem:[%s8993 + $0x70] sm:$0xf]
  %v9459 = vld [vmem:[%s8993 + $0x74] sm:$0x1]
  %v9460 = vld [vmem:[%s8993 + $0x78] sm:$0xf]
  %v9461 = vld [vmem:[%s8993 + $0x7c] sm:$0x1]
  %v9462 = vld [vmem:[%s8993 + $0x80] sm:$0xf]
  %v9463 = vld [vmem:[%s8993 + $0x84] sm:$0x1]
  %v9465 = vshrl.u32 %v9432, 16
  %v9467 = vrot.slane %v9465, 4
  %v9468 = vshll.u32 %v9432, 16
  %v9470 = vrot.slane %v9468, 5
  %v9471 = vor.u32 %v9467, %v9470
  %v9472 = vrot.slane %v9471, 4
  %v9474 = vshll.u32 %v9433, 16
  %v9476 = vrot.slane %v9474, 5
  %v9477 = vsel %vm3025, %v9472, %v9476
  %v9479 = vshrl.u32 %v9434, 16
  %v9481 = vrot.slane %v9479, 4
  %v9482 = vshll.u32 %v9434, 16
  %v9484 = vrot.slane %v9482, 5
  %v9485 = vor.u32 %v9481, %v9484
  %v9486 = vrot.slane %v9485, 4
  %v9488 = vshll.u32 %v9435, 16
  %v9490 = vrot.slane %v9488, 5
  %v9491 = vsel %vm3025, %v9486, %v9490
  %v9493 = vshrl.u32 %v9436, 16
  %v9495 = vrot.slane %v9493, 4
  %v9496 = vshll.u32 %v9436, 16
  %v9498 = vrot.slane %v9496, 5
  %v9499 = vor.u32 %v9495, %v9498
  %v9500 = vrot.slane %v9499, 4
  %v9502 = vshll.u32 %v9437, 16
  %v9504 = vrot.slane %v9502, 5
  %v9505 = vsel %vm3025, %v9500, %v9504
  %v9507 = vshrl.u32 %v9438, 16
  %v9509 = vrot.slane %v9507, 4
  %v9510 = vshll.u32 %v9438, 16
  %v9512 = vrot.slane %v9510, 5
  %v9513 = vor.u32 %v9509, %v9512
  %v9514 = vrot.slane %v9513, 4
  %v9516 = vshll.u32 %v9439, 16
  %v9518 = vrot.slane %v9516, 5
  %v9519 = vsel %vm3025, %v9514, %v9518
  %v9521 = vshrl.u32 %v9440, 16
  %v9523 = vrot.slane %v9521, 4
  %v9524 = vshll.u32 %v9440, 16
  %v9526 = vrot.slane %v9524, 5
  %v9527 = vor.u32 %v9523, %v9526
  %v9528 = vrot.slane %v9527, 4
  %v9530 = vshll.u32 %v9441, 16
  %v9532 = vrot.slane %v9530, 5
  %v9533 = vsel %vm3025, %v9528, %v9532
  %v9535 = vshrl.u32 %v9442, 16
  %v9537 = vrot.slane %v9535, 4
  %v9538 = vshll.u32 %v9442, 16
  %v9540 = vrot.slane %v9538, 5
  %v9541 = vor.u32 %v9537, %v9540
  %v9542 = vrot.slane %v9541, 4
  %v9544 = vshll.u32 %v9443, 16
  %v9546 = vrot.slane %v9544, 5
  %v9547 = vsel %vm3025, %v9542, %v9546
  %v9549 = vshrl.u32 %v9444, 16
  %v9551 = vrot.slane %v9549, 4
  %v9552 = vshll.u32 %v9444, 16
  %v9554 = vrot.slane %v9552, 5
  %v9555 = vor.u32 %v9551, %v9554
  %v9556 = vrot.slane %v9555, 4
  %v9558 = vshll.u32 %v9445, 16
  %v9560 = vrot.slane %v9558, 5
  %v9561 = vsel %vm3025, %v9556, %v9560
  %v9563 = vshrl.u32 %v9446, 16
  %v9565 = vrot.slane %v9563, 4
  %v9566 = vshll.u32 %v9446, 16
  %v9568 = vrot.slane %v9566, 5
  %v9569 = vor.u32 %v9565, %v9568
  %v9570 = vrot.slane %v9569, 4
  %v9572 = vshll.u32 %v9447, 16
  %v9574 = vrot.slane %v9572, 5
  %v9575 = vsel %vm3025, %v9570, %v9574
  %v9577 = vshrl.u32 %v9448, 16
  %v9579 = vrot.slane %v9577, 4
  %v9580 = vshll.u32 %v9448, 16
  %v9582 = vrot.slane %v9580, 5
  %v9583 = vor.u32 %v9579, %v9582
  %v9584 = vrot.slane %v9583, 4
  %v9586 = vshll.u32 %v9449, 16
  %v9588 = vrot.slane %v9586, 5
  %v9589 = vsel %vm3025, %v9584, %v9588
  %v9591 = vshrl.u32 %v9450, 16
  %v9593 = vrot.slane %v9591, 4
  %v9594 = vshll.u32 %v9450, 16
  %v9596 = vrot.slane %v9594, 5
  %v9597 = vor.u32 %v9593, %v9596
  %v9598 = vrot.slane %v9597, 4
  %v9600 = vshll.u32 %v9451, 16
  %v9602 = vrot.slane %v9600, 5
  %v9603 = vsel %vm3025, %v9598, %v9602
  %v9605 = vshrl.u32 %v9452, 16
  %v9607 = vrot.slane %v9605, 4
  %v9608 = vshll.u32 %v9452, 16
  %v9610 = vrot.slane %v9608, 5
  %v9611 = vor.u32 %v9607, %v9610
  %v9612 = vrot.slane %v9611, 4
  %v9614 = vshll.u32 %v9453, 16
  %v9616 = vrot.slane %v9614, 5
  %v9617 = vsel %vm3025, %v9612, %v9616
  %v9619 = vshrl.u32 %v9454, 16
  %v9621 = vrot.slane %v9619, 4
  %v9622 = vshll.u32 %v9454, 16
  %v9624 = vrot.slane %v9622, 5
  %v9625 = vor.u32 %v9621, %v9624
  %v9626 = vrot.slane %v9625, 4
  %v9628 = vshll.u32 %v9455, 16
  %v9630 = vrot.slane %v9628, 5
  %v9631 = vsel %vm3025, %v9626, %v9630
  %v9633 = vshrl.u32 %v9456, 16
  %v9635 = vrot.slane %v9633, 4
  %v9636 = vshll.u32 %v9456, 16
  %v9638 = vrot.slane %v9636, 5
  %v9639 = vor.u32 %v9635, %v9638
  %v9640 = vrot.slane %v9639, 4
  %v9642 = vshll.u32 %v9457, 16
  %v9644 = vrot.slane %v9642, 5
  %v9645 = vsel %vm3025, %v9640, %v9644
  %v9647 = vshrl.u32 %v9458, 16
  %v9649 = vrot.slane %v9647, 4
  %v9650 = vshll.u32 %v9458, 16
  %v9652 = vrot.slane %v9650, 5
  %v9653 = vor.u32 %v9649, %v9652
  %v9654 = vrot.slane %v9653, 4
  %v9656 = vshll.u32 %v9459, 16
  %v9658 = vrot.slane %v9656, 5
  %v9659 = vsel %vm3025, %v9654, %v9658
  %v9661 = vshrl.u32 %v9460, 16
  %v9663 = vrot.slane %v9661, 4
  %v9664 = vshll.u32 %v9460, 16
  %v9666 = vrot.slane %v9664, 5
  %v9667 = vor.u32 %v9663, %v9666
  %v9668 = vrot.slane %v9667, 4
  %v9670 = vshll.u32 %v9461, 16
  %v9672 = vrot.slane %v9670, 5
  %v9673 = vsel %vm3025, %v9668, %v9672
  %v9675 = vshrl.u32 %v9462, 16
  %v9677 = vrot.slane %v9675, 4
  %v9678 = vshll.u32 %v9462, 16
  %v9680 = vrot.slane %v9678, 5
  %v9681 = vor.u32 %v9677, %v9680
  %v9682 = vrot.slane %v9681, 4
  %v9684 = vshll.u32 %v9463, 16
  %v9686 = vrot.slane %v9684, 5
  %v9687 = vsel %vm3025, %v9682, %v9686
  %v9688 = vunpack.c.l.b16 %v9477
  %v9689 = vunpack.c.l.b16 %v9491
  %v9690 = vunpack.c.l.b16 %v9505
  %v9691 = vunpack.c.l.b16 %v9519
  %v9692 = vunpack.c.l.b16 %v9533
  %v9693 = vunpack.c.l.b16 %v9547
  %v9694 = vunpack.c.l.b16 %v9561
  %v9695 = vunpack.c.l.b16 %v9575
  %v9696 = vunpack.c.l.b16 %v9589
  %v9697 = vunpack.c.l.b16 %v9603
  %v9698 = vunpack.c.l.b16 %v9617
  %v9699 = vunpack.c.l.b16 %v9631
  %v9700 = vunpack.c.l.b16 %v9645
  %v9701 = vunpack.c.l.b16 %v9659
  %v9702 = vunpack.c.l.b16 %v9673
  %v9703 = vunpack.c.l.b16 %v9687
  %v9704 = vpack.c.b16 %v9689, %v9688
  %v9705 = vpack.c.b16 %v9691, %v9690
  %v9706 = vpack.c.b16 %v9693, %v9692
  %v9707 = vpack.c.b16 %v9695, %v9694
  %v9708 = vpack.c.b16 %v9697, %v9696
  %v9709 = vpack.c.b16 %v9699, %v9698
  %v9710 = vpack.c.b16 %v9701, %v9700
  %v9711 = vpack.c.b16 %v9703, %v9702
  %9712 = vrot.lane.b32.xlu0 %v9704, 64
  %v9713 = vpop.permute.xlu0 %9712
  %9714 = vrot.lane.b32.xlu0 %v9705, 64
  %v9715 = vpop.permute.xlu0 %9714
  %9716 = vrot.lane.b32.xlu0 %v9706, 64
  %v9717 = vpop.permute.xlu0 %9716
  %9718 = vrot.lane.b32.xlu0 %v9707, 64
  %v9719 = vpop.permute.xlu0 %9718
  %9720 = vrot.lane.b32.xlu0 %v9708, 64
  %v9721 = vpop.permute.xlu0 %9720
  %9722 = vrot.lane.b32.xlu0 %v9709, 64
  %v9723 = vpop.permute.xlu0 %9722
  %9724 = vrot.lane.b32.xlu0 %v9710, 64
  %v9725 = vpop.permute.xlu0 %9724
  %9726 = vrot.lane.b32.xlu0 %v9711, 64
  %v9727 = vpop.permute.xlu0 %9726
  %v9730 = vsel %vm7044, %v9042, %v9713
  %v9734 = vsel %vm7044, %v9043, %v9715
  %v9738 = vsel %vm7044, %v9044, %v9717
  %v9742 = vsel %vm7044, %v9045, %v9719
  %v9746 = vsel %vm7044, %v9046, %v9721
  %v9750 = vsel %vm7044, %v9047, %v9723
  %v9754 = vsel %vm7044, %v9048, %v9725
  %v9758 = vsel %vm7044, %v9049, %v9727
  %s9760 = scalar_lea.vmem %s10, 384
  %v9761 = vld [vmem:[%s9760] sm:$0xf]
  %v9762 = vld [vmem:[%s9760 + $0x4] sm:$0xf]
  %v9763 = vld [vmem:[%s9760 + $0x8] sm:$0xf]
  %v9764 = vld [vmem:[%s9760 + $0xc] sm:$0xf]
  %v9765 = vld [vmem:[%s9760 + $0x10] sm:$0xf]
  %v9766 = vld [vmem:[%s9760 + $0x14] sm:$0xf]
  %v9767 = vld [vmem:[%s9760 + $0x18] sm:$0xf]
  %v9768 = vld [vmem:[%s9760 + $0x1c] sm:$0xf]
  %v9769 = vld [vmem:[%s9760 + $0x20] sm:$0xf]
  %v9770 = vld [vmem:[%s9760 + $0x24] sm:$0xf]
  %v9771 = vld [vmem:[%s9760 + $0x28] sm:$0xf]
  %v9772 = vld [vmem:[%s9760 + $0x2c] sm:$0xf]
  %v9773 = vld [vmem:[%s9760 + $0x30] sm:$0xf]
  %v9774 = vld [vmem:[%s9760 + $0x34] sm:$0xf]
  %v9775 = vld [vmem:[%s9760 + $0x38] sm:$0xf]
  %v9776 = vld [vmem:[%s9760 + $0x3c] sm:$0xf]
  %v9777 = vld [vmem:[%s9760 + $0x40] sm:$0xf]
  %v9778 = vld [vmem:[%s9760 + $0x44] sm:$0xf]
  %v9779 = vld [vmem:[%s9760 + $0x48] sm:$0xf]
  %v9780 = vld [vmem:[%s9760 + $0x4c] sm:$0xf]
  %v9781 = vld [vmem:[%s9760 + $0x50] sm:$0xf]
  %v9782 = vld [vmem:[%s9760 + $0x54] sm:$0xf]
  %v9783 = vld [vmem:[%s9760 + $0x58] sm:$0xf]
  %v9784 = vld [vmem:[%s9760 + $0x5c] sm:$0xf]
  %v9785 = vld [vmem:[%s9760 + $0x60] sm:$0xf]
  %v9786 = vld [vmem:[%s9760 + $0x64] sm:$0xf]
  %v9787 = vld [vmem:[%s9760 + $0x68] sm:$0xf]
  %v9788 = vld [vmem:[%s9760 + $0x6c] sm:$0xf]
  %v9789 = vld [vmem:[%s9760 + $0x70] sm:$0xf]
  %v9790 = vld [vmem:[%s9760 + $0x74] sm:$0xf]
  %v9791 = vld [vmem:[%s9760 + $0x78] sm:$0xf]
  %v9792 = vld [vmem:[%s9760 + $0x7c] sm:$0xf]
  %v9825 = vunpack.c.l.b16 %v9761
  %v9826 = vunpack.c.l.b16 %v9762
  %v9827 = vunpack.c.l.b16 %v9763
  %v9828 = vunpack.c.l.b16 %v9764
  %v9829 = vunpack.c.l.b16 %v9765
  %v9830 = vunpack.c.l.b16 %v9766
  %v9831 = vunpack.c.l.b16 %v9767
  %v9832 = vunpack.c.l.b16 %v9768
  %v9833 = vunpack.c.l.b16 %v9769
  %v9834 = vunpack.c.l.b16 %v9770
  %v9835 = vunpack.c.l.b16 %v9771
  %v9836 = vunpack.c.l.b16 %v9772
  %v9837 = vunpack.c.l.b16 %v9773
  %v9838 = vunpack.c.l.b16 %v9774
  %v9839 = vunpack.c.l.b16 %v9775
  %v9840 = vunpack.c.l.b16 %v9776
  %v9841 = vunpack.c.l.b16 %v9777
  %v9842 = vunpack.c.l.b16 %v9778
  %v9843 = vunpack.c.l.b16 %v9779
  %v9844 = vunpack.c.l.b16 %v9780
  %v9845 = vunpack.c.l.b16 %v9781
  %v9846 = vunpack.c.l.b16 %v9782
  %v9847 = vunpack.c.l.b16 %v9783
  %v9848 = vunpack.c.l.b16 %v9784
  %v9849 = vunpack.c.l.b16 %v9785
  %v9850 = vunpack.c.l.b16 %v9786
  %v9851 = vunpack.c.l.b16 %v9787
  %v9852 = vunpack.c.l.b16 %v9788
  %v9853 = vunpack.c.l.b16 %v9789
  %v9854 = vunpack.c.l.b16 %v9790
  %v9855 = vunpack.c.l.b16 %v9791
  %v9856 = vunpack.c.l.b16 %v9792
  %v9857 = vpack.c.b16 %v9826, %v9825
  %v9858 = vpack.c.b16 %v9828, %v9827
  %v9859 = vpack.c.b16 %v9830, %v9829
  %v9860 = vpack.c.b16 %v9832, %v9831
  %v9861 = vpack.c.b16 %v9834, %v9833
  %v9862 = vpack.c.b16 %v9836, %v9835
  %v9863 = vpack.c.b16 %v9838, %v9837
  %v9864 = vpack.c.b16 %v9840, %v9839
  %v9865 = vpack.c.b16 %v9842, %v9841
  %v9866 = vpack.c.b16 %v9844, %v9843
  %v9867 = vpack.c.b16 %v9846, %v9845
  %v9868 = vpack.c.b16 %v9848, %v9847
  %v9869 = vpack.c.b16 %v9850, %v9849
  %v9870 = vpack.c.b16 %v9852, %v9851
  %v9871 = vpack.c.b16 %v9854, %v9853
  %v9872 = vpack.c.b16 %v9856, %v9855
  %9889 = vmatprep.subr.bf16.mxu0 0
  %9890 = vmatpush1.bf16.msra.mxu0 %v9864
  %9891 = vmatprep.subr.bf16.mxu0 0
  %9892 = vmatpush1.bf16.msra.mxu0 %v9863
  %9893 = vmatprep.subr.bf16.mxu0 0
  %9894 = vmatpush1.bf16.msra.mxu0 %v9862
  %9895 = vmatprep.subr.bf16.mxu0 0
  %9896 = vmatpush1.bf16.msra.mxu0 %v9861
  %9897 = vmatprep.subr.bf16.mxu0 0
  %9898 = vmatpush1.bf16.msra.mxu0 %v9860
  %9899 = vmatprep.subr.bf16.mxu0 0
  %9900 = vmatpush1.bf16.msra.mxu0 %v9859
  %9901 = vmatprep.subr.bf16.mxu0 0
  %9902 = vmatpush1.bf16.msra.mxu0 %v9858
  %9903 = vmatprep.subr.bf16.mxu0 0
  %9904 = vmatpush1.bf16.msra.mxu0 %v9857
  %9905 = vmatprep.subr.bf16.mxu0 0
  %9906 = vmatpush2.bf16.msra.mxu0 %v9872
  %9907 = vmatprep.subr.bf16.mxu0 0
  %9908 = vmatpush2.bf16.msra.mxu0 %v9871
  %9909 = vmatprep.subr.bf16.mxu0 0
  %9910 = vmatpush2.bf16.msra.mxu0 %v9870
  %9911 = vmatprep.subr.bf16.mxu0 0
  %9912 = vmatpush2.bf16.msra.mxu0 %v9869
  %9913 = vmatprep.subr.bf16.mxu0 0
  %9914 = vmatpush2.bf16.msra.mxu0 %v9868
  %9915 = vmatprep.subr.bf16.mxu0 0
  %9916 = vmatpush2.bf16.msra.mxu0 %v9867
  %9917 = vmatprep.subr.bf16.mxu0 0
  %9918 = vmatpush2.bf16.msra.mxu0 %v9866
  %9919 = vmatprep.subr.bf16.mxu0 0
  %9920 = vmatpush2.bf16.msra.mxu0 %v9865
  %9921 = vmatprep.mubr.bf16.mxu0 %v9730
  %9922 = vmatmul.mubr.bf16.gmra.mxu0 %v8628
  %v9923 = vpop.f32.mrf.mxu0
  %v9924 = vadd.f32 0.0, %v9923
  %v9925 = vpop.f32.mrf.mxu0
  %v9926 = vpop.f32.mrf.mxu0
  %v9927 = vadd.f32 0.0, %v9926
  %v9928 = vpop.f32.mrf.mxu0
  %9929 = vmatprep.mubr.bf16.mxu0 %v9734
  %9930 = vmatmul.mubr.bf16.gmra.mxu0 %v8631
  %v9931 = vpop.f32.mrf.mxu0
  %v9932 = vadd.f32 0.0, %v9931
  %v9933 = vpop.f32.mrf.mxu0
  %v9934 = vpop.f32.mrf.mxu0
  %v9935 = vadd.f32 0.0, %v9934
  %v9936 = vpop.f32.mrf.mxu0
  %9937 = vmatprep.mubr.bf16.mxu0 %v9738
  %9938 = vmatmul.mubr.bf16.gmra.mxu0 %v8634
  %v9939 = vpop.f32.mrf.mxu0
  %v9940 = vadd.f32 0.0, %v9939
  %v9941 = vpop.f32.mrf.mxu0
  %v9942 = vpop.f32.mrf.mxu0
  %v9943 = vadd.f32 0.0, %v9942
  %v9944 = vpop.f32.mrf.mxu0
  %9945 = vmatprep.mubr.bf16.mxu0 %v9742
  %9946 = vmatmul.mubr.bf16.gmra.mxu0 %v8637
  %v9947 = vpop.f32.mrf.mxu0
  %v9948 = vadd.f32 0.0, %v9947
  %v9949 = vpop.f32.mrf.mxu0
  %v9950 = vpop.f32.mrf.mxu0
  %v9951 = vadd.f32 0.0, %v9950
  %v9952 = vpop.f32.mrf.mxu0
  %9953 = vmatprep.mubr.bf16.mxu0 %v9746
  %9954 = vmatmul.mubr.bf16.gmra.mxu0 %v8640
  %v9955 = vpop.f32.mrf.mxu0
  %v9956 = vadd.f32 0.0, %v9955
  %v9957 = vpop.f32.mrf.mxu0
  %v9958 = vpop.f32.mrf.mxu0
  %v9959 = vadd.f32 0.0, %v9958
  %v9960 = vpop.f32.mrf.mxu0
  %9961 = vmatprep.mubr.bf16.mxu0 %v9750
  %9962 = vmatmul.mubr.bf16.gmra.mxu0 %v8643
  %v9963 = vpop.f32.mrf.mxu0
  %v9964 = vadd.f32 0.0, %v9963
  %v9965 = vpop.f32.mrf.mxu0
  %v9966 = vpop.f32.mrf.mxu0
  %v9967 = vadd.f32 0.0, %v9966
  %v9968 = vpop.f32.mrf.mxu0
  %9969 = vmatprep.mubr.bf16.mxu0 %v9754
  %9970 = vmatmul.mubr.bf16.gmra.mxu0 %v8646
  %v9971 = vpop.f32.mrf.mxu0
  %v9972 = vadd.f32 0.0, %v9971
  %v9973 = vpop.f32.mrf.mxu0
  %v9974 = vpop.f32.mrf.mxu0
  %v9975 = vadd.f32 0.0, %v9974
  %v9976 = vpop.f32.mrf.mxu0
  %9977 = vmatprep.mubr.bf16.mxu0 %v9758
  %9978 = vmatmul.mubr.bf16.gmra.mxu0 %v8649
  %v9979 = vpop.f32.mrf.mxu0
  %v9980 = vadd.f32 0.0, %v9979
  %v9981 = vpop.f32.mrf.mxu0
  %v9982 = vpop.f32.mrf.mxu0
  %v9983 = vadd.f32 0.0, %v9982
  %v9984 = vpop.f32.mrf.mxu0
  %9985 = vdwg.mxu0
  %v9986 = vmul.f32 %v9924, %v8137
  %v9987 = vmul.f32 %v9927, %v8137
  %v9988 = vmul.f32 %v9932, %v8137
  %v9989 = vmul.f32 %v9935, %v8137
  %v9990 = vmul.f32 %v9940, %v8137
  %v9991 = vmul.f32 %v9943, %v8137
  %v9992 = vmul.f32 %v9948, %v8137
  %v9993 = vmul.f32 %v9951, %v8137
  %v9994 = vmul.f32 %v9956, %v8137
  %v9995 = vmul.f32 %v9959, %v8137
  %v9996 = vmul.f32 %v9964, %v8137
  %v9997 = vmul.f32 %v9967, %v8137
  %v9998 = vmul.f32 %v9972, %v8137
  %v9999 = vmul.f32 %v9975, %v8137
  %v10000 = vmul.f32 %v9980, %v8137
  %v10001 = vmul.f32 %v9983, %v8137
  %v10002 = vadd.f32 %v9986, %v8159
  %v10003 = vadd.f32 %v9987, %v8159
  %v10004 = vadd.f32 %v9988, %v8159
  %v10005 = vadd.f32 %v9989, %v8159
  %v10006 = vadd.f32 %v9990, %v8159
  %v10007 = vadd.f32 %v9991, %v8159
  %v10008 = vadd.f32 %v9992, %v8159
  %v10009 = vadd.f32 %v9993, %v8159
  %v10010 = vadd.f32 %v9994, %v8159
  %v10011 = vadd.f32 %v9995, %v8159
  %v10012 = vadd.f32 %v9996, %v8159
  %v10013 = vadd.f32 %v9997, %v8159
  %v10014 = vadd.f32 %v9998, %v8159
  %v10015 = vadd.f32 %v9999, %v8159
  %v10016 = vadd.f32 %v10000, %v8159
  %v10017 = vadd.f32 %v10001, %v8159
  %v10018 = vmax.f32 %v10002, 0.0
  %v10019 = vmax.f32 %v10003, 0.0
  %v10020 = vmax.f32 %v10004, 0.0
  %v10021 = vmax.f32 %v10005, 0.0
  %v10022 = vmax.f32 %v10006, 0.0
  %v10023 = vmax.f32 %v10007, 0.0
  %v10024 = vmax.f32 %v10008, 0.0
  %v10025 = vmax.f32 %v10009, 0.0
  %v10026 = vmax.f32 %v10010, 0.0
  %v10027 = vmax.f32 %v10011, 0.0
  %v10028 = vmax.f32 %v10012, 0.0
  %v10029 = vmax.f32 %v10013, 0.0
  %v10030 = vmax.f32 %v10014, 0.0
  %v10031 = vmax.f32 %v10015, 0.0
  %v10032 = vmax.f32 %v10016, 0.0
  %v10033 = vmax.f32 %v10017, 0.0
  %s10034 = scalar_lea.vmem [#allocation2], 384
  %v10035 = vld [vmem:[%s10034] sm:$0xff]
  %v10036 = vld [vmem:[%s10034 + $0x8] sm:$0xff]
  %v10037 = vld [vmem:[%s10034 + $0x10] sm:$0xff]
  %v10038 = vld [vmem:[%s10034 + $0x18] sm:$0xff]
  %v10039 = vld [vmem:[%s10034 + $0x20] sm:$0xff]
  %v10040 = vld [vmem:[%s10034 + $0x28] sm:$0xff]
  %v10041 = vld [vmem:[%s10034 + $0x30] sm:$0xff]
  %v10042 = vld [vmem:[%s10034 + $0x38] sm:$0xff]
  %v10043 = vld [vmem:[%s10034 + $0x40] sm:$0xff]
  %v10044 = vld [vmem:[%s10034 + $0x48] sm:$0xff]
  %v10045 = vld [vmem:[%s10034 + $0x50] sm:$0xff]
  %v10046 = vld [vmem:[%s10034 + $0x58] sm:$0xff]
  %v10047 = vld [vmem:[%s10034 + $0x60] sm:$0xff]
  %v10048 = vld [vmem:[%s10034 + $0x68] sm:$0xff]
  %v10049 = vld [vmem:[%s10034 + $0x70] sm:$0xff]
  %v10050 = vld [vmem:[%s10034 + $0x78] sm:$0xff]
  %v10051 = vadd.f32 %v10018, %v10035
  %v10052 = vadd.f32 %v10019, %v10036
  %v10053 = vadd.f32 %v10020, %v10037
  %v10054 = vadd.f32 %v10021, %v10038
  %v10055 = vadd.f32 %v10022, %v10039
  %v10056 = vadd.f32 %v10023, %v10040
  %v10057 = vadd.f32 %v10024, %v10041
  %v10058 = vadd.f32 %v10025, %v10042
  %v10059 = vadd.f32 %v10026, %v10043
  %v10060 = vadd.f32 %v10027, %v10044
  %v10061 = vadd.f32 %v10028, %v10045
  %v10062 = vadd.f32 %v10029, %v10046
  %v10063 = vadd.f32 %v10030, %v10047
  %v10064 = vadd.f32 %v10031, %v10048
  %v10065 = vadd.f32 %v10032, %v10049
  %v10066 = vadd.f32 %v10033, %v10050
  %v10067 = vmul.f32 %v10051, %v8229
  %v10068 = vmul.f32 %v10052, %v8229
  %v10069 = vmul.f32 %v10053, %v8229
  %v10070 = vmul.f32 %v10054, %v8229
  %v10071 = vmul.f32 %v10055, %v8229
  %v10072 = vmul.f32 %v10056, %v8229
  %v10073 = vmul.f32 %v10057, %v8229
  %v10074 = vmul.f32 %v10058, %v8229
  %v10075 = vmul.f32 %v10059, %v8229
  %v10076 = vmul.f32 %v10060, %v8229
  %v10077 = vmul.f32 %v10061, %v8229
  %v10078 = vmul.f32 %v10062, %v8229
  %v10079 = vmul.f32 %v10063, %v8229
  %v10080 = vmul.f32 %v10064, %v8229
  %v10081 = vmul.f32 %v10065, %v8229
  %v10082 = vmul.f32 %v10066, %v8229
  %10083 = vadd.xlane.f32.xlu0 %v10067
  %v10084 = vpop.xlane.xlu0 %10083
  %10085 = vadd.xlane.f32.xlu0 %v10068
  %v10086 = vpop.xlane.xlu0 %10085
  %10087 = vadd.xlane.f32.xlu0 %v10069
  %v10088 = vpop.xlane.xlu0 %10087
  %10089 = vadd.xlane.f32.xlu0 %v10070
  %v10090 = vpop.xlane.xlu0 %10089
  %10091 = vadd.xlane.f32.xlu0 %v10071
  %v10092 = vpop.xlane.xlu0 %10091
  %10093 = vadd.xlane.f32.xlu0 %v10072
  %v10094 = vpop.xlane.xlu0 %10093
  %10095 = vadd.xlane.f32.xlu0 %v10073
  %v10096 = vpop.xlane.xlu0 %10095
  %10097 = vadd.xlane.f32.xlu0 %v10074
  %v10098 = vpop.xlane.xlu0 %10097
  %10099 = vadd.xlane.f32.xlu0 %v10075
  %v10100 = vpop.xlane.xlu0 %10099
  %10101 = vadd.xlane.f32.xlu0 %v10076
  %v10102 = vpop.xlane.xlu0 %10101
  %10103 = vadd.xlane.f32.xlu0 %v10077
  %v10104 = vpop.xlane.xlu0 %10103
  %10105 = vadd.xlane.f32.xlu0 %v10078
  %v10106 = vpop.xlane.xlu0 %10105
  %10107 = vadd.xlane.f32.xlu0 %v10079
  %v10108 = vpop.xlane.xlu0 %10107
  %10109 = vadd.xlane.f32.xlu0 %v10080
  %v10110 = vpop.xlane.xlu0 %10109
  %10111 = vadd.xlane.f32.xlu0 %v10081
  %v10112 = vpop.xlane.xlu0 %10111
  %10113 = vadd.xlane.f32.xlu0 %v10082
  %v10114 = vpop.xlane.xlu0 %10113
  %v10115 = vadd.f32 %v10084, %v8279
  %v10116 = vadd.f32 %v10086, %v8279
  %v10117 = vadd.f32 %v10088, %v8279
  %v10118 = vadd.f32 %v10090, %v8279
  %v10119 = vadd.f32 %v10092, %v8279
  %v10120 = vadd.f32 %v10094, %v8279
  %v10121 = vadd.f32 %v10096, %v8279
  %v10122 = vadd.f32 %v10098, %v8279
  %v10123 = vadd.f32 %v10100, %v8279
  %v10124 = vadd.f32 %v10102, %v8279
  %v10125 = vadd.f32 %v10104, %v8279
  %v10126 = vadd.f32 %v10106, %v8279
  %v10127 = vadd.f32 %v10108, %v8279
  %v10128 = vadd.f32 %v10110, %v8279
  %v10129 = vadd.f32 %v10112, %v8279
  %v10130 = vadd.f32 %v10114, %v8279
  %vm10131 = vcmp.eq.s32.totalorder %v7923, 3
  %v10132 = vsel %vm10131, 1, 0
  %vm10133 = vcmp.eq.s32.totalorder %v10132, 1
  %v10134 = vsel %vm10133, %v10115, 0.0
  %v10135 = vsel %vm10133, %v10116, 0.0
  %v10136 = vsel %vm10133, %v10117, 0.0
  %v10137 = vsel %vm10133, %v10118, 0.0
  %v10138 = vsel %vm10133, %v10119, 0.0
  %v10139 = vsel %vm10133, %v10120, 0.0
  %v10140 = vsel %vm10133, %v10121, 0.0
  %v10141 = vsel %vm10133, %v10122, 0.0
  %v10142 = vsel %vm10133, %v10123, 0.0
  %v10143 = vsel %vm10133, %v10124, 0.0
  %v10144 = vsel %vm10133, %v10125, 0.0
  %v10145 = vsel %vm10133, %v10126, 0.0
  %v10146 = vsel %vm10133, %v10127, 0.0
  %v10147 = vsel %vm10133, %v10128, 0.0
  %v10148 = vsel %vm10133, %v10129, 0.0
  %v10149 = vsel %vm10133, %v10130, 0.0
  %v10150 = vadd.f32 %v9416, %v10134
  %v10151 = vadd.f32 %v9417, %v10135
  %v10152 = vadd.f32 %v9418, %v10136
  %v10153 = vadd.f32 %v9419, %v10137
  %v10154 = vadd.f32 %v9420, %v10138
  %v10155 = vadd.f32 %v9421, %v10139
  %v10156 = vadd.f32 %v9422, %v10140
  %v10157 = vadd.f32 %v9423, %v10141
  %v10158 = vadd.f32 %v9424, %v10142
  %v10159 = vadd.f32 %v9425, %v10143
  %v10160 = vadd.f32 %v9426, %v10144
  %v10161 = vadd.f32 %v9427, %v10145
  %v10162 = vadd.f32 %v9428, %v10146
  %v10163 = vadd.f32 %v9429, %v10147
  %v10164 = vadd.f32 %v9430, %v10148
  %v10165 = vadd.f32 %v9431, %v10149
  %vm10166 = vcmask 31744
  %10167 = vst.msk [vmem:[%s15] sm:$0xff] %vm10166, %v10150
  %10168 = vst.msk [vmem:[%s15 + $0x8] sm:$0xff] %vm10166, %v10151
  %10169 = vst.msk [vmem:[%s15 + $0x10] sm:$0xff] %vm10166, %v10152
  %10170 = vst.msk [vmem:[%s15 + $0x18] sm:$0xff] %vm10166, %v10153
  %10171 = vst.msk [vmem:[%s15 + $0x20] sm:$0xff] %vm10166, %v10154
  %10172 = vst.msk [vmem:[%s15 + $0x28] sm:$0xff] %vm10166, %v10155
  %10173 = vst.msk [vmem:[%s15 + $0x30] sm:$0xff] %vm10166, %v10156
  %10174 = vst.msk [vmem:[%s15 + $0x38] sm:$0xff] %vm10166, %v10157
  %10175 = vst.msk [vmem:[%s15 + $0x40] sm:$0xff] %vm10166, %v10158
  %10176 = vst.msk [vmem:[%s15 + $0x48] sm:$0xff] %vm10166, %v10159
  %10177 = vst.msk [vmem:[%s15 + $0x50] sm:$0xff] %vm10166, %v10160
  %10178 = vst.msk [vmem:[%s15 + $0x58] sm:$0xff] %vm10166, %v10161
  %10179 = vst.msk [vmem:[%s15 + $0x60] sm:$0xff] %vm10166, %v10162
  %10180 = vst.msk [vmem:[%s15 + $0x68] sm:$0xff] %vm10166, %v10163
  %10181 = vst.msk [vmem:[%s15 + $0x70] sm:$0xff] %vm10166, %v10164
  %10182 = vst.msk [vmem:[%s15 + $0x78] sm:$0xff] %vm10166, %v10165
  // Predicated region
  $region62: #{unet_forward.1} parent=0 // pred_check
    _
  $region63: #{unet_forward.1} parent=0 // pred_check_branch
    %10184 = sbr.rel (0) target = $region65
  $region64: #{unet_forward.1} parent=0 // pred_region
    _
  $region65: #{unet_forward.1} parent=0 // pred_fallthru
    _
  // Predicated region
  $region66: #{unet_forward.1} parent=0 // pred_check
    _
  $region67: #{unet_forward.1} parent=0 // pred_check_branch
    %10186 = sbr.rel (0) target = $region69
  $region68: #{unet_forward.1} parent=0 // pred_region
    _
  $region69: #{unet_forward.1} parent=0 // pred_fallthru
    _

</llo_original>
